<compile_context>
chip_gen: v6e
topology: v6e:2x2x1
jax: 0.10.0
libtpu: 0.0.40
codegen_flags: <defaults>
</compile_context>

<pallas_src>
import functools

import numpy as np
import jax
import jax.numpy as jnp
from jax import lax
from jax.experimental import pallas as pl
from jax.experimental.pallas import tpu as pltpu

# Large (N, N) MXU operands run in bf16 (f32 accumulation via
# preferred_element_type).  Set to jnp.float32 to recover exact f32 matmuls.
_MXU_DTYPE = jnp.bfloat16
_LG_PAD = 128   # lane-dense pad for the per-head attention-logit output


def _tile(n, pref):
    """Legal tile size: `pref` when it evenly divides `n`, else the full dim
    (a full-dim block always satisfies the (8, 128) block constraint)."""
    if n <= pref or n % pref != 0:
        return n
    return pref


# --------------------------------------------------------------------------
# Kernel 1: fused GAT precompute (row-tiled over nodes).
#   h  = (pre_w + pre_b) @ gat_w                       (one-hot Linear shortcut)
#   lg = leaky_relu(h @ att_g, 0.2)                    (per-head source logits,
#        att_g is the block-diagonal (HD, 128) layout of att_src)
# --------------------------------------------------------------------------
def _precompute_kernel(pre_w_ref, pre_b_ref, gat_w_ref, att_g_ref,
                       h_ref, lg_ref):
    x0 = pre_w_ref[...] + pre_b_ref[...]
    h = jnp.dot(x0, gat_w_ref[...], preferred_element_type=jnp.float32)
    h_ref[...] = h
    lg = jnp.dot(h, att_g_ref[...], preferred_element_type=jnp.float32)
    lg_ref[...] = jnp.where(lg >= 0, lg, 0.2 * lg)      # leaky_relu(0.2)


def precompute_pallas(pre_w, pre_b, gat_w, att_g, row_tile=256):
    N, HD = pre_w.shape
    P = att_g.shape[1]
    tm = _tile(N, row_tile)
    return pl.pallas_call(
        _precompute_kernel,
        out_shape=(jax.ShapeDtypeStruct((N, HD), jnp.float32),
                   jax.ShapeDtypeStruct((N, P), jnp.float32)),
        grid=(N // tm,),
        in_specs=[
            pl.BlockSpec((tm, HD), lambda i: (i, 0)),
            pl.BlockSpec((1, HD), lambda i: (0, 0)),
            pl.BlockSpec((HD, HD), lambda i: (0, 0)),
            pl.BlockSpec((HD, P), lambda i: (0, 0)),
        ],
        out_specs=(pl.BlockSpec((tm, HD), lambda i: (i, 0)),
                   pl.BlockSpec((tm, P), lambda i: (i, 0))),
        compiler_params=pltpu.CompilerParams(dimension_semantics=("parallel",)),
    )(pre_w, pre_b, gat_w, att_g)


# --------------------------------------------------------------------------
# Kernel 2: fused weighted-GAT aggregation over ALL modalities + emb Linear.
#   For destination tile d, modality m, source tile k:
#     num += adj[m, d-tile, k-tile] @ S[k-tile]       (S = exp_w ⊙ h, (N, HD))
#     den += mask                    @ Wfull[k-tile]  (Wfull = per-head exp_w
#                                                      broadcast over dim cols)
#   Last source tile:   mod_acc += coef[d-tile, m] * (num / (den + 1e-16) + b)
#   Last modality:      out[d-tile] = mod_acc @ emb_w + emb_b
#   coef = 2 * scales[m] * interp_masks[:, m]  (the 2 = n_layers==1 residual).
#   Adjacency tiles arrive as f32 and are cast to bf16 on-chip.
# --------------------------------------------------------------------------
def _wgat_emb_kernel(adj_ref, s_ref, w_ref, coef_ref, b_ref, ew_ref, eb_ref,
                     o_ref, num_acc, den_acc, mod_acc):
    m = pl.program_id(1)
    k = pl.program_id(2)
    nm = pl.num_programs(1)
    nk = pl.num_programs(2)

    @pl.when((m == 0) & (k == 0))
    def _():
        mod_acc[...] = jnp.zeros_like(mod_acc)

    @pl.when(k == 0)
    def _():
        num_acc[...] = jnp.zeros_like(num_acc)
        den_acc[...] = jnp.zeros_like(den_acc)

    adj_f32 = adj_ref[...]                              # (tm, tk), 0 => no edge
    mask = (adj_f32 != 0).astype(_MXU_DTYPE)            # 0/1 edge mask
    adj = adj_f32.astype(_MXU_DTYPE)
    num_acc[...] += jnp.dot(adj, s_ref[...], preferred_element_type=jnp.float32)
    den_acc[...] += jnp.dot(mask, w_ref[...], preferred_element_type=jnp.float32)

    @pl.when(k == nk - 1)
    def _():
        gat = num_acc[...] / (den_acc[...] + 1e-16) + b_ref[...]   # (tm, HD)
        # Select coefficient column m (n_mod is tiny; iota-select is cheap).
        cols = lax.broadcasted_iota(jnp.int32, coef_ref.shape, 1)
        coef = jnp.sum(jnp.where(cols == m, coef_ref[...], 0.0),
                       axis=1, keepdims=True)                       # (tm, 1)
        mod_acc[...] += coef * gat

    @pl.when((k == nk - 1) & (m == nm - 1))
    def _():
        o_ref[...] = (jnp.dot(mod_acc[...], ew_ref[...],
                              preferred_element_type=jnp.float32)
                      + eb_ref[...])


def wgat_emb_pallas(adj_all, s, w_full, coef, gat_b, emb_w, emb_b, *,
                    dst_tile=256, src_tile=512):
    n_mod, N, N2 = adj_all.shape
    assert N == N2
    HD = s.shape[1]
    E = emb_w.shape[1]
    tm = _tile(N, dst_tile)
    tk = _tile(N, src_tile)
    return pl.pallas_call(
        _wgat_emb_kernel,
        out_shape=jax.ShapeDtypeStruct((N, E), jnp.float32),
        grid=(N // tm, n_mod, N // tk),
        in_specs=[
            pl.BlockSpec((None, tm, tk), lambda d, m, k: (m, d, k)),    # adj
            pl.BlockSpec((tk, HD), lambda d, m, k: (k, 0)),             # S
            pl.BlockSpec((tk, HD), lambda d, m, k: (k, 0)),             # Wfull
            pl.BlockSpec((tm, coef.shape[1]), lambda d, m, k: (d, 0)),  # coef
            pl.BlockSpec((1, HD), lambda d, m, k: (0, 0)),              # gat_b
            pl.BlockSpec((HD, E), lambda d, m, k: (0, 0)),              # emb_w
            pl.BlockSpec((1, E), lambda d, m, k: (0, 0)),               # emb_b
        ],
        out_specs=pl.BlockSpec((tm, E), lambda d, m, k: (d, 0)),
        scratch_shapes=[pltpu.VMEM((tm, HD), jnp.float32),
                        pltpu.VMEM((tm, HD), jnp.float32),
                        pltpu.VMEM((tm, HD), jnp.float32)],
        compiler_params=pltpu.CompilerParams(
            dimension_semantics=("parallel", "arbitrary", "arbitrary")),
    )(adj_all, s, w_full, coef, gat_b, emb_w, emb_b)


# --------------------------------------------------------------------------
# Kernel 3: tiled reconstruction Gram matrix  dot = emb @ emb.T
# --------------------------------------------------------------------------
def _gram_kernel(a_ref, b_ref, o_ref):
    o_ref[...] = lax.dot_general(a_ref[...], b_ref[...],
                                 (((1,), (1,)), ((), ())),
                                 preferred_element_type=jnp.float32)


def gram_pallas(e, row_tile=256):
    N, D = e.shape
    tm = _tile(N, row_tile)
    eb = e.astype(_MXU_DTYPE)
    return pl.pallas_call(
        _gram_kernel,
        out_shape=jax.ShapeDtypeStruct((N, N), jnp.float32),
        grid=(N // tm, N // tm),
        in_specs=[pl.BlockSpec((tm, D), lambda i, j: (i, 0)),
                  pl.BlockSpec((tm, D), lambda i, j: (j, 0))],
        out_specs=pl.BlockSpec((tm, tm), lambda i, j: (i, j)),
        compiler_params=pltpu.CompilerParams(
            dimension_semantics=("parallel", "parallel")),
    )(eb, eb)


# --------------------------------------------------------------------------
# Kernel 4: fused epilogue  (emb - mean)/std -> fc + leaky_relu(0.01) -> out.
# The 4-wide prediction is written into a 128-lane padded slab (lane-dense
# store) and sliced outside the kernel.
# --------------------------------------------------------------------------
def _epilogue_kernel(x_ref, mu_ref, isd_ref, fcw_ref, fcb_ref, ow_ref, ob_ref,
                     last_ref, pred_ref, *, neg_slope):
    xn = (x_ref[...] - mu_ref[...]) * isd_ref[...]
    h1 = jnp.dot(xn, fcw_ref[...], preferred_element_type=jnp.float32)
    h1 = h1 + fcb_ref[...]
    h1 = jnp.where(h1 >= 0, h1, neg_slope * h1)        # F.leaky_relu default
    last_ref[...] = h1
    pred_ref[...] = jnp.dot(h1, ow_ref[...],
                            preferred_element_type=jnp.float32) + ob_ref[...]


def epilogue_pallas(emb, mu, inv_std, fc_w, fc_b, out_w_pad, out_b_pad,
                    row_tile=256, neg_slope=0.01):
    N, E = emb.shape
    _, H = fc_w.shape
    _, P = out_w_pad.shape
    tm = _tile(N, row_tile)
    kernel = functools.partial(_epilogue_kernel, neg_slope=neg_slope)
    return pl.pallas_call(
        kernel,
        out_shape=(jax.ShapeDtypeStruct((N, H), jnp.float32),
                   jax.ShapeDtypeStruct((N, P), jnp.float32)),
        grid=(N // tm,),
        in_specs=[
            pl.BlockSpec((tm, E), lambda i: (i, 0)),
            pl.BlockSpec((1, E), lambda i: (0, 0)),
            pl.BlockSpec((1, E), lambda i: (0, 0)),
            pl.BlockSpec((E, H), lambda i: (0, 0)),
            pl.BlockSpec((1, H), lambda i: (0, 0)),
            pl.BlockSpec((H, P), lambda i: (0, 0)),
            pl.BlockSpec((1, P), lambda i: (0, 0)),
        ],
        out_specs=(pl.BlockSpec((tm, H), lambda i: (i, 0)),
                   pl.BlockSpec((tm, P), lambda i: (i, 0))),
        compiler_params=pltpu.CompilerParams(dimension_semantics=("parallel",)),
    )(emb, mu, inv_std, fc_w, fc_b, out_w_pad, out_b_pad)


# --------------------------------------------------------------------------
# Full Bionic forward (glue in plain JAX, hot paths in the kernels above).
# --------------------------------------------------------------------------
def bionic_forward(params, adj_all, masks, *, heads, dim,
                   dst_tile=256, src_tile=512):
    if isinstance(adj_all, (list, tuple)):
        adj_all = jnp.stack(adj_all, axis=0)
    adj_all = adj_all.astype(jnp.float32)
    n_mod = adj_all.shape[0]
    N = masks.shape[0]
    HD = heads * dim

    # Interp (evaluate=True deterministic path).
    scales = jax.nn.softmax(params["net_scales"], axis=-1)       # (1, n_mod)
    interp_masks = jax.nn.softmax(masks, axis=0)                 # (N, n_mod)

    # ---- modality-invariant precompute ------------------------------------
    # Block-diagonal layout of att_src: att_g[h*dim + j, h] = att_src[h, j],
    # padded to 128 lanes so the logit store is lane-dense.
    att_g = jnp.zeros((HD, _LG_PAD), jnp.float32)
    for hh in range(heads):
        att_g = att_g.at[hh * dim:(hh + 1) * dim, hh].set(
            params["gat_att_src"][hh])

    # Pre_GAT_Dense on one-hot features (I @ pre_w + pre_b == pre_w + pre_b),
    # GAT linear projection (no bias) and source attention logits, fused.
    h, lg_pad = precompute_pallas(params["pre_w"], params["pre_b"],
                                  params["gat_w"], att_g)
    lg = lg_pad[:, :heads]                                        # (N, heads)

    # Per-head stabilized exp weights (global per-head max as the shift; it
    # cancels between numerator and denominator of the edge softmax).
    c = jnp.max(lg, axis=0, keepdims=True)
    wexp = jnp.exp(lg - c)                                        # (N, heads)
    w_full = jnp.repeat(wexp, dim, axis=1)                        # (N, HD)
    s = (w_full * h).astype(_MXU_DTYPE)                           # weighted msgs
    w_full = w_full.astype(_MXU_DTYPE)

    # Layer residual (n_layers == 1 -> 2 * gat_out) folded into Interp coef.
    coef = (2.0 * scales * interp_masks).astype(jnp.float32)      # (N, n_mod)

    # ---- fused attention aggregation + modality sum + emb Linear ----------
    emb = wgat_emb_pallas(adj_all, s, w_full, coef, params["gat_b"],
                          params["emb_w"], params["emb_b"],
                          dst_tile=dst_tile, src_tile=src_tile)

    # ---- epilogue ----------------------------------------------------------
    means = jnp.mean(emb, axis=0, keepdims=True)
    stds = jnp.std(emb, axis=0, ddof=1, keepdims=True)   # torch.std unbiased
    inv_std = 1.0 / stds

    n_out = params["out_w"].shape[1]
    P = max(128, -(-n_out // 128) * 128)                 # lane-dense pad
    out_w_pad = jnp.zeros((params["out_w"].shape[0], P), jnp.float32)
    out_w_pad = out_w_pad.at[:, :n_out].set(params["out_w"])
    out_b_pad = jnp.zeros((1, P), jnp.float32).at[:, :n_out].set(params["out_b"])

    last_layer_out, pred_pad = epilogue_pallas(
        emb, means, inv_std, params["fc_w"], params["fc_b"],
        out_w_pad, out_b_pad)
    out = pred_pad[:, :n_out]

    dot = gram_pallas(emb)

    out_pre_cat_layers = []   # not implemented in the reference either
    return dot, emb, out_pre_cat_layers, scales, out, last_layer_out


# --------------------------------------------------------------------------
# Pure-JAX f32 reference (mirrors the original module semantics) for checking.
# --------------------------------------------------------------------------
def _reference_forward(params, adj_list, masks, *, heads, dim):
    N = masks.shape[0]
    HD = heads * dim
    scales = jax.nn.softmax(params["net_scales"], axis=-1)
    interp_masks = jax.nn.softmax(masks, axis=0)
    x0 = params["pre_w"] + params["pre_b"]
    h = x0 @ params["gat_w"]
    x_store = jnp.zeros((N, HD), jnp.float32)
    for i, adj in enumerate(adj_list):
        mask = (adj != 0).astype(jnp.float32)
        cols = []
        for hd in range(heads):
            hh = h[:, hd * dim:(hd + 1) * dim]
            a = params["gat_att_src"][hd]
            lg = hh @ a
            lg = jnp.where(lg >= 0, lg, 0.2 * lg)
            w = jnp.exp(lg - jnp.max(lg))[:, None]
            num = adj @ (w * hh)
            den = mask @ w + 1e-16
            cols.append(num / den + params["gat_b"][:, hd * dim:(hd + 1) * dim])
        g = jnp.concatenate(cols, axis=1)
        x_store = x_store + 2.0 * scales[0, i] * interp_masks[:, i:i + 1] * g
    emb = x_store @ params["emb_w"] + params["emb_b"]
    means = jnp.mean(emb, axis=0, keepdims=True)
    stds = jnp.std(emb, axis=0, ddof=1, keepdims=True)
    xn = (emb - means) / stds
    last = xn @ params["fc_w"] + params["fc_b"]
    last = jnp.where(last >= 0, last, 0.01 * last)
    pred = last @ params["out_w"] + params["out_b"]
    dot = emb @ emb.T
    return dot, emb, pred, last


if __name__ == "__main__":
    # Small, self-consistent shapes (in_size == number of nodes).
    N = 512
    n_mod = 2
    heads, dim = 2, 8      # gat_shapes = {dimension: 8, n_heads: 2, n_layers: 1}
    emb_size = 32
    HD = heads * dim

    key = jax.random.PRNGKey(0)
    keys = jax.random.split(key, 12)
    params = {
        "net_scales": jnp.full((1, n_mod), 1.0 / n_mod, jnp.float32),
        "pre_w": 0.1 * jax.random.normal(keys[0], (N, HD), jnp.float32),
        "pre_b": 0.1 * jax.random.normal(keys[1], (1, HD), jnp.float32),
        "gat_w": 0.1 * jax.random.normal(keys[2], (HD, HD), jnp.float32),
        "gat_att_src": 0.1 * jax.random.normal(keys[3], (heads, dim), jnp.float32),
        "gat_b": 0.1 * jax.random.normal(keys[4], (1, HD), jnp.float32),
        "emb_w": 0.1 * jax.random.normal(keys[5], (HD, emb_size), jnp.float32),
        "emb_b": 0.1 * jax.random.normal(keys[6], (1, emb_size), jnp.float32),
        "fc_w": 0.1 * jax.random.normal(keys[7], (emb_size, 256), jnp.float32),
        "fc_b": 0.1 * jax.random.normal(keys[8], (1, 256), jnp.float32),
        "out_w": 0.1 * jax.random.normal(keys[9], (256, 4), jnp.float32),
        "out_b": 0.1 * jax.random.normal(keys[10], (1, 4), jnp.float32),
    }

    # One dense weighted adjacency per modality (A[i, j] = weight of edge j->i).
    adj_list = []
    akeys = jax.random.split(keys[11], 2 * n_mod)
    for m in range(n_mod):
        edge = jax.random.bernoulli(akeys[2 * m], 0.1, (N, N)).astype(jnp.float32)
        w = jax.random.uniform(akeys[2 * m + 1], (N, N), jnp.float32, 0.5, 1.5)
        adj_list.append(edge * w)
    adj_all = jnp.stack(adj_list, axis=0)                  # (n_mod, N, N) f32

    masks = jax.random.bernoulli(jax.random.PRNGKey(123), 0.7,
                                 (N, n_mod)).astype(jnp.float32)

    fwd = jax.jit(functools.partial(bionic_forward, heads=heads, dim=dim,
                                    dst_tile=256, src_tile=256))
    outs = fwd(params, adj_all, masks)
    outs = jax.block_until_ready(outs)
    dot, emb, pre_cat, scales, pred, last = outs

    assert dot.shape == (N, N) and emb.shape == (N, emb_size)
    assert pred.shape == (N, 4) and last.shape == (N, 256)
    assert scales.shape == (1, n_mod) and pre_cat == []

    # Sanity check against the plain-JAX f32 reference.  Loose tolerance: the
    # Pallas path runs the big (N, N) matmuls in bf16 with f32 accumulation.
    r_dot, r_emb, r_pred, r_last = _reference_forward(
        params, adj_list, masks, heads=heads, dim=dim)
    np.testing.assert_allclose(np.asarray(emb), np.asarray(r_emb),
                               rtol=5e-2, atol=1e-2)
    np.testing.assert_allclose(np.asarray(dot), np.asarray(r_dot),
                               rtol=5e-2, atol=1e-2)
    np.testing.assert_allclose(np.asarray(last), np.asarray(r_last),
                               rtol=5e-2, atol=2e-2)
    np.testing.assert_allclose(np.asarray(pred), np.asarray(r_pred),
                               rtol=5e-2, atol=2e-2)

    print("KERNEL_OK")
</pallas_src>

<mosaic_0001>
module attributes {stable_mosaic.version = 11 : i64} {
  func.func @_precompute_kernel(%arg0: i32, %arg1: memref<256x16xf32, #tpu.memory_space<vmem>>, %arg2: memref<1x16xf32, #tpu.memory_space<vmem>>, %arg3: memref<16x16xf32, #tpu.memory_space<vmem>>, %arg4: memref<16x128xf32, #tpu.memory_space<vmem>>, %arg5: memref<256x16xf32, #tpu.memory_space<vmem>>, %arg6: memref<256x128xf32, #tpu.memory_space<vmem>>) attributes {dimension_semantics = [#tpu.dimension_semantics<parallel>], iteration_bounds = array<i64: 2>, scalar_prefetch = 0 : i64, scratch_operands = 0 : i64, tpu.core_type = #tpu.core_type<tc>, window_params = [{transform_indices = @transform_0, window_bounds = array<i64: 256, 16>}, {pipeline_mode = #tpu.pipeline_mode<synchronous>, transform_indices = @transform_1, window_bounds = array<i64: 1, 16>}, {pipeline_mode = #tpu.pipeline_mode<synchronous>, transform_indices = @transform_2, window_bounds = array<i64: 16, 16>}, {pipeline_mode = #tpu.pipeline_mode<synchronous>, transform_indices = @transform_3, window_bounds = array<i64: 16, 128>}, {transform_indices = @transform_4, window_bounds = array<i64: 256, 16>}, {transform_indices = @transform_5, window_bounds = array<i64: 256, 128>}]} {
    %c0 = arith.constant 0 : index
    %c0_0 = arith.constant 0 : index
    %0 = vector.load %arg1[%c0, %c0_0] : memref<256x16xf32, #tpu.memory_space<vmem>>, vector<256x16xf32>
    %c0_1 = arith.constant 0 : index
    %c0_2 = arith.constant 0 : index
    %1 = vector.load %arg2[%c0_1, %c0_2] : memref<1x16xf32, #tpu.memory_space<vmem>>, vector<1x16xf32>
    %2 = vector.broadcast %1 : vector<1x16xf32> to vector<256x16xf32>
    %3 = arith.addf %0, %2 : vector<256x16xf32>
    %c0_3 = arith.constant 0 : index
    %c0_4 = arith.constant 0 : index
    %4 = vector.load %arg3[%c0_3, %c0_4] : memref<16x16xf32, #tpu.memory_space<vmem>>, vector<16x16xf32>
    %cst = arith.constant dense<0.000000e+00> : vector<256x16xf32>
    %5 = tpu.matmul %3, %4, %cst {dimension_numbers = #tpu.dot_dimension_numbers<[1], [0], [0], [1], [0, 0, 1, 1], [], []>} : vector<256x16xf32>, vector<16x16xf32>, vector<256x16xf32> -> vector<256x16xf32>
    %c0_5 = arith.constant 0 : index
    %c0_6 = arith.constant 0 : index
    %6 = vector.load %arg5[%c0_5, %c0_6] : memref<256x16xf32, #tpu.memory_space<vmem>>, vector<256x16xf32>
    tpu.vector_store %arg5[%c0_5, %c0_6], %5 {strides = array<i32>} : memref<256x16xf32, #tpu.memory_space<vmem>>, vector<256x16xf32>,
    %c0_7 = arith.constant 0 : index
    %c0_8 = arith.constant 0 : index
    %7 = vector.load %arg4[%c0_7, %c0_8] : memref<16x128xf32, #tpu.memory_space<vmem>>, vector<16x128xf32>
    %cst_9 = arith.constant dense<0.000000e+00> : vector<256x128xf32>
    %8 = tpu.matmul %5, %7, %cst_9 {dimension_numbers = #tpu.dot_dimension_numbers<[1], [0], [0], [1], [0, 0, 1, 1], [], []>} : vector<256x16xf32>, vector<16x128xf32>, vector<256x128xf32> -> vector<256x128xf32>
    %cst_10 = arith.constant 0.000000e+00 : f32
    %9 = vector.broadcast %cst_10 : f32 to vector<256x128xf32>
    %10 = arith.cmpf oge, %8, %9 : vector<256x128xf32>
    %cst_11 = arith.constant 2.000000e-01 : f32
    %11 = vector.broadcast %cst_11 : f32 to vector<256x128xf32>
    %12 = arith.mulf %11, %8 : vector<256x128xf32>
    %13 = arith.select %10, %8, %12 : vector<256x128xi1>, vector<256x128xf32>
    %c0_12 = arith.constant 0 : index
    %c0_13 = arith.constant 0 : index
    %14 = vector.load %arg6[%c0_12, %c0_13] : memref<256x128xf32, #tpu.memory_space<vmem>>, vector<256x128xf32>
    tpu.vector_store %arg6[%c0_12, %c0_13], %13 {strides = array<i32>} : memref<256x128xf32, #tpu.memory_space<vmem>>, vector<256x128xf32>,
    return
  }
  func.func @transform_0(%arg0: i32) -> (i32, i32) {
    %c0_i32 = arith.constant 0 : i32
    %c0_i32_0 = arith.constant 0 : i32
    return %arg0, %c0_i32 : i32, i32
  }
  func.func @transform_1(%arg0: i32) -> (i32, i32) {
    %c0_i32 = arith.constant 0 : i32
    %c0_i32_0 = arith.constant 0 : i32
    %c0_i32_1 = arith.constant 0 : i32
    return %c0_i32, %c0_i32_0 : i32, i32
  }
  func.func @transform_2(%arg0: i32) -> (i32, i32) {
    %c0_i32 = arith.constant 0 : i32
    %c0_i32_0 = arith.constant 0 : i32
    %c0_i32_1 = arith.constant 0 : i32
    return %c0_i32, %c0_i32_0 : i32, i32
  }
  func.func @transform_3(%arg0: i32) -> (i32, i32) {
    %c0_i32 = arith.constant 0 : i32
    %c0_i32_0 = arith.constant 0 : i32
    %c0_i32_1 = arith.constant 0 : i32
    return %c0_i32, %c0_i32_0 : i32, i32
  }
  func.func @transform_4(%arg0: i32) -> (i32, i32) {
    %c0_i32 = arith.constant 0 : i32
    %c0_i32_0 = arith.constant 0 : i32
    return %arg0, %c0_i32 : i32, i32
  }
  func.func @transform_5(%arg0: i32) -> (i32, i32) {
    %c0_i32 = arith.constant 0 : i32
    %c0_i32_0 = arith.constant 0 : i32
    return %arg0, %c0_i32 : i32, i32
  }
}

module attributes {stable_mosaic.version = 11 : i64} {
  func.func @_wgat_emb_kernel(%arg0: i32, %arg1: i32, %arg2: i32, %arg3: memref<1x256x256xf32, #tpu.memory_space<vmem>>, %arg4: memref<256x16xbf16, #tpu.memory_space<vmem>>, %arg5: memref<256x16xbf16, #tpu.memory_space<vmem>>, %arg6: memref<256x2xf32, #tpu.memory_space<vmem>>, %arg7: memref<1x16xf32, #tpu.memory_space<vmem>>, %arg8: memref<16x32xf32, #tpu.memory_space<vmem>>, %arg9: memref<1x32xf32, #tpu.memory_space<vmem>>, %arg10: memref<256x32xf32, #tpu.memory_space<vmem>>, %arg11: memref<256x16xf32, #tpu.memory_space<vmem>>, %arg12: memref<256x16xf32, #tpu.memory_space<vmem>>, %arg13: memref<256x16xf32, #tpu.memory_space<vmem>>) attributes {dimension_semantics = [#tpu.dimension_semantics<parallel>, #tpu.dimension_semantics<arbitrary>, #tpu.dimension_semantics<arbitrary>], iteration_bounds = array<i64: 2, 2, 2>, scalar_prefetch = 0 : i64, scratch_operands = 3 : i64, tpu.core_type = #tpu.core_type<tc>, window_params = [{transform_indices = @transform_0, window_bounds = array<i64: 1, 256, 256>}, {transform_indices = @transform_1, window_bounds = array<i64: 256, 16>}, {transform_indices = @transform_2, window_bounds = array<i64: 256, 16>}, {transform_indices = @transform_3, window_bounds = array<i64: 256, 2>}, {pipeline_mode = #tpu.pipeline_mode<synchronous>, transform_indices = @transform_4, window_bounds = array<i64: 1, 16>}, {pipeline_mode = #tpu.pipeline_mode<synchronous>, transform_indices = @transform_5, window_bounds = array<i64: 16, 32>}, {pipeline_mode = #tpu.pipeline_mode<synchronous>, transform_indices = @transform_6, window_bounds = array<i64: 1, 32>}, {transform_indices = @transform_7, window_bounds = array<i64: 256, 32>}]} {
    %c0_i32 = arith.constant 0 : i32
    %0 = arith.cmpi eq, %arg1, %c0_i32 : i32
    %c0_i32_0 = arith.constant 0 : i32
    %1 = arith.cmpi eq, %arg2, %c0_i32_0 : i32
    %2 = arith.andi %0, %1 : i1
    %3 = arith.extui %2 : i1 to i32
    %c0_i32_1 = arith.constant 0 : i32
    %4 = arith.cmpi ne, %3, %c0_i32_1 : i32
    scf.if %4 {
      %cst_24 = arith.constant 0.000000e+00 : f32
      %34 = vector.broadcast %cst_24 : f32 to vector<256x16xf32>
      %c0_25 = arith.constant 0 : index
      %c0_26 = arith.constant 0 : index
      %35 = vector.load %arg13[%c0_25, %c0_26] : memref<256x16xf32, #tpu.memory_space<vmem>>, vector<256x16xf32>
      tpu.vector_store %arg13[%c0_25, %c0_26], %34 {strides = array<i32>} : memref<256x16xf32, #tpu.memory_space<vmem>>, vector<256x16xf32>,
    } else {
    }
    %c0_i32_2 = arith.constant 0 : i32
    %5 = arith.cmpi eq, %arg2, %c0_i32_2 : i32
    %6 = arith.extui %5 : i1 to i32
    %c0_i32_3 = arith.constant 0 : i32
    %7 = arith.cmpi ne, %6, %c0_i32_3 : i32
    scf.if %7 {
      %cst_24 = arith.constant 0.000000e+00 : f32
      %34 = vector.broadcast %cst_24 : f32 to vector<256x16xf32>
      %c0_25 = arith.constant 0 : index
      %c0_26 = arith.constant 0 : index
      %35 = vector.load %arg11[%c0_25, %c0_26] : memref<256x16xf32, #tpu.memory_space<vmem>>, vector<256x16xf32>
      tpu.vector_store %arg11[%c0_25, %c0_26], %34 {strides = array<i32>} : memref<256x16xf32, #tpu.memory_space<vmem>>, vector<256x16xf32>,
      %cst_27 = arith.constant 0.000000e+00 : f32
      %36 = vector.broadcast %cst_27 : f32 to vector<256x16xf32>
      %c0_28 = arith.constant 0 : index
      %c0_29 = arith.constant 0 : index
      %37 = vector.load %arg12[%c0_28, %c0_29] : memref<256x16xf32, #tpu.memory_space<vmem>>, vector<256x16xf32>
      tpu.vector_store %arg12[%c0_28, %c0_29], %36 {strides = array<i32>} : memref<256x16xf32, #tpu.memory_space<vmem>>, vector<256x16xf32>,
    } else {
    }
    %c0 = arith.constant 0 : index
    %c0_4 = arith.constant 0 : index
    %c0_5 = arith.constant 0 : index
    %8 = vector.load %arg3[%c0, %c0_4, %c0_5] : memref<1x256x256xf32, #tpu.memory_space<vmem>>, vector<1x256x256xf32>
    %9 = vector.shape_cast %8 : vector<1x256x256xf32> to vector<256x256xf32>
    %cst = arith.constant 0.000000e+00 : f32
    %10 = vector.broadcast %cst : f32 to vector<256x256xf32>
    %11 = arith.cmpf one, %9, %10 : vector<256x256xf32>
    %12 = arith.extui %11 : vector<256x256xi1> to vector<256x256xi32>
    %13 = arith.sitofp %12 : vector<256x256xi32> to vector<256x256xf32>
    %14 = arith.truncf %13 : vector<256x256xf32> to vector<256x256xbf16>
    %15 = arith.truncf %9 : vector<256x256xf32> to vector<256x256xbf16>
    %c0_6 = arith.constant 0 : index
    %c0_7 = arith.constant 0 : index
    %16 = vector.load %arg11[%c0_6, %c0_7] : memref<256x16xf32, #tpu.memory_space<vmem>>, vector<256x16xf32>
    %c0_8 = arith.constant 0 : index
    %c0_9 = arith.constant 0 : index
    %17 = vector.load %arg4[%c0_8, %c0_9] : memref<256x16xbf16, #tpu.memory_space<vmem>>, vector<256x16xbf16>
    %cst_10 = arith.constant dense<0.000000e+00> : vector<256x16xf32>
    %18 = tpu.matmul %15, %17, %cst_10 {dimension_numbers = #tpu.dot_dimension_numbers<[1], [0], [0], [1], [0, 0, 1, 1], [], []>} : vector<256x256xbf16>, vector<256x16xbf16>, vector<256x16xf32> -> vector<256x16xf32>
    %19 = arith.addf %16, %18 : vector<256x16xf32>
    %c0_11 = arith.constant 0 : index
    %c0_12 = arith.constant 0 : index
    %20 = vector.load %arg11[%c0_11, %c0_12] : memref<256x16xf32, #tpu.memory_space<vmem>>, vector<256x16xf32>
    tpu.vector_store %arg11[%c0_11, %c0_12], %19 {strides = array<i32>} : memref<256x16xf32, #tpu.memory_space<vmem>>, vector<256x16xf32>,
    %c0_13 = arith.constant 0 : index
    %c0_14 = arith.constant 0 : index
    %21 = vector.load %arg12[%c0_13, %c0_14] : memref<256x16xf32, #tpu.memory_space<vmem>>, vector<256x16xf32>
    %c0_15 = arith.constant 0 : index
    %c0_16 = arith.constant 0 : index
    %22 = vector.load %arg5[%c0_15, %c0_16] : memref<256x16xbf16, #tpu.memory_space<vmem>>, vector<256x16xbf16>
    %cst_17 = arith.constant dense<0.000000e+00> : vector<256x16xf32>
    %23 = tpu.matmul %14, %22, %cst_17 {dimension_numbers = #tpu.dot_dimension_numbers<[1], [0], [0], [1], [0, 0, 1, 1], [], []>} : vector<256x256xbf16>, vector<256x16xbf16>, vector<256x16xf32> -> vector<256x16xf32>
    %24 = arith.addf %21, %23 : vector<256x16xf32>
    %c0_18 = arith.constant 0 : index
    %c0_19 = arith.constant 0 : index
    %25 = vector.load %arg12[%c0_18, %c0_19] : memref<256x16xf32, #tpu.memory_space<vmem>>, vector<256x16xf32>
    tpu.vector_store %arg12[%c0_18, %c0_19], %24 {strides = array<i32>} : memref<256x16xf32, #tpu.memory_space<vmem>>, vector<256x16xf32>,
    %c1_i32 = arith.constant 1 : i32
    %26 = arith.cmpi eq, %arg2, %c1_i32 : i32
    %27 = arith.extui %26 : i1 to i32
    %c0_i32_20 = arith.constant 0 : i32
    %28 = arith.cmpi ne, %27, %c0_i32_20 : i32
    scf.if %28 {
      %c0_24 = arith.constant 0 : index
      %c0_25 = arith.constant 0 : index
      %34 = vector.load %arg11[%c0_24, %c0_25] : memref<256x16xf32, #tpu.memory_space<vmem>>, vector<256x16xf32>
      %c0_26 = arith.constant 0 : index
      %c0_27 = arith.constant 0 : index
      %35 = vector.load %arg12[%c0_26, %c0_27] : memref<256x16xf32, #tpu.memory_space<vmem>>, vector<256x16xf32>
      %cst_28 = arith.constant 1.000000e-16 : f32
      %36 = vector.broadcast %cst_28 : f32 to vector<256x16xf32>
      %37 = arith.addf %35, %36 : vector<256x16xf32>
      %38 = arith.divf %34, %37 : vector<256x16xf32>
      %c0_29 = arith.constant 0 : index
      %c0_30 = arith.constant 0 : index
      %39 = vector.load %arg7[%c0_29, %c0_30] : memref<1x16xf32, #tpu.memory_space<vmem>>, vector<1x16xf32>
      %40 = vector.broadcast %39 : vector<1x16xf32> to vector<256x16xf32>
      %41 = arith.addf %38, %40 : vector<256x16xf32>
      %42 = tpu.iota {dimensions = array<i32: 1>} : vector<256x2xi32>
      %43 = vector.broadcast %arg1 : i32 to vector<256x2xi32>
      %44 = arith.cmpi eq, %42, %43 : vector<256x2xi32>
      %c0_31 = arith.constant 0 : index
      %c0_32 = arith.constant 0 : index
      %45 = vector.load %arg6[%c0_31, %c0_32] : memref<256x2xf32, #tpu.memory_space<vmem>>, vector<256x2xf32>
      %cst_33 = arith.constant 0.000000e+00 : f32
      %46 = vector.broadcast %cst_33 : f32 to vector<256x2xf32>
      %47 = arith.select %44, %45, %46 : vector<256x2xi1>, vector<256x2xf32>
      %cst_34 = arith.constant dense<0.000000e+00> : vector<256xf32>
      %48 = vector.multi_reduction <add>, %47, %cst_34 [1] : vector<256x2xf32> to vector<256xf32>
      %49 = vector.shape_cast %48 : vector<256xf32> to vector<256x1xf32>
      %c0_35 = arith.constant 0 : index
      %c0_36 = arith.constant 0 : index
      %50 = vector.load %arg13[%c0_35, %c0_36] : memref<256x16xf32, #tpu.memory_space<vmem>>, vector<256x16xf32>
      %51 = vector.broadcast %49 : vector<256x1xf32> to vector<256x16xf32>
      %52 = arith.mulf %51, %41 : vector<256x16xf32>
      %53 = arith.addf %50, %52 : vector<256x16xf32>
      %c0_37 = arith.constant 0 : index
      %c0_38 = arith.constant 0 : index
      %54 = vector.load %arg13[%c0_37, %c0_38] : memref<256x16xf32, #tpu.memory_space<vmem>>, vector<256x16xf32>
      tpu.vector_store %arg13[%c0_37, %c0_38], %53 {strides = array<i32>} : memref<256x16xf32, #tpu.memory_space<vmem>>, vector<256x16xf32>,
    } else {
    }
    %c1_i32_21 = arith.constant 1 : i32
    %29 = arith.cmpi eq, %arg2, %c1_i32_21 : i32
    %c1_i32_22 = arith.constant 1 : i32
    %30 = arith.cmpi eq, %arg1, %c1_i32_22 : i32
    %31 = arith.andi %29, %30 : i1
    %32 = arith.extui %31 : i1 to i32
    %c0_i32_23 = arith.constant 0 : i32
    %33 = arith.cmpi ne, %32, %c0_i32_23 : i32
    scf.if %33 {
      %c0_24 = arith.constant 0 : index
      %c0_25 = arith.constant 0 : index
      %34 = vector.load %arg13[%c0_24, %c0_25] : memref<256x16xf32, #tpu.memory_space<vmem>>, vector<256x16xf32>
      %c0_26 = arith.constant 0 : index
      %c0_27 = arith.constant 0 : index
      %35 = vector.load %arg8[%c0_26, %c0_27] : memref<16x32xf32, #tpu.memory_space<vmem>>, vector<16x32xf32>
      %cst_28 = arith.constant dense<0.000000e+00> : vector<256x32xf32>
      %36 = tpu.matmul %34, %35, %cst_28 {dimension_numbers = #tpu.dot_dimension_numbers<[1], [0], [0], [1], [0, 0, 1, 1], [], []>} : vector<256x16xf32>, vector<16x32xf32>, vector<256x32xf32> -> vector<256x32xf32>
      %c0_29 = arith.constant 0 : index
      %c0_30 = arith.constant 0 : index
      %37 = vector.load %arg9[%c0_29, %c0_30] : memref<1x32xf32, #tpu.memory_space<vmem>>, vector<1x32xf32>
      %38 = vector.broadcast %37 : vector<1x32xf32> to vector<256x32xf32>
      %39 = arith.addf %36, %38 : vector<256x32xf32>
      %c0_31 = arith.constant 0 : index
      %c0_32 = arith.constant 0 : index
      %40 = vector.load %arg10[%c0_31, %c0_32] : memref<256x32xf32, #tpu.memory_space<vmem>>, vector<256x32xf32>
      tpu.vector_store %arg10[%c0_31, %c0_32], %39 {strides = array<i32>} : memref<256x32xf32, #tpu.memory_space<vmem>>, vector<256x32xf32>,
    } else {
    }
    return
  }
  func.func @transform_0(%arg0: i32, %arg1: i32, %arg2: i32) -> (i32, i32, i32) {
    %c0_i32 = arith.constant 0 : i32
    return %arg1, %arg0, %arg2 : i32, i32, i32
  }
  func.func @transform_1(%arg0: i32, %arg1: i32, %arg2: i32) -> (i32, i32) {
    %c0_i32 = arith.constant 0 : i32
    %c0_i32_0 = arith.constant 0 : i32
    return %arg2, %c0_i32 : i32, i32
  }
  func.func @transform_2(%arg0: i32, %arg1: i32, %arg2: i32) -> (i32, i32) {
    %c0_i32 = arith.constant 0 : i32
    %c0_i32_0 = arith.constant 0 : i32
    return %arg2, %c0_i32 : i32, i32
  }
  func.func @transform_3(%arg0: i32, %arg1: i32, %arg2: i32) -> (i32, i32) {
    %c0_i32 = arith.constant 0 : i32
    %c0_i32_0 = arith.constant 0 : i32
    return %arg0, %c0_i32 : i32, i32
  }
  func.func @transform_4(%arg0: i32, %arg1: i32, %arg2: i32) -> (i32, i32) {
    %c0_i32 = arith.constant 0 : i32
    %c0_i32_0 = arith.constant 0 : i32
    %c0_i32_1 = arith.constant 0 : i32
    return %c0_i32, %c0_i32_0 : i32, i32
  }
  func.func @transform_5(%arg0: i32, %arg1: i32, %arg2: i32) -> (i32, i32) {
    %c0_i32 = arith.constant 0 : i32
    %c0_i32_0 = arith.constant 0 : i32
    %c0_i32_1 = arith.constant 0 : i32
    return %c0_i32, %c0_i32_0 : i32, i32
  }
  func.func @transform_6(%arg0: i32, %arg1: i32, %arg2: i32) -> (i32, i32) {
    %c0_i32 = arith.constant 0 : i32
    %c0_i32_0 = arith.constant 0 : i32
    %c0_i32_1 = arith.constant 0 : i32
    return %c0_i32, %c0_i32_0 : i32, i32
  }
  func.func @transform_7(%arg0: i32, %arg1: i32, %arg2: i32) -> (i32, i32) {
    %c0_i32 = arith.constant 0 : i32
    %c0_i32_0 = arith.constant 0 : i32
    return %arg0, %c0_i32 : i32, i32
  }
}

module attributes {stable_mosaic.version = 11 : i64} {
  func.func @_epilogue_kernel(%arg0: i32, %arg1: memref<256x32xf32, #tpu.memory_space<vmem>>, %arg2: memref<1x32xf32, #tpu.memory_space<vmem>>, %arg3: memref<1x32xf32, #tpu.memory_space<vmem>>, %arg4: memref<32x256xf32, #tpu.memory_space<vmem>>, %arg5: memref<1x256xf32, #tpu.memory_space<vmem>>, %arg6: memref<256x128xf32, #tpu.memory_space<vmem>>, %arg7: memref<1x128xf32, #tpu.memory_space<vmem>>, %arg8: memref<256x256xf32, #tpu.memory_space<vmem>>, %arg9: memref<256x128xf32, #tpu.memory_space<vmem>>) attributes {dimension_semantics = [#tpu.dimension_semantics<parallel>], iteration_bounds = array<i64: 2>, scalar_prefetch = 0 : i64, scratch_operands = 0 : i64, tpu.core_type = #tpu.core_type<tc>, window_params = [{transform_indices = @transform_0, window_bounds = array<i64: 256, 32>}, {pipeline_mode = #tpu.pipeline_mode<synchronous>, transform_indices = @transform_1, window_bounds = array<i64: 1, 32>}, {pipeline_mode = #tpu.pipeline_mode<synchronous>, transform_indices = @transform_2, window_bounds = array<i64: 1, 32>}, {pipeline_mode = #tpu.pipeline_mode<synchronous>, transform_indices = @transform_3, window_bounds = array<i64: 32, 256>}, {pipeline_mode = #tpu.pipeline_mode<synchronous>, transform_indices = @transform_4, window_bounds = array<i64: 1, 256>}, {pipeline_mode = #tpu.pipeline_mode<synchronous>, transform_indices = @transform_5, window_bounds = array<i64: 256, 128>}, {pipeline_mode = #tpu.pipeline_mode<synchronous>, transform_indices = @transform_6, window_bounds = array<i64: 1, 128>}, {transform_indices = @transform_7, window_bounds = array<i64: 256, 256>}, {transform_indices = @transform_8, window_bounds = array<i64: 256, 128>}]} {
    %c0 = arith.constant 0 : index
    %c0_0 = arith.constant 0 : index
    %0 = vector.load %arg1[%c0, %c0_0] : memref<256x32xf32, #tpu.memory_space<vmem>>, vector<256x32xf32>
    %c0_1 = arith.constant 0 : index
    %c0_2 = arith.constant 0 : index
    %1 = vector.load %arg2[%c0_1, %c0_2] : memref<1x32xf32, #tpu.memory_space<vmem>>, vector<1x32xf32>
    %2 = vector.broadcast %1 : vector<1x32xf32> to vector<256x32xf32>
    %3 = arith.subf %0, %2 : vector<256x32xf32>
    %c0_3 = arith.constant 0 : index
    %c0_4 = arith.constant 0 : index
    %4 = vector.load %arg3[%c0_3, %c0_4] : memref<1x32xf32, #tpu.memory_space<vmem>>, vector<1x32xf32>
    %5 = vector.broadcast %4 : vector<1x32xf32> to vector<256x32xf32>
    %6 = arith.mulf %3, %5 : vector<256x32xf32>
    %c0_5 = arith.constant 0 : index
    %c0_6 = arith.constant 0 : index
    %7 = vector.load %arg4[%c0_5, %c0_6] : memref<32x256xf32, #tpu.memory_space<vmem>>, vector<32x256xf32>
    %cst = arith.constant dense<0.000000e+00> : vector<256x256xf32>
    %8 = tpu.matmul %6, %7, %cst {dimension_numbers = #tpu.dot_dimension_numbers<[1], [0], [0], [1], [0, 0, 1, 1], [], []>} : vector<256x32xf32>, vector<32x256xf32>, vector<256x256xf32> -> vector<256x256xf32>
    %c0_7 = arith.constant 0 : index
    %c0_8 = arith.constant 0 : index
    %9 = vector.load %arg5[%c0_7, %c0_8] : memref<1x256xf32, #tpu.memory_space<vmem>>, vector<1x256xf32>
    %10 = vector.broadcast %9 : vector<1x256xf32> to vector<256x256xf32>
    %11 = arith.addf %8, %10 : vector<256x256xf32>
    %cst_9 = arith.constant 0.000000e+00 : f32
    %12 = vector.broadcast %cst_9 : f32 to vector<256x256xf32>
    %13 = arith.cmpf oge, %11, %12 : vector<256x256xf32>
    %cst_10 = arith.constant 0.00999999977 : f32
    %14 = vector.broadcast %cst_10 : f32 to vector<256x256xf32>
    %15 = arith.mulf %14, %11 : vector<256x256xf32>
    %16 = arith.select %13, %11, %15 : vector<256x256xi1>, vector<256x256xf32>
    %c0_11 = arith.constant 0 : index
    %c0_12 = arith.constant 0 : index
    %17 = vector.load %arg8[%c0_11, %c0_12] : memref<256x256xf32, #tpu.memory_space<vmem>>, vector<256x256xf32>
    tpu.vector_store %arg8[%c0_11, %c0_12], %16 {strides = array<i32>} : memref<256x256xf32, #tpu.memory_space<vmem>>, vector<256x256xf32>,
    %c0_13 = arith.constant 0 : index
    %c0_14 = arith.constant 0 : index
    %18 = vector.load %arg6[%c0_13, %c0_14] : memref<256x128xf32, #tpu.memory_space<vmem>>, vector<256x128xf32>
    %cst_15 = arith.constant dense<0.000000e+00> : vector<256x128xf32>
    %19 = tpu.matmul %16, %18, %cst_15 {dimension_numbers = #tpu.dot_dimension_numbers<[1], [0], [0], [1], [0, 0, 1, 1], [], []>} : vector<256x256xf32>, vector<256x128xf32>, vector<256x128xf32> -> vector<256x128xf32>
    %c0_16 = arith.constant 0 : index
    %c0_17 = arith.constant 0 : index
    %20 = vector.load %arg7[%c0_16, %c0_17] : memref<1x128xf32, #tpu.memory_space<vmem>>, vector<1x128xf32>
    %21 = vector.broadcast %20 : vector<1x128xf32> to vector<256x128xf32>
    %22 = arith.addf %19, %21 : vector<256x128xf32>
    %c0_18 = arith.constant 0 : index
    %c0_19 = arith.constant 0 : index
    %23 = vector.load %arg9[%c0_18, %c0_19] : memref<256x128xf32, #tpu.memory_space<vmem>>, vector<256x128xf32>
    tpu.vector_store %arg9[%c0_18, %c0_19], %22 {strides = array<i32>} : memref<256x128xf32, #tpu.memory_space<vmem>>, vector<256x128xf32>,
    return
  }
  func.func @transform_0(%arg0: i32) -> (i32, i32) {
    %c0_i32 = arith.constant 0 : i32
    %c0_i32_0 = arith.constant 0 : i32
    return %arg0, %c0_i32 : i32, i32
  }
  func.func @transform_1(%arg0: i32) -> (i32, i32) {
    %c0_i32 = arith.constant 0 : i32
    %c0_i32_0 = arith.constant 0 : i32
    %c0_i32_1 = arith.constant 0 : i32
    return %c0_i32, %c0_i32_0 : i32, i32
  }
  func.func @transform_2(%arg0: i32) -> (i32, i32) {
    %c0_i32 = arith.constant 0 : i32
    %c0_i32_0 = arith.constant 0 : i32
    %c0_i32_1 = arith.constant 0 : i32
    return %c0_i32, %c0_i32_0 : i32, i32
  }
  func.func @transform_3(%arg0: i32) -> (i32, i32) {
    %c0_i32 = arith.constant 0 : i32
    %c0_i32_0 = arith.constant 0 : i32
    %c0_i32_1 = arith.constant 0 : i32
    return %c0_i32, %c0_i32_0 : i32, i32
  }
  func.func @transform_4(%arg0: i32) -> (i32, i32) {
    %c0_i32 = arith.constant 0 : i32
    %c0_i32_0 = arith.constant 0 : i32
    %c0_i32_1 = arith.constant 0 : i32
    return %c0_i32, %c0_i32_0 : i32, i32
  }
  func.func @transform_5(%arg0: i32) -> (i32, i32) {
    %c0_i32 = arith.constant 0 : i32
    %c0_i32_0 = arith.constant 0 : i32
    %c0_i32_1 = arith.constant 0 : i32
    return %c0_i32, %c0_i32_0 : i32, i32
  }
  func.func @transform_6(%arg0: i32) -> (i32, i32) {
    %c0_i32 = arith.constant 0 : i32
    %c0_i32_0 = arith.constant 0 : i32
    %c0_i32_1 = arith.constant 0 : i32
    return %c0_i32, %c0_i32_0 : i32, i32
  }
  func.func @transform_7(%arg0: i32) -> (i32, i32) {
    %c0_i32 = arith.constant 0 : i32
    %c0_i32_0 = arith.constant 0 : i32
    return %arg0, %c0_i32 : i32, i32
  }
  func.func @transform_8(%arg0: i32) -> (i32, i32) {
    %c0_i32 = arith.constant 0 : i32
    %c0_i32_0 = arith.constant 0 : i32
    return %arg0, %c0_i32 : i32, i32
  }
}

module attributes {stable_mosaic.version = 11 : i64} {
  func.func @_gram_kernel(%arg0: i32, %arg1: i32, %arg2: memref<256x32xbf16, #tpu.memory_space<vmem>>, %arg3: memref<256x32xbf16, #tpu.memory_space<vmem>>, %arg4: memref<256x256xf32, #tpu.memory_space<vmem>>) attributes {dimension_semantics = [#tpu.dimension_semantics<parallel>, #tpu.dimension_semantics<parallel>], iteration_bounds = array<i64: 2, 2>, scalar_prefetch = 0 : i64, scratch_operands = 0 : i64, tpu.core_type = #tpu.core_type<tc>, window_params = [{transform_indices = @transform_0, window_bounds = array<i64: 256, 32>}, {transform_indices = @transform_1, window_bounds = array<i64: 256, 32>}, {transform_indices = @transform_2, window_bounds = array<i64: 256, 256>}]} {
    %c0 = arith.constant 0 : index
    %c0_0 = arith.constant 0 : index
    %0 = vector.load %arg2[%c0, %c0_0] : memref<256x32xbf16, #tpu.memory_space<vmem>>, vector<256x32xbf16>
    %c0_1 = arith.constant 0 : index
    %c0_2 = arith.constant 0 : index
    %1 = vector.load %arg3[%c0_1, %c0_2] : memref<256x32xbf16, #tpu.memory_space<vmem>>, vector<256x32xbf16>
    %cst = arith.constant dense<0.000000e+00> : vector<256x256xf32>
    %2 = tpu.matmul %0, %1, %cst {dimension_numbers = #tpu.dot_dimension_numbers<[1], [1], [0], [0], [0, 0, 1, 0], [], []>} : vector<256x32xbf16>, vector<256x32xbf16>, vector<256x256xf32> -> vector<256x256xf32>
    %c0_3 = arith.constant 0 : index
    %c0_4 = arith.constant 0 : index
    %3 = vector.load %arg4[%c0_3, %c0_4] : memref<256x256xf32, #tpu.memory_space<vmem>>, vector<256x256xf32>
    tpu.vector_store %arg4[%c0_3, %c0_4], %2 {strides = array<i32>} : memref<256x256xf32, #tpu.memory_space<vmem>>, vector<256x256xf32>,
    return
  }
  func.func @transform_0(%arg0: i32, %arg1: i32) -> (i32, i32) {
    %c0_i32 = arith.constant 0 : i32
    %c0_i32_0 = arith.constant 0 : i32
    return %arg0, %c0_i32 : i32, i32
  }
  func.func @transform_1(%arg0: i32, %arg1: i32) -> (i32, i32) {
    %c0_i32 = arith.constant 0 : i32
    %c0_i32_0 = arith.constant 0 : i32
    return %arg1, %c0_i32 : i32, i32
  }
  func.func @transform_2(%arg0: i32, %arg1: i32) -> (i32, i32) {
    %c0_i32 = arith.constant 0 : i32
    return %arg0, %arg1 : i32, i32
  }
}

</mosaic_0001>

<llo_original>
// kernel: bionic_forward.4
$region0: #{bionic_forward.4}
  #allocation0 [shape = 'u32[]', space=smem, size = 0x4, offset = 0x4, fixed_abs, tag = 'smem constant byte address 0x4 - core index']
  #allocation1 [shape = 'u32[144,128]{1,0:T(1,128)}', space=vmem, size = 0x12000, scoped, tag = 'internal scratch']
  %s0 = inlined_call_operand.vmem [shape: f32[512,16], index: 0, kind: input, shape index: {}]
  %s1 = inlined_call_operand.hbm [shape: f32[1,16], index: 1, kind: input, shape index: {}]
  %s2 = inlined_call_operand.hbm [shape: f32[16,16], index: 2, kind: input, shape index: {}]
  %s3 = inlined_call_operand.vmem [shape: f32[16,128], index: 3, kind: input, shape index: {}]
  %s4 = inlined_call_operand.vmem [shape: f32[512,16], index: 4, kind: output, shape index: {0}]
  %s5 = inlined_call_operand.vmem [shape: f32[512,128], index: 5, kind: output, shape index: {1}]
  %6 = xla_tuple %s4, %s5
  %s7 = sld [smem:[#allocation0]]
  $region65: #{bionic_forward.4} parent=0
    _
  %s9 = ssub.s32 1, %s7
  %s10 = scalar_select 0, %s9, %s7
  $region1: #{bionic_forward.4} parent=0
    #allocation2 [shape = 'u8[512]{0}', space=vmem, size = 0x400, scoped, tag = 'input window, operand 1, single buffered']
    #allocation3 [shape = 's32[2]{0}', space=sflag, size = 0x8, scoped, tag = 'scoped memory for bionic_forward.4']
    #allocation4 [shape = 'u8[8192]{0}', space=vmem, size = 0x2000, scoped, tag = 'input window, operand 2, single buffered']
    #allocation5 [shape = 's32[1]{0}', space=sflag, size = 0x4, scoped, tag = 'scoped memory for bionic_forward.4']
    %11 = vsyncpa [#allocation3], 0
    %12 = vsyncpa [#allocation5], 0
    loop: start=0, step=1, limit=4
    $region2: #{bionic_forward.4} parent=1 // loop_pre_header
      _
    $region3: #{bionic_forward.4} parent=1 // loop_header
      %s14 = sphi 0, %s18
      %p15 = scmp.ge.s32.totalorder %s14, 4
      %s24 = sphi 0, %s26
      %s27 = sphi 0, %s24
      %s28 = sphi 0, %s27
      %s44 = sphi 0, %s28
      %s48 = sphi 0, %s48
      %s50 = sphi 0, %s48
      %s51 = sphi 0, %s50
      %s65 = sphi 0, %s51
      %s69 = sphi 0, %s69
      %s71 = sphi 0, %s69
      %s72 = sphi 0, %s71
      %s86 = sphi 0, %s72
      %s90 = sphi 0, %s90
      %s92 = sphi 0, %s90
      %s93 = sphi 0, %s92
      %s107 = sphi 0, %s93
      %s113 = sphi 0, %s115
      %s116 = sphi 0, %s113
      %s117 = sphi 0, %s116
      %s133 = sphi 0, %s117
      %s139 = sphi 0, %s141
      %s142 = sphi 0, %s139
      %s143 = sphi 0, %s142
      %s159 = sphi 0, %s143
    $region4: #{bionic_forward.4} parent=1 // loop_header_branch
      %17 = sbr.rel (%p15) target = $region8
    $region5: #{bionic_forward.4} parent=1 // loop_body
      %s19 = ssub.s32 %s14, 1
      %s20 = ssub.s32 %s14, 2
      %s21 = sadd.s32 %s14, 1
      %s22 = ssub.s32 %s14, %s21
      %p23 = scmp.eq.s32.totalorder %s22, 0
      %s25 = sadd.s32 %s24, 1
      %s26 = scalar_select %p23, %s24, %s25
      %p29 = pneg %p23
      %p30 = scmp.eq.s32.totalorder %s14, 1
      %p31 = por %p29, %p30
      %p32 = scmp.ne.s32.totalorder %s24, %s27
      %p33 = scmp.eq.s32.totalorder %s14, 0
      %p34 = por %p32, %p33
      %p35 = scmp.ne.s32.totalorder %s24, %s27
      %p36 = scmp.eq.s32.totalorder %s19, 1
      %p37 = por %p35, %p36
      %p38 = scmp.ne.s32.totalorder %s27, %s28
      %p39 = scmp.eq.s32.totalorder %s19, 0
      %p40 = por %p38, %p39
      %p41 = scmp.ne.s32.totalorder %s27, %s28
      %p42 = scmp.eq.s32.totalorder %s20, 1
      %p43 = por %p41, %p42
      %p45 = scmp.ne.s32.totalorder %s28, %s44
      %p46 = scmp.eq.s32.totalorder %s20, 0
      %p47 = por %p45, %p46
      %s49 = sadd.s32 %s48, 1
      %p52 = scmp.eq.s32.totalorder %s14, 1
      %p53 = scmp.ne.s32.totalorder %s48, %s50
      %p54 = scmp.eq.s32.totalorder %s14, 0
      %p55 = por %p53, %p54
      %p56 = scmp.ne.s32.totalorder %s48, %s50
      %p57 = scmp.eq.s32.totalorder %s19, 1
      %p58 = por %p56, %p57
      %p59 = scmp.ne.s32.totalorder %s50, %s51
      %p60 = scmp.eq.s32.totalorder %s19, 0
      %p61 = por %p59, %p60
      %p62 = scmp.ne.s32.totalorder %s50, %s51
      %p63 = scmp.eq.s32.totalorder %s20, 1
      %p64 = por %p62, %p63
      %p66 = scmp.ne.s32.totalorder %s51, %s65
      %p67 = scmp.eq.s32.totalorder %s20, 0
      %p68 = por %p66, %p67
      %s70 = sadd.s32 %s69, 1
      %p73 = scmp.eq.s32.totalorder %s14, 1
      %p74 = scmp.ne.s32.totalorder %s69, %s71
      %p75 = scmp.eq.s32.totalorder %s14, 0
      %p76 = por %p74, %p75
      %p77 = scmp.ne.s32.totalorder %s69, %s71
      %p78 = scmp.eq.s32.totalorder %s19, 1
      %p79 = por %p77, %p78
      %p80 = scmp.ne.s32.totalorder %s71, %s72
      %p81 = scmp.eq.s32.totalorder %s19, 0
      %p82 = por %p80, %p81
      %p83 = scmp.ne.s32.totalorder %s71, %s72
      %p84 = scmp.eq.s32.totalorder %s20, 1
      %p85 = por %p83, %p84
      %p87 = scmp.ne.s32.totalorder %s72, %s86
      %p88 = scmp.eq.s32.totalorder %s20, 0
      %p89 = por %p87, %p88
      %s91 = sadd.s32 %s90, 1
      %p94 = scmp.eq.s32.totalorder %s14, 1
      %p95 = scmp.ne.s32.totalorder %s90, %s92
      %p96 = scmp.eq.s32.totalorder %s14, 0
      %p97 = por %p95, %p96
      %p98 = scmp.ne.s32.totalorder %s90, %s92
      %p99 = scmp.eq.s32.totalorder %s19, 1
      %p100 = por %p98, %p99
      %p101 = scmp.ne.s32.totalorder %s92, %s93
      %p102 = scmp.eq.s32.totalorder %s19, 0
      %p103 = por %p101, %p102
      %p104 = scmp.ne.s32.totalorder %s92, %s93
      %p105 = scmp.eq.s32.totalorder %s20, 1
      %p106 = por %p104, %p105
      %p108 = scmp.ne.s32.totalorder %s93, %s107
      %p109 = scmp.eq.s32.totalorder %s20, 0
      %p110 = por %p108, %p109
      %s111 = ssub.s32 %s14, %s21
      %p112 = scmp.eq.s32.totalorder %s111, 0
      %s114 = sadd.s32 %s113, 1
      %s115 = scalar_select %p112, %s113, %s114
      %p118 = pneg %p112
      %p119 = scmp.eq.s32.totalorder %s14, 1
      %p120 = por %p118, %p119
      %p121 = scmp.ne.s32.totalorder %s113, %s116
      %p122 = scmp.eq.s32.totalorder %s14, 0
      %p123 = por %p121, %p122
      %p124 = scmp.ne.s32.totalorder %s113, %s116
      %p125 = scmp.eq.s32.totalorder %s19, 1
      %p126 = por %p124, %p125
      %p127 = scmp.ne.s32.totalorder %s116, %s117
      %p128 = scmp.eq.s32.totalorder %s19, 0
      %p129 = por %p127, %p128
      %p130 = scmp.ne.s32.totalorder %s116, %s117
      %p131 = scmp.eq.s32.totalorder %s20, 1
      %p132 = por %p130, %p131
      %p134 = scmp.ne.s32.totalorder %s117, %s133
      %p135 = scmp.eq.s32.totalorder %s20, 0
      %p136 = por %p134, %p135
      %s137 = ssub.s32 %s14, %s21
      %p138 = scmp.eq.s32.totalorder %s137, 0
      %s140 = sadd.s32 %s139, 1
      %s141 = scalar_select %p138, %s139, %s140
      %p144 = pneg %p138
      %p145 = scmp.eq.s32.totalorder %s14, 1
      %p146 = por %p144, %p145
      %p147 = scmp.ne.s32.totalorder %s139, %s142
      %p148 = scmp.eq.s32.totalorder %s14, 0
      %p149 = por %p147, %p148
      %p150 = scmp.ne.s32.totalorder %s139, %s142
      %p151 = scmp.eq.s32.totalorder %s19, 1
      %p152 = por %p150, %p151
      %p153 = scmp.ne.s32.totalorder %s142, %s143
      %p154 = scmp.eq.s32.totalorder %s19, 0
      %p155 = por %p153, %p154
      %p156 = scmp.ne.s32.totalorder %s142, %s143
      %p157 = scmp.eq.s32.totalorder %s20, 1
      %p158 = por %p156, %p157
      %p160 = scmp.ne.s32.totalorder %s143, %s159
      %p161 = scmp.eq.s32.totalorder %s20, 0
      %p162 = por %p160, %p161
      %p163 = scmp.le.s32.totalorder 1, %s14
      %p164 = scmp.lt.s32.totalorder %s14, 3
      %p165 = pnand %p163, %p164
      %p166 = pneg %p165
      // Predicated region
      $region9: #{bionic_forward.4} parent=5 // pred_check
        _
      $region10: #{bionic_forward.4} parent=5 // pred_check_branch
        %168 = sbr.rel (%p165) target = $region12
      $region11: #{bionic_forward.4} parent=5 // pred_region
        %s169 = ssub.s32 %s14, 1
        // Predicated region
        $region13: #{bionic_forward.4} parent=11 // pred_check
          %p170 = pneg %p61
        $region14: #{bionic_forward.4} parent=11 // pred_check_branch
          %172 = sbr.rel (%p170) target = $region16
        $region15: #{bionic_forward.4} parent=11 // pred_region
          %s174 = ssub.s32 16, 16
          %175 = vsyncadd [#allocation3], %s174
          %s177 = sshll.u32 [#allocation2], 4
          %s178 = int_to_ptr.vmem [resolvable:$true] %s177
          %180 = dma.hbm_to_vmem [thread:$0]  %s1, 16, %s178, [#allocation3]
        $region16: #{bionic_forward.4} parent=11 // pred_fallthru
          _
        // Predicated region
        $region17: #{bionic_forward.4} parent=11 // pred_check
          %p181 = pneg %p82
        $region18: #{bionic_forward.4} parent=11 // pred_check_branch
          %183 = sbr.rel (%p181) target = $region20
        $region19: #{bionic_forward.4} parent=11 // pred_region
          %s185 = ssub.s32 256, 256
          %186 = vsyncadd [#allocation5], %s185
          %s187 = sshll.u32 [#allocation4], 4
          %s188 = int_to_ptr.vmem [resolvable:$true] %s187
          %193 = dma.hbm_to_vmem [thread:$0]  %s2, 256, %s188, [#allocation5], 128, 128, 8
        $region20: #{bionic_forward.4} parent=11 // pred_fallthru
          _
        // Predicated region
        $region21: #{bionic_forward.4} parent=11 // pred_check
          %p194 = pneg %p103
        $region22: #{bionic_forward.4} parent=11 // pred_check_branch
          %196 = sbr.rel (%p194) target = $region24
        $region23: #{bionic_forward.4} parent=11 // pred_region
          _
        $region24: #{bionic_forward.4} parent=11 // pred_fallthru
          _
      $region12: #{bionic_forward.4} parent=5 // pred_fallthru
        _
      %p197 = scmp.lt.s32.totalorder %s14, 2
      // Predicated region
      $region25: #{bionic_forward.4} parent=5 // pred_check
        %p198 = pneg %p197
      $region26: #{bionic_forward.4} parent=5 // pred_check_branch
        %200 = sbr.rel (%p198) target = $region28
      $region27: #{bionic_forward.4} parent=5 // pred_region
        // Predicated region
        $region29: #{bionic_forward.4} parent=27 // pred_check
          %p201 = pneg %p34
        $region30: #{bionic_forward.4} parent=27 // pred_check_branch
          %203 = sbr.rel (%p201) target = $region32
        $region31: #{bionic_forward.4} parent=27 // pred_region
          %s204 = smul.u32 32, %s14
          %p205 = scmp.lt.s32.totalorder %s204, 63
          %s206 = scalar_select %p205, %s204, 63
          %s207 = smul.addr %s206, 8
          %s208 = scalar_lea.vmem %s0, %s207
          %s209 = smul.u32 32, %s14
        $region32: #{bionic_forward.4} parent=27 // pred_fallthru
          _
      $region28: #{bionic_forward.4} parent=5 // pred_fallthru
        _
      %p210 = scmp.le.s32.totalorder 1, %s14
      %p211 = scmp.lt.s32.totalorder %s14, 3
      %p212 = pnand %p210, %p211
      %p213 = pneg %p212
      // Predicated region
      $region33: #{bionic_forward.4} parent=5 // pred_check
        _
      $region34: #{bionic_forward.4} parent=5 // pred_check_branch
        %215 = sbr.rel (%p212) target = $region36
      $region35: #{bionic_forward.4} parent=5 // pred_region
        %s216 = ssub.s32 %s14, 1
        // Predicated region
        $region37: #{bionic_forward.4} parent=35 // pred_check
          %p217 = pneg %p61
        $region38: #{bionic_forward.4} parent=35 // pred_check_branch
          %219 = sbr.rel (%p217) target = $region40
        $region39: #{bionic_forward.4} parent=35 // pred_region
          %220 = dma.done [#allocation3], 16
        $region40: #{bionic_forward.4} parent=35 // pred_fallthru
          _
        // Predicated region
        $region41: #{bionic_forward.4} parent=35 // pred_check
          %p221 = pneg %p82
        $region42: #{bionic_forward.4} parent=35 // pred_check_branch
          %223 = sbr.rel (%p221) target = $region44
        $region43: #{bionic_forward.4} parent=35 // pred_region
          %224 = dma.done [#allocation5], 256
        $region44: #{bionic_forward.4} parent=35 // pred_fallthru
          _
        %s225 = smul.u32 32, %s19
        %p226 = scmp.lt.s32.totalorder %s225, 63
        %s227 = scalar_select %p226, %s225, 63
        %s228 = smul.addr %s227, 8
        %s229 = scalar_lea.vmem %s0, %s228
        %p230 = pneg %p40
        %p231 = pneg %p37
        %p232 = pneg %p61
        %p233 = pneg %p58
        %p234 = pneg %p82
        %p235 = pneg %p79
        %p236 = pneg %p103
        %p237 = pneg %p100
        %p238 = pneg %p129
        %p239 = pneg %p126
        %s240 = smul.u32 32, %s19
        %p241 = scmp.lt.s32.totalorder %s240, 63
        %s242 = scalar_select %p241, %s240, 63
        %s243 = smul.addr %s242, 8
        %s244 = scalar_lea.vmem %s4, %s243
        %p245 = pneg %p155
        %p246 = pneg %p152
        %s247 = smul.u32 32, %s19
        %p248 = scmp.lt.s32.totalorder %s247, 63
        %s249 = scalar_select %p248, %s247, 63
        %s250 = smul.addr %s249, 8
        %s251 = scalar_lea.vmem %s5, %s250
        %s252 = smul.u32 32, %s19
        %p253 = scmp.lt.s32.totalorder %s252, 63
        %s254 = scalar_select %p253, %s252, 63
        %s255 = smul.addr %s254, 8
        %s256 = scalar_lea.vmem %s0, %s255
        %s257 = smul.u32 32, %s19
        %s258 = smul.u32 32, %s19
        %p259 = scmp.lt.s32.totalorder %s258, 63
        %s260 = scalar_select %p259, %s258, 63
        %s261 = smul.addr %s260, 8
        %s262 = scalar_lea.vmem %s4, %s261
        %s263 = smul.u32 32, %s19
        %s264 = smul.u32 32, %s19
        %p265 = scmp.lt.s32.totalorder %s264, 63
        %s266 = scalar_select %p265, %s264, 63
        %s267 = smul.addr %s266, 8
        %s268 = scalar_lea.vmem %s5, %s267
        %s269 = smul.u32 32, %s19
        %v270 = vld [vmem:[%s256] sm:$0xff]
        %v271 = vld [vmem:[%s256 + $0x8] sm:$0xff]
        %v272 = vld [vmem:[%s256 + $0x10] sm:$0xff]
        %v273 = vld [vmem:[%s256 + $0x18] sm:$0xff]
        %v274 = vld [vmem:[%s256 + $0x20] sm:$0xff]
        %v275 = vld [vmem:[%s256 + $0x28] sm:$0xff]
        %v276 = vld [vmem:[%s256 + $0x30] sm:$0xff]
        %v277 = vld [vmem:[%s256 + $0x38] sm:$0xff]
        %v278 = vld [vmem:[%s256 + $0x40] sm:$0xff]
        %v279 = vld [vmem:[%s256 + $0x48] sm:$0xff]
        %v280 = vld [vmem:[%s256 + $0x50] sm:$0xff]
        %v281 = vld [vmem:[%s256 + $0x58] sm:$0xff]
        %v282 = vld [vmem:[%s256 + $0x60] sm:$0xff]
        %v283 = vld [vmem:[%s256 + $0x68] sm:$0xff]
        %v284 = vld [vmem:[%s256 + $0x70] sm:$0xff]
        %v285 = vld [vmem:[%s256 + $0x78] sm:$0xff]
        %v286 = vld [vmem:[%s256 + $0x80] sm:$0xff]
        %v287 = vld [vmem:[%s256 + $0x88] sm:$0xff]
        %v288 = vld [vmem:[%s256 + $0x90] sm:$0xff]
        %v289 = vld [vmem:[%s256 + $0x98] sm:$0xff]
        %v290 = vld [vmem:[%s256 + $0xa0] sm:$0xff]
        %v291 = vld [vmem:[%s256 + $0xa8] sm:$0xff]
        %v292 = vld [vmem:[%s256 + $0xb0] sm:$0xff]
        %v293 = vld [vmem:[%s256 + $0xb8] sm:$0xff]
        %v294 = vld [vmem:[%s256 + $0xc0] sm:$0xff]
        %v295 = vld [vmem:[%s256 + $0xc8] sm:$0xff]
        %v296 = vld [vmem:[%s256 + $0xd0] sm:$0xff]
        %v297 = vld [vmem:[%s256 + $0xd8] sm:$0xff]
        %v298 = vld [vmem:[%s256 + $0xe0] sm:$0xff]
        %v299 = vld [vmem:[%s256 + $0xe8] sm:$0xff]
        %v300 = vld [vmem:[%s256 + $0xf0] sm:$0xff]
        %v301 = vld [vmem:[%s256 + $0xf8] sm:$0xff]
        %v302 = vld [vmem:[#allocation2] sm:$0x1]
        %v304 = vlaneseq
        %v305 = vshrl.u32 %v304, 7
        %v306 = vsub.s32 0, %v305
        %v307 = vrot.slane %v302, %v306
        %v309 = vadd.f32 %v270, %v307
        %v310 = vadd.f32 %v271, %v307
        %v311 = vadd.f32 %v272, %v307
        %v312 = vadd.f32 %v273, %v307
        %v313 = vadd.f32 %v274, %v307
        %v314 = vadd.f32 %v275, %v307
        %v315 = vadd.f32 %v276, %v307
        %v316 = vadd.f32 %v277, %v307
        %v317 = vadd.f32 %v278, %v307
        %v318 = vadd.f32 %v279, %v307
        %v319 = vadd.f32 %v280, %v307
        %v320 = vadd.f32 %v281, %v307
        %v321 = vadd.f32 %v282, %v307
        %v322 = vadd.f32 %v283, %v307
        %v323 = vadd.f32 %v284, %v307
        %v324 = vadd.f32 %v285, %v307
        %v325 = vadd.f32 %v286, %v307
        %v326 = vadd.f32 %v287, %v307
        %v327 = vadd.f32 %v288, %v307
        %v328 = vadd.f32 %v289, %v307
        %v329 = vadd.f32 %v290, %v307
        %v330 = vadd.f32 %v291, %v307
        %v331 = vadd.f32 %v292, %v307
        %v332 = vadd.f32 %v293, %v307
        %v333 = vadd.f32 %v294, %v307
        %v334 = vadd.f32 %v295, %v307
        %v335 = vadd.f32 %v296, %v307
        %v336 = vadd.f32 %v297, %v307
        %v337 = vadd.f32 %v298, %v307
        %v338 = vadd.f32 %v299, %v307
        %v339 = vadd.f32 %v300, %v307
        %v340 = vadd.f32 %v301, %v307
        %v341 = vld [vmem:[#allocation4] sm:$0xff]
        %v342 = vld [vmem:[#allocation4 + $0x8] sm:$0xff]
        %vm343 = vcmask 130048
        %v345 = vsel %vm343, %v309, 0
        %v348 = vsel %vm343, %v310, 0
        %v351 = vsel %vm343, %v311, 0
        %v354 = vsel %vm343, %v312, 0
        %v357 = vsel %vm343, %v313, 0
        %v360 = vsel %vm343, %v314, 0
        %v363 = vsel %vm343, %v315, 0
        %v366 = vsel %vm343, %v316, 0
        %v369 = vsel %vm343, %v317, 0
        %v372 = vsel %vm343, %v318, 0
        %v375 = vsel %vm343, %v319, 0
        %v378 = vsel %vm343, %v320, 0
        %v381 = vsel %vm343, %v321, 0
        %v384 = vsel %vm343, %v322, 0
        %v387 = vsel %vm343, %v323, 0
        %v390 = vsel %vm343, %v324, 0
        %v393 = vsel %vm343, %v325, 0
        %v396 = vsel %vm343, %v326, 0
        %v399 = vsel %vm343, %v327, 0
        %v402 = vsel %vm343, %v328, 0
        %v405 = vsel %vm343, %v329, 0
        %v408 = vsel %vm343, %v330, 0
        %v411 = vsel %vm343, %v331, 0
        %v414 = vsel %vm343, %v332, 0
        %v417 = vsel %vm343, %v333, 0
        %v420 = vsel %vm343, %v334, 0
        %v423 = vsel %vm343, %v335, 0
        %v426 = vsel %vm343, %v336, 0
        %v429 = vsel %vm343, %v337, 0
        %v432 = vsel %vm343, %v338, 0
        %v435 = vsel %vm343, %v339, 0
        %v438 = vsel %vm343, %v340, 0
        %440 = vmatprep.subr.mxu0 0.0
        %441 = vmatpush1.msra.mxu0 0.0
        %442 = vmatprep.subr.mxu0 0.0
        %443 = vmatpush1.msra.mxu0 0.0
        %444 = vmatprep.subr.mxu0 0.0
        %445 = vmatpush1.msra.mxu0 0.0
        %446 = vmatprep.subr.mxu0 0.0
        %447 = vmatpush1.msra.mxu0 0.0
        %448 = vmatprep.subr.mxu0 0.0
        %449 = vmatpush1.msra.mxu0 0.0
        %450 = vmatprep.subr.mxu0 0.0
        %451 = vmatpush1.msra.mxu0 0.0
        %452 = vmatprep.subr.mxu0 0.0
        %453 = vmatpush1.msra.mxu0 0.0
        %454 = vmatprep.subr.mxu0 0.0
        %455 = vmatpush1.msra.mxu0 0.0
        %456 = vmatprep.subr.mxu0 0.0
        %457 = vmatpush1.msra.mxu0 0.0
        %458 = vmatprep.subr.mxu0 0.0
        %459 = vmatpush1.msra.mxu0 0.0
        %460 = vmatprep.subr.mxu0 0.0
        %461 = vmatpush1.msra.mxu0 0.0
        %462 = vmatprep.subr.mxu0 0.0
        %463 = vmatpush1.msra.mxu0 0.0
        %464 = vmatprep.subr.mxu0 0.0
        %465 = vmatpush1.msra.mxu0 0.0
        %466 = vmatprep.subr.mxu0 0.0
        %467 = vmatpush1.msra.mxu0 0.0
        %468 = vmatprep.subr.mxu0 0.0
        %469 = vmatpush1.msra.mxu0 %v342
        %470 = vmatprep.subr.mxu0 0.0
        %471 = vmatpush1.msra.mxu0 %v341
        %472 = vmatprep.subr.mxu0 0.0
        %473 = vmatpush2.msra.mxu0 0.0
        %474 = vmatprep.subr.mxu0 0.0
        %475 = vmatpush2.msra.mxu0 0.0
        %476 = vmatprep.subr.mxu0 0.0
        %477 = vmatpush2.msra.mxu0 0.0
        %478 = vmatprep.subr.mxu0 0.0
        %479 = vmatpush2.msra.mxu0 0.0
        %480 = vmatprep.subr.mxu0 0.0
        %481 = vmatpush2.msra.mxu0 0.0
        %482 = vmatprep.subr.mxu0 0.0
        %483 = vmatpush2.msra.mxu0 0.0
        %484 = vmatprep.subr.mxu0 0.0
        %485 = vmatpush2.msra.mxu0 0.0
        %486 = vmatprep.subr.mxu0 0.0
        %487 = vmatpush2.msra.mxu0 0.0
        %488 = vmatprep.subr.mxu0 0.0
        %489 = vmatpush2.msra.mxu0 0.0
        %490 = vmatprep.subr.mxu0 0.0
        %491 = vmatpush2.msra.mxu0 0.0
        %492 = vmatprep.subr.mxu0 0.0
        %493 = vmatpush2.msra.mxu0 0.0
        %494 = vmatprep.subr.mxu0 0.0
        %495 = vmatpush2.msra.mxu0 0.0
        %496 = vmatprep.subr.mxu0 0.0
        %497 = vmatpush2.msra.mxu0 0.0
        %498 = vmatprep.subr.mxu0 0.0
        %499 = vmatpush2.msra.mxu0 0.0
        %500 = vmatprep.subr.mxu0 0.0
        %501 = vmatpush2.msra.mxu0 0.0
        %502 = vmatprep.subr.mxu0 0.0
        %503 = vmatpush2.msra.mxu0 0.0
        %504 = vmatprep.mubr.f32.mxu0 0.0
        %505 = vmatmul.mubr.f32.gmra.mxu0 %v345
        %v506 = vpop.f32.mrf.mxu0
        %v507 = vadd.f32 0.0, %v506
        %v508 = vpop.f32.mrf.mxu0
        %509 = vmatprep.mubr.f32.mxu0 0.0
        %510 = vmatmul.mubr.f32.gmra.mxu0 %v348
        %v511 = vpop.f32.mrf.mxu0
        %v512 = vadd.f32 0.0, %v511
        %v513 = vpop.f32.mrf.mxu0
        %514 = vmatprep.mubr.f32.mxu0 0.0
        %515 = vmatmul.mubr.f32.gmra.mxu0 %v351
        %v516 = vpop.f32.mrf.mxu0
        %v517 = vadd.f32 0.0, %v516
        %v518 = vpop.f32.mrf.mxu0
        %519 = vmatprep.mubr.f32.mxu0 0.0
        %520 = vmatmul.mubr.f32.gmra.mxu0 %v354
        %v521 = vpop.f32.mrf.mxu0
        %v522 = vadd.f32 0.0, %v521
        %v523 = vpop.f32.mrf.mxu0
        %524 = vmatprep.mubr.f32.mxu0 0.0
        %525 = vmatmul.mubr.f32.gmra.mxu0 %v357
        %v526 = vpop.f32.mrf.mxu0
        %v527 = vadd.f32 0.0, %v526
        %v528 = vpop.f32.mrf.mxu0
        %529 = vmatprep.mubr.f32.mxu0 0.0
        %530 = vmatmul.mubr.f32.gmra.mxu0 %v360
        %v531 = vpop.f32.mrf.mxu0
        %v532 = vadd.f32 0.0, %v531
        %v533 = vpop.f32.mrf.mxu0
        %534 = vmatprep.mubr.f32.mxu0 0.0
        %535 = vmatmul.mubr.f32.gmra.mxu0 %v363
        %v536 = vpop.f32.mrf.mxu0
        %v537 = vadd.f32 0.0, %v536
        %v538 = vpop.f32.mrf.mxu0
        %539 = vmatprep.mubr.f32.mxu0 0.0
        %540 = vmatmul.mubr.f32.gmra.mxu0 %v366
        %v541 = vpop.f32.mrf.mxu0
        %v542 = vadd.f32 0.0, %v541
        %v543 = vpop.f32.mrf.mxu0
        %544 = vmatprep.mubr.f32.mxu0 0.0
        %545 = vmatmul.mubr.f32.gmra.mxu0 %v369
        %v546 = vpop.f32.mrf.mxu0
        %v547 = vadd.f32 0.0, %v546
        %v548 = vpop.f32.mrf.mxu0
        %549 = vmatprep.mubr.f32.mxu0 0.0
        %550 = vmatmul.mubr.f32.gmra.mxu0 %v372
        %v551 = vpop.f32.mrf.mxu0
        %v552 = vadd.f32 0.0, %v551
        %v553 = vpop.f32.mrf.mxu0
        %554 = vmatprep.mubr.f32.mxu0 0.0
        %555 = vmatmul.mubr.f32.gmra.mxu0 %v375
        %v556 = vpop.f32.mrf.mxu0
        %v557 = vadd.f32 0.0, %v556
        %v558 = vpop.f32.mrf.mxu0
        %559 = vmatprep.mubr.f32.mxu0 0.0
        %560 = vmatmul.mubr.f32.gmra.mxu0 %v378
        %v561 = vpop.f32.mrf.mxu0
        %v562 = vadd.f32 0.0, %v561
        %v563 = vpop.f32.mrf.mxu0
        %564 = vmatprep.mubr.f32.mxu0 0.0
        %565 = vmatmul.mubr.f32.gmra.mxu0 %v381
        %v566 = vpop.f32.mrf.mxu0
        %v567 = vadd.f32 0.0, %v566
        %v568 = vpop.f32.mrf.mxu0
        %569 = vmatprep.mubr.f32.mxu0 0.0
        %570 = vmatmul.mubr.f32.gmra.mxu0 %v384
        %v571 = vpop.f32.mrf.mxu0
        %v572 = vadd.f32 0.0, %v571
        %v573 = vpop.f32.mrf.mxu0
        %574 = vmatprep.mubr.f32.mxu0 0.0
        %575 = vmatmul.mubr.f32.gmra.mxu0 %v387
        %v576 = vpop.f32.mrf.mxu0
        %v577 = vadd.f32 0.0, %v576
        %v578 = vpop.f32.mrf.mxu0
        %579 = vmatprep.mubr.f32.mxu0 0.0
        %580 = vmatmul.mubr.f32.gmra.mxu0 %v390
        %v581 = vpop.f32.mrf.mxu0
        %v582 = vadd.f32 0.0, %v581
        %v583 = vpop.f32.mrf.mxu0
        %584 = vmatprep.mubr.f32.mxu0 0.0
        %585 = vmatmul.mubr.f32.gmra.mxu0 %v393
        %v586 = vpop.f32.mrf.mxu0
        %v587 = vadd.f32 0.0, %v586
        %v588 = vpop.f32.mrf.mxu0
        %589 = vmatprep.mubr.f32.mxu0 0.0
        %590 = vmatmul.mubr.f32.gmra.mxu0 %v396
        %v591 = vpop.f32.mrf.mxu0
        %v592 = vadd.f32 0.0, %v591
        %v593 = vpop.f32.mrf.mxu0
        %594 = vmatprep.mubr.f32.mxu0 0.0
        %595 = vmatmul.mubr.f32.gmra.mxu0 %v399
        %v596 = vpop.f32.mrf.mxu0
        %v597 = vadd.f32 0.0, %v596
        %v598 = vpop.f32.mrf.mxu0
        %599 = vmatprep.mubr.f32.mxu0 0.0
        %600 = vmatmul.mubr.f32.gmra.mxu0 %v402
        %v601 = vpop.f32.mrf.mxu0
        %v602 = vadd.f32 0.0, %v601
        %v603 = vpop.f32.mrf.mxu0
        %604 = vmatprep.mubr.f32.mxu0 0.0
        %605 = vmatmul.mubr.f32.gmra.mxu0 %v405
        %v606 = vpop.f32.mrf.mxu0
        %v607 = vadd.f32 0.0, %v606
        %v608 = vpop.f32.mrf.mxu0
        %609 = vmatprep.mubr.f32.mxu0 0.0
        %610 = vmatmul.mubr.f32.gmra.mxu0 %v408
        %v611 = vpop.f32.mrf.mxu0
        %v612 = vadd.f32 0.0, %v611
        %v613 = vpop.f32.mrf.mxu0
        %614 = vmatprep.mubr.f32.mxu0 0.0
        %615 = vmatmul.mubr.f32.gmra.mxu0 %v411
        %v616 = vpop.f32.mrf.mxu0
        %v617 = vadd.f32 0.0, %v616
        %v618 = vpop.f32.mrf.mxu0
        %619 = vmatprep.mubr.f32.mxu0 0.0
        %620 = vmatmul.mubr.f32.gmra.mxu0 %v414
        %v621 = vpop.f32.mrf.mxu0
        %v622 = vadd.f32 0.0, %v621
        %v623 = vpop.f32.mrf.mxu0
        %624 = vmatprep.mubr.f32.mxu0 0.0
        %625 = vmatmul.mubr.f32.gmra.mxu0 %v417
        %v626 = vpop.f32.mrf.mxu0
        %v627 = vadd.f32 0.0, %v626
        %v628 = vpop.f32.mrf.mxu0
        %629 = vmatprep.mubr.f32.mxu0 0.0
        %630 = vmatmul.mubr.f32.gmra.mxu0 %v420
        %v631 = vpop.f32.mrf.mxu0
        %v632 = vadd.f32 0.0, %v631
        %v633 = vpop.f32.mrf.mxu0
        %634 = vmatprep.mubr.f32.mxu0 0.0
        %635 = vmatmul.mubr.f32.gmra.mxu0 %v423
        %v636 = vpop.f32.mrf.mxu0
        %v637 = vadd.f32 0.0, %v636
        %v638 = vpop.f32.mrf.mxu0
        %639 = vmatprep.mubr.f32.mxu0 0.0
        %640 = vmatmul.mubr.f32.gmra.mxu0 %v426
        %v641 = vpop.f32.mrf.mxu0
        %v642 = vadd.f32 0.0, %v641
        %v643 = vpop.f32.mrf.mxu0
        %644 = vmatprep.mubr.f32.mxu0 0.0
        %645 = vmatmul.mubr.f32.gmra.mxu0 %v429
        %v646 = vpop.f32.mrf.mxu0
        %v647 = vadd.f32 0.0, %v646
        %v648 = vpop.f32.mrf.mxu0
        %649 = vmatprep.mubr.f32.mxu0 0.0
        %650 = vmatmul.mubr.f32.gmra.mxu0 %v432
        %v651 = vpop.f32.mrf.mxu0
        %v652 = vadd.f32 0.0, %v651
        %v653 = vpop.f32.mrf.mxu0
        %654 = vmatprep.mubr.f32.mxu0 0.0
        %655 = vmatmul.mubr.f32.gmra.mxu0 %v435
        %v656 = vpop.f32.mrf.mxu0
        %v657 = vadd.f32 0.0, %v656
        %v658 = vpop.f32.mrf.mxu0
        %659 = vmatprep.mubr.f32.mxu0 0.0
        %660 = vmatmul.mubr.f32.gmra.mxu0 %v438
        %v661 = vpop.f32.mrf.mxu0
        %v662 = vadd.f32 0.0, %v661
        %v663 = vpop.f32.mrf.mxu0
        %664 = vdwg.mxu0
        %665 = vst.msk [vmem:[%s262] sm:$0xff] %vm343, %v507
        %666 = vst.msk [vmem:[%s262 + $0x8] sm:$0xff] %vm343, %v512
        %667 = vst.msk [vmem:[%s262 + $0x10] sm:$0xff] %vm343, %v517
        %668 = vst.msk [vmem:[%s262 + $0x18] sm:$0xff] %vm343, %v522
        %669 = vst.msk [vmem:[%s262 + $0x20] sm:$0xff] %vm343, %v527
        %670 = vst.msk [vmem:[%s262 + $0x28] sm:$0xff] %vm343, %v532
        %671 = vst.msk [vmem:[%s262 + $0x30] sm:$0xff] %vm343, %v537
        %672 = vst.msk [vmem:[%s262 + $0x38] sm:$0xff] %vm343, %v542
        %673 = vst.msk [vmem:[%s262 + $0x40] sm:$0xff] %vm343, %v547
        %674 = vst.msk [vmem:[%s262 + $0x48] sm:$0xff] %vm343, %v552
        %675 = vst.msk [vmem:[%s262 + $0x50] sm:$0xff] %vm343, %v557
        %676 = vst.msk [vmem:[%s262 + $0x58] sm:$0xff] %vm343, %v562
        %677 = vst.msk [vmem:[%s262 + $0x60] sm:$0xff] %vm343, %v567
        %678 = vst.msk [vmem:[%s262 + $0x68] sm:$0xff] %vm343, %v572
        %679 = vst.msk [vmem:[%s262 + $0x70] sm:$0xff] %vm343, %v577
        %680 = vst.msk [vmem:[%s262 + $0x78] sm:$0xff] %vm343, %v582
        %681 = vst.msk [vmem:[%s262 + $0x80] sm:$0xff] %vm343, %v587
        %682 = vst.msk [vmem:[%s262 + $0x88] sm:$0xff] %vm343, %v592
        %683 = vst.msk [vmem:[%s262 + $0x90] sm:$0xff] %vm343, %v597
        %684 = vst.msk [vmem:[%s262 + $0x98] sm:$0xff] %vm343, %v602
        %685 = vst.msk [vmem:[%s262 + $0xa0] sm:$0xff] %vm343, %v607
        %686 = vst.msk [vmem:[%s262 + $0xa8] sm:$0xff] %vm343, %v612
        %687 = vst.msk [vmem:[%s262 + $0xb0] sm:$0xff] %vm343, %v617
        %688 = vst.msk [vmem:[%s262 + $0xb8] sm:$0xff] %vm343, %v622
        %689 = vst.msk [vmem:[%s262 + $0xc0] sm:$0xff] %vm343, %v627
        %690 = vst.msk [vmem:[%s262 + $0xc8] sm:$0xff] %vm343, %v632
        %691 = vst.msk [vmem:[%s262 + $0xd0] sm:$0xff] %vm343, %v637
        %692 = vst.msk [vmem:[%s262 + $0xd8] sm:$0xff] %vm343, %v642
        %693 = vst.msk [vmem:[%s262 + $0xe0] sm:$0xff] %vm343, %v647
        %694 = vst.msk [vmem:[%s262 + $0xe8] sm:$0xff] %vm343, %v652
        %695 = vst.msk [vmem:[%s262 + $0xf0] sm:$0xff] %vm343, %v657
        %696 = vst.msk [vmem:[%s262 + $0xf8] sm:$0xff] %vm343, %v662
        %v697 = vld [vmem:[%s3] sm:$0xff]
        %v698 = vld [vmem:[%s3 + $0x8] sm:$0xff]
        %v700 = vsel %vm343, %v507, 0
        %v703 = vsel %vm343, %v512, 0
        %v706 = vsel %vm343, %v517, 0
        %v709 = vsel %vm343, %v522, 0
        %v712 = vsel %vm343, %v527, 0
        %v715 = vsel %vm343, %v532, 0
        %v718 = vsel %vm343, %v537, 0
        %v721 = vsel %vm343, %v542, 0
        %v724 = vsel %vm343, %v547, 0
        %v727 = vsel %vm343, %v552, 0
        %v730 = vsel %vm343, %v557, 0
        %v733 = vsel %vm343, %v562, 0
        %v736 = vsel %vm343, %v567, 0
        %v739 = vsel %vm343, %v572, 0
        %v742 = vsel %vm343, %v577, 0
        %v745 = vsel %vm343, %v582, 0
        %v748 = vsel %vm343, %v587, 0
        %v751 = vsel %vm343, %v592, 0
        %v754 = vsel %vm343, %v597, 0
        %v757 = vsel %vm343, %v602, 0
        %v760 = vsel %vm343, %v607, 0
        %v763 = vsel %vm343, %v612, 0
        %v766 = vsel %vm343, %v617, 0
        %v769 = vsel %vm343, %v622, 0
        %v772 = vsel %vm343, %v627, 0
        %v775 = vsel %vm343, %v632, 0
        %v778 = vsel %vm343, %v637, 0
        %v781 = vsel %vm343, %v642, 0
        %v784 = vsel %vm343, %v647, 0
        %v787 = vsel %vm343, %v652, 0
        %v790 = vsel %vm343, %v657, 0
        %v793 = vsel %vm343, %v662, 0
        %795 = vmatprep.subr.mxu0 0.0
        %796 = vmatpush1.msra.mxu0 0.0
        %797 = vmatprep.subr.mxu0 0.0
        %798 = vmatpush1.msra.mxu0 0.0
        %799 = vmatprep.subr.mxu0 0.0
        %800 = vmatpush1.msra.mxu0 0.0
        %801 = vmatprep.subr.mxu0 0.0
        %802 = vmatpush1.msra.mxu0 0.0
        %803 = vmatprep.subr.mxu0 0.0
        %804 = vmatpush1.msra.mxu0 0.0
        %805 = vmatprep.subr.mxu0 0.0
        %806 = vmatpush1.msra.mxu0 0.0
        %807 = vmatprep.subr.mxu0 0.0
        %808 = vmatpush1.msra.mxu0 0.0
        %809 = vmatprep.subr.mxu0 0.0
        %810 = vmatpush1.msra.mxu0 0.0
        %811 = vmatprep.subr.mxu0 0.0
        %812 = vmatpush1.msra.mxu0 0.0
        %813 = vmatprep.subr.mxu0 0.0
        %814 = vmatpush1.msra.mxu0 0.0
        %815 = vmatprep.subr.mxu0 0.0
        %816 = vmatpush1.msra.mxu0 0.0
        %817 = vmatprep.subr.mxu0 0.0
        %818 = vmatpush1.msra.mxu0 0.0
        %819 = vmatprep.subr.mxu0 0.0
        %820 = vmatpush1.msra.mxu0 0.0
        %821 = vmatprep.subr.mxu0 0.0
        %822 = vmatpush1.msra.mxu0 0.0
        %823 = vmatprep.subr.mxu0 0.0
        %824 = vmatpush1.msra.mxu0 %v698
        %825 = vmatprep.subr.mxu0 0.0
        %826 = vmatpush1.msra.mxu0 %v697
        %827 = vmatprep.subr.mxu0 0.0
        %828 = vmatpush2.msra.mxu0 0.0
        %829 = vmatprep.subr.mxu0 0.0
        %830 = vmatpush2.msra.mxu0 0.0
        %831 = vmatprep.subr.mxu0 0.0
        %832 = vmatpush2.msra.mxu0 0.0
        %833 = vmatprep.subr.mxu0 0.0
        %834 = vmatpush2.msra.mxu0 0.0
        %835 = vmatprep.subr.mxu0 0.0
        %836 = vmatpush2.msra.mxu0 0.0
        %837 = vmatprep.subr.mxu0 0.0
        %838 = vmatpush2.msra.mxu0 0.0
        %839 = vmatprep.subr.mxu0 0.0
        %840 = vmatpush2.msra.mxu0 0.0
        %841 = vmatprep.subr.mxu0 0.0
        %842 = vmatpush2.msra.mxu0 0.0
        %843 = vmatprep.subr.mxu0 0.0
        %844 = vmatpush2.msra.mxu0 0.0
        %845 = vmatprep.subr.mxu0 0.0
        %846 = vmatpush2.msra.mxu0 0.0
        %847 = vmatprep.subr.mxu0 0.0
        %848 = vmatpush2.msra.mxu0 0.0
        %849 = vmatprep.subr.mxu0 0.0
        %850 = vmatpush2.msra.mxu0 0.0
        %851 = vmatprep.subr.mxu0 0.0
        %852 = vmatpush2.msra.mxu0 0.0
        %853 = vmatprep.subr.mxu0 0.0
        %854 = vmatpush2.msra.mxu0 0.0
        %855 = vmatprep.subr.mxu0 0.0
        %856 = vmatpush2.msra.mxu0 0.0
        %857 = vmatprep.subr.mxu0 0.0
        %858 = vmatpush2.msra.mxu0 0.0
        %859 = vmatprep.mubr.f32.mxu0 0.0
        %860 = vmatmul.mubr.f32.gmra.mxu0 %v700
        %v861 = vpop.f32.mrf.mxu0
        %v862 = vadd.f32 0.0, %v861
        %v863 = vpop.f32.mrf.mxu0
        %864 = vmatprep.mubr.f32.mxu0 0.0
        %865 = vmatmul.mubr.f32.gmra.mxu0 %v703
        %v866 = vpop.f32.mrf.mxu0
        %v867 = vadd.f32 0.0, %v866
        %v868 = vpop.f32.mrf.mxu0
        %869 = vmatprep.mubr.f32.mxu0 0.0
        %870 = vmatmul.mubr.f32.gmra.mxu0 %v706
        %v871 = vpop.f32.mrf.mxu0
        %v872 = vadd.f32 0.0, %v871
        %v873 = vpop.f32.mrf.mxu0
        %874 = vmatprep.mubr.f32.mxu0 0.0
        %875 = vmatmul.mubr.f32.gmra.mxu0 %v709
        %v876 = vpop.f32.mrf.mxu0
        %v877 = vadd.f32 0.0, %v876
        %v878 = vpop.f32.mrf.mxu0
        %879 = vmatprep.mubr.f32.mxu0 0.0
        %880 = vmatmul.mubr.f32.gmra.mxu0 %v712
        %v881 = vpop.f32.mrf.mxu0
        %v882 = vadd.f32 0.0, %v881
        %v883 = vpop.f32.mrf.mxu0
        %884 = vmatprep.mubr.f32.mxu0 0.0
        %885 = vmatmul.mubr.f32.gmra.mxu0 %v715
        %v886 = vpop.f32.mrf.mxu0
        %v887 = vadd.f32 0.0, %v886
        %v888 = vpop.f32.mrf.mxu0
        %889 = vmatprep.mubr.f32.mxu0 0.0
        %890 = vmatmul.mubr.f32.gmra.mxu0 %v718
        %v891 = vpop.f32.mrf.mxu0
        %v892 = vadd.f32 0.0, %v891
        %v893 = vpop.f32.mrf.mxu0
        %894 = vmatprep.mubr.f32.mxu0 0.0
        %895 = vmatmul.mubr.f32.gmra.mxu0 %v721
        %v896 = vpop.f32.mrf.mxu0
        %v897 = vadd.f32 0.0, %v896
        %v898 = vpop.f32.mrf.mxu0
        %899 = vmatprep.mubr.f32.mxu0 0.0
        %900 = vmatmul.mubr.f32.gmra.mxu0 %v724
        %v901 = vpop.f32.mrf.mxu0
        %v902 = vadd.f32 0.0, %v901
        %v903 = vpop.f32.mrf.mxu0
        %904 = vmatprep.mubr.f32.mxu0 0.0
        %905 = vmatmul.mubr.f32.gmra.mxu0 %v727
        %v906 = vpop.f32.mrf.mxu0
        %v907 = vadd.f32 0.0, %v906
        %v908 = vpop.f32.mrf.mxu0
        %909 = vmatprep.mubr.f32.mxu0 0.0
        %910 = vmatmul.mubr.f32.gmra.mxu0 %v730
        %v911 = vpop.f32.mrf.mxu0
        %v912 = vadd.f32 0.0, %v911
        %v913 = vpop.f32.mrf.mxu0
        %914 = vmatprep.mubr.f32.mxu0 0.0
        %915 = vmatmul.mubr.f32.gmra.mxu0 %v733
        %v916 = vpop.f32.mrf.mxu0
        %v917 = vadd.f32 0.0, %v916
        %v918 = vpop.f32.mrf.mxu0
        %919 = vmatprep.mubr.f32.mxu0 0.0
        %920 = vmatmul.mubr.f32.gmra.mxu0 %v736
        %v921 = vpop.f32.mrf.mxu0
        %v922 = vadd.f32 0.0, %v921
        %v923 = vpop.f32.mrf.mxu0
        %924 = vmatprep.mubr.f32.mxu0 0.0
        %925 = vmatmul.mubr.f32.gmra.mxu0 %v739
        %v926 = vpop.f32.mrf.mxu0
        %v927 = vadd.f32 0.0, %v926
        %v928 = vpop.f32.mrf.mxu0
        %929 = vmatprep.mubr.f32.mxu0 0.0
        %930 = vmatmul.mubr.f32.gmra.mxu0 %v742
        %v931 = vpop.f32.mrf.mxu0
        %v932 = vadd.f32 0.0, %v931
        %v933 = vpop.f32.mrf.mxu0
        %934 = vmatprep.mubr.f32.mxu0 0.0
        %935 = vmatmul.mubr.f32.gmra.mxu0 %v745
        %v936 = vpop.f32.mrf.mxu0
        %v937 = vadd.f32 0.0, %v936
        %v938 = vpop.f32.mrf.mxu0
        %939 = vmatprep.mubr.f32.mxu0 0.0
        %940 = vmatmul.mubr.f32.gmra.mxu0 %v748
        %v941 = vpop.f32.mrf.mxu0
        %v942 = vadd.f32 0.0, %v941
        %v943 = vpop.f32.mrf.mxu0
        %944 = vmatprep.mubr.f32.mxu0 0.0
        %945 = vmatmul.mubr.f32.gmra.mxu0 %v751
        %v946 = vpop.f32.mrf.mxu0
        %v947 = vadd.f32 0.0, %v946
        %v948 = vpop.f32.mrf.mxu0
        %949 = vmatprep.mubr.f32.mxu0 0.0
        %950 = vmatmul.mubr.f32.gmra.mxu0 %v754
        %v951 = vpop.f32.mrf.mxu0
        %v952 = vadd.f32 0.0, %v951
        %v953 = vpop.f32.mrf.mxu0
        %954 = vmatprep.mubr.f32.mxu0 0.0
        %955 = vmatmul.mubr.f32.gmra.mxu0 %v757
        %v956 = vpop.f32.mrf.mxu0
        %v957 = vadd.f32 0.0, %v956
        %v958 = vpop.f32.mrf.mxu0
        %959 = vmatprep.mubr.f32.mxu0 0.0
        %960 = vmatmul.mubr.f32.gmra.mxu0 %v760
        %v961 = vpop.f32.mrf.mxu0
        %v962 = vadd.f32 0.0, %v961
        %v963 = vpop.f32.mrf.mxu0
        %964 = vmatprep.mubr.f32.mxu0 0.0
        %965 = vmatmul.mubr.f32.gmra.mxu0 %v763
        %v966 = vpop.f32.mrf.mxu0
        %v967 = vadd.f32 0.0, %v966
        %v968 = vpop.f32.mrf.mxu0
        %969 = vmatprep.mubr.f32.mxu0 0.0
        %970 = vmatmul.mubr.f32.gmra.mxu0 %v766
        %v971 = vpop.f32.mrf.mxu0
        %v972 = vadd.f32 0.0, %v971
        %v973 = vpop.f32.mrf.mxu0
        %974 = vmatprep.mubr.f32.mxu0 0.0
        %975 = vmatmul.mubr.f32.gmra.mxu0 %v769
        %v976 = vpop.f32.mrf.mxu0
        %v977 = vadd.f32 0.0, %v976
        %v978 = vpop.f32.mrf.mxu0
        %979 = vmatprep.mubr.f32.mxu0 0.0
        %980 = vmatmul.mubr.f32.gmra.mxu0 %v772
        %v981 = vpop.f32.mrf.mxu0
        %v982 = vadd.f32 0.0, %v981
        %v983 = vpop.f32.mrf.mxu0
        %984 = vmatprep.mubr.f32.mxu0 0.0
        %985 = vmatmul.mubr.f32.gmra.mxu0 %v775
        %v986 = vpop.f32.mrf.mxu0
        %v987 = vadd.f32 0.0, %v986
        %v988 = vpop.f32.mrf.mxu0
        %989 = vmatprep.mubr.f32.mxu0 0.0
        %990 = vmatmul.mubr.f32.gmra.mxu0 %v778
        %v991 = vpop.f32.mrf.mxu0
        %v992 = vadd.f32 0.0, %v991
        %v993 = vpop.f32.mrf.mxu0
        %994 = vmatprep.mubr.f32.mxu0 0.0
        %995 = vmatmul.mubr.f32.gmra.mxu0 %v781
        %v996 = vpop.f32.mrf.mxu0
        %v997 = vadd.f32 0.0, %v996
        %v998 = vpop.f32.mrf.mxu0
        %999 = vmatprep.mubr.f32.mxu0 0.0
        %1000 = vmatmul.mubr.f32.gmra.mxu0 %v784
        %v1001 = vpop.f32.mrf.mxu0
        %v1002 = vadd.f32 0.0, %v1001
        %v1003 = vpop.f32.mrf.mxu0
        %1004 = vmatprep.mubr.f32.mxu0 0.0
        %1005 = vmatmul.mubr.f32.gmra.mxu0 %v787
        %v1006 = vpop.f32.mrf.mxu0
        %v1007 = vadd.f32 0.0, %v1006
        %v1008 = vpop.f32.mrf.mxu0
        %1009 = vmatprep.mubr.f32.mxu0 0.0
        %1010 = vmatmul.mubr.f32.gmra.mxu0 %v790
        %v1011 = vpop.f32.mrf.mxu0
        %v1012 = vadd.f32 0.0, %v1011
        %v1013 = vpop.f32.mrf.mxu0
        %1014 = vmatprep.mubr.f32.mxu0 0.0
        %1015 = vmatmul.mubr.f32.gmra.mxu0 %v793
        %v1016 = vpop.f32.mrf.mxu0
        %v1017 = vadd.f32 0.0, %v1016
        %v1018 = vpop.f32.mrf.mxu0
        %1019 = vdwg.mxu0
        %vm1020 = vcmp.ge.f32.partialorder %v862, 0.0
        %vm1021 = vcmp.ge.f32.partialorder %v867, 0.0
        %vm1022 = vcmp.ge.f32.partialorder %v872, 0.0
        %vm1023 = vcmp.ge.f32.partialorder %v877, 0.0
        %vm1024 = vcmp.ge.f32.partialorder %v882, 0.0
        %vm1025 = vcmp.ge.f32.partialorder %v887, 0.0
        %vm1026 = vcmp.ge.f32.partialorder %v892, 0.0
        %vm1027 = vcmp.ge.f32.partialorder %v897, 0.0
        %vm1028 = vcmp.ge.f32.partialorder %v902, 0.0
        %vm1029 = vcmp.ge.f32.partialorder %v907, 0.0
        %vm1030 = vcmp.ge.f32.partialorder %v912, 0.0
        %vm1031 = vcmp.ge.f32.partialorder %v917, 0.0
        %vm1032 = vcmp.ge.f32.partialorder %v922, 0.0
        %vm1033 = vcmp.ge.f32.partialorder %v927, 0.0
        %vm1034 = vcmp.ge.f32.partialorder %v932, 0.0
        %vm1035 = vcmp.ge.f32.partialorder %v937, 0.0
        %vm1036 = vcmp.ge.f32.partialorder %v942, 0.0
        %vm1037 = vcmp.ge.f32.partialorder %v947, 0.0
        %vm1038 = vcmp.ge.f32.partialorder %v952, 0.0
        %vm1039 = vcmp.ge.f32.partialorder %v957, 0.0
        %vm1040 = vcmp.ge.f32.partialorder %v962, 0.0
        %vm1041 = vcmp.ge.f32.partialorder %v967, 0.0
        %vm1042 = vcmp.ge.f32.partialorder %v972, 0.0
        %vm1043 = vcmp.ge.f32.partialorder %v977, 0.0
        %vm1044 = vcmp.ge.f32.partialorder %v982, 0.0
        %vm1045 = vcmp.ge.f32.partialorder %v987, 0.0
        %vm1046 = vcmp.ge.f32.partialorder %v992, 0.0
        %vm1047 = vcmp.ge.f32.partialorder %v997, 0.0
        %vm1048 = vcmp.ge.f32.partialorder %v1002, 0.0
        %vm1049 = vcmp.ge.f32.partialorder %v1007, 0.0
        %vm1050 = vcmp.ge.f32.partialorder %v1012, 0.0
        %vm1051 = vcmp.ge.f32.partialorder %v1017, 0.0
        %v1052 = vmul.f32 %v862, 0.2
        %v1053 = vmul.f32 %v867, 0.2
        %v1054 = vmul.f32 %v872, 0.2
        %v1055 = vmul.f32 %v877, 0.2
        %v1056 = vmul.f32 %v882, 0.2
        %v1057 = vmul.f32 %v887, 0.2
        %v1058 = vmul.f32 %v892, 0.2
        %v1059 = vmul.f32 %v897, 0.2
        %v1060 = vmul.f32 %v902, 0.2
        %v1061 = vmul.f32 %v907, 0.2
        %v1062 = vmul.f32 %v912, 0.2
        %v1063 = vmul.f32 %v917, 0.2
        %v1064 = vmul.f32 %v922, 0.2
        %v1065 = vmul.f32 %v927, 0.2
        %v1066 = vmul.f32 %v932, 0.2
        %v1067 = vmul.f32 %v937, 0.2
        %v1068 = vmul.f32 %v942, 0.2
        %v1069 = vmul.f32 %v947, 0.2
        %v1070 = vmul.f32 %v952, 0.2
        %v1071 = vmul.f32 %v957, 0.2
        %v1072 = vmul.f32 %v962, 0.2
        %v1073 = vmul.f32 %v967, 0.2
        %v1074 = vmul.f32 %v972, 0.2
        %v1075 = vmul.f32 %v977, 0.2
        %v1076 = vmul.f32 %v982, 0.2
        %v1077 = vmul.f32 %v987, 0.2
        %v1078 = vmul.f32 %v992, 0.2
        %v1079 = vmul.f32 %v997, 0.2
        %v1080 = vmul.f32 %v1002, 0.2
        %v1081 = vmul.f32 %v1007, 0.2
        %v1082 = vmul.f32 %v1012, 0.2
        %v1083 = vmul.f32 %v1017, 0.2
        %v1084 = vsel %vm1020, %v862, %v1052
        %v1085 = vsel %vm1021, %v867, %v1053
        %v1086 = vsel %vm1022, %v872, %v1054
        %v1087 = vsel %vm1023, %v877, %v1055
        %v1088 = vsel %vm1024, %v882, %v1056
        %v1089 = vsel %vm1025, %v887, %v1057
        %v1090 = vsel %vm1026, %v892, %v1058
        %v1091 = vsel %vm1027, %v897, %v1059
        %v1092 = vsel %vm1028, %v902, %v1060
        %v1093 = vsel %vm1029, %v907, %v1061
        %v1094 = vsel %vm1030, %v912, %v1062
        %v1095 = vsel %vm1031, %v917, %v1063
        %v1096 = vsel %vm1032, %v922, %v1064
        %v1097 = vsel %vm1033, %v927, %v1065
        %v1098 = vsel %vm1034, %v932, %v1066
        %v1099 = vsel %vm1035, %v937, %v1067
        %v1100 = vsel %vm1036, %v942, %v1068
        %v1101 = vsel %vm1037, %v947, %v1069
        %v1102 = vsel %vm1038, %v952, %v1070
        %v1103 = vsel %vm1039, %v957, %v1071
        %v1104 = vsel %vm1040, %v962, %v1072
        %v1105 = vsel %vm1041, %v967, %v1073
        %v1106 = vsel %vm1042, %v972, %v1074
        %v1107 = vsel %vm1043, %v977, %v1075
        %v1108 = vsel %vm1044, %v982, %v1076
        %v1109 = vsel %vm1045, %v987, %v1077
        %v1110 = vsel %vm1046, %v992, %v1078
        %v1111 = vsel %vm1047, %v997, %v1079
        %v1112 = vsel %vm1048, %v1002, %v1080
        %v1113 = vsel %vm1049, %v1007, %v1081
        %v1114 = vsel %vm1050, %v1012, %v1082
        %v1115 = vsel %vm1051, %v1017, %v1083
        %1116 = vst [vmem:[%s268] sm:$0xff] %v1084
        %1117 = vst [vmem:[%s268 + $0x8] sm:$0xff] %v1085
        %1118 = vst [vmem:[%s268 + $0x10] sm:$0xff] %v1086
        %1119 = vst [vmem:[%s268 + $0x18] sm:$0xff] %v1087
        %1120 = vst [vmem:[%s268 + $0x20] sm:$0xff] %v1088
        %1121 = vst [vmem:[%s268 + $0x28] sm:$0xff] %v1089
        %1122 = vst [vmem:[%s268 + $0x30] sm:$0xff] %v1090
        %1123 = vst [vmem:[%s268 + $0x38] sm:$0xff] %v1091
        %1124 = vst [vmem:[%s268 + $0x40] sm:$0xff] %v1092
        %1125 = vst [vmem:[%s268 + $0x48] sm:$0xff] %v1093
        %1126 = vst [vmem:[%s268 + $0x50] sm:$0xff] %v1094
        %1127 = vst [vmem:[%s268 + $0x58] sm:$0xff] %v1095
        %1128 = vst [vmem:[%s268 + $0x60] sm:$0xff] %v1096
        %1129 = vst [vmem:[%s268 + $0x68] sm:$0xff] %v1097
        %1130 = vst [vmem:[%s268 + $0x70] sm:$0xff] %v1098
        %1131 = vst [vmem:[%s268 + $0x78] sm:$0xff] %v1099
        %1132 = vst [vmem:[%s268 + $0x80] sm:$0xff] %v1100
        %1133 = vst [vmem:[%s268 + $0x88] sm:$0xff] %v1101
        %1134 = vst [vmem:[%s268 + $0x90] sm:$0xff] %v1102
        %1135 = vst [vmem:[%s268 + $0x98] sm:$0xff] %v1103
        %1136 = vst [vmem:[%s268 + $0xa0] sm:$0xff] %v1104
        %1137 = vst [vmem:[%s268 + $0xa8] sm:$0xff] %v1105
        %1138 = vst [vmem:[%s268 + $0xb0] sm:$0xff] %v1106
        %1139 = vst [vmem:[%s268 + $0xb8] sm:$0xff] %v1107
        %1140 = vst [vmem:[%s268 + $0xc0] sm:$0xff] %v1108
        %1141 = vst [vmem:[%s268 + $0xc8] sm:$0xff] %v1109
        %1142 = vst [vmem:[%s268 + $0xd0] sm:$0xff] %v1110
        %1143 = vst [vmem:[%s268 + $0xd8] sm:$0xff] %v1111
        %1144 = vst [vmem:[%s268 + $0xe0] sm:$0xff] %v1112
        %1145 = vst [vmem:[%s268 + $0xe8] sm:$0xff] %v1113
        %1146 = vst [vmem:[%s268 + $0xf0] sm:$0xff] %v1114
        %1147 = vst [vmem:[%s268 + $0xf8] sm:$0xff] %v1115
        %s1148 = smul.u32 32, %s19
        %p1149 = scmp.lt.s32.totalorder %s1148, 63
        %s1150 = scalar_select %p1149, %s1148, 63
        %s1151 = smul.addr %s1150, 8
        %s1152 = scalar_lea.vmem %s4, %s1151
        %s1153 = smul.u32 32, %s19
        %p1154 = scmp.lt.s32.totalorder %s1153, 63
        %s1155 = scalar_select %p1154, %s1153, 63
        %s1156 = smul.addr %s1155, 8
        %s1157 = scalar_lea.vmem %s5, %s1156
        // Predicated region
        $region45: #{bionic_forward.4} parent=35 // pred_check
          %p1158 = pneg %p126
        $region46: #{bionic_forward.4} parent=35 // pred_check_branch
          %1160 = sbr.rel (%p1158) target = $region48
        $region47: #{bionic_forward.4} parent=35 // pred_region
          %s1161 = smul.u32 32, %s19
        $region48: #{bionic_forward.4} parent=35 // pred_fallthru
          _
        // Predicated region
        $region49: #{bionic_forward.4} parent=35 // pred_check
          %p1162 = pneg %p152
        $region50: #{bionic_forward.4} parent=35 // pred_check_branch
          %1164 = sbr.rel (%p1162) target = $region52
        $region51: #{bionic_forward.4} parent=35 // pred_region
          %s1165 = smul.u32 32, %s19
        $region52: #{bionic_forward.4} parent=35 // pred_fallthru
          _
      $region36: #{bionic_forward.4} parent=5 // pred_fallthru
        _
      %p1166 = scmp.le.s32.totalorder 2, %s14
      // Predicated region
      $region53: #{bionic_forward.4} parent=5 // pred_check
        %p1167 = pneg %p1166
      $region54: #{bionic_forward.4} parent=5 // pred_check_branch
        %1169 = sbr.rel (%p1167) target = $region56
      $region55: #{bionic_forward.4} parent=5 // pred_region
        %s1170 = ssub.s32 %s14, 2
        // Predicated region
        $region57: #{bionic_forward.4} parent=55 // pred_check
          %p1171 = pneg %p132
        $region58: #{bionic_forward.4} parent=55 // pred_check_branch
          %1173 = sbr.rel (%p1171) target = $region60
        $region59: #{bionic_forward.4} parent=55 // pred_region
          %s1174 = smul.u32 32, %s20
          %p1175 = scmp.lt.s32.totalorder %s1174, 63
          %s1176 = scalar_select %p1175, %s1174, 63
          %s1177 = smul.addr %s1176, 8
          %s1178 = scalar_lea.vmem %s4, %s1177
        $region60: #{bionic_forward.4} parent=55 // pred_fallthru
          _
        // Predicated region
        $region61: #{bionic_forward.4} parent=55 // pred_check
          %p1179 = pneg %p158
        $region62: #{bionic_forward.4} parent=55 // pred_check_branch
          %1181 = sbr.rel (%p1179) target = $region64
        $region63: #{bionic_forward.4} parent=55 // pred_region
          %s1182 = smul.u32 32, %s20
          %p1183 = scmp.lt.s32.totalorder %s1182, 63
          %s1184 = scalar_select %p1183, %s1182, 63
          %s1185 = smul.addr %s1184, 8
          %s1186 = scalar_lea.vmem %s5, %s1185
        $region64: #{bionic_forward.4} parent=55 // pred_fallthru
          _
      $region56: #{bionic_forward.4} parent=5 // pred_fallthru
        _
    $region6: #{bionic_forward.4} parent=1 // loop_footer
      %s18 = sadd.s32 1, %s14
    $region7: #{bionic_forward.4} parent=1 // loop_footer_branch
      %13 = sbr.rel target = $region3
    $region8: #{bionic_forward.4} parent=1 // loop_exit
      _
    %1187 = vsyncpa [#allocation3], 1
    %s1188 = scalar_lea.sflag [#allocation3], 1
    %1189 = vsyncpa %s1188, 1
    %1190 = vsyncpa [#allocation5], 1

// kernel: bionic_forward.6
$region0: #{bionic_forward.6}
  #allocation0 [shape = 'u32[]', space=smem, size = 0x4, offset = 0x4, fixed_abs, tag = 'smem constant byte address 0x4 - core index']
  #allocation1 [shape = 'u32[144,128]{1,0:T(1,128)}', space=vmem, size = 0x12000, scoped, tag = 'internal scratch']
  %s0 = inlined_call_operand.vmem [shape: f32[512,32], index: 0, kind: input, shape index: {}]
  %s1 = inlined_call_operand.vmem [shape: f32[1,32], index: 1, kind: input, shape index: {}]
  %s2 = inlined_call_operand.vmem [shape: f32[1,32], index: 2, kind: input, shape index: {}]
  %s3 = inlined_call_operand.vmem [shape: f32[32,256], index: 3, kind: input, shape index: {}]
  %s4 = inlined_call_operand.vmem [shape: f32[1,256], index: 4, kind: input, shape index: {}]
  %s5 = inlined_call_operand.vmem [shape: f32[256,128], index: 5, kind: input, shape index: {}]
  %s6 = inlined_call_operand.vmem [shape: f32[1,128], index: 6, kind: input, shape index: {}]
  %s7 = inlined_call_operand.hbm [shape: f32[512,256], index: 7, kind: output, shape index: {0}]
  %s8 = inlined_call_operand.vmem [shape: f32[512,128], index: 8, kind: output, shape index: {1}]
  %9 = xla_tuple %s7, %s8
  %s10 = sld [smem:[#allocation0]]
  $region69: #{bionic_forward.6} parent=0
    _
  %s12 = ssub.s32 1, %s10
  %s13 = scalar_select 0, %s12, %s10
  $region1: #{bionic_forward.6} parent=0
    #allocation2 [shape = 'u8[524288]{0}', space=vmem, size = 0x80000, scoped, tag = 'output window, operand 0']
    #allocation3 [shape = 's32[2]{0}', space=sflag, size = 0x8, scoped, tag = 'scoped memory for bionic_forward.6']
    %14 = vsyncpa [#allocation3], 0
    %s15 = scalar_lea.sflag [#allocation3], 1
    %16 = vsyncpa %s15, 0
    loop: start=0, step=1, limit=4
    $region2: #{bionic_forward.6} parent=1 // loop_pre_header
      _
    $region3: #{bionic_forward.6} parent=1 // loop_header
      %s18 = sphi 0, %s22
      %p19 = scmp.ge.s32.totalorder %s18, 4
      %s28 = sphi 0, %s30
      %s31 = sphi 0, %s28
      %s32 = sphi 0, %s31
      %s48 = sphi 0, %s32
      %s52 = sphi 0, %s52
      %s54 = sphi 0, %s52
      %s55 = sphi 0, %s54
      %s69 = sphi 0, %s55
      %s73 = sphi 0, %s73
      %s75 = sphi 0, %s73
      %s76 = sphi 0, %s75
      %s90 = sphi 0, %s76
      %s94 = sphi 0, %s94
      %s96 = sphi 0, %s94
      %s97 = sphi 0, %s96
      %s111 = sphi 0, %s97
      %s115 = sphi 0, %s115
      %s117 = sphi 0, %s115
      %s118 = sphi 0, %s117
      %s132 = sphi 0, %s118
      %s136 = sphi 0, %s136
      %s138 = sphi 0, %s136
      %s139 = sphi 0, %s138
      %s153 = sphi 0, %s139
      %s157 = sphi 0, %s157
      %s159 = sphi 0, %s157
      %s160 = sphi 0, %s159
      %s174 = sphi 0, %s160
      %s180 = sphi 0, %s182
      %s183 = sphi 0, %s180
      %s184 = sphi 0, %s183
      %s200 = sphi 0, %s184
      %s206 = sphi 0, %s208
      %s209 = sphi 0, %s206
      %s210 = sphi 0, %s209
      %s226 = sphi 0, %s210
    $region4: #{bionic_forward.6} parent=1 // loop_header_branch
      %21 = sbr.rel (%p19) target = $region8
    $region5: #{bionic_forward.6} parent=1 // loop_body
      %s23 = ssub.s32 %s18, 1
      %s24 = ssub.s32 %s18, 2
      %s25 = sadd.s32 %s18, 1
      %s26 = ssub.s32 %s18, %s25
      %p27 = scmp.eq.s32.totalorder %s26, 0
      %s29 = sadd.s32 %s28, 1
      %s30 = scalar_select %p27, %s28, %s29
      %p33 = pneg %p27
      %p34 = scmp.eq.s32.totalorder %s18, 1
      %p35 = por %p33, %p34
      %p36 = scmp.ne.s32.totalorder %s28, %s31
      %p37 = scmp.eq.s32.totalorder %s18, 0
      %p38 = por %p36, %p37
      %p39 = scmp.ne.s32.totalorder %s28, %s31
      %p40 = scmp.eq.s32.totalorder %s23, 1
      %p41 = por %p39, %p40
      %p42 = scmp.ne.s32.totalorder %s31, %s32
      %p43 = scmp.eq.s32.totalorder %s23, 0
      %p44 = por %p42, %p43
      %p45 = scmp.ne.s32.totalorder %s31, %s32
      %p46 = scmp.eq.s32.totalorder %s24, 1
      %p47 = por %p45, %p46
      %p49 = scmp.ne.s32.totalorder %s32, %s48
      %p50 = scmp.eq.s32.totalorder %s24, 0
      %p51 = por %p49, %p50
      %s53 = sadd.s32 %s52, 1
      %p56 = scmp.eq.s32.totalorder %s18, 1
      %p57 = scmp.ne.s32.totalorder %s52, %s54
      %p58 = scmp.eq.s32.totalorder %s18, 0
      %p59 = por %p57, %p58
      %p60 = scmp.ne.s32.totalorder %s52, %s54
      %p61 = scmp.eq.s32.totalorder %s23, 1
      %p62 = por %p60, %p61
      %p63 = scmp.ne.s32.totalorder %s54, %s55
      %p64 = scmp.eq.s32.totalorder %s23, 0
      %p65 = por %p63, %p64
      %p66 = scmp.ne.s32.totalorder %s54, %s55
      %p67 = scmp.eq.s32.totalorder %s24, 1
      %p68 = por %p66, %p67
      %p70 = scmp.ne.s32.totalorder %s55, %s69
      %p71 = scmp.eq.s32.totalorder %s24, 0
      %p72 = por %p70, %p71
      %s74 = sadd.s32 %s73, 1
      %p77 = scmp.eq.s32.totalorder %s18, 1
      %p78 = scmp.ne.s32.totalorder %s73, %s75
      %p79 = scmp.eq.s32.totalorder %s18, 0
      %p80 = por %p78, %p79
      %p81 = scmp.ne.s32.totalorder %s73, %s75
      %p82 = scmp.eq.s32.totalorder %s23, 1
      %p83 = por %p81, %p82
      %p84 = scmp.ne.s32.totalorder %s75, %s76
      %p85 = scmp.eq.s32.totalorder %s23, 0
      %p86 = por %p84, %p85
      %p87 = scmp.ne.s32.totalorder %s75, %s76
      %p88 = scmp.eq.s32.totalorder %s24, 1
      %p89 = por %p87, %p88
      %p91 = scmp.ne.s32.totalorder %s76, %s90
      %p92 = scmp.eq.s32.totalorder %s24, 0
      %p93 = por %p91, %p92
      %s95 = sadd.s32 %s94, 1
      %p98 = scmp.eq.s32.totalorder %s18, 1
      %p99 = scmp.ne.s32.totalorder %s94, %s96
      %p100 = scmp.eq.s32.totalorder %s18, 0
      %p101 = por %p99, %p100
      %p102 = scmp.ne.s32.totalorder %s94, %s96
      %p103 = scmp.eq.s32.totalorder %s23, 1
      %p104 = por %p102, %p103
      %p105 = scmp.ne.s32.totalorder %s96, %s97
      %p106 = scmp.eq.s32.totalorder %s23, 0
      %p107 = por %p105, %p106
      %p108 = scmp.ne.s32.totalorder %s96, %s97
      %p109 = scmp.eq.s32.totalorder %s24, 1
      %p110 = por %p108, %p109
      %p112 = scmp.ne.s32.totalorder %s97, %s111
      %p113 = scmp.eq.s32.totalorder %s24, 0
      %p114 = por %p112, %p113
      %s116 = sadd.s32 %s115, 1
      %p119 = scmp.eq.s32.totalorder %s18, 1
      %p120 = scmp.ne.s32.totalorder %s115, %s117
      %p121 = scmp.eq.s32.totalorder %s18, 0
      %p122 = por %p120, %p121
      %p123 = scmp.ne.s32.totalorder %s115, %s117
      %p124 = scmp.eq.s32.totalorder %s23, 1
      %p125 = por %p123, %p124
      %p126 = scmp.ne.s32.totalorder %s117, %s118
      %p127 = scmp.eq.s32.totalorder %s23, 0
      %p128 = por %p126, %p127
      %p129 = scmp.ne.s32.totalorder %s117, %s118
      %p130 = scmp.eq.s32.totalorder %s24, 1
      %p131 = por %p129, %p130
      %p133 = scmp.ne.s32.totalorder %s118, %s132
      %p134 = scmp.eq.s32.totalorder %s24, 0
      %p135 = por %p133, %p134
      %s137 = sadd.s32 %s136, 1
      %p140 = scmp.eq.s32.totalorder %s18, 1
      %p141 = scmp.ne.s32.totalorder %s136, %s138
      %p142 = scmp.eq.s32.totalorder %s18, 0
      %p143 = por %p141, %p142
      %p144 = scmp.ne.s32.totalorder %s136, %s138
      %p145 = scmp.eq.s32.totalorder %s23, 1
      %p146 = por %p144, %p145
      %p147 = scmp.ne.s32.totalorder %s138, %s139
      %p148 = scmp.eq.s32.totalorder %s23, 0
      %p149 = por %p147, %p148
      %p150 = scmp.ne.s32.totalorder %s138, %s139
      %p151 = scmp.eq.s32.totalorder %s24, 1
      %p152 = por %p150, %p151
      %p154 = scmp.ne.s32.totalorder %s139, %s153
      %p155 = scmp.eq.s32.totalorder %s24, 0
      %p156 = por %p154, %p155
      %s158 = sadd.s32 %s157, 1
      %p161 = scmp.eq.s32.totalorder %s18, 1
      %p162 = scmp.ne.s32.totalorder %s157, %s159
      %p163 = scmp.eq.s32.totalorder %s18, 0
      %p164 = por %p162, %p163
      %p165 = scmp.ne.s32.totalorder %s157, %s159
      %p166 = scmp.eq.s32.totalorder %s23, 1
      %p167 = por %p165, %p166
      %p168 = scmp.ne.s32.totalorder %s159, %s160
      %p169 = scmp.eq.s32.totalorder %s23, 0
      %p170 = por %p168, %p169
      %p171 = scmp.ne.s32.totalorder %s159, %s160
      %p172 = scmp.eq.s32.totalorder %s24, 1
      %p173 = por %p171, %p172
      %p175 = scmp.ne.s32.totalorder %s160, %s174
      %p176 = scmp.eq.s32.totalorder %s24, 0
      %p177 = por %p175, %p176
      %s178 = ssub.s32 %s18, %s25
      %p179 = scmp.eq.s32.totalorder %s178, 0
      %s181 = sadd.s32 %s180, 1
      %s182 = scalar_select %p179, %s180, %s181
      %p185 = pneg %p179
      %p186 = scmp.eq.s32.totalorder %s18, 1
      %p187 = por %p185, %p186
      %p188 = scmp.ne.s32.totalorder %s180, %s183
      %p189 = scmp.eq.s32.totalorder %s18, 0
      %p190 = por %p188, %p189
      %p191 = scmp.ne.s32.totalorder %s180, %s183
      %p192 = scmp.eq.s32.totalorder %s23, 1
      %p193 = por %p191, %p192
      %p194 = scmp.ne.s32.totalorder %s183, %s184
      %p195 = scmp.eq.s32.totalorder %s23, 0
      %p196 = por %p194, %p195
      %p197 = scmp.ne.s32.totalorder %s183, %s184
      %p198 = scmp.eq.s32.totalorder %s24, 1
      %p199 = por %p197, %p198
      %p201 = scmp.ne.s32.totalorder %s184, %s200
      %p202 = scmp.eq.s32.totalorder %s24, 0
      %p203 = por %p201, %p202
      %s204 = ssub.s32 %s18, %s25
      %p205 = scmp.eq.s32.totalorder %s204, 0
      %s207 = sadd.s32 %s206, 1
      %s208 = scalar_select %p205, %s206, %s207
      %p211 = pneg %p205
      %p212 = scmp.eq.s32.totalorder %s18, 1
      %p213 = por %p211, %p212
      %p214 = scmp.ne.s32.totalorder %s206, %s209
      %p215 = scmp.eq.s32.totalorder %s18, 0
      %p216 = por %p214, %p215
      %p217 = scmp.ne.s32.totalorder %s206, %s209
      %p218 = scmp.eq.s32.totalorder %s23, 1
      %p219 = por %p217, %p218
      %p220 = scmp.ne.s32.totalorder %s209, %s210
      %p221 = scmp.eq.s32.totalorder %s23, 0
      %p222 = por %p220, %p221
      %p223 = scmp.ne.s32.totalorder %s209, %s210
      %p224 = scmp.eq.s32.totalorder %s24, 1
      %p225 = por %p223, %p224
      %p227 = scmp.ne.s32.totalorder %s210, %s226
      %p228 = scmp.eq.s32.totalorder %s24, 0
      %p229 = por %p227, %p228
      %p230 = scmp.le.s32.totalorder 1, %s18
      %p231 = scmp.lt.s32.totalorder %s18, 3
      %p232 = pnand %p230, %p231
      %p233 = pneg %p232
      // Predicated region
      $region9: #{bionic_forward.6} parent=5 // pred_check
        _
      $region10: #{bionic_forward.6} parent=5 // pred_check_branch
        %235 = sbr.rel (%p232) target = $region12
      $region11: #{bionic_forward.6} parent=5 // pred_region
        %s236 = ssub.s32 %s18, 1
        // Predicated region
        $region13: #{bionic_forward.6} parent=11 // pred_check
          %p237 = pneg %p65
        $region14: #{bionic_forward.6} parent=11 // pred_check_branch
          %239 = sbr.rel (%p237) target = $region16
        $region15: #{bionic_forward.6} parent=11 // pred_region
          _
        $region16: #{bionic_forward.6} parent=11 // pred_fallthru
          _
        // Predicated region
        $region17: #{bionic_forward.6} parent=11 // pred_check
          %p240 = pneg %p86
        $region18: #{bionic_forward.6} parent=11 // pred_check_branch
          %242 = sbr.rel (%p240) target = $region20
        $region19: #{bionic_forward.6} parent=11 // pred_region
          _
        $region20: #{bionic_forward.6} parent=11 // pred_fallthru
          _
        // Predicated region
        $region21: #{bionic_forward.6} parent=11 // pred_check
          %p243 = pneg %p107
        $region22: #{bionic_forward.6} parent=11 // pred_check_branch
          %245 = sbr.rel (%p243) target = $region24
        $region23: #{bionic_forward.6} parent=11 // pred_region
          _
        $region24: #{bionic_forward.6} parent=11 // pred_fallthru
          _
        // Predicated region
        $region25: #{bionic_forward.6} parent=11 // pred_check
          %p246 = pneg %p128
        $region26: #{bionic_forward.6} parent=11 // pred_check_branch
          %248 = sbr.rel (%p246) target = $region28
        $region27: #{bionic_forward.6} parent=11 // pred_region
          _
        $region28: #{bionic_forward.6} parent=11 // pred_fallthru
          _
        // Predicated region
        $region29: #{bionic_forward.6} parent=11 // pred_check
          %p249 = pneg %p149
        $region30: #{bionic_forward.6} parent=11 // pred_check_branch
          %251 = sbr.rel (%p249) target = $region32
        $region31: #{bionic_forward.6} parent=11 // pred_region
          _
        $region32: #{bionic_forward.6} parent=11 // pred_fallthru
          _
        // Predicated region
        $region33: #{bionic_forward.6} parent=11 // pred_check
          %p252 = pneg %p170
        $region34: #{bionic_forward.6} parent=11 // pred_check_branch
          %254 = sbr.rel (%p252) target = $region36
        $region35: #{bionic_forward.6} parent=11 // pred_region
          _
        $region36: #{bionic_forward.6} parent=11 // pred_fallthru
          _
      $region12: #{bionic_forward.6} parent=5 // pred_fallthru
        _
      %p255 = scmp.lt.s32.totalorder %s18, 2
      // Predicated region
      $region37: #{bionic_forward.6} parent=5 // pred_check
        %p256 = pneg %p255
      $region38: #{bionic_forward.6} parent=5 // pred_check_branch
        %258 = sbr.rel (%p256) target = $region40
      $region39: #{bionic_forward.6} parent=5 // pred_region
        // Predicated region
        $region41: #{bionic_forward.6} parent=39 // pred_check
          %p259 = pneg %p38
        $region42: #{bionic_forward.6} parent=39 // pred_check_branch
          %261 = sbr.rel (%p259) target = $region44
        $region43: #{bionic_forward.6} parent=39 // pred_region
          %s262 = smul.u32 32, %s18
          %p263 = scmp.lt.s32.totalorder %s262, 63
          %s264 = scalar_select %p263, %s262, 63
          %s265 = smul.addr %s264, 8
          %s266 = scalar_lea.vmem %s0, %s265
          %s267 = smul.u32 32, %s18
        $region44: #{bionic_forward.6} parent=39 // pred_fallthru
          _
      $region40: #{bionic_forward.6} parent=5 // pred_fallthru
        _
      %p268 = scmp.le.s32.totalorder 1, %s18
      %p269 = scmp.lt.s32.totalorder %s18, 3
      %p270 = pnand %p268, %p269
      %p271 = pneg %p270
      // Predicated region
      $region45: #{bionic_forward.6} parent=5 // pred_check
        _
      $region46: #{bionic_forward.6} parent=5 // pred_check_branch
        %273 = sbr.rel (%p270) target = $region48
      $region47: #{bionic_forward.6} parent=5 // pred_region
        %s274 = ssub.s32 %s18, 1
        %s275 = smul.u32 32, %s23
        %p276 = scmp.lt.s32.totalorder %s275, 63
        %s277 = scalar_select %p276, %s275, 63
        %s278 = smul.addr %s277, 8
        %s279 = scalar_lea.vmem %s0, %s278
        %p280 = pneg %p44
        %p281 = pneg %p41
        %p282 = pneg %p65
        %p283 = pneg %p62
        %p284 = pneg %p86
        %p285 = pneg %p83
        %p286 = pneg %p107
        %p287 = pneg %p104
        %p288 = pneg %p128
        %p289 = pneg %p125
        %p290 = pneg %p149
        %p291 = pneg %p146
        %p292 = pneg %p170
        %p293 = pneg %p167
        %p294 = pneg %p196
        %p295 = pneg %p193
        %s296 = sand.u32 %s183, 1
        %s297 = scalar_lea.sflag [#allocation3], %s296
        %s298 = sand.u32 %s183, 1
        %s299 = smul.addr %s298, 512
        %s300 = scalar_lea.vmem [#allocation2], %s299
        %p301 = pneg %p222
        %p302 = pneg %p219
        %s303 = smul.u32 32, %s23
        %p304 = scmp.lt.s32.totalorder %s303, 63
        %s305 = scalar_select %p304, %s303, 63
        %s306 = smul.addr %s305, 8
        %s307 = scalar_lea.vmem %s8, %s306
        %s308 = smul.u32 32, %s23
        %p309 = scmp.lt.s32.totalorder %s308, 63
        %s310 = scalar_select %p309, %s308, 63
        %s311 = smul.addr %s310, 8
        %s312 = scalar_lea.vmem %s0, %s311
        %s313 = smul.u32 32, %s23
        %s314 = smul.u32 32, %s23
        %s315 = smul.u32 32, %s23
        %p316 = scmp.lt.s32.totalorder %s315, 63
        %s317 = scalar_select %p316, %s315, 63
        %s318 = smul.addr %s317, 8
        %s319 = scalar_lea.vmem %s8, %s318
        %s320 = smul.u32 32, %s23
        %v321 = vld [vmem:[%s312] sm:$0xff]
        %v322 = vld [vmem:[%s312 + $0x8] sm:$0xff]
        %v323 = vld [vmem:[%s312 + $0x10] sm:$0xff]
        %v324 = vld [vmem:[%s312 + $0x18] sm:$0xff]
        %v325 = vld [vmem:[%s312 + $0x20] sm:$0xff]
        %v326 = vld [vmem:[%s312 + $0x28] sm:$0xff]
        %v327 = vld [vmem:[%s312 + $0x30] sm:$0xff]
        %v328 = vld [vmem:[%s312 + $0x38] sm:$0xff]
        %v329 = vld [vmem:[%s312 + $0x40] sm:$0xff]
        %v330 = vld [vmem:[%s312 + $0x48] sm:$0xff]
        %v331 = vld [vmem:[%s312 + $0x50] sm:$0xff]
        %v332 = vld [vmem:[%s312 + $0x58] sm:$0xff]
        %v333 = vld [vmem:[%s312 + $0x60] sm:$0xff]
        %v334 = vld [vmem:[%s312 + $0x68] sm:$0xff]
        %v335 = vld [vmem:[%s312 + $0x70] sm:$0xff]
        %v336 = vld [vmem:[%s312 + $0x78] sm:$0xff]
        %v337 = vld [vmem:[%s312 + $0x80] sm:$0xff]
        %v338 = vld [vmem:[%s312 + $0x88] sm:$0xff]
        %v339 = vld [vmem:[%s312 + $0x90] sm:$0xff]
        %v340 = vld [vmem:[%s312 + $0x98] sm:$0xff]
        %v341 = vld [vmem:[%s312 + $0xa0] sm:$0xff]
        %v342 = vld [vmem:[%s312 + $0xa8] sm:$0xff]
        %v343 = vld [vmem:[%s312 + $0xb0] sm:$0xff]
        %v344 = vld [vmem:[%s312 + $0xb8] sm:$0xff]
        %v345 = vld [vmem:[%s312 + $0xc0] sm:$0xff]
        %v346 = vld [vmem:[%s312 + $0xc8] sm:$0xff]
        %v347 = vld [vmem:[%s312 + $0xd0] sm:$0xff]
        %v348 = vld [vmem:[%s312 + $0xd8] sm:$0xff]
        %v349 = vld [vmem:[%s312 + $0xe0] sm:$0xff]
        %v350 = vld [vmem:[%s312 + $0xe8] sm:$0xff]
        %v351 = vld [vmem:[%s312 + $0xf0] sm:$0xff]
        %v352 = vld [vmem:[%s312 + $0xf8] sm:$0xff]
        %v353 = vld [vmem:[%s1] sm:$0x1]
        %v355 = vlaneseq
        %v356 = vshrl.u32 %v355, 7
        %v357 = vsub.s32 0, %v356
        %v358 = vrot.slane %v353, %v357
        %v360 = vsub.f32 %v321, %v358
        %v361 = vsub.f32 %v322, %v358
        %v362 = vsub.f32 %v323, %v358
        %v363 = vsub.f32 %v324, %v358
        %v364 = vsub.f32 %v325, %v358
        %v365 = vsub.f32 %v326, %v358
        %v366 = vsub.f32 %v327, %v358
        %v367 = vsub.f32 %v328, %v358
        %v368 = vsub.f32 %v329, %v358
        %v369 = vsub.f32 %v330, %v358
        %v370 = vsub.f32 %v331, %v358
        %v371 = vsub.f32 %v332, %v358
        %v372 = vsub.f32 %v333, %v358
        %v373 = vsub.f32 %v334, %v358
        %v374 = vsub.f32 %v335, %v358
        %v375 = vsub.f32 %v336, %v358
        %v376 = vsub.f32 %v337, %v358
        %v377 = vsub.f32 %v338, %v358
        %v378 = vsub.f32 %v339, %v358
        %v379 = vsub.f32 %v340, %v358
        %v380 = vsub.f32 %v341, %v358
        %v381 = vsub.f32 %v342, %v358
        %v382 = vsub.f32 %v343, %v358
        %v383 = vsub.f32 %v344, %v358
        %v384 = vsub.f32 %v345, %v358
        %v385 = vsub.f32 %v346, %v358
        %v386 = vsub.f32 %v347, %v358
        %v387 = vsub.f32 %v348, %v358
        %v388 = vsub.f32 %v349, %v358
        %v389 = vsub.f32 %v350, %v358
        %v390 = vsub.f32 %v351, %v358
        %v391 = vsub.f32 %v352, %v358
        %v392 = vld [vmem:[%s2] sm:$0x1]
        %v394 = vlaneseq
        %v395 = vshrl.u32 %v394, 7
        %v396 = vsub.s32 0, %v395
        %v397 = vrot.slane %v392, %v396
        %v399 = vmul.f32 %v360, %v397
        %v400 = vmul.f32 %v361, %v397
        %v401 = vmul.f32 %v362, %v397
        %v402 = vmul.f32 %v363, %v397
        %v403 = vmul.f32 %v364, %v397
        %v404 = vmul.f32 %v365, %v397
        %v405 = vmul.f32 %v366, %v397
        %v406 = vmul.f32 %v367, %v397
        %v407 = vmul.f32 %v368, %v397
        %v408 = vmul.f32 %v369, %v397
        %v409 = vmul.f32 %v370, %v397
        %v410 = vmul.f32 %v371, %v397
        %v411 = vmul.f32 %v372, %v397
        %v412 = vmul.f32 %v373, %v397
        %v413 = vmul.f32 %v374, %v397
        %v414 = vmul.f32 %v375, %v397
        %v415 = vmul.f32 %v376, %v397
        %v416 = vmul.f32 %v377, %v397
        %v417 = vmul.f32 %v378, %v397
        %v418 = vmul.f32 %v379, %v397
        %v419 = vmul.f32 %v380, %v397
        %v420 = vmul.f32 %v381, %v397
        %v421 = vmul.f32 %v382, %v397
        %v422 = vmul.f32 %v383, %v397
        %v423 = vmul.f32 %v384, %v397
        %v424 = vmul.f32 %v385, %v397
        %v425 = vmul.f32 %v386, %v397
        %v426 = vmul.f32 %v387, %v397
        %v427 = vmul.f32 %v388, %v397
        %v428 = vmul.f32 %v389, %v397
        %v429 = vmul.f32 %v390, %v397
        %v430 = vmul.f32 %v391, %v397
        %v431 = vld [vmem:[%s3] sm:$0xff]
        %v432 = vld [vmem:[%s3 + $0x8] sm:$0xff]
        %v433 = vld [vmem:[%s3 + $0x10] sm:$0xff]
        %v434 = vld [vmem:[%s3 + $0x18] sm:$0xff]
        %v435 = vld [vmem:[%s3 + $0x20] sm:$0xff]
        %v436 = vld [vmem:[%s3 + $0x28] sm:$0xff]
        %v437 = vld [vmem:[%s3 + $0x30] sm:$0xff]
        %v438 = vld [vmem:[%s3 + $0x38] sm:$0xff]
        %v439 = vld [vmem:[%s4] sm:$0x3]
        %v441 = vlaneseq
        %v442 = vshrl.u32 %v441, 7
        %v443 = vsub.s32 0, %v442
        %v444 = vrot.slane %v439, %v443
        %v445 = vlaneseq
        %v446 = vshrl.u32 %v445, 7
        %v447 = vsub.s32 1, %v446
        %v448 = vrot.slane %v439, %v447
        %vm451 = vcmask 261120
        %v453 = vsel %vm451, %v399, 0
        %v456 = vsel %vm451, %v400, 0
        %v459 = vsel %vm451, %v401, 0
        %v462 = vsel %vm451, %v402, 0
        %v465 = vsel %vm451, %v403, 0
        %v468 = vsel %vm451, %v404, 0
        %v471 = vsel %vm451, %v405, 0
        %v474 = vsel %vm451, %v406, 0
        %v477 = vsel %vm451, %v407, 0
        %v480 = vsel %vm451, %v408, 0
        %v483 = vsel %vm451, %v409, 0
        %v486 = vsel %vm451, %v410, 0
        %v489 = vsel %vm451, %v411, 0
        %v492 = vsel %vm451, %v412, 0
        %v495 = vsel %vm451, %v413, 0
        %v498 = vsel %vm451, %v414, 0
        %v501 = vsel %vm451, %v415, 0
        %v504 = vsel %vm451, %v416, 0
        %v507 = vsel %vm451, %v417, 0
        %v510 = vsel %vm451, %v418, 0
        %v513 = vsel %vm451, %v419, 0
        %v516 = vsel %vm451, %v420, 0
        %v519 = vsel %vm451, %v421, 0
        %v522 = vsel %vm451, %v422, 0
        %v525 = vsel %vm451, %v423, 0
        %v528 = vsel %vm451, %v424, 0
        %v531 = vsel %vm451, %v425, 0
        %v534 = vsel %vm451, %v426, 0
        %v537 = vsel %vm451, %v427, 0
        %v540 = vsel %vm451, %v428, 0
        %v543 = vsel %vm451, %v429, 0
        %v546 = vsel %vm451, %v430, 0
        %548 = vmatprep.subr.mxu0 0.0
        %549 = vmatpush1.msra.mxu0 0.0
        %550 = vmatprep.subr.mxu0 0.0
        %551 = vmatpush1.msra.mxu0 0.0
        %552 = vmatprep.subr.mxu0 0.0
        %553 = vmatpush1.msra.mxu0 0.0
        %554 = vmatprep.subr.mxu0 0.0
        %555 = vmatpush1.msra.mxu0 0.0
        %556 = vmatprep.subr.mxu0 0.0
        %557 = vmatpush1.msra.mxu0 0.0
        %558 = vmatprep.subr.mxu0 0.0
        %559 = vmatpush1.msra.mxu0 0.0
        %560 = vmatprep.subr.mxu0 0.0
        %561 = vmatpush1.msra.mxu0 0.0
        %562 = vmatprep.subr.mxu0 0.0
        %563 = vmatpush1.msra.mxu0 0.0
        %564 = vmatprep.subr.mxu0 0.0
        %565 = vmatpush1.msra.mxu0 0.0
        %566 = vmatprep.subr.mxu0 0.0
        %567 = vmatpush1.msra.mxu0 0.0
        %568 = vmatprep.subr.mxu0 0.0
        %569 = vmatpush1.msra.mxu0 0.0
        %570 = vmatprep.subr.mxu0 0.0
        %571 = vmatpush1.msra.mxu0 0.0
        %572 = vmatprep.subr.mxu0 %v438
        %573 = vmatpush1.msra.mxu0 %v437
        %574 = vmatprep.subr.mxu0 %v436
        %575 = vmatpush1.msra.mxu0 %v435
        %576 = vmatprep.subr.mxu0 %v434
        %577 = vmatpush1.msra.mxu0 %v433
        %578 = vmatprep.subr.mxu0 %v432
        %579 = vmatpush1.msra.mxu0 %v431
        %580 = vmatprep.subr.mxu0 0.0
        %581 = vmatpush2.msra.mxu0 0.0
        %582 = vmatprep.subr.mxu0 0.0
        %583 = vmatpush2.msra.mxu0 0.0
        %584 = vmatprep.subr.mxu0 0.0
        %585 = vmatpush2.msra.mxu0 0.0
        %586 = vmatprep.subr.mxu0 0.0
        %587 = vmatpush2.msra.mxu0 0.0
        %588 = vmatprep.subr.mxu0 0.0
        %589 = vmatpush2.msra.mxu0 0.0
        %590 = vmatprep.subr.mxu0 0.0
        %591 = vmatpush2.msra.mxu0 0.0
        %592 = vmatprep.subr.mxu0 0.0
        %593 = vmatpush2.msra.mxu0 0.0
        %594 = vmatprep.subr.mxu0 0.0
        %595 = vmatpush2.msra.mxu0 0.0
        %596 = vmatprep.subr.mxu0 0.0
        %597 = vmatpush2.msra.mxu0 0.0
        %598 = vmatprep.subr.mxu0 0.0
        %599 = vmatpush2.msra.mxu0 0.0
        %600 = vmatprep.subr.mxu0 0.0
        %601 = vmatpush2.msra.mxu0 0.0
        %602 = vmatprep.subr.mxu0 0.0
        %603 = vmatpush2.msra.mxu0 0.0
        %604 = vmatprep.subr.mxu0 0.0
        %605 = vmatpush2.msra.mxu0 0.0
        %606 = vmatprep.subr.mxu0 0.0
        %607 = vmatpush2.msra.mxu0 0.0
        %608 = vmatprep.subr.mxu0 0.0
        %609 = vmatpush2.msra.mxu0 0.0
        %610 = vmatprep.subr.mxu0 0.0
        %611 = vmatpush2.msra.mxu0 0.0
        %612 = vmatprep.mubr.f32.mxu0 0.0
        %613 = vmatmul.mubr.f32.gmra.mxu0 %v453
        %v614 = vpop.f32.mrf.mxu0
        %v615 = vadd.f32 %v444, %v614
        %v616 = vpop.f32.mrf.mxu0
        %v617 = vadd.f32 %v448, %v616
        %618 = vmatprep.mubr.f32.mxu0 0.0
        %619 = vmatmul.mubr.f32.gmra.mxu0 %v456
        %v620 = vpop.f32.mrf.mxu0
        %v621 = vadd.f32 %v444, %v620
        %v622 = vpop.f32.mrf.mxu0
        %v623 = vadd.f32 %v448, %v622
        %624 = vmatprep.mubr.f32.mxu0 0.0
        %625 = vmatmul.mubr.f32.gmra.mxu0 %v459
        %v626 = vpop.f32.mrf.mxu0
        %v627 = vadd.f32 %v444, %v626
        %v628 = vpop.f32.mrf.mxu0
        %v629 = vadd.f32 %v448, %v628
        %630 = vmatprep.mubr.f32.mxu0 0.0
        %631 = vmatmul.mubr.f32.gmra.mxu0 %v462
        %v632 = vpop.f32.mrf.mxu0
        %v633 = vadd.f32 %v444, %v632
        %v634 = vpop.f32.mrf.mxu0
        %v635 = vadd.f32 %v448, %v634
        %636 = vmatprep.mubr.f32.mxu0 0.0
        %637 = vmatmul.mubr.f32.gmra.mxu0 %v465
        %v638 = vpop.f32.mrf.mxu0
        %v639 = vadd.f32 %v444, %v638
        %v640 = vpop.f32.mrf.mxu0
        %v641 = vadd.f32 %v448, %v640
        %642 = vmatprep.mubr.f32.mxu0 0.0
        %643 = vmatmul.mubr.f32.gmra.mxu0 %v468
        %v644 = vpop.f32.mrf.mxu0
        %v645 = vadd.f32 %v444, %v644
        %v646 = vpop.f32.mrf.mxu0
        %v647 = vadd.f32 %v448, %v646
        %648 = vmatprep.mubr.f32.mxu0 0.0
        %649 = vmatmul.mubr.f32.gmra.mxu0 %v471
        %v650 = vpop.f32.mrf.mxu0
        %v651 = vadd.f32 %v444, %v650
        %v652 = vpop.f32.mrf.mxu0
        %v653 = vadd.f32 %v448, %v652
        %654 = vmatprep.mubr.f32.mxu0 0.0
        %655 = vmatmul.mubr.f32.gmra.mxu0 %v474
        %v656 = vpop.f32.mrf.mxu0
        %v657 = vadd.f32 %v444, %v656
        %v658 = vpop.f32.mrf.mxu0
        %v659 = vadd.f32 %v448, %v658
        %660 = vmatprep.mubr.f32.mxu0 0.0
        %661 = vmatmul.mubr.f32.gmra.mxu0 %v477
        %v662 = vpop.f32.mrf.mxu0
        %v663 = vadd.f32 %v444, %v662
        %v664 = vpop.f32.mrf.mxu0
        %v665 = vadd.f32 %v448, %v664
        %666 = vmatprep.mubr.f32.mxu0 0.0
        %667 = vmatmul.mubr.f32.gmra.mxu0 %v480
        %v668 = vpop.f32.mrf.mxu0
        %v669 = vadd.f32 %v444, %v668
        %v670 = vpop.f32.mrf.mxu0
        %v671 = vadd.f32 %v448, %v670
        %672 = vmatprep.mubr.f32.mxu0 0.0
        %673 = vmatmul.mubr.f32.gmra.mxu0 %v483
        %v674 = vpop.f32.mrf.mxu0
        %v675 = vadd.f32 %v444, %v674
        %v676 = vpop.f32.mrf.mxu0
        %v677 = vadd.f32 %v448, %v676
        %678 = vmatprep.mubr.f32.mxu0 0.0
        %679 = vmatmul.mubr.f32.gmra.mxu0 %v486
        %v680 = vpop.f32.mrf.mxu0
        %v681 = vadd.f32 %v444, %v680
        %v682 = vpop.f32.mrf.mxu0
        %v683 = vadd.f32 %v448, %v682
        %684 = vmatprep.mubr.f32.mxu0 0.0
        %685 = vmatmul.mubr.f32.gmra.mxu0 %v489
        %v686 = vpop.f32.mrf.mxu0
        %v687 = vadd.f32 %v444, %v686
        %v688 = vpop.f32.mrf.mxu0
        %v689 = vadd.f32 %v448, %v688
        %690 = vmatprep.mubr.f32.mxu0 0.0
        %691 = vmatmul.mubr.f32.gmra.mxu0 %v492
        %v692 = vpop.f32.mrf.mxu0
        %v693 = vadd.f32 %v444, %v692
        %v694 = vpop.f32.mrf.mxu0
        %v695 = vadd.f32 %v448, %v694
        %696 = vmatprep.mubr.f32.mxu0 0.0
        %697 = vmatmul.mubr.f32.gmra.mxu0 %v495
        %v698 = vpop.f32.mrf.mxu0
        %v699 = vadd.f32 %v444, %v698
        %v700 = vpop.f32.mrf.mxu0
        %v701 = vadd.f32 %v448, %v700
        %702 = vmatprep.mubr.f32.mxu0 0.0
        %703 = vmatmul.mubr.f32.gmra.mxu0 %v498
        %v704 = vpop.f32.mrf.mxu0
        %v705 = vadd.f32 %v444, %v704
        %v706 = vpop.f32.mrf.mxu0
        %v707 = vadd.f32 %v448, %v706
        %708 = vmatprep.mubr.f32.mxu0 0.0
        %709 = vmatmul.mubr.f32.gmra.mxu0 %v501
        %v710 = vpop.f32.mrf.mxu0
        %v711 = vadd.f32 %v444, %v710
        %v712 = vpop.f32.mrf.mxu0
        %v713 = vadd.f32 %v448, %v712
        %714 = vmatprep.mubr.f32.mxu0 0.0
        %715 = vmatmul.mubr.f32.gmra.mxu0 %v504
        %v716 = vpop.f32.mrf.mxu0
        %v717 = vadd.f32 %v444, %v716
        %v718 = vpop.f32.mrf.mxu0
        %v719 = vadd.f32 %v448, %v718
        %720 = vmatprep.mubr.f32.mxu0 0.0
        %721 = vmatmul.mubr.f32.gmra.mxu0 %v507
        %v722 = vpop.f32.mrf.mxu0
        %v723 = vadd.f32 %v444, %v722
        %v724 = vpop.f32.mrf.mxu0
        %v725 = vadd.f32 %v448, %v724
        %726 = vmatprep.mubr.f32.mxu0 0.0
        %727 = vmatmul.mubr.f32.gmra.mxu0 %v510
        %v728 = vpop.f32.mrf.mxu0
        %v729 = vadd.f32 %v444, %v728
        %v730 = vpop.f32.mrf.mxu0
        %v731 = vadd.f32 %v448, %v730
        %732 = vmatprep.mubr.f32.mxu0 0.0
        %733 = vmatmul.mubr.f32.gmra.mxu0 %v513
        %v734 = vpop.f32.mrf.mxu0
        %v735 = vadd.f32 %v444, %v734
        %v736 = vpop.f32.mrf.mxu0
        %v737 = vadd.f32 %v448, %v736
        %738 = vmatprep.mubr.f32.mxu0 0.0
        %739 = vmatmul.mubr.f32.gmra.mxu0 %v516
        %v740 = vpop.f32.mrf.mxu0
        %v741 = vadd.f32 %v444, %v740
        %v742 = vpop.f32.mrf.mxu0
        %v743 = vadd.f32 %v448, %v742
        %744 = vmatprep.mubr.f32.mxu0 0.0
        %745 = vmatmul.mubr.f32.gmra.mxu0 %v519
        %v746 = vpop.f32.mrf.mxu0
        %v747 = vadd.f32 %v444, %v746
        %v748 = vpop.f32.mrf.mxu0
        %v749 = vadd.f32 %v448, %v748
        %750 = vmatprep.mubr.f32.mxu0 0.0
        %751 = vmatmul.mubr.f32.gmra.mxu0 %v522
        %v752 = vpop.f32.mrf.mxu0
        %v753 = vadd.f32 %v444, %v752
        %v754 = vpop.f32.mrf.mxu0
        %v755 = vadd.f32 %v448, %v754
        %756 = vmatprep.mubr.f32.mxu0 0.0
        %757 = vmatmul.mubr.f32.gmra.mxu0 %v525
        %v758 = vpop.f32.mrf.mxu0
        %v759 = vadd.f32 %v444, %v758
        %v760 = vpop.f32.mrf.mxu0
        %v761 = vadd.f32 %v448, %v760
        %762 = vmatprep.mubr.f32.mxu0 0.0
        %763 = vmatmul.mubr.f32.gmra.mxu0 %v528
        %v764 = vpop.f32.mrf.mxu0
        %v765 = vadd.f32 %v444, %v764
        %v766 = vpop.f32.mrf.mxu0
        %v767 = vadd.f32 %v448, %v766
        %768 = vmatprep.mubr.f32.mxu0 0.0
        %769 = vmatmul.mubr.f32.gmra.mxu0 %v531
        %v770 = vpop.f32.mrf.mxu0
        %v771 = vadd.f32 %v444, %v770
        %v772 = vpop.f32.mrf.mxu0
        %v773 = vadd.f32 %v448, %v772
        %774 = vmatprep.mubr.f32.mxu0 0.0
        %775 = vmatmul.mubr.f32.gmra.mxu0 %v534
        %v776 = vpop.f32.mrf.mxu0
        %v777 = vadd.f32 %v444, %v776
        %v778 = vpop.f32.mrf.mxu0
        %v779 = vadd.f32 %v448, %v778
        %780 = vmatprep.mubr.f32.mxu0 0.0
        %781 = vmatmul.mubr.f32.gmra.mxu0 %v537
        %v782 = vpop.f32.mrf.mxu0
        %v783 = vadd.f32 %v444, %v782
        %v784 = vpop.f32.mrf.mxu0
        %v785 = vadd.f32 %v448, %v784
        %786 = vmatprep.mubr.f32.mxu0 0.0
        %787 = vmatmul.mubr.f32.gmra.mxu0 %v540
        %v788 = vpop.f32.mrf.mxu0
        %v789 = vadd.f32 %v444, %v788
        %v790 = vpop.f32.mrf.mxu0
        %v791 = vadd.f32 %v448, %v790
        %792 = vmatprep.mubr.f32.mxu0 0.0
        %793 = vmatmul.mubr.f32.gmra.mxu0 %v543
        %v794 = vpop.f32.mrf.mxu0
        %v795 = vadd.f32 %v444, %v794
        %v796 = vpop.f32.mrf.mxu0
        %v797 = vadd.f32 %v448, %v796
        %798 = vmatprep.mubr.f32.mxu0 0.0
        %799 = vmatmul.mubr.f32.gmra.mxu0 %v546
        %v800 = vpop.f32.mrf.mxu0
        %v801 = vadd.f32 %v444, %v800
        %v802 = vpop.f32.mrf.mxu0
        %v803 = vadd.f32 %v448, %v802
        %804 = vdwg.mxu0
        %vm805 = vcmp.ge.f32.partialorder %v615, 0.0
        %vm806 = vcmp.ge.f32.partialorder %v617, 0.0
        %vm807 = vcmp.ge.f32.partialorder %v621, 0.0
        %vm808 = vcmp.ge.f32.partialorder %v623, 0.0
        %vm809 = vcmp.ge.f32.partialorder %v627, 0.0
        %vm810 = vcmp.ge.f32.partialorder %v629, 0.0
        %vm811 = vcmp.ge.f32.partialorder %v633, 0.0
        %vm812 = vcmp.ge.f32.partialorder %v635, 0.0
        %vm813 = vcmp.ge.f32.partialorder %v639, 0.0
        %vm814 = vcmp.ge.f32.partialorder %v641, 0.0
        %vm815 = vcmp.ge.f32.partialorder %v645, 0.0
        %vm816 = vcmp.ge.f32.partialorder %v647, 0.0
        %vm817 = vcmp.ge.f32.partialorder %v651, 0.0
        %vm818 = vcmp.ge.f32.partialorder %v653, 0.0
        %vm819 = vcmp.ge.f32.partialorder %v657, 0.0
        %vm820 = vcmp.ge.f32.partialorder %v659, 0.0
        %vm821 = vcmp.ge.f32.partialorder %v663, 0.0
        %vm822 = vcmp.ge.f32.partialorder %v665, 0.0
        %vm823 = vcmp.ge.f32.partialorder %v669, 0.0
        %vm824 = vcmp.ge.f32.partialorder %v671, 0.0
        %vm825 = vcmp.ge.f32.partialorder %v675, 0.0
        %vm826 = vcmp.ge.f32.partialorder %v677, 0.0
        %vm827 = vcmp.ge.f32.partialorder %v681, 0.0
        %vm828 = vcmp.ge.f32.partialorder %v683, 0.0
        %vm829 = vcmp.ge.f32.partialorder %v687, 0.0
        %vm830 = vcmp.ge.f32.partialorder %v689, 0.0
        %vm831 = vcmp.ge.f32.partialorder %v693, 0.0
        %vm832 = vcmp.ge.f32.partialorder %v695, 0.0
        %vm833 = vcmp.ge.f32.partialorder %v699, 0.0
        %vm834 = vcmp.ge.f32.partialorder %v701, 0.0
        %vm835 = vcmp.ge.f32.partialorder %v705, 0.0
        %vm836 = vcmp.ge.f32.partialorder %v707, 0.0
        %vm837 = vcmp.ge.f32.partialorder %v711, 0.0
        %vm838 = vcmp.ge.f32.partialorder %v713, 0.0
        %vm839 = vcmp.ge.f32.partialorder %v717, 0.0
        %vm840 = vcmp.ge.f32.partialorder %v719, 0.0
        %vm841 = vcmp.ge.f32.partialorder %v723, 0.0
        %vm842 = vcmp.ge.f32.partialorder %v725, 0.0
        %vm843 = vcmp.ge.f32.partialorder %v729, 0.0
        %vm844 = vcmp.ge.f32.partialorder %v731, 0.0
        %vm845 = vcmp.ge.f32.partialorder %v735, 0.0
        %vm846 = vcmp.ge.f32.partialorder %v737, 0.0
        %vm847 = vcmp.ge.f32.partialorder %v741, 0.0
        %vm848 = vcmp.ge.f32.partialorder %v743, 0.0
        %vm849 = vcmp.ge.f32.partialorder %v747, 0.0
        %vm850 = vcmp.ge.f32.partialorder %v749, 0.0
        %vm851 = vcmp.ge.f32.partialorder %v753, 0.0
        %vm852 = vcmp.ge.f32.partialorder %v755, 0.0
        %vm853 = vcmp.ge.f32.partialorder %v759, 0.0
        %vm854 = vcmp.ge.f32.partialorder %v761, 0.0
        %vm855 = vcmp.ge.f32.partialorder %v765, 0.0
        %vm856 = vcmp.ge.f32.partialorder %v767, 0.0
        %vm857 = vcmp.ge.f32.partialorder %v771, 0.0
        %vm858 = vcmp.ge.f32.partialorder %v773, 0.0
        %vm859 = vcmp.ge.f32.partialorder %v777, 0.0
        %vm860 = vcmp.ge.f32.partialorder %v779, 0.0
        %vm861 = vcmp.ge.f32.partialorder %v783, 0.0
        %vm862 = vcmp.ge.f32.partialorder %v785, 0.0
        %vm863 = vcmp.ge.f32.partialorder %v789, 0.0
        %vm864 = vcmp.ge.f32.partialorder %v791, 0.0
        %vm865 = vcmp.ge.f32.partialorder %v795, 0.0
        %vm866 = vcmp.ge.f32.partialorder %v797, 0.0
        %vm867 = vcmp.ge.f32.partialorder %v801, 0.0
        %vm868 = vcmp.ge.f32.partialorder %v803, 0.0
        %v869 = vmul.f32 %v615, 0.01
        %v870 = vmul.f32 %v617, 0.01
        %v871 = vmul.f32 %v621, 0.01
        %v872 = vmul.f32 %v623, 0.01
        %v873 = vmul.f32 %v627, 0.01
        %v874 = vmul.f32 %v629, 0.01
        %v875 = vmul.f32 %v633, 0.01
        %v876 = vmul.f32 %v635, 0.01
        %v877 = vmul.f32 %v639, 0.01
        %v878 = vmul.f32 %v641, 0.01
        %v879 = vmul.f32 %v645, 0.01
        %v880 = vmul.f32 %v647, 0.01
        %v881 = vmul.f32 %v651, 0.01
        %v882 = vmul.f32 %v653, 0.01
        %v883 = vmul.f32 %v657, 0.01
        %v884 = vmul.f32 %v659, 0.01
        %v885 = vmul.f32 %v663, 0.01
        %v886 = vmul.f32 %v665, 0.01
        %v887 = vmul.f32 %v669, 0.01
        %v888 = vmul.f32 %v671, 0.01
        %v889 = vmul.f32 %v675, 0.01
        %v890 = vmul.f32 %v677, 0.01
        %v891 = vmul.f32 %v681, 0.01
        %v892 = vmul.f32 %v683, 0.01
        %v893 = vmul.f32 %v687, 0.01
        %v894 = vmul.f32 %v689, 0.01
        %v895 = vmul.f32 %v693, 0.01
        %v896 = vmul.f32 %v695, 0.01
        %v897 = vmul.f32 %v699, 0.01
        %v898 = vmul.f32 %v701, 0.01
        %v899 = vmul.f32 %v705, 0.01
        %v900 = vmul.f32 %v707, 0.01
        %v901 = vmul.f32 %v711, 0.01
        %v902 = vmul.f32 %v713, 0.01
        %v903 = vmul.f32 %v717, 0.01
        %v904 = vmul.f32 %v719, 0.01
        %v905 = vmul.f32 %v723, 0.01
        %v906 = vmul.f32 %v725, 0.01
        %v907 = vmul.f32 %v729, 0.01
        %v908 = vmul.f32 %v731, 0.01
        %v909 = vmul.f32 %v735, 0.01
        %v910 = vmul.f32 %v737, 0.01
        %v911 = vmul.f32 %v741, 0.01
        %v912 = vmul.f32 %v743, 0.01
        %v913 = vmul.f32 %v747, 0.01
        %v914 = vmul.f32 %v749, 0.01
        %v915 = vmul.f32 %v753, 0.01
        %v916 = vmul.f32 %v755, 0.01
        %v917 = vmul.f32 %v759, 0.01
        %v918 = vmul.f32 %v761, 0.01
        %v919 = vmul.f32 %v765, 0.01
        %v920 = vmul.f32 %v767, 0.01
        %v921 = vmul.f32 %v771, 0.01
        %v922 = vmul.f32 %v773, 0.01
        %v923 = vmul.f32 %v777, 0.01
        %v924 = vmul.f32 %v779, 0.01
        %v925 = vmul.f32 %v783, 0.01
        %v926 = vmul.f32 %v785, 0.01
        %v927 = vmul.f32 %v789, 0.01
        %v928 = vmul.f32 %v791, 0.01
        %v929 = vmul.f32 %v795, 0.01
        %v930 = vmul.f32 %v797, 0.01
        %v931 = vmul.f32 %v801, 0.01
        %v932 = vmul.f32 %v803, 0.01
        %v933 = vsel %vm805, %v615, %v869
        %v934 = vsel %vm806, %v617, %v870
        %v935 = vsel %vm807, %v621, %v871
        %v936 = vsel %vm808, %v623, %v872
        %v937 = vsel %vm809, %v627, %v873
        %v938 = vsel %vm810, %v629, %v874
        %v939 = vsel %vm811, %v633, %v875
        %v940 = vsel %vm812, %v635, %v876
        %v941 = vsel %vm813, %v639, %v877
        %v942 = vsel %vm814, %v641, %v878
        %v943 = vsel %vm815, %v645, %v879
        %v944 = vsel %vm816, %v647, %v880
        %v945 = vsel %vm817, %v651, %v881
        %v946 = vsel %vm818, %v653, %v882
        %v947 = vsel %vm819, %v657, %v883
        %v948 = vsel %vm820, %v659, %v884
        %v949 = vsel %vm821, %v663, %v885
        %v950 = vsel %vm822, %v665, %v886
        %v951 = vsel %vm823, %v669, %v887
        %v952 = vsel %vm824, %v671, %v888
        %v953 = vsel %vm825, %v675, %v889
        %v954 = vsel %vm826, %v677, %v890
        %v955 = vsel %vm827, %v681, %v891
        %v956 = vsel %vm828, %v683, %v892
        %v957 = vsel %vm829, %v687, %v893
        %v958 = vsel %vm830, %v689, %v894
        %v959 = vsel %vm831, %v693, %v895
        %v960 = vsel %vm832, %v695, %v896
        %v961 = vsel %vm833, %v699, %v897
        %v962 = vsel %vm834, %v701, %v898
        %v963 = vsel %vm835, %v705, %v899
        %v964 = vsel %vm836, %v707, %v900
        %v965 = vsel %vm837, %v711, %v901
        %v966 = vsel %vm838, %v713, %v902
        %v967 = vsel %vm839, %v717, %v903
        %v968 = vsel %vm840, %v719, %v904
        %v969 = vsel %vm841, %v723, %v905
        %v970 = vsel %vm842, %v725, %v906
        %v971 = vsel %vm843, %v729, %v907
        %v972 = vsel %vm844, %v731, %v908
        %v973 = vsel %vm845, %v735, %v909
        %v974 = vsel %vm846, %v737, %v910
        %v975 = vsel %vm847, %v741, %v911
        %v976 = vsel %vm848, %v743, %v912
        %v977 = vsel %vm849, %v747, %v913
        %v978 = vsel %vm850, %v749, %v914
        %v979 = vsel %vm851, %v753, %v915
        %v980 = vsel %vm852, %v755, %v916
        %v981 = vsel %vm853, %v759, %v917
        %v982 = vsel %vm854, %v761, %v918
        %v983 = vsel %vm855, %v765, %v919
        %v984 = vsel %vm856, %v767, %v920
        %v985 = vsel %vm857, %v771, %v921
        %v986 = vsel %vm858, %v773, %v922
        %v987 = vsel %vm859, %v777, %v923
        %v988 = vsel %vm860, %v779, %v924
        %v989 = vsel %vm861, %v783, %v925
        %v990 = vsel %vm862, %v785, %v926
        %v991 = vsel %vm863, %v789, %v927
        %v992 = vsel %vm864, %v791, %v928
        %v993 = vsel %vm865, %v795, %v929
        %v994 = vsel %vm866, %v797, %v930
        %v995 = vsel %vm867, %v801, %v931
        %v996 = vsel %vm868, %v803, %v932
        %997 = vst [vmem:[%s300] sm:$0xff] %v933
        %998 = vst [vmem:[%s300 + $0x8] sm:$0xff] %v934
        %999 = vst [vmem:[%s300 + $0x10] sm:$0xff] %v935
        %1000 = vst [vmem:[%s300 + $0x18] sm:$0xff] %v936
        %1001 = vst [vmem:[%s300 + $0x20] sm:$0xff] %v937
        %1002 = vst [vmem:[%s300 + $0x28] sm:$0xff] %v938
        %1003 = vst [vmem:[%s300 + $0x30] sm:$0xff] %v939
        %1004 = vst [vmem:[%s300 + $0x38] sm:$0xff] %v940
        %1005 = vst [vmem:[%s300 + $0x40] sm:$0xff] %v941
        %1006 = vst [vmem:[%s300 + $0x48] sm:$0xff] %v942
        %1007 = vst [vmem:[%s300 + $0x50] sm:$0xff] %v943
        %1008 = vst [vmem:[%s300 + $0x58] sm:$0xff] %v944
        %1009 = vst [vmem:[%s300 + $0x60] sm:$0xff] %v945
        %1010 = vst [vmem:[%s300 + $0x68] sm:$0xff] %v946
        %1011 = vst [vmem:[%s300 + $0x70] sm:$0xff] %v947
        %1012 = vst [vmem:[%s300 + $0x78] sm:$0xff] %v948
        %1013 = vst [vmem:[%s300 + $0x80] sm:$0xff] %v949
        %1014 = vst [vmem:[%s300 + $0x88] sm:$0xff] %v950
        %1015 = vst [vmem:[%s300 + $0x90] sm:$0xff] %v951
        %1016 = vst [vmem:[%s300 + $0x98] sm:$0xff] %v952
        %1017 = vst [vmem:[%s300 + $0xa0] sm:$0xff] %v953
        %1018 = vst [vmem:[%s300 + $0xa8] sm:$0xff] %v954
        %1019 = vst [vmem:[%s300 + $0xb0] sm:$0xff] %v955
        %1020 = vst [vmem:[%s300 + $0xb8] sm:$0xff] %v956
        %1021 = vst [vmem:[%s300 + $0xc0] sm:$0xff] %v957
        %1022 = vst [vmem:[%s300 + $0xc8] sm:$0xff] %v958
        %1023 = vst [vmem:[%s300 + $0xd0] sm:$0xff] %v959
        %1024 = vst [vmem:[%s300 + $0xd8] sm:$0xff] %v960
        %1025 = vst [vmem:[%s300 + $0xe0] sm:$0xff] %v961
        %1026 = vst [vmem:[%s300 + $0xe8] sm:$0xff] %v962
        %1027 = vst [vmem:[%s300 + $0xf0] sm:$0xff] %v963
        %1028 = vst [vmem:[%s300 + $0xf8] sm:$0xff] %v964
        %1029 = vst [vmem:[%s300 + $0x100] sm:$0xff] %v965
        %1030 = vst [vmem:[%s300 + $0x108] sm:$0xff] %v966
        %1031 = vst [vmem:[%s300 + $0x110] sm:$0xff] %v967
        %1032 = vst [vmem:[%s300 + $0x118] sm:$0xff] %v968
        %1033 = vst [vmem:[%s300 + $0x120] sm:$0xff] %v969
        %1034 = vst [vmem:[%s300 + $0x128] sm:$0xff] %v970
        %1035 = vst [vmem:[%s300 + $0x130] sm:$0xff] %v971
        %1036 = vst [vmem:[%s300 + $0x138] sm:$0xff] %v972
        %1037 = vst [vmem:[%s300 + $0x140] sm:$0xff] %v973
        %1038 = vst [vmem:[%s300 + $0x148] sm:$0xff] %v974
        %1039 = vst [vmem:[%s300 + $0x150] sm:$0xff] %v975
        %1040 = vst [vmem:[%s300 + $0x158] sm:$0xff] %v976
        %1041 = vst [vmem:[%s300 + $0x160] sm:$0xff] %v977
        %1042 = vst [vmem:[%s300 + $0x168] sm:$0xff] %v978
        %1043 = vst [vmem:[%s300 + $0x170] sm:$0xff] %v979
        %1044 = vst [vmem:[%s300 + $0x178] sm:$0xff] %v980
        %1045 = vst [vmem:[%s300 + $0x180] sm:$0xff] %v981
        %1046 = vst [vmem:[%s300 + $0x188] sm:$0xff] %v982
        %1047 = vst [vmem:[%s300 + $0x190] sm:$0xff] %v983
        %1048 = vst [vmem:[%s300 + $0x198] sm:$0xff] %v984
        %1049 = vst [vmem:[%s300 + $0x1a0] sm:$0xff] %v985
        %1050 = vst [vmem:[%s300 + $0x1a8] sm:$0xff] %v986
        %1051 = vst [vmem:[%s300 + $0x1b0] sm:$0xff] %v987
        %1052 = vst [vmem:[%s300 + $0x1b8] sm:$0xff] %v988
        %1053 = vst [vmem:[%s300 + $0x1c0] sm:$0xff] %v989
        %1054 = vst [vmem:[%s300 + $0x1c8] sm:$0xff] %v990
        %1055 = vst [vmem:[%s300 + $0x1d0] sm:$0xff] %v991
        %1056 = vst [vmem:[%s300 + $0x1d8] sm:$0xff] %v992
        %1057 = vst [vmem:[%s300 + $0x1e0] sm:$0xff] %v993
        %1058 = vst [vmem:[%s300 + $0x1e8] sm:$0xff] %v994
        %1059 = vst [vmem:[%s300 + $0x1f0] sm:$0xff] %v995
        %1060 = vst [vmem:[%s300 + $0x1f8] sm:$0xff] %v996
        %v1061 = vld [vmem:[%s5] sm:$0xff]
        %v1062 = vld [vmem:[%s5 + $0x8] sm:$0xff]
        %v1063 = vld [vmem:[%s5 + $0x10] sm:$0xff]
        %v1064 = vld [vmem:[%s5 + $0x18] sm:$0xff]
        %v1065 = vld [vmem:[%s5 + $0x20] sm:$0xff]
        %v1066 = vld [vmem:[%s5 + $0x28] sm:$0xff]
        %v1067 = vld [vmem:[%s5 + $0x30] sm:$0xff]
        %v1068 = vld [vmem:[%s5 + $0x38] sm:$0xff]
        %v1069 = vld [vmem:[%s5 + $0x40] sm:$0xff]
        %v1070 = vld [vmem:[%s5 + $0x48] sm:$0xff]
        %v1071 = vld [vmem:[%s5 + $0x50] sm:$0xff]
        %v1072 = vld [vmem:[%s5 + $0x58] sm:$0xff]
        %v1073 = vld [vmem:[%s5 + $0x60] sm:$0xff]
        %v1074 = vld [vmem:[%s5 + $0x68] sm:$0xff]
        %v1075 = vld [vmem:[%s5 + $0x70] sm:$0xff]
        %v1076 = vld [vmem:[%s5 + $0x78] sm:$0xff]
        %v1077 = vld [vmem:[%s5 + $0x80] sm:$0xff]
        %v1078 = vld [vmem:[%s5 + $0x88] sm:$0xff]
        %v1079 = vld [vmem:[%s5 + $0x90] sm:$0xff]
        %v1080 = vld [vmem:[%s5 + $0x98] sm:$0xff]
        %v1081 = vld [vmem:[%s5 + $0xa0] sm:$0xff]
        %v1082 = vld [vmem:[%s5 + $0xa8] sm:$0xff]
        %v1083 = vld [vmem:[%s5 + $0xb0] sm:$0xff]
        %v1084 = vld [vmem:[%s5 + $0xb8] sm:$0xff]
        %v1085 = vld [vmem:[%s5 + $0xc0] sm:$0xff]
        %v1086 = vld [vmem:[%s5 + $0xc8] sm:$0xff]
        %v1087 = vld [vmem:[%s5 + $0xd0] sm:$0xff]
        %v1088 = vld [vmem:[%s5 + $0xd8] sm:$0xff]
        %v1089 = vld [vmem:[%s5 + $0xe0] sm:$0xff]
        %v1090 = vld [vmem:[%s5 + $0xe8] sm:$0xff]
        %v1091 = vld [vmem:[%s5 + $0xf0] sm:$0xff]
        %v1092 = vld [vmem:[%s5 + $0xf8] sm:$0xff]
        %v1093 = vld [vmem:[%s6] sm:$0x1]
        %v1095 = vlaneseq
        %v1096 = vshrl.u32 %v1095, 7
        %v1097 = vsub.s32 0, %v1096
        %v1098 = vrot.slane %v1093, %v1097
        %1100 = vmatprep.subr.mxu0 0.0
        %1101 = vmatpush1.msra.mxu0 %v1076
        %1102 = vmatprep.subr.mxu0 0.0
        %1103 = vmatpush1.msra.mxu0 %v1075
        %1104 = vmatprep.subr.mxu0 0.0
        %1105 = vmatpush1.msra.mxu0 %v1074
        %1106 = vmatprep.subr.mxu0 0.0
        %1107 = vmatpush1.msra.mxu0 %v1073
        %1108 = vmatprep.subr.mxu0 0.0
        %1109 = vmatpush1.msra.mxu0 %v1072
        %1110 = vmatprep.subr.mxu0 0.0
        %1111 = vmatpush1.msra.mxu0 %v1071
        %1112 = vmatprep.subr.mxu0 0.0
        %1113 = vmatpush1.msra.mxu0 %v1070
        %1114 = vmatprep.subr.mxu0 0.0
        %1115 = vmatpush1.msra.mxu0 %v1069
        %1116 = vmatprep.subr.mxu0 0.0
        %1117 = vmatpush1.msra.mxu0 %v1068
        %1118 = vmatprep.subr.mxu0 0.0
        %1119 = vmatpush1.msra.mxu0 %v1067
        %1120 = vmatprep.subr.mxu0 0.0
        %1121 = vmatpush1.msra.mxu0 %v1066
        %1122 = vmatprep.subr.mxu0 0.0
        %1123 = vmatpush1.msra.mxu0 %v1065
        %1124 = vmatprep.subr.mxu0 0.0
        %1125 = vmatpush1.msra.mxu0 %v1064
        %1126 = vmatprep.subr.mxu0 0.0
        %1127 = vmatpush1.msra.mxu0 %v1063
        %1128 = vmatprep.subr.mxu0 0.0
        %1129 = vmatpush1.msra.mxu0 %v1062
        %1130 = vmatprep.subr.mxu0 0.0
        %1131 = vmatpush1.msra.mxu0 %v1061
        %1132 = vmatprep.subr.mxu0 0.0
        %1133 = vmatpush2.msra.mxu0 %v1092
        %1134 = vmatprep.subr.mxu0 0.0
        %1135 = vmatpush2.msra.mxu0 %v1091
        %1136 = vmatprep.subr.mxu0 0.0
        %1137 = vmatpush2.msra.mxu0 %v1090
        %1138 = vmatprep.subr.mxu0 0.0
        %1139 = vmatpush2.msra.mxu0 %v1089
        %1140 = vmatprep.subr.mxu0 0.0
        %1141 = vmatpush2.msra.mxu0 %v1088
        %1142 = vmatprep.subr.mxu0 0.0
        %1143 = vmatpush2.msra.mxu0 %v1087
        %1144 = vmatprep.subr.mxu0 0.0
        %1145 = vmatpush2.msra.mxu0 %v1086
        %1146 = vmatprep.subr.mxu0 0.0
        %1147 = vmatpush2.msra.mxu0 %v1085
        %1148 = vmatprep.subr.mxu0 0.0
        %1149 = vmatpush2.msra.mxu0 %v1084
        %1150 = vmatprep.subr.mxu0 0.0
        %1151 = vmatpush2.msra.mxu0 %v1083
        %1152 = vmatprep.subr.mxu0 0.0
        %1153 = vmatpush2.msra.mxu0 %v1082
        %1154 = vmatprep.subr.mxu0 0.0
        %1155 = vmatpush2.msra.mxu0 %v1081
        %1156 = vmatprep.subr.mxu0 0.0
        %1157 = vmatpush2.msra.mxu0 %v1080
        %1158 = vmatprep.subr.mxu0 0.0
        %1159 = vmatpush2.msra.mxu0 %v1079
        %1160 = vmatprep.subr.mxu0 0.0
        %1161 = vmatpush2.msra.mxu0 %v1078
        %1162 = vmatprep.subr.mxu0 0.0
        %1163 = vmatpush2.msra.mxu0 %v1077
        %1164 = vmatprep.mubr.f32.mxu0 %v934
        %1165 = vmatmul.mubr.f32.gmra.mxu0 %v933
        %v1166 = vpop.f32.mrf.mxu0
        %v1167 = vadd.f32 %v1098, %v1166
        %v1168 = vpop.f32.mrf.mxu0
        %1169 = vmatprep.mubr.f32.mxu0 %v936
        %1170 = vmatmul.mubr.f32.gmra.mxu0 %v935
        %v1171 = vpop.f32.mrf.mxu0
        %v1172 = vadd.f32 %v1098, %v1171
        %v1173 = vpop.f32.mrf.mxu0
        %1174 = vmatprep.mubr.f32.mxu0 %v938
        %1175 = vmatmul.mubr.f32.gmra.mxu0 %v937
        %v1176 = vpop.f32.mrf.mxu0
        %v1177 = vadd.f32 %v1098, %v1176
        %v1178 = vpop.f32.mrf.mxu0
        %1179 = vmatprep.mubr.f32.mxu0 %v940
        %1180 = vmatmul.mubr.f32.gmra.mxu0 %v939
        %v1181 = vpop.f32.mrf.mxu0
        %v1182 = vadd.f32 %v1098, %v1181
        %v1183 = vpop.f32.mrf.mxu0
        %1184 = vmatprep.mubr.f32.mxu0 %v942
        %1185 = vmatmul.mubr.f32.gmra.mxu0 %v941
        %v1186 = vpop.f32.mrf.mxu0
        %v1187 = vadd.f32 %v1098, %v1186
        %v1188 = vpop.f32.mrf.mxu0
        %1189 = vmatprep.mubr.f32.mxu0 %v944
        %1190 = vmatmul.mubr.f32.gmra.mxu0 %v943
        %v1191 = vpop.f32.mrf.mxu0
        %v1192 = vadd.f32 %v1098, %v1191
        %v1193 = vpop.f32.mrf.mxu0
        %1194 = vmatprep.mubr.f32.mxu0 %v946
        %1195 = vmatmul.mubr.f32.gmra.mxu0 %v945
        %v1196 = vpop.f32.mrf.mxu0
        %v1197 = vadd.f32 %v1098, %v1196
        %v1198 = vpop.f32.mrf.mxu0
        %1199 = vmatprep.mubr.f32.mxu0 %v948
        %1200 = vmatmul.mubr.f32.gmra.mxu0 %v947
        %v1201 = vpop.f32.mrf.mxu0
        %v1202 = vadd.f32 %v1098, %v1201
        %v1203 = vpop.f32.mrf.mxu0
        %1204 = vmatprep.mubr.f32.mxu0 %v950
        %1205 = vmatmul.mubr.f32.gmra.mxu0 %v949
        %v1206 = vpop.f32.mrf.mxu0
        %v1207 = vadd.f32 %v1098, %v1206
        %v1208 = vpop.f32.mrf.mxu0
        %1209 = vmatprep.mubr.f32.mxu0 %v952
        %1210 = vmatmul.mubr.f32.gmra.mxu0 %v951
        %v1211 = vpop.f32.mrf.mxu0
        %v1212 = vadd.f32 %v1098, %v1211
        %v1213 = vpop.f32.mrf.mxu0
        %1214 = vmatprep.mubr.f32.mxu0 %v954
        %1215 = vmatmul.mubr.f32.gmra.mxu0 %v953
        %v1216 = vpop.f32.mrf.mxu0
        %v1217 = vadd.f32 %v1098, %v1216
        %v1218 = vpop.f32.mrf.mxu0
        %1219 = vmatprep.mubr.f32.mxu0 %v956
        %1220 = vmatmul.mubr.f32.gmra.mxu0 %v955
        %v1221 = vpop.f32.mrf.mxu0
        %v1222 = vadd.f32 %v1098, %v1221
        %v1223 = vpop.f32.mrf.mxu0
        %1224 = vmatprep.mubr.f32.mxu0 %v958
        %1225 = vmatmul.mubr.f32.gmra.mxu0 %v957
        %v1226 = vpop.f32.mrf.mxu0
        %v1227 = vadd.f32 %v1098, %v1226
        %v1228 = vpop.f32.mrf.mxu0
        %1229 = vmatprep.mubr.f32.mxu0 %v960
        %1230 = vmatmul.mubr.f32.gmra.mxu0 %v959
        %v1231 = vpop.f32.mrf.mxu0
        %v1232 = vadd.f32 %v1098, %v1231
        %v1233 = vpop.f32.mrf.mxu0
        %1234 = vmatprep.mubr.f32.mxu0 %v962
        %1235 = vmatmul.mubr.f32.gmra.mxu0 %v961
        %v1236 = vpop.f32.mrf.mxu0
        %v1237 = vadd.f32 %v1098, %v1236
        %v1238 = vpop.f32.mrf.mxu0
        %1239 = vmatprep.mubr.f32.mxu0 %v964
        %1240 = vmatmul.mubr.f32.gmra.mxu0 %v963
        %v1241 = vpop.f32.mrf.mxu0
        %v1242 = vadd.f32 %v1098, %v1241
        %v1243 = vpop.f32.mrf.mxu0
        %1244 = vmatprep.mubr.f32.mxu0 %v966
        %1245 = vmatmul.mubr.f32.gmra.mxu0 %v965
        %v1246 = vpop.f32.mrf.mxu0
        %v1247 = vadd.f32 %v1098, %v1246
        %v1248 = vpop.f32.mrf.mxu0
        %1249 = vmatprep.mubr.f32.mxu0 %v968
        %1250 = vmatmul.mubr.f32.gmra.mxu0 %v967
        %v1251 = vpop.f32.mrf.mxu0
        %v1252 = vadd.f32 %v1098, %v1251
        %v1253 = vpop.f32.mrf.mxu0
        %1254 = vmatprep.mubr.f32.mxu0 %v970
        %1255 = vmatmul.mubr.f32.gmra.mxu0 %v969
        %v1256 = vpop.f32.mrf.mxu0
        %v1257 = vadd.f32 %v1098, %v1256
        %v1258 = vpop.f32.mrf.mxu0
        %1259 = vmatprep.mubr.f32.mxu0 %v972
        %1260 = vmatmul.mubr.f32.gmra.mxu0 %v971
        %v1261 = vpop.f32.mrf.mxu0
        %v1262 = vadd.f32 %v1098, %v1261
        %v1263 = vpop.f32.mrf.mxu0
        %1264 = vmatprep.mubr.f32.mxu0 %v974
        %1265 = vmatmul.mubr.f32.gmra.mxu0 %v973
        %v1266 = vpop.f32.mrf.mxu0
        %v1267 = vadd.f32 %v1098, %v1266
        %v1268 = vpop.f32.mrf.mxu0
        %1269 = vmatprep.mubr.f32.mxu0 %v976
        %1270 = vmatmul.mubr.f32.gmra.mxu0 %v975
        %v1271 = vpop.f32.mrf.mxu0
        %v1272 = vadd.f32 %v1098, %v1271
        %v1273 = vpop.f32.mrf.mxu0
        %1274 = vmatprep.mubr.f32.mxu0 %v978
        %1275 = vmatmul.mubr.f32.gmra.mxu0 %v977
        %v1276 = vpop.f32.mrf.mxu0
        %v1277 = vadd.f32 %v1098, %v1276
        %v1278 = vpop.f32.mrf.mxu0
        %1279 = vmatprep.mubr.f32.mxu0 %v980
        %1280 = vmatmul.mubr.f32.gmra.mxu0 %v979
        %v1281 = vpop.f32.mrf.mxu0
        %v1282 = vadd.f32 %v1098, %v1281
        %v1283 = vpop.f32.mrf.mxu0
        %1284 = vmatprep.mubr.f32.mxu0 %v982
        %1285 = vmatmul.mubr.f32.gmra.mxu0 %v981
        %v1286 = vpop.f32.mrf.mxu0
        %v1287 = vadd.f32 %v1098, %v1286
        %v1288 = vpop.f32.mrf.mxu0
        %1289 = vmatprep.mubr.f32.mxu0 %v984
        %1290 = vmatmul.mubr.f32.gmra.mxu0 %v983
        %v1291 = vpop.f32.mrf.mxu0
        %v1292 = vadd.f32 %v1098, %v1291
        %v1293 = vpop.f32.mrf.mxu0
        %1294 = vmatprep.mubr.f32.mxu0 %v986
        %1295 = vmatmul.mubr.f32.gmra.mxu0 %v985
        %v1296 = vpop.f32.mrf.mxu0
        %v1297 = vadd.f32 %v1098, %v1296
        %v1298 = vpop.f32.mrf.mxu0
        %1299 = vmatprep.mubr.f32.mxu0 %v988
        %1300 = vmatmul.mubr.f32.gmra.mxu0 %v987
        %v1301 = vpop.f32.mrf.mxu0
        %v1302 = vadd.f32 %v1098, %v1301
        %v1303 = vpop.f32.mrf.mxu0
        %1304 = vmatprep.mubr.f32.mxu0 %v990
        %1305 = vmatmul.mubr.f32.gmra.mxu0 %v989
        %v1306 = vpop.f32.mrf.mxu0
        %v1307 = vadd.f32 %v1098, %v1306
        %v1308 = vpop.f32.mrf.mxu0
        %1309 = vmatprep.mubr.f32.mxu0 %v992
        %1310 = vmatmul.mubr.f32.gmra.mxu0 %v991
        %v1311 = vpop.f32.mrf.mxu0
        %v1312 = vadd.f32 %v1098, %v1311
        %v1313 = vpop.f32.mrf.mxu0
        %1314 = vmatprep.mubr.f32.mxu0 %v994
        %1315 = vmatmul.mubr.f32.gmra.mxu0 %v993
        %v1316 = vpop.f32.mrf.mxu0
        %v1317 = vadd.f32 %v1098, %v1316
        %v1318 = vpop.f32.mrf.mxu0
        %1319 = vmatprep.mubr.f32.mxu0 %v996
        %1320 = vmatmul.mubr.f32.gmra.mxu0 %v995
        %v1321 = vpop.f32.mrf.mxu0
        %v1322 = vadd.f32 %v1098, %v1321
        %v1323 = vpop.f32.mrf.mxu0
        %1324 = vdwg.mxu0
        %1325 = vst [vmem:[%s319] sm:$0xff] %v1167
        %1326 = vst [vmem:[%s319 + $0x8] sm:$0xff] %v1172
        %1327 = vst [vmem:[%s319 + $0x10] sm:$0xff] %v1177
        %1328 = vst [vmem:[%s319 + $0x18] sm:$0xff] %v1182
        %1329 = vst [vmem:[%s319 + $0x20] sm:$0xff] %v1187
        %1330 = vst [vmem:[%s319 + $0x28] sm:$0xff] %v1192
        %1331 = vst [vmem:[%s319 + $0x30] sm:$0xff] %v1197
        %1332 = vst [vmem:[%s319 + $0x38] sm:$0xff] %v1202
        %1333 = vst [vmem:[%s319 + $0x40] sm:$0xff] %v1207
        %1334 = vst [vmem:[%s319 + $0x48] sm:$0xff] %v1212
        %1335 = vst [vmem:[%s319 + $0x50] sm:$0xff] %v1217
        %1336 = vst [vmem:[%s319 + $0x58] sm:$0xff] %v1222
        %1337 = vst [vmem:[%s319 + $0x60] sm:$0xff] %v1227
        %1338 = vst [vmem:[%s319 + $0x68] sm:$0xff] %v1232
        %1339 = vst [vmem:[%s319 + $0x70] sm:$0xff] %v1237
        %1340 = vst [vmem:[%s319 + $0x78] sm:$0xff] %v1242
        %1341 = vst [vmem:[%s319 + $0x80] sm:$0xff] %v1247
        %1342 = vst [vmem:[%s319 + $0x88] sm:$0xff] %v1252
        %1343 = vst [vmem:[%s319 + $0x90] sm:$0xff] %v1257
        %1344 = vst [vmem:[%s319 + $0x98] sm:$0xff] %v1262
        %1345 = vst [vmem:[%s319 + $0xa0] sm:$0xff] %v1267
        %1346 = vst [vmem:[%s319 + $0xa8] sm:$0xff] %v1272
        %1347 = vst [vmem:[%s319 + $0xb0] sm:$0xff] %v1277
        %1348 = vst [vmem:[%s319 + $0xb8] sm:$0xff] %v1282
        %1349 = vst [vmem:[%s319 + $0xc0] sm:$0xff] %v1287
        %1350 = vst [vmem:[%s319 + $0xc8] sm:$0xff] %v1292
        %1351 = vst [vmem:[%s319 + $0xd0] sm:$0xff] %v1297
        %1352 = vst [vmem:[%s319 + $0xd8] sm:$0xff] %v1302
        %1353 = vst [vmem:[%s319 + $0xe0] sm:$0xff] %v1307
        %1354 = vst [vmem:[%s319 + $0xe8] sm:$0xff] %v1312
        %1355 = vst [vmem:[%s319 + $0xf0] sm:$0xff] %v1317
        %1356 = vst [vmem:[%s319 + $0xf8] sm:$0xff] %v1322
        %s1357 = sand.u32 %s183, 1
        %s1358 = scalar_lea.sflag [#allocation3], %s1357
        %s1359 = sand.u32 %s183, 1
        %s1360 = smul.addr %s1359, 512
        %s1361 = scalar_lea.vmem [#allocation2], %s1360
        %s1362 = smul.u32 32, %s23
        %p1363 = scmp.lt.s32.totalorder %s1362, 63
        %s1364 = scalar_select %p1363, %s1362, 63
        %s1365 = smul.addr %s1364, 8
        %s1366 = scalar_lea.vmem %s8, %s1365
        // Predicated region
        $region49: #{bionic_forward.6} parent=47 // pred_check
          %p1367 = pneg %p193
        $region50: #{bionic_forward.6} parent=47 // pred_check_branch
          %1369 = sbr.rel (%p1367) target = $region52
        $region51: #{bionic_forward.6} parent=47 // pred_region
          %s1370 = smul.u32 32, %s23
          %s1372 = ssub.s32 8192, 8192
          %1373 = vsyncadd %s1358, %s1372
          %s1374 = smul.addr %s1370, 2
          %s1375 = smul.addr %s1374, 128
          %s1376 = scalar_lea.hbm %s7, %s1375
          %s1377 = sshll.u32 %s1361, 4
          %s1378 = int_to_ptr.vmem [resolvable:$true] %s1377
          %1383 = dma.vmem_to_hbm [thread:$0]  %s1378, 8192, %s1376, %s1358, 256, 256, 16
        $region52: #{bionic_forward.6} parent=47 // pred_fallthru
          _
        // Predicated region
        $region53: #{bionic_forward.6} parent=47 // pred_check
          %p1384 = pneg %p219
        $region54: #{bionic_forward.6} parent=47 // pred_check_branch
          %1386 = sbr.rel (%p1384) target = $region56
        $region55: #{bionic_forward.6} parent=47 // pred_region
          %s1387 = smul.u32 32, %s23
        $region56: #{bionic_forward.6} parent=47 // pred_fallthru
          _
      $region48: #{bionic_forward.6} parent=5 // pred_fallthru
        _
      %p1388 = scmp.le.s32.totalorder 2, %s18
      // Predicated region
      $region57: #{bionic_forward.6} parent=5 // pred_check
        %p1389 = pneg %p1388
      $region58: #{bionic_forward.6} parent=5 // pred_check_branch
        %1391 = sbr.rel (%p1389) target = $region60
      $region59: #{bionic_forward.6} parent=5 // pred_region
        %s1392 = ssub.s32 %s18, 2
        // Predicated region
        $region61: #{bionic_forward.6} parent=59 // pred_check
          %p1393 = pneg %p199
        $region62: #{bionic_forward.6} parent=59 // pred_check_branch
          %1395 = sbr.rel (%p1393) target = $region64
        $region63: #{bionic_forward.6} parent=59 // pred_region
          %s1396 = sand.u32 %s184, 1
          %s1397 = scalar_lea.sflag [#allocation3], %s1396
          %s1398 = sand.u32 %s184, 1
          %s1399 = smul.addr %s1398, 512
          %s1400 = scalar_lea.vmem [#allocation2], %s1399
          %1401 = dma.done %s1397, 8192
        $region64: #{bionic_forward.6} parent=59 // pred_fallthru
          _
        // Predicated region
        $region65: #{bionic_forward.6} parent=59 // pred_check
          %p1402 = pneg %p225
        $region66: #{bionic_forward.6} parent=59 // pred_check_branch
          %1404 = sbr.rel (%p1402) target = $region68
        $region67: #{bionic_forward.6} parent=59 // pred_region
          %s1405 = smul.u32 32, %s24
          %p1406 = scmp.lt.s32.totalorder %s1405, 63
          %s1407 = scalar_select %p1406, %s1405, 63
          %s1408 = smul.addr %s1407, 8
          %s1409 = scalar_lea.vmem %s8, %s1408
        $region68: #{bionic_forward.6} parent=59 // pred_fallthru
          _
      $region60: #{bionic_forward.6} parent=5 // pred_fallthru
        _
    $region6: #{bionic_forward.6} parent=1 // loop_footer
      %s22 = sadd.s32 1, %s18
    $region7: #{bionic_forward.6} parent=1 // loop_footer_branch
      %17 = sbr.rel target = $region3
    $region8: #{bionic_forward.6} parent=1 // loop_exit
      _
    %1410 = vsyncpa [#allocation3], 1
    %s1411 = scalar_lea.sflag [#allocation3], 1
    %1412 = vsyncpa %s1411, 1

// kernel: bionic_forward.7
$region0: #{bionic_forward.7}
  #allocation0 [shape = 'u32[]', space=smem, size = 0x4, offset = 0x4, fixed_abs, tag = 'smem constant byte address 0x4 - core index']
  #allocation1 [shape = 'u32[144,128]{1,0:T(1,128)}', space=vmem, size = 0x12000, scoped, tag = 'internal scratch']
  %s0 = inlined_call_operand.vmem [shape: bf16[512,32], index: 0, kind: input, shape index: {}, may-alias: {0,1}]
  %s1 = inlined_call_operand.vmem [shape: bf16[512,32], index: 1, kind: input, shape index: {}, may-alias: {0,1}]
  %s2 = inlined_call_operand.hbm [shape: f32[512,512], index: 2, kind: output, shape index: {}]
  %s3 = sld [smem:[#allocation0]]
  $region41: #{bionic_forward.7} parent=0
    _
  %s5 = ssub.s32 1, %s3
  %s6 = scalar_select 0, %s5, %s3
  $region1: #{bionic_forward.7} parent=0
    #allocation2 [shape = 'u8[524288]{0}', space=vmem, size = 0x80000, scoped, tag = 'output window, operand 0']
    #allocation3 [shape = 's32[2]{0}', space=sflag, size = 0x8, scoped, tag = 'scoped memory for bionic_forward.7']
    %7 = vsyncpa [#allocation3], 0
    %s8 = scalar_lea.sflag [#allocation3], 1
    %9 = vsyncpa %s8, 0
    loop: start=0, step=1, limit=6
    $region2: #{bionic_forward.7} parent=1 // loop_pre_header
      _
    $region3: #{bionic_forward.7} parent=1 // loop_header
      %s11 = sphi 0, %s15
      %p12 = scmp.ge.s32.totalorder %s11, 6
      %s18 = sphi 0, %s30
      %s19 = sphi 0, %s26
      %s20 = sphi 0, %s18
      %s21 = sphi 0, %s19
      %s22 = sphi 0, %s20
      %s23 = sphi 0, %s21
      %s33 = sphi 0, %s35
      %s36 = sphi 0, %s33
      %s37 = sphi 0, %s36
      %s53 = sphi 0, %s37
      %s59 = sphi 0, %s61
      %s62 = sphi 0, %s59
      %s63 = sphi 0, %s62
      %s79 = sphi 0, %s63
      %s87 = sphi 0, %s89
      %s90 = sphi 0, %s87
      %s91 = sphi 0, %s90
      %s107 = sphi 0, %s91
    $region4: #{bionic_forward.7} parent=1 // loop_header_branch
      %14 = sbr.rel (%p12) target = $region8
    $region5: #{bionic_forward.7} parent=1 // loop_body
      %s16 = ssub.s32 %s11, 1
      %s17 = ssub.s32 %s11, 2
      %s24 = sadd.s32 1, %s19
      %p25 = scmp.ge.s32.totalorder %s24, 2
      %s26 = scalar_select %p25, 0, %s24
      %s27 = sadd.s32 1, %s18
      %s28 = scalar_select %p25, %s27, %s18
      %p29 = scmp.ge.s32.totalorder %s28, 2
      %s30 = scalar_select %p29, 0, %s28
      %s31 = ssub.s32 %s18, %s30
      %p32 = scmp.eq.s32.totalorder %s31, 0
      %s34 = sadd.s32 %s33, 1
      %s35 = scalar_select %p32, %s33, %s34
      %p38 = pneg %p32
      %p39 = scmp.eq.s32.totalorder %s11, 3
      %p40 = por %p38, %p39
      %p41 = scmp.ne.s32.totalorder %s33, %s36
      %p42 = scmp.eq.s32.totalorder %s11, 0
      %p43 = por %p41, %p42
      %p44 = scmp.ne.s32.totalorder %s33, %s36
      %p45 = scmp.eq.s32.totalorder %s16, 3
      %p46 = por %p44, %p45
      %p47 = scmp.ne.s32.totalorder %s36, %s37
      %p48 = scmp.eq.s32.totalorder %s16, 0
      %p49 = por %p47, %p48
      %p50 = scmp.ne.s32.totalorder %s36, %s37
      %p51 = scmp.eq.s32.totalorder %s17, 3
      %p52 = por %p50, %p51
      %p54 = scmp.ne.s32.totalorder %s37, %s53
      %p55 = scmp.eq.s32.totalorder %s17, 0
      %p56 = por %p54, %p55
      %s57 = ssub.s32 %s19, %s26
      %p58 = scmp.eq.s32.totalorder %s57, 0
      %s60 = sadd.s32 %s59, 1
      %s61 = scalar_select %p58, %s59, %s60
      %p64 = pneg %p58
      %p65 = scmp.eq.s32.totalorder %s11, 3
      %p66 = por %p64, %p65
      %p67 = scmp.ne.s32.totalorder %s59, %s62
      %p68 = scmp.eq.s32.totalorder %s11, 0
      %p69 = por %p67, %p68
      %p70 = scmp.ne.s32.totalorder %s59, %s62
      %p71 = scmp.eq.s32.totalorder %s16, 3
      %p72 = por %p70, %p71
      %p73 = scmp.ne.s32.totalorder %s62, %s63
      %p74 = scmp.eq.s32.totalorder %s16, 0
      %p75 = por %p73, %p74
      %p76 = scmp.ne.s32.totalorder %s62, %s63
      %p77 = scmp.eq.s32.totalorder %s17, 3
      %p78 = por %p76, %p77
      %p80 = scmp.ne.s32.totalorder %s63, %s79
      %p81 = scmp.eq.s32.totalorder %s17, 0
      %p82 = por %p80, %p81
      %s83 = ssub.s32 %s18, %s30
      %s84 = ssub.s32 %s19, %s26
      %s85 = sor.u32 %s83, %s84
      %p86 = scmp.eq.s32.totalorder %s85, 0
      %s88 = sadd.s32 %s87, 1
      %s89 = scalar_select %p86, %s87, %s88
      %p92 = pneg %p86
      %p93 = scmp.eq.s32.totalorder %s11, 3
      %p94 = por %p92, %p93
      %p95 = scmp.ne.s32.totalorder %s87, %s90
      %p96 = scmp.eq.s32.totalorder %s11, 0
      %p97 = por %p95, %p96
      %p98 = scmp.ne.s32.totalorder %s87, %s90
      %p99 = scmp.eq.s32.totalorder %s16, 3
      %p100 = por %p98, %p99
      %p101 = scmp.ne.s32.totalorder %s90, %s91
      %p102 = scmp.eq.s32.totalorder %s16, 0
      %p103 = por %p101, %p102
      %p104 = scmp.ne.s32.totalorder %s90, %s91
      %p105 = scmp.eq.s32.totalorder %s17, 3
      %p106 = por %p104, %p105
      %p108 = scmp.ne.s32.totalorder %s91, %s107
      %p109 = scmp.eq.s32.totalorder %s17, 0
      %p110 = por %p108, %p109
      %p111 = scmp.le.s32.totalorder 1, %s11
      %p112 = scmp.lt.s32.totalorder %s11, 5
      %p113 = pnand %p111, %p112
      %p114 = pneg %p113
      // Predicated region
      $region9: #{bionic_forward.7} parent=5 // pred_check
        _
      $region10: #{bionic_forward.7} parent=5 // pred_check_branch
        %116 = sbr.rel (%p113) target = $region12
      $region11: #{bionic_forward.7} parent=5 // pred_region
        %s117 = ssub.s32 %s11, 1
      $region12: #{bionic_forward.7} parent=5 // pred_fallthru
        _
      %p118 = scmp.lt.s32.totalorder %s11, 4
      // Predicated region
      $region13: #{bionic_forward.7} parent=5 // pred_check
        %p119 = pneg %p118
      $region14: #{bionic_forward.7} parent=5 // pred_check_branch
        %121 = sbr.rel (%p119) target = $region16
      $region15: #{bionic_forward.7} parent=5 // pred_region
        // Predicated region
        $region17: #{bionic_forward.7} parent=15 // pred_check
          %p122 = pneg %p43
        $region18: #{bionic_forward.7} parent=15 // pred_check_branch
          %124 = sbr.rel (%p122) target = $region20
        $region19: #{bionic_forward.7} parent=15 // pred_region
          %s125 = smul.u32 32, %s18
          %p126 = scmp.lt.s32.totalorder %s125, 63
          %s127 = scalar_select %p126, %s125, 63
          %s128 = smul.addr %s127, 4
          %s129 = scalar_lea.vmem %s0, %s128
          %s130 = smul.u32 32, %s18
        $region20: #{bionic_forward.7} parent=15 // pred_fallthru
          _
        // Predicated region
        $region21: #{bionic_forward.7} parent=15 // pred_check
          %p131 = pneg %p69
        $region22: #{bionic_forward.7} parent=15 // pred_check_branch
          %133 = sbr.rel (%p131) target = $region24
        $region23: #{bionic_forward.7} parent=15 // pred_region
          %s134 = smul.u32 32, %s19
          %p135 = scmp.lt.s32.totalorder %s134, 63
          %s136 = scalar_select %p135, %s134, 63
          %s137 = smul.addr %s136, 4
          %s138 = scalar_lea.vmem %s1, %s137
          %s139 = smul.u32 32, %s19
        $region24: #{bionic_forward.7} parent=15 // pred_fallthru
          _
      $region16: #{bionic_forward.7} parent=5 // pred_fallthru
        _
      %p140 = scmp.le.s32.totalorder 1, %s11
      %p141 = scmp.lt.s32.totalorder %s11, 5
      %p142 = pnand %p140, %p141
      %p143 = pneg %p142
      // Predicated region
      $region25: #{bionic_forward.7} parent=5 // pred_check
        _
      $region26: #{bionic_forward.7} parent=5 // pred_check_branch
        %145 = sbr.rel (%p142) target = $region28
      $region27: #{bionic_forward.7} parent=5 // pred_region
        %s146 = ssub.s32 %s11, 1
        %s147 = smul.u32 32, %s20
        %p148 = scmp.lt.s32.totalorder %s147, 63
        %s149 = scalar_select %p148, %s147, 63
        %s150 = smul.addr %s149, 4
        %s151 = scalar_lea.vmem %s0, %s150
        %p152 = pneg %p49
        %p153 = pneg %p46
        %s154 = smul.u32 32, %s21
        %p155 = scmp.lt.s32.totalorder %s154, 63
        %s156 = scalar_select %p155, %s154, 63
        %s157 = smul.addr %s156, 4
        %s158 = scalar_lea.vmem %s1, %s157
        %p159 = pneg %p75
        %p160 = pneg %p72
        %p161 = pneg %p103
        %p162 = pneg %p100
        %s163 = sand.u32 %s90, 1
        %s164 = scalar_lea.sflag [#allocation3], %s163
        %s165 = sand.u32 %s90, 1
        %s166 = smul.addr %s165, 512
        %s167 = scalar_lea.vmem [#allocation2], %s166
        %s168 = smul.u32 32, %s20
        %p169 = scmp.lt.s32.totalorder %s168, 63
        %s170 = scalar_select %p169, %s168, 63
        %s171 = smul.addr %s170, 4
        %s172 = scalar_lea.vmem %s0, %s171
        %s173 = smul.u32 32, %s20
        %s174 = smul.u32 32, %s21
        %p175 = scmp.lt.s32.totalorder %s174, 63
        %s176 = scalar_select %p175, %s174, 63
        %s177 = smul.addr %s176, 4
        %s178 = scalar_lea.vmem %s1, %s177
        %s179 = smul.u32 32, %s21
        %s180 = smul.u32 32, %s20
        %s181 = smul.u32 2, %s21
        %v183 = vld [vmem:[%s172] sm:$0xf]
        %v184 = vld [vmem:[%s172 + $0x4] sm:$0xf]
        %v185 = vld [vmem:[%s172 + $0x8] sm:$0xf]
        %v186 = vld [vmem:[%s172 + $0xc] sm:$0xf]
        %v187 = vld [vmem:[%s172 + $0x10] sm:$0xf]
        %v188 = vld [vmem:[%s172 + $0x14] sm:$0xf]
        %v189 = vld [vmem:[%s172 + $0x18] sm:$0xf]
        %v190 = vld [vmem:[%s172 + $0x1c] sm:$0xf]
        %v191 = vld [vmem:[%s172 + $0x20] sm:$0xf]
        %v192 = vld [vmem:[%s172 + $0x24] sm:$0xf]
        %v193 = vld [vmem:[%s172 + $0x28] sm:$0xf]
        %v194 = vld [vmem:[%s172 + $0x2c] sm:$0xf]
        %v195 = vld [vmem:[%s172 + $0x30] sm:$0xf]
        %v196 = vld [vmem:[%s172 + $0x34] sm:$0xf]
        %v197 = vld [vmem:[%s172 + $0x38] sm:$0xf]
        %v198 = vld [vmem:[%s172 + $0x3c] sm:$0xf]
        %v199 = vld [vmem:[%s172 + $0x40] sm:$0xf]
        %v200 = vld [vmem:[%s172 + $0x44] sm:$0xf]
        %v201 = vld [vmem:[%s172 + $0x48] sm:$0xf]
        %v202 = vld [vmem:[%s172 + $0x4c] sm:$0xf]
        %v203 = vld [vmem:[%s172 + $0x50] sm:$0xf]
        %v204 = vld [vmem:[%s172 + $0x54] sm:$0xf]
        %v205 = vld [vmem:[%s172 + $0x58] sm:$0xf]
        %v206 = vld [vmem:[%s172 + $0x5c] sm:$0xf]
        %v207 = vld [vmem:[%s172 + $0x60] sm:$0xf]
        %v208 = vld [vmem:[%s172 + $0x64] sm:$0xf]
        %v209 = vld [vmem:[%s172 + $0x68] sm:$0xf]
        %v210 = vld [vmem:[%s172 + $0x6c] sm:$0xf]
        %v211 = vld [vmem:[%s172 + $0x70] sm:$0xf]
        %v212 = vld [vmem:[%s172 + $0x74] sm:$0xf]
        %v213 = vld [vmem:[%s172 + $0x78] sm:$0xf]
        %v214 = vld [vmem:[%s172 + $0x7c] sm:$0xf]
        %v215 = vld [vmem:[%s178] sm:$0xf]
        %v216 = vld [vmem:[%s178 + $0x4] sm:$0xf]
        %v217 = vld [vmem:[%s178 + $0x8] sm:$0xf]
        %v218 = vld [vmem:[%s178 + $0xc] sm:$0xf]
        %v219 = vld [vmem:[%s178 + $0x10] sm:$0xf]
        %v220 = vld [vmem:[%s178 + $0x14] sm:$0xf]
        %v221 = vld [vmem:[%s178 + $0x18] sm:$0xf]
        %v222 = vld [vmem:[%s178 + $0x1c] sm:$0xf]
        %v223 = vld [vmem:[%s178 + $0x20] sm:$0xf]
        %v224 = vld [vmem:[%s178 + $0x24] sm:$0xf]
        %v225 = vld [vmem:[%s178 + $0x28] sm:$0xf]
        %v226 = vld [vmem:[%s178 + $0x2c] sm:$0xf]
        %v227 = vld [vmem:[%s178 + $0x30] sm:$0xf]
        %v228 = vld [vmem:[%s178 + $0x34] sm:$0xf]
        %v229 = vld [vmem:[%s178 + $0x38] sm:$0xf]
        %v230 = vld [vmem:[%s178 + $0x3c] sm:$0xf]
        %v231 = vld [vmem:[%s178 + $0x40] sm:$0xf]
        %v232 = vld [vmem:[%s178 + $0x44] sm:$0xf]
        %v233 = vld [vmem:[%s178 + $0x48] sm:$0xf]
        %v234 = vld [vmem:[%s178 + $0x4c] sm:$0xf]
        %v235 = vld [vmem:[%s178 + $0x50] sm:$0xf]
        %v236 = vld [vmem:[%s178 + $0x54] sm:$0xf]
        %v237 = vld [vmem:[%s178 + $0x58] sm:$0xf]
        %v238 = vld [vmem:[%s178 + $0x5c] sm:$0xf]
        %v239 = vld [vmem:[%s178 + $0x60] sm:$0xf]
        %v240 = vld [vmem:[%s178 + $0x64] sm:$0xf]
        %v241 = vld [vmem:[%s178 + $0x68] sm:$0xf]
        %v242 = vld [vmem:[%s178 + $0x6c] sm:$0xf]
        %v243 = vld [vmem:[%s178 + $0x70] sm:$0xf]
        %v244 = vld [vmem:[%s178 + $0x74] sm:$0xf]
        %v245 = vld [vmem:[%s178 + $0x78] sm:$0xf]
        %v246 = vld [vmem:[%s178 + $0x7c] sm:$0xf]
        %v279 = vunpack.c.l.b16 %v183
        %v280 = vunpack.c.l.b16 %v184
        %v281 = vunpack.c.l.b16 %v185
        %v282 = vunpack.c.l.b16 %v186
        %v283 = vunpack.c.l.b16 %v187
        %v284 = vunpack.c.l.b16 %v188
        %v285 = vunpack.c.l.b16 %v189
        %v286 = vunpack.c.l.b16 %v190
        %v287 = vunpack.c.l.b16 %v191
        %v288 = vunpack.c.l.b16 %v192
        %v289 = vunpack.c.l.b16 %v193
        %v290 = vunpack.c.l.b16 %v194
        %v291 = vunpack.c.l.b16 %v195
        %v292 = vunpack.c.l.b16 %v196
        %v293 = vunpack.c.l.b16 %v197
        %v294 = vunpack.c.l.b16 %v198
        %v295 = vunpack.c.l.b16 %v199
        %v296 = vunpack.c.l.b16 %v200
        %v297 = vunpack.c.l.b16 %v201
        %v298 = vunpack.c.l.b16 %v202
        %v299 = vunpack.c.l.b16 %v203
        %v300 = vunpack.c.l.b16 %v204
        %v301 = vunpack.c.l.b16 %v205
        %v302 = vunpack.c.l.b16 %v206
        %v303 = vunpack.c.l.b16 %v207
        %v304 = vunpack.c.l.b16 %v208
        %v305 = vunpack.c.l.b16 %v209
        %v306 = vunpack.c.l.b16 %v210
        %v307 = vunpack.c.l.b16 %v211
        %v308 = vunpack.c.l.b16 %v212
        %v309 = vunpack.c.l.b16 %v213
        %v310 = vunpack.c.l.b16 %v214
        %v311 = vpack.c.b16 %v280, %v279
        %v312 = vpack.c.b16 %v282, %v281
        %v313 = vpack.c.b16 %v284, %v283
        %v314 = vpack.c.b16 %v286, %v285
        %v315 = vpack.c.b16 %v288, %v287
        %v316 = vpack.c.b16 %v290, %v289
        %v317 = vpack.c.b16 %v292, %v291
        %v318 = vpack.c.b16 %v294, %v293
        %v319 = vpack.c.b16 %v296, %v295
        %v320 = vpack.c.b16 %v298, %v297
        %v321 = vpack.c.b16 %v300, %v299
        %v322 = vpack.c.b16 %v302, %v301
        %v323 = vpack.c.b16 %v304, %v303
        %v324 = vpack.c.b16 %v306, %v305
        %v325 = vpack.c.b16 %v308, %v307
        %v326 = vpack.c.b16 %v310, %v309
        %v359 = vunpack.c.l.b16 %v215
        %v360 = vunpack.c.l.b16 %v216
        %v361 = vunpack.c.l.b16 %v217
        %v362 = vunpack.c.l.b16 %v218
        %v363 = vunpack.c.l.b16 %v219
        %v364 = vunpack.c.l.b16 %v220
        %v365 = vunpack.c.l.b16 %v221
        %v366 = vunpack.c.l.b16 %v222
        %v367 = vunpack.c.l.b16 %v223
        %v368 = vunpack.c.l.b16 %v224
        %v369 = vunpack.c.l.b16 %v225
        %v370 = vunpack.c.l.b16 %v226
        %v371 = vunpack.c.l.b16 %v227
        %v372 = vunpack.c.l.b16 %v228
        %v373 = vunpack.c.l.b16 %v229
        %v374 = vunpack.c.l.b16 %v230
        %v375 = vunpack.c.l.b16 %v231
        %v376 = vunpack.c.l.b16 %v232
        %v377 = vunpack.c.l.b16 %v233
        %v378 = vunpack.c.l.b16 %v234
        %v379 = vunpack.c.l.b16 %v235
        %v380 = vunpack.c.l.b16 %v236
        %v381 = vunpack.c.l.b16 %v237
        %v382 = vunpack.c.l.b16 %v238
        %v383 = vunpack.c.l.b16 %v239
        %v384 = vunpack.c.l.b16 %v240
        %v385 = vunpack.c.l.b16 %v241
        %v386 = vunpack.c.l.b16 %v242
        %v387 = vunpack.c.l.b16 %v243
        %v388 = vunpack.c.l.b16 %v244
        %v389 = vunpack.c.l.b16 %v245
        %v390 = vunpack.c.l.b16 %v246
        %v391 = vpack.c.b16 %v360, %v359
        %v392 = vpack.c.b16 %v362, %v361
        %v393 = vpack.c.b16 %v364, %v363
        %v394 = vpack.c.b16 %v366, %v365
        %v395 = vpack.c.b16 %v368, %v367
        %v396 = vpack.c.b16 %v370, %v369
        %v397 = vpack.c.b16 %v372, %v371
        %v398 = vpack.c.b16 %v374, %v373
        %v399 = vpack.c.b16 %v376, %v375
        %v400 = vpack.c.b16 %v378, %v377
        %v401 = vpack.c.b16 %v380, %v379
        %v402 = vpack.c.b16 %v382, %v381
        %v403 = vpack.c.b16 %v384, %v383
        %v404 = vpack.c.b16 %v386, %v385
        %v405 = vpack.c.b16 %v388, %v387
        %v406 = vpack.c.b16 %v390, %v389
        %vm407 = vcmask 261120
        %v409 = vsel %vm407, %v311, 0
        %v412 = vsel %vm407, %v312, 0
        %v415 = vsel %vm407, %v313, 0
        %v418 = vsel %vm407, %v314, 0
        %v421 = vsel %vm407, %v315, 0
        %v424 = vsel %vm407, %v316, 0
        %v427 = vsel %vm407, %v317, 0
        %v430 = vsel %vm407, %v318, 0
        %v433 = vsel %vm407, %v319, 0
        %v436 = vsel %vm407, %v320, 0
        %v439 = vsel %vm407, %v321, 0
        %v442 = vsel %vm407, %v322, 0
        %v445 = vsel %vm407, %v323, 0
        %v448 = vsel %vm407, %v324, 0
        %v451 = vsel %vm407, %v325, 0
        %v454 = vsel %vm407, %v326, 0
        %v457 = vsel %vm407, %v391, 0
        %v460 = vsel %vm407, %v392, 0
        %v463 = vsel %vm407, %v393, 0
        %v466 = vsel %vm407, %v394, 0
        %v469 = vsel %vm407, %v395, 0
        %v472 = vsel %vm407, %v396, 0
        %v475 = vsel %vm407, %v397, 0
        %v478 = vsel %vm407, %v398, 0
        %v481 = vsel %vm407, %v399, 0
        %v484 = vsel %vm407, %v400, 0
        %v487 = vsel %vm407, %v401, 0
        %v490 = vsel %vm407, %v402, 0
        %v493 = vsel %vm407, %v403, 0
        %v496 = vsel %vm407, %v404, 0
        %v499 = vsel %vm407, %v405, 0
        %v502 = vsel %vm407, %v406, 0
        %504 = vmatprep.subr.bf16.mxu0 0
        %505 = vmatpush1.bf16.xpose.msra.mxu0 %v478
        %506 = vmatprep.subr.bf16.mxu0 0
        %507 = vmatpush1.bf16.xpose.msra.mxu0 %v475
        %508 = vmatprep.subr.bf16.mxu0 0
        %509 = vmatpush1.bf16.xpose.msra.mxu0 %v472
        %510 = vmatprep.subr.bf16.mxu0 0
        %511 = vmatpush1.bf16.xpose.msra.mxu0 %v469
        %512 = vmatprep.subr.bf16.mxu0 0
        %513 = vmatpush1.bf16.xpose.msra.mxu0 %v466
        %514 = vmatprep.subr.bf16.mxu0 0
        %515 = vmatpush1.bf16.xpose.msra.mxu0 %v463
        %516 = vmatprep.subr.bf16.mxu0 0
        %517 = vmatpush1.bf16.xpose.msra.mxu0 %v460
        %518 = vmatprep.subr.bf16.mxu0 0
        %519 = vmatpush1.bf16.xpose.msra.mxu0 %v457
        %520 = vmatprep.subr.bf16.mxu0 0
        %521 = vmatpush2.bf16.xpose.msra.mxu0 %v502
        %522 = vmatprep.subr.bf16.mxu0 0
        %523 = vmatpush2.bf16.xpose.msra.mxu0 %v499
        %524 = vmatprep.subr.bf16.mxu0 0
        %525 = vmatpush2.bf16.xpose.msra.mxu0 %v496
        %526 = vmatprep.subr.bf16.mxu0 0
        %527 = vmatpush2.bf16.xpose.msra.mxu0 %v493
        %528 = vmatprep.subr.bf16.mxu0 0
        %529 = vmatpush2.bf16.xpose.msra.mxu0 %v490
        %530 = vmatprep.subr.bf16.mxu0 0
        %531 = vmatpush2.bf16.xpose.msra.mxu0 %v487
        %532 = vmatprep.subr.bf16.mxu0 0
        %533 = vmatpush2.bf16.xpose.msra.mxu0 %v484
        %534 = vmatprep.subr.bf16.mxu0 0
        %535 = vmatpush2.bf16.xpose.msra.mxu0 %v481
        %536 = vmatprep.mubr.bf16.mxu0 0
        %537 = vmatmul.mubr.bf16.gmra.mxu0 %v409
        %v538 = vpop.f32.mrf.mxu0
        %v539 = vadd.f32 0.0, %v538
        %v540 = vpop.f32.mrf.mxu0
        %v541 = vadd.f32 0.0, %v540
        %v542 = vpop.f32.mrf.mxu0
        %v543 = vadd.f32 0.0, %v542
        %v544 = vpop.f32.mrf.mxu0
        %v545 = vadd.f32 0.0, %v544
        %546 = vmatprep.mubr.bf16.mxu0 0
        %547 = vmatmul.mubr.bf16.gmra.mxu0 %v412
        %v548 = vpop.f32.mrf.mxu0
        %v549 = vadd.f32 0.0, %v548
        %v550 = vpop.f32.mrf.mxu0
        %v551 = vadd.f32 0.0, %v550
        %v552 = vpop.f32.mrf.mxu0
        %v553 = vadd.f32 0.0, %v552
        %v554 = vpop.f32.mrf.mxu0
        %v555 = vadd.f32 0.0, %v554
        %556 = vmatprep.mubr.bf16.mxu0 0
        %557 = vmatmul.mubr.bf16.gmra.mxu0 %v415
        %v558 = vpop.f32.mrf.mxu0
        %v559 = vadd.f32 0.0, %v558
        %v560 = vpop.f32.mrf.mxu0
        %v561 = vadd.f32 0.0, %v560
        %v562 = vpop.f32.mrf.mxu0
        %v563 = vadd.f32 0.0, %v562
        %v564 = vpop.f32.mrf.mxu0
        %v565 = vadd.f32 0.0, %v564
        %566 = vmatprep.mubr.bf16.mxu0 0
        %567 = vmatmul.mubr.bf16.gmra.mxu0 %v418
        %v568 = vpop.f32.mrf.mxu0
        %v569 = vadd.f32 0.0, %v568
        %v570 = vpop.f32.mrf.mxu0
        %v571 = vadd.f32 0.0, %v570
        %v572 = vpop.f32.mrf.mxu0
        %v573 = vadd.f32 0.0, %v572
        %v574 = vpop.f32.mrf.mxu0
        %v575 = vadd.f32 0.0, %v574
        %576 = vmatprep.mubr.bf16.mxu0 0
        %577 = vmatmul.mubr.bf16.gmra.mxu0 %v421
        %v578 = vpop.f32.mrf.mxu0
        %v579 = vadd.f32 0.0, %v578
        %v580 = vpop.f32.mrf.mxu0
        %v581 = vadd.f32 0.0, %v580
        %v582 = vpop.f32.mrf.mxu0
        %v583 = vadd.f32 0.0, %v582
        %v584 = vpop.f32.mrf.mxu0
        %v585 = vadd.f32 0.0, %v584
        %586 = vmatprep.mubr.bf16.mxu0 0
        %587 = vmatmul.mubr.bf16.gmra.mxu0 %v424
        %v588 = vpop.f32.mrf.mxu0
        %v589 = vadd.f32 0.0, %v588
        %v590 = vpop.f32.mrf.mxu0
        %v591 = vadd.f32 0.0, %v590
        %v592 = vpop.f32.mrf.mxu0
        %v593 = vadd.f32 0.0, %v592
        %v594 = vpop.f32.mrf.mxu0
        %v595 = vadd.f32 0.0, %v594
        %596 = vmatprep.mubr.bf16.mxu0 0
        %597 = vmatmul.mubr.bf16.gmra.mxu0 %v427
        %v598 = vpop.f32.mrf.mxu0
        %v599 = vadd.f32 0.0, %v598
        %v600 = vpop.f32.mrf.mxu0
        %v601 = vadd.f32 0.0, %v600
        %v602 = vpop.f32.mrf.mxu0
        %v603 = vadd.f32 0.0, %v602
        %v604 = vpop.f32.mrf.mxu0
        %v605 = vadd.f32 0.0, %v604
        %606 = vmatprep.mubr.bf16.mxu0 0
        %607 = vmatmul.mubr.bf16.gmra.mxu0 %v430
        %v608 = vpop.f32.mrf.mxu0
        %v609 = vadd.f32 0.0, %v608
        %v610 = vpop.f32.mrf.mxu0
        %v611 = vadd.f32 0.0, %v610
        %v612 = vpop.f32.mrf.mxu0
        %v613 = vadd.f32 0.0, %v612
        %v614 = vpop.f32.mrf.mxu0
        %v615 = vadd.f32 0.0, %v614
        %616 = vmatprep.mubr.bf16.mxu0 0
        %617 = vmatmul.mubr.bf16.gmra.mxu0 %v433
        %v618 = vpop.f32.mrf.mxu0
        %v619 = vadd.f32 0.0, %v618
        %v620 = vpop.f32.mrf.mxu0
        %v621 = vadd.f32 0.0, %v620
        %v622 = vpop.f32.mrf.mxu0
        %v623 = vadd.f32 0.0, %v622
        %v624 = vpop.f32.mrf.mxu0
        %v625 = vadd.f32 0.0, %v624
        %626 = vmatprep.mubr.bf16.mxu0 0
        %627 = vmatmul.mubr.bf16.gmra.mxu0 %v436
        %v628 = vpop.f32.mrf.mxu0
        %v629 = vadd.f32 0.0, %v628
        %v630 = vpop.f32.mrf.mxu0
        %v631 = vadd.f32 0.0, %v630
        %v632 = vpop.f32.mrf.mxu0
        %v633 = vadd.f32 0.0, %v632
        %v634 = vpop.f32.mrf.mxu0
        %v635 = vadd.f32 0.0, %v634
        %636 = vmatprep.mubr.bf16.mxu0 0
        %637 = vmatmul.mubr.bf16.gmra.mxu0 %v439
        %v638 = vpop.f32.mrf.mxu0
        %v639 = vadd.f32 0.0, %v638
        %v640 = vpop.f32.mrf.mxu0
        %v641 = vadd.f32 0.0, %v640
        %v642 = vpop.f32.mrf.mxu0
        %v643 = vadd.f32 0.0, %v642
        %v644 = vpop.f32.mrf.mxu0
        %v645 = vadd.f32 0.0, %v644
        %646 = vmatprep.mubr.bf16.mxu0 0
        %647 = vmatmul.mubr.bf16.gmra.mxu0 %v442
        %v648 = vpop.f32.mrf.mxu0
        %v649 = vadd.f32 0.0, %v648
        %v650 = vpop.f32.mrf.mxu0
        %v651 = vadd.f32 0.0, %v650
        %v652 = vpop.f32.mrf.mxu0
        %v653 = vadd.f32 0.0, %v652
        %v654 = vpop.f32.mrf.mxu0
        %v655 = vadd.f32 0.0, %v654
        %656 = vmatprep.mubr.bf16.mxu0 0
        %657 = vmatmul.mubr.bf16.gmra.mxu0 %v445
        %v658 = vpop.f32.mrf.mxu0
        %v659 = vadd.f32 0.0, %v658
        %v660 = vpop.f32.mrf.mxu0
        %v661 = vadd.f32 0.0, %v660
        %v662 = vpop.f32.mrf.mxu0
        %v663 = vadd.f32 0.0, %v662
        %v664 = vpop.f32.mrf.mxu0
        %v665 = vadd.f32 0.0, %v664
        %666 = vmatprep.mubr.bf16.mxu0 0
        %667 = vmatmul.mubr.bf16.gmra.mxu0 %v448
        %v668 = vpop.f32.mrf.mxu0
        %v669 = vadd.f32 0.0, %v668
        %v670 = vpop.f32.mrf.mxu0
        %v671 = vadd.f32 0.0, %v670
        %v672 = vpop.f32.mrf.mxu0
        %v673 = vadd.f32 0.0, %v672
        %v674 = vpop.f32.mrf.mxu0
        %v675 = vadd.f32 0.0, %v674
        %676 = vmatprep.mubr.bf16.mxu0 0
        %677 = vmatmul.mubr.bf16.gmra.mxu0 %v451
        %v678 = vpop.f32.mrf.mxu0
        %v679 = vadd.f32 0.0, %v678
        %v680 = vpop.f32.mrf.mxu0
        %v681 = vadd.f32 0.0, %v680
        %v682 = vpop.f32.mrf.mxu0
        %v683 = vadd.f32 0.0, %v682
        %v684 = vpop.f32.mrf.mxu0
        %v685 = vadd.f32 0.0, %v684
        %686 = vmatprep.mubr.bf16.mxu0 0
        %687 = vmatmul.mubr.bf16.gmra.mxu0 %v454
        %v688 = vpop.f32.mrf.mxu0
        %v689 = vadd.f32 0.0, %v688
        %v690 = vpop.f32.mrf.mxu0
        %v691 = vadd.f32 0.0, %v690
        %v692 = vpop.f32.mrf.mxu0
        %v693 = vadd.f32 0.0, %v692
        %v694 = vpop.f32.mrf.mxu0
        %v695 = vadd.f32 0.0, %v694
        %696 = vdwg.mxu0
        %697 = vst [vmem:[%s167] sm:$0xff] %v539
        %698 = vst [vmem:[%s167 + $0x8] sm:$0xff] %v541
        %699 = vst [vmem:[%s167 + $0x10] sm:$0xff] %v543
        %700 = vst [vmem:[%s167 + $0x18] sm:$0xff] %v545
        %701 = vst [vmem:[%s167 + $0x20] sm:$0xff] %v549
        %702 = vst [vmem:[%s167 + $0x28] sm:$0xff] %v551
        %703 = vst [vmem:[%s167 + $0x30] sm:$0xff] %v553
        %704 = vst [vmem:[%s167 + $0x38] sm:$0xff] %v555
        %705 = vst [vmem:[%s167 + $0x40] sm:$0xff] %v559
        %706 = vst [vmem:[%s167 + $0x48] sm:$0xff] %v561
        %707 = vst [vmem:[%s167 + $0x50] sm:$0xff] %v563
        %708 = vst [vmem:[%s167 + $0x58] sm:$0xff] %v565
        %709 = vst [vmem:[%s167 + $0x60] sm:$0xff] %v569
        %710 = vst [vmem:[%s167 + $0x68] sm:$0xff] %v571
        %711 = vst [vmem:[%s167 + $0x70] sm:$0xff] %v573
        %712 = vst [vmem:[%s167 + $0x78] sm:$0xff] %v575
        %713 = vst [vmem:[%s167 + $0x80] sm:$0xff] %v579
        %714 = vst [vmem:[%s167 + $0x88] sm:$0xff] %v581
        %715 = vst [vmem:[%s167 + $0x90] sm:$0xff] %v583
        %716 = vst [vmem:[%s167 + $0x98] sm:$0xff] %v585
        %717 = vst [vmem:[%s167 + $0xa0] sm:$0xff] %v589
        %718 = vst [vmem:[%s167 + $0xa8] sm:$0xff] %v591
        %719 = vst [vmem:[%s167 + $0xb0] sm:$0xff] %v593
        %720 = vst [vmem:[%s167 + $0xb8] sm:$0xff] %v595
        %721 = vst [vmem:[%s167 + $0xc0] sm:$0xff] %v599
        %722 = vst [vmem:[%s167 + $0xc8] sm:$0xff] %v601
        %723 = vst [vmem:[%s167 + $0xd0] sm:$0xff] %v603
        %724 = vst [vmem:[%s167 + $0xd8] sm:$0xff] %v605
        %725 = vst [vmem:[%s167 + $0xe0] sm:$0xff] %v609
        %726 = vst [vmem:[%s167 + $0xe8] sm:$0xff] %v611
        %727 = vst [vmem:[%s167 + $0xf0] sm:$0xff] %v613
        %728 = vst [vmem:[%s167 + $0xf8] sm:$0xff] %v615
        %729 = vst [vmem:[%s167 + $0x100] sm:$0xff] %v619
        %730 = vst [vmem:[%s167 + $0x108] sm:$0xff] %v621
        %731 = vst [vmem:[%s167 + $0x110] sm:$0xff] %v623
        %732 = vst [vmem:[%s167 + $0x118] sm:$0xff] %v625
        %733 = vst [vmem:[%s167 + $0x120] sm:$0xff] %v629
        %734 = vst [vmem:[%s167 + $0x128] sm:$0xff] %v631
        %735 = vst [vmem:[%s167 + $0x130] sm:$0xff] %v633
        %736 = vst [vmem:[%s167 + $0x138] sm:$0xff] %v635
        %737 = vst [vmem:[%s167 + $0x140] sm:$0xff] %v639
        %738 = vst [vmem:[%s167 + $0x148] sm:$0xff] %v641
        %739 = vst [vmem:[%s167 + $0x150] sm:$0xff] %v643
        %740 = vst [vmem:[%s167 + $0x158] sm:$0xff] %v645
        %741 = vst [vmem:[%s167 + $0x160] sm:$0xff] %v649
        %742 = vst [vmem:[%s167 + $0x168] sm:$0xff] %v651
        %743 = vst [vmem:[%s167 + $0x170] sm:$0xff] %v653
        %744 = vst [vmem:[%s167 + $0x178] sm:$0xff] %v655
        %745 = vst [vmem:[%s167 + $0x180] sm:$0xff] %v659
        %746 = vst [vmem:[%s167 + $0x188] sm:$0xff] %v661
        %747 = vst [vmem:[%s167 + $0x190] sm:$0xff] %v663
        %748 = vst [vmem:[%s167 + $0x198] sm:$0xff] %v665
        %749 = vst [vmem:[%s167 + $0x1a0] sm:$0xff] %v669
        %750 = vst [vmem:[%s167 + $0x1a8] sm:$0xff] %v671
        %751 = vst [vmem:[%s167 + $0x1b0] sm:$0xff] %v673
        %752 = vst [vmem:[%s167 + $0x1b8] sm:$0xff] %v675
        %753 = vst [vmem:[%s167 + $0x1c0] sm:$0xff] %v679
        %754 = vst [vmem:[%s167 + $0x1c8] sm:$0xff] %v681
        %755 = vst [vmem:[%s167 + $0x1d0] sm:$0xff] %v683
        %756 = vst [vmem:[%s167 + $0x1d8] sm:$0xff] %v685
        %757 = vst [vmem:[%s167 + $0x1e0] sm:$0xff] %v689
        %758 = vst [vmem:[%s167 + $0x1e8] sm:$0xff] %v691
        %759 = vst [vmem:[%s167 + $0x1f0] sm:$0xff] %v693
        %760 = vst [vmem:[%s167 + $0x1f8] sm:$0xff] %v695
        %s761 = sand.u32 %s90, 1
        %s762 = scalar_lea.sflag [#allocation3], %s761
        %s763 = sand.u32 %s90, 1
        %s764 = smul.addr %s763, 512
        %s765 = scalar_lea.vmem [#allocation2], %s764
        // Predicated region
        $region29: #{bionic_forward.7} parent=27 // pred_check
          %p766 = pneg %p100
        $region30: #{bionic_forward.7} parent=27 // pred_check_branch
          %768 = sbr.rel (%p766) target = $region32
        $region31: #{bionic_forward.7} parent=27 // pred_region
          %s769 = smul.u32 32, %s20
          %s770 = smul.u32 2, %s21
          %s772 = ssub.s32 8192, 8192
          %773 = vsyncadd %s762, %s772
          %s774 = smul.addr %s769, 4
          %s775 = sadd.s32 %s770, %s774
          %s776 = smul.addr %s775, 128
          %s777 = scalar_lea.hbm %s2, %s776
          %s778 = sshll.u32 %s765, 4
          %s779 = int_to_ptr.vmem [resolvable:$true] %s778
          %784 = dma.vmem_to_hbm [thread:$0]  %s779, 8192, %s777, %s762, 256, 512, 16
        $region32: #{bionic_forward.7} parent=27 // pred_fallthru
          _
      $region28: #{bionic_forward.7} parent=5 // pred_fallthru
        _
      %p785 = scmp.le.s32.totalorder 2, %s11
      // Predicated region
      $region33: #{bionic_forward.7} parent=5 // pred_check
        %p786 = pneg %p785
      $region34: #{bionic_forward.7} parent=5 // pred_check_branch
        %788 = sbr.rel (%p786) target = $region36
      $region35: #{bionic_forward.7} parent=5 // pred_region
        %s789 = ssub.s32 %s11, 2
        // Predicated region
        $region37: #{bionic_forward.7} parent=35 // pred_check
          %p790 = pneg %p106
        $region38: #{bionic_forward.7} parent=35 // pred_check_branch
          %792 = sbr.rel (%p790) target = $region40
        $region39: #{bionic_forward.7} parent=35 // pred_region
          %s793 = sand.u32 %s91, 1
          %s794 = scalar_lea.sflag [#allocation3], %s793
          %s795 = sand.u32 %s91, 1
          %s796 = smul.addr %s795, 512
          %s797 = scalar_lea.vmem [#allocation2], %s796
          %798 = dma.done %s794, 8192
        $region40: #{bionic_forward.7} parent=35 // pred_fallthru
          _
      $region36: #{bionic_forward.7} parent=5 // pred_fallthru
        _
    $region6: #{bionic_forward.7} parent=1 // loop_footer
      %s15 = sadd.s32 1, %s11
    $region7: #{bionic_forward.7} parent=1 // loop_footer_branch
      %10 = sbr.rel target = $region3
    $region8: #{bionic_forward.7} parent=1 // loop_exit
      _
    %799 = vsyncpa [#allocation3], 1
    %s800 = scalar_lea.sflag [#allocation3], 1
    %801 = vsyncpa %s800, 1

// kernel: bionic_forward.5
$region0: #{bionic_forward.5}
  #allocation0 [shape = 'u32[]', space=smem, size = 0x4, offset = 0x4, fixed_abs, tag = 'smem constant byte address 0x4 - core index']
  #allocation1 [shape = 'u32[144,128]{1,0:T(1,128)}', space=vmem, size = 0x12000, scoped, tag = 'internal scratch']
  #allocation2 [shape = 'f32[256,16]{1,0:T(8,128)}', space=vmem, size = 0x20000, scoped, tag = 'scratch operand']
  #allocation3 [shape = 'f32[256,16]{1,0:T(8,128)}', space=vmem, size = 0x20000, scoped, tag = 'scratch operand']
  #allocation4 [shape = 'f32[256,16]{1,0:T(8,128)}', space=vmem, size = 0x20000, scoped, tag = 'scratch operand']
  %s0 = inlined_call_operand.vmem [shape: f32[2,512,512], index: 0, kind: input, shape index: {}]
  %s1 = inlined_call_operand.vmem [shape: bf16[512,16], index: 1, kind: input, shape index: {}]
  %s2 = inlined_call_operand.vmem [shape: bf16[512,16], index: 2, kind: input, shape index: {}]
  %s3 = inlined_call_operand.vmem [shape: f32[512,2], index: 3, kind: input, shape index: {}]
  %s4 = inlined_call_operand.vmem [shape: f32[1,16], index: 4, kind: input, shape index: {}]
  %s5 = inlined_call_operand.vmem [shape: f32[16,32], index: 5, kind: input, shape index: {}]
  %s6 = inlined_call_operand.vmem [shape: f32[1,32], index: 6, kind: input, shape index: {}]
  %s7 = inlined_call_operand.vmem [shape: f32[512,32], index: 7, kind: output, shape index: {}]
  %s8 = sld [smem:[#allocation0]]
  $region100: #{bionic_forward.5} parent=0
    _
  %s10 = ssub.s32 1, %s8
  %s11 = scalar_select 0, %s10, %s8
  $region1: #{bionic_forward.5} parent=0
    #allocation5 [shape = 'u8[524288]{0}', space=vmem, size = 0x80000, scoped, tag = 'input window, operand 0']
    loop: start=0, step=1, limit=10
    $region2: #{bionic_forward.5} parent=1 // loop_pre_header
      _
    $region3: #{bionic_forward.5} parent=1 // loop_header
      %s13 = sphi 0, %s17
      %p14 = scmp.ge.s32.totalorder %s13, 10
      %s20 = sphi 0, %s39
      %s21 = sphi 0, %s35
      %s22 = sphi 0, %s31
      %s23 = sphi 0, %s20
      %s24 = sphi 0, %s21
      %s25 = sphi 0, %s22
      %s26 = sphi 0, %s23
      %s27 = sphi 0, %s24
      %s28 = sphi 0, %s25
      %s46 = sphi 0, %s48
      %s49 = sphi 0, %s46
      %s50 = sphi 0, %s49
      %s66 = sphi 0, %s50
      %s72 = sphi 0, %s74
      %s75 = sphi 0, %s72
      %s76 = sphi 0, %s75
      %s92 = sphi 0, %s76
      %s98 = sphi 0, %s100
      %s101 = sphi 0, %s98
      %s102 = sphi 0, %s101
      %s118 = sphi 0, %s102
      %s124 = sphi 0, %s126
      %s127 = sphi 0, %s124
      %s128 = sphi 0, %s127
      %s144 = sphi 0, %s128
      %s148 = sphi 0, %s148
      %s150 = sphi 0, %s148
      %s151 = sphi 0, %s150
      %s165 = sphi 0, %s151
      %s169 = sphi 0, %s169
      %s171 = sphi 0, %s169
      %s172 = sphi 0, %s171
      %s186 = sphi 0, %s172
      %s190 = sphi 0, %s190
      %s192 = sphi 0, %s190
      %s193 = sphi 0, %s192
      %s207 = sphi 0, %s193
      %s213 = sphi 0, %s215
      %s216 = sphi 0, %s213
      %s217 = sphi 0, %s216
      %s233 = sphi 0, %s217
    $region4: #{bionic_forward.5} parent=1 // loop_header_branch
      %16 = sbr.rel (%p14) target = $region8
    $region5: #{bionic_forward.5} parent=1 // loop_body
      %s18 = ssub.s32 %s13, 1
      %s19 = ssub.s32 %s13, 2
      %s29 = sadd.s32 1, %s22
      %p30 = scmp.ge.s32.totalorder %s29, 2
      %s31 = scalar_select %p30, 0, %s29
      %s32 = sadd.s32 1, %s21
      %s33 = scalar_select %p30, %s32, %s21
      %p34 = scmp.ge.s32.totalorder %s33, 2
      %s35 = scalar_select %p34, 0, %s33
      %s36 = sadd.s32 1, %s20
      %s37 = scalar_select %p34, %s36, %s20
      %p38 = scmp.ge.s32.totalorder %s37, 2
      %s39 = scalar_select %p38, 0, %s37
      %s40 = ssub.s32 %s21, %s35
      %s41 = ssub.s32 %s20, %s39
      %s42 = sor.u32 %s40, %s41
      %s43 = ssub.s32 %s22, %s31
      %s44 = sor.u32 %s42, %s43
      %p45 = scmp.eq.s32.totalorder %s44, 0
      %s47 = sadd.s32 %s46, 1
      %s48 = scalar_select %p45, %s46, %s47
      %p51 = pneg %p45
      %p52 = scmp.eq.s32.totalorder %s13, 7
      %p53 = por %p51, %p52
      %p54 = scmp.ne.s32.totalorder %s46, %s49
      %p55 = scmp.eq.s32.totalorder %s13, 0
      %p56 = por %p54, %p55
      %p57 = scmp.ne.s32.totalorder %s46, %s49
      %p58 = scmp.eq.s32.totalorder %s18, 7
      %p59 = por %p57, %p58
      %p60 = scmp.ne.s32.totalorder %s49, %s50
      %p61 = scmp.eq.s32.totalorder %s18, 0
      %p62 = por %p60, %p61
      %p63 = scmp.ne.s32.totalorder %s49, %s50
      %p64 = scmp.eq.s32.totalorder %s19, 7
      %p65 = por %p63, %p64
      %p67 = scmp.ne.s32.totalorder %s50, %s66
      %p68 = scmp.eq.s32.totalorder %s19, 0
      %p69 = por %p67, %p68
      %s70 = ssub.s32 %s22, %s31
      %p71 = scmp.eq.s32.totalorder %s70, 0
      %s73 = sadd.s32 %s72, 1
      %s74 = scalar_select %p71, %s72, %s73
      %p77 = pneg %p71
      %p78 = scmp.eq.s32.totalorder %s13, 7
      %p79 = por %p77, %p78
      %p80 = scmp.ne.s32.totalorder %s72, %s75
      %p81 = scmp.eq.s32.totalorder %s13, 0
      %p82 = por %p80, %p81
      %p83 = scmp.ne.s32.totalorder %s72, %s75
      %p84 = scmp.eq.s32.totalorder %s18, 7
      %p85 = por %p83, %p84
      %p86 = scmp.ne.s32.totalorder %s75, %s76
      %p87 = scmp.eq.s32.totalorder %s18, 0
      %p88 = por %p86, %p87
      %p89 = scmp.ne.s32.totalorder %s75, %s76
      %p90 = scmp.eq.s32.totalorder %s19, 7
      %p91 = por %p89, %p90
      %p93 = scmp.ne.s32.totalorder %s76, %s92
      %p94 = scmp.eq.s32.totalorder %s19, 0
      %p95 = por %p93, %p94
      %s96 = ssub.s32 %s22, %s31
      %p97 = scmp.eq.s32.totalorder %s96, 0
      %s99 = sadd.s32 %s98, 1
      %s100 = scalar_select %p97, %s98, %s99
      %p103 = pneg %p97
      %p104 = scmp.eq.s32.totalorder %s13, 7
      %p105 = por %p103, %p104
      %p106 = scmp.ne.s32.totalorder %s98, %s101
      %p107 = scmp.eq.s32.totalorder %s13, 0
      %p108 = por %p106, %p107
      %p109 = scmp.ne.s32.totalorder %s98, %s101
      %p110 = scmp.eq.s32.totalorder %s18, 7
      %p111 = por %p109, %p110
      %p112 = scmp.ne.s32.totalorder %s101, %s102
      %p113 = scmp.eq.s32.totalorder %s18, 0
      %p114 = por %p112, %p113
      %p115 = scmp.ne.s32.totalorder %s101, %s102
      %p116 = scmp.eq.s32.totalorder %s19, 7
      %p117 = por %p115, %p116
      %p119 = scmp.ne.s32.totalorder %s102, %s118
      %p120 = scmp.eq.s32.totalorder %s19, 0
      %p121 = por %p119, %p120
      %s122 = ssub.s32 %s20, %s39
      %p123 = scmp.eq.s32.totalorder %s122, 0
      %s125 = sadd.s32 %s124, 1
      %s126 = scalar_select %p123, %s124, %s125
      %p129 = pneg %p123
      %p130 = scmp.eq.s32.totalorder %s13, 7
      %p131 = por %p129, %p130
      %p132 = scmp.ne.s32.totalorder %s124, %s127
      %p133 = scmp.eq.s32.totalorder %s13, 0
      %p134 = por %p132, %p133
      %p135 = scmp.ne.s32.totalorder %s124, %s127
      %p136 = scmp.eq.s32.totalorder %s18, 7
      %p137 = por %p135, %p136
      %p138 = scmp.ne.s32.totalorder %s127, %s128
      %p139 = scmp.eq.s32.totalorder %s18, 0
      %p140 = por %p138, %p139
      %p141 = scmp.ne.s32.totalorder %s127, %s128
      %p142 = scmp.eq.s32.totalorder %s19, 7
      %p143 = por %p141, %p142
      %p145 = scmp.ne.s32.totalorder %s128, %s144
      %p146 = scmp.eq.s32.totalorder %s19, 0
      %p147 = por %p145, %p146
      %s149 = sadd.s32 %s148, 1
      %p152 = scmp.eq.s32.totalorder %s13, 7
      %p153 = scmp.ne.s32.totalorder %s148, %s150
      %p154 = scmp.eq.s32.totalorder %s13, 0
      %p155 = por %p153, %p154
      %p156 = scmp.ne.s32.totalorder %s148, %s150
      %p157 = scmp.eq.s32.totalorder %s18, 7
      %p158 = por %p156, %p157
      %p159 = scmp.ne.s32.totalorder %s150, %s151
      %p160 = scmp.eq.s32.totalorder %s18, 0
      %p161 = por %p159, %p160
      %p162 = scmp.ne.s32.totalorder %s150, %s151
      %p163 = scmp.eq.s32.totalorder %s19, 7
      %p164 = por %p162, %p163
      %p166 = scmp.ne.s32.totalorder %s151, %s165
      %p167 = scmp.eq.s32.totalorder %s19, 0
      %p168 = por %p166, %p167
      %s170 = sadd.s32 %s169, 1
      %p173 = scmp.eq.s32.totalorder %s13, 7
      %p174 = scmp.ne.s32.totalorder %s169, %s171
      %p175 = scmp.eq.s32.totalorder %s13, 0
      %p176 = por %p174, %p175
      %p177 = scmp.ne.s32.totalorder %s169, %s171
      %p178 = scmp.eq.s32.totalorder %s18, 7
      %p179 = por %p177, %p178
      %p180 = scmp.ne.s32.totalorder %s171, %s172
      %p181 = scmp.eq.s32.totalorder %s18, 0
      %p182 = por %p180, %p181
      %p183 = scmp.ne.s32.totalorder %s171, %s172
      %p184 = scmp.eq.s32.totalorder %s19, 7
      %p185 = por %p183, %p184
      %p187 = scmp.ne.s32.totalorder %s172, %s186
      %p188 = scmp.eq.s32.totalorder %s19, 0
      %p189 = por %p187, %p188
      %s191 = sadd.s32 %s190, 1
      %p194 = scmp.eq.s32.totalorder %s13, 7
      %p195 = scmp.ne.s32.totalorder %s190, %s192
      %p196 = scmp.eq.s32.totalorder %s13, 0
      %p197 = por %p195, %p196
      %p198 = scmp.ne.s32.totalorder %s190, %s192
      %p199 = scmp.eq.s32.totalorder %s18, 7
      %p200 = por %p198, %p199
      %p201 = scmp.ne.s32.totalorder %s192, %s193
      %p202 = scmp.eq.s32.totalorder %s18, 0
      %p203 = por %p201, %p202
      %p204 = scmp.ne.s32.totalorder %s192, %s193
      %p205 = scmp.eq.s32.totalorder %s19, 7
      %p206 = por %p204, %p205
      %p208 = scmp.ne.s32.totalorder %s193, %s207
      %p209 = scmp.eq.s32.totalorder %s19, 0
      %p210 = por %p208, %p209
      %s211 = ssub.s32 %s20, %s39
      %p212 = scmp.eq.s32.totalorder %s211, 0
      %s214 = sadd.s32 %s213, 1
      %s215 = scalar_select %p212, %s213, %s214
      %p218 = pneg %p212
      %p219 = scmp.eq.s32.totalorder %s13, 7
      %p220 = por %p218, %p219
      %p221 = scmp.ne.s32.totalorder %s213, %s216
      %p222 = scmp.eq.s32.totalorder %s13, 0
      %p223 = por %p221, %p222
      %p224 = scmp.ne.s32.totalorder %s213, %s216
      %p225 = scmp.eq.s32.totalorder %s18, 7
      %p226 = por %p224, %p225
      %p227 = scmp.ne.s32.totalorder %s216, %s217
      %p228 = scmp.eq.s32.totalorder %s18, 0
      %p229 = por %p227, %p228
      %p230 = scmp.ne.s32.totalorder %s216, %s217
      %p231 = scmp.eq.s32.totalorder %s19, 7
      %p232 = por %p230, %p231
      %p234 = scmp.ne.s32.totalorder %s217, %s233
      %p235 = scmp.eq.s32.totalorder %s19, 0
      %p236 = por %p234, %p235
      %p237 = scmp.le.s32.totalorder 1, %s13
      %p238 = scmp.lt.s32.totalorder %s13, 9
      %p239 = pnand %p237, %p238
      %p240 = pneg %p239
      // Predicated region
      $region9: #{bionic_forward.5} parent=5 // pred_check
        _
      $region10: #{bionic_forward.5} parent=5 // pred_check_branch
        %242 = sbr.rel (%p239) target = $region12
      $region11: #{bionic_forward.5} parent=5 // pred_region
        %s243 = ssub.s32 %s13, 1
        // Predicated region
        $region13: #{bionic_forward.5} parent=11 // pred_check
          %p244 = pneg %p161
        $region14: #{bionic_forward.5} parent=11 // pred_check_branch
          %246 = sbr.rel (%p244) target = $region16
        $region15: #{bionic_forward.5} parent=11 // pred_region
          _
        $region16: #{bionic_forward.5} parent=11 // pred_fallthru
          _
        // Predicated region
        $region17: #{bionic_forward.5} parent=11 // pred_check
          %p247 = pneg %p182
        $region18: #{bionic_forward.5} parent=11 // pred_check_branch
          %249 = sbr.rel (%p247) target = $region20
        $region19: #{bionic_forward.5} parent=11 // pred_region
          _
        $region20: #{bionic_forward.5} parent=11 // pred_fallthru
          _
        // Predicated region
        $region21: #{bionic_forward.5} parent=11 // pred_check
          %p250 = pneg %p203
        $region22: #{bionic_forward.5} parent=11 // pred_check_branch
          %252 = sbr.rel (%p250) target = $region24
        $region23: #{bionic_forward.5} parent=11 // pred_region
          _
        $region24: #{bionic_forward.5} parent=11 // pred_fallthru
          _
      $region12: #{bionic_forward.5} parent=5 // pred_fallthru
        _
      %p253 = scmp.lt.s32.totalorder %s13, 8
      // Predicated region
      $region25: #{bionic_forward.5} parent=5 // pred_check
        %p254 = pneg %p253
      $region26: #{bionic_forward.5} parent=5 // pred_check_branch
        %256 = sbr.rel (%p254) target = $region28
      $region27: #{bionic_forward.5} parent=5 // pred_region
        // Predicated region
        $region29: #{bionic_forward.5} parent=27 // pred_check
          %p257 = pneg %p56
        $region30: #{bionic_forward.5} parent=27 // pred_check_branch
          %259 = sbr.rel (%p257) target = $region32
        $region31: #{bionic_forward.5} parent=27 // pred_region
          %s260 = sand.u32 %s46, 1
          %s261 = sand.u32 %s46, 1
          %s262 = smul.addr %s261, 512
          %s263 = scalar_lea.vmem [#allocation5], %s262
          %s264 = smul.u32 32, %s20
          %s265 = smul.u32 2, %s22
          %s266 = smul.addr %s264, 4
          %s267 = sadd.s32 %s265, %s266
          %s268 = smul.addr %s21, 256
          %s269 = sadd.s32 %s267, %s268
          %s270 = smul.addr %s269, 8
          %s271 = scalar_lea.vmem %s0, %s270
          // Predicated region
          $region33: #{bionic_forward.5} parent=31 // pred_check
            _
          $region34: #{bionic_forward.5} parent=31 // pred_check_branch
            %273 = sbr.rel (0) target = $region36
          $region35: #{bionic_forward.5} parent=31 // pred_region
            // Predicated region
            $region37: #{bionic_forward.5} parent=35 // pred_check
              _
            $region38: #{bionic_forward.5} parent=35 // pred_check_branch
              %275 = sbr.rel (0) target = $region40
            $region39: #{bionic_forward.5} parent=35 // pred_region
              loop: start=0, step=1, limit=1
              $region41: #{bionic_forward.5} parent=39 // loop_pre_header
                _
              $region42: #{bionic_forward.5} parent=39 // loop_header
                %s277 = sphi 0, %s281
                %p278 = scmp.ge.s32.totalorder %s277, 1
                %s282 = sphi %s271, %s271
                %s283 = sphi %s263, %s263
              $region43: #{bionic_forward.5} parent=39 // loop_header_branch
                %280 = sbr.rel (%p278) target = $region47
              $region44: #{bionic_forward.5} parent=39 // loop_body
                %v284 = vld [vmem:[%s282] sm:$0xff]
                %285 = vst [vmem:[%s283] sm:$0xff] %v284
                %v286 = vld [vmem:[%s282 + $0x8] sm:$0xff]
                %287 = vst [vmem:[%s283 + $0x8] sm:$0xff] %v286
                %v288 = vld [vmem:[%s282 + $0x20] sm:$0xff]
                %289 = vst [vmem:[%s283 + $0x10] sm:$0xff] %v288
                %v290 = vld [vmem:[%s282 + $0x28] sm:$0xff]
                %291 = vst [vmem:[%s283 + $0x18] sm:$0xff] %v290
                %v292 = vld [vmem:[%s282 + $0x40] sm:$0xff]
                %293 = vst [vmem:[%s283 + $0x20] sm:$0xff] %v292
                %v294 = vld [vmem:[%s282 + $0x48] sm:$0xff]
                %295 = vst [vmem:[%s283 + $0x28] sm:$0xff] %v294
                %v296 = vld [vmem:[%s282 + $0x60] sm:$0xff]
                %297 = vst [vmem:[%s283 + $0x30] sm:$0xff] %v296
                %v298 = vld [vmem:[%s282 + $0x68] sm:$0xff]
                %299 = vst [vmem:[%s283 + $0x38] sm:$0xff] %v298
                %v300 = vld [vmem:[%s282 + $0x80] sm:$0xff]
                %301 = vst [vmem:[%s283 + $0x40] sm:$0xff] %v300
                %v302 = vld [vmem:[%s282 + $0x88] sm:$0xff]
                %303 = vst [vmem:[%s283 + $0x48] sm:$0xff] %v302
                %v304 = vld [vmem:[%s282 + $0xa0] sm:$0xff]
                %305 = vst [vmem:[%s283 + $0x50] sm:$0xff] %v304
                %v306 = vld [vmem:[%s282 + $0xa8] sm:$0xff]
                %307 = vst [vmem:[%s283 + $0x58] sm:$0xff] %v306
                %v308 = vld [vmem:[%s282 + $0xc0] sm:$0xff]
                %309 = vst [vmem:[%s283 + $0x60] sm:$0xff] %v308
                %v310 = vld [vmem:[%s282 + $0xc8] sm:$0xff]
                %311 = vst [vmem:[%s283 + $0x68] sm:$0xff] %v310
                %v312 = vld [vmem:[%s282 + $0xe0] sm:$0xff]
                %313 = vst [vmem:[%s283 + $0x70] sm:$0xff] %v312
                %v314 = vld [vmem:[%s282 + $0xe8] sm:$0xff]
                %315 = vst [vmem:[%s283 + $0x78] sm:$0xff] %v314
                %v316 = vld [vmem:[%s282 + $0x100] sm:$0xff]
                %317 = vst [vmem:[%s283 + $0x80] sm:$0xff] %v316
                %v318 = vld [vmem:[%s282 + $0x108] sm:$0xff]
                %319 = vst [vmem:[%s283 + $0x88] sm:$0xff] %v318
                %v320 = vld [vmem:[%s282 + $0x120] sm:$0xff]
                %321 = vst [vmem:[%s283 + $0x90] sm:$0xff] %v320
                %v322 = vld [vmem:[%s282 + $0x128] sm:$0xff]
                %323 = vst [vmem:[%s283 + $0x98] sm:$0xff] %v322
                %v324 = vld [vmem:[%s282 + $0x140] sm:$0xff]
                %325 = vst [vmem:[%s283 + $0xa0] sm:$0xff] %v324
                %v326 = vld [vmem:[%s282 + $0x148] sm:$0xff]
                %327 = vst [vmem:[%s283 + $0xa8] sm:$0xff] %v326
                %v328 = vld [vmem:[%s282 + $0x160] sm:$0xff]
                %329 = vst [vmem:[%s283 + $0xb0] sm:$0xff] %v328
                %v330 = vld [vmem:[%s282 + $0x168] sm:$0xff]
                %331 = vst [vmem:[%s283 + $0xb8] sm:$0xff] %v330
                %v332 = vld [vmem:[%s282 + $0x180] sm:$0xff]
                %333 = vst [vmem:[%s283 + $0xc0] sm:$0xff] %v332
                %v334 = vld [vmem:[%s282 + $0x188] sm:$0xff]
                %335 = vst [vmem:[%s283 + $0xc8] sm:$0xff] %v334
                %v336 = vld [vmem:[%s282 + $0x1a0] sm:$0xff]
                %337 = vst [vmem:[%s283 + $0xd0] sm:$0xff] %v336
                %v338 = vld [vmem:[%s282 + $0x1a8] sm:$0xff]
                %339 = vst [vmem:[%s283 + $0xd8] sm:$0xff] %v338
                %v340 = vld [vmem:[%s282 + $0x1c0] sm:$0xff]
                %341 = vst [vmem:[%s283 + $0xe0] sm:$0xff] %v340
                %v342 = vld [vmem:[%s282 + $0x1c8] sm:$0xff]
                %343 = vst [vmem:[%s283 + $0xe8] sm:$0xff] %v342
                %v344 = vld [vmem:[%s282 + $0x1e0] sm:$0xff]
                %345 = vst [vmem:[%s283 + $0xf0] sm:$0xff] %v344
                %v346 = vld [vmem:[%s282 + $0x1e8] sm:$0xff]
                %347 = vst [vmem:[%s283 + $0xf8] sm:$0xff] %v346
                %v348 = vld [vmem:[%s282 + $0x200] sm:$0xff]
                %349 = vst [vmem:[%s283 + $0x100] sm:$0xff] %v348
                %v350 = vld [vmem:[%s282 + $0x208] sm:$0xff]
                %351 = vst [vmem:[%s283 + $0x108] sm:$0xff] %v350
                %v352 = vld [vmem:[%s282 + $0x220] sm:$0xff]
                %353 = vst [vmem:[%s283 + $0x110] sm:$0xff] %v352
                %v354 = vld [vmem:[%s282 + $0x228] sm:$0xff]
                %355 = vst [vmem:[%s283 + $0x118] sm:$0xff] %v354
                %v356 = vld [vmem:[%s282 + $0x240] sm:$0xff]
                %357 = vst [vmem:[%s283 + $0x120] sm:$0xff] %v356
                %v358 = vld [vmem:[%s282 + $0x248] sm:$0xff]
                %359 = vst [vmem:[%s283 + $0x128] sm:$0xff] %v358
                %v360 = vld [vmem:[%s282 + $0x260] sm:$0xff]
                %361 = vst [vmem:[%s283 + $0x130] sm:$0xff] %v360
                %v362 = vld [vmem:[%s282 + $0x268] sm:$0xff]
                %363 = vst [vmem:[%s283 + $0x138] sm:$0xff] %v362
                %v364 = vld [vmem:[%s282 + $0x280] sm:$0xff]
                %365 = vst [vmem:[%s283 + $0x140] sm:$0xff] %v364
                %v366 = vld [vmem:[%s282 + $0x288] sm:$0xff]
                %367 = vst [vmem:[%s283 + $0x148] sm:$0xff] %v366
                %v368 = vld [vmem:[%s282 + $0x2a0] sm:$0xff]
                %369 = vst [vmem:[%s283 + $0x150] sm:$0xff] %v368
                %v370 = vld [vmem:[%s282 + $0x2a8] sm:$0xff]
                %371 = vst [vmem:[%s283 + $0x158] sm:$0xff] %v370
                %v372 = vld [vmem:[%s282 + $0x2c0] sm:$0xff]
                %373 = vst [vmem:[%s283 + $0x160] sm:$0xff] %v372
                %v374 = vld [vmem:[%s282 + $0x2c8] sm:$0xff]
                %375 = vst [vmem:[%s283 + $0x168] sm:$0xff] %v374
                %v376 = vld [vmem:[%s282 + $0x2e0] sm:$0xff]
                %377 = vst [vmem:[%s283 + $0x170] sm:$0xff] %v376
                %v378 = vld [vmem:[%s282 + $0x2e8] sm:$0xff]
                %379 = vst [vmem:[%s283 + $0x178] sm:$0xff] %v378
                %v380 = vld [vmem:[%s282 + $0x300] sm:$0xff]
                %381 = vst [vmem:[%s283 + $0x180] sm:$0xff] %v380
                %v382 = vld [vmem:[%s282 + $0x308] sm:$0xff]
                %383 = vst [vmem:[%s283 + $0x188] sm:$0xff] %v382
                %v384 = vld [vmem:[%s282 + $0x320] sm:$0xff]
                %385 = vst [vmem:[%s283 + $0x190] sm:$0xff] %v384
                %v386 = vld [vmem:[%s282 + $0x328] sm:$0xff]
                %387 = vst [vmem:[%s283 + $0x198] sm:$0xff] %v386
                %v388 = vld [vmem:[%s282 + $0x340] sm:$0xff]
                %389 = vst [vmem:[%s283 + $0x1a0] sm:$0xff] %v388
                %v390 = vld [vmem:[%s282 + $0x348] sm:$0xff]
                %391 = vst [vmem:[%s283 + $0x1a8] sm:$0xff] %v390
                %v392 = vld [vmem:[%s282 + $0x360] sm:$0xff]
                %393 = vst [vmem:[%s283 + $0x1b0] sm:$0xff] %v392
                %v394 = vld [vmem:[%s282 + $0x368] sm:$0xff]
                %395 = vst [vmem:[%s283 + $0x1b8] sm:$0xff] %v394
                %v396 = vld [vmem:[%s282 + $0x380] sm:$0xff]
                %397 = vst [vmem:[%s283 + $0x1c0] sm:$0xff] %v396
                %v398 = vld [vmem:[%s282 + $0x388] sm:$0xff]
                %399 = vst [vmem:[%s283 + $0x1c8] sm:$0xff] %v398
                %v400 = vld [vmem:[%s282 + $0x3a0] sm:$0xff]
                %401 = vst [vmem:[%s283 + $0x1d0] sm:$0xff] %v400
                %v402 = vld [vmem:[%s282 + $0x3a8] sm:$0xff]
                %403 = vst [vmem:[%s283 + $0x1d8] sm:$0xff] %v402
                %v404 = vld [vmem:[%s282 + $0x3c0] sm:$0xff]
                %405 = vst [vmem:[%s283 + $0x1e0] sm:$0xff] %v404
                %v406 = vld [vmem:[%s282 + $0x3c8] sm:$0xff]
                %407 = vst [vmem:[%s283 + $0x1e8] sm:$0xff] %v406
                %v408 = vld [vmem:[%s282 + $0x3e0] sm:$0xff]
                %409 = vst [vmem:[%s283 + $0x1f0] sm:$0xff] %v408
                %v410 = vld [vmem:[%s282 + $0x3e8] sm:$0xff]
                %411 = vst [vmem:[%s283 + $0x1f8] sm:$0xff] %v410
              $region45: #{bionic_forward.5} parent=39 // loop_footer
                %s281 = sadd.s32 1, %s277
              $region46: #{bionic_forward.5} parent=39 // loop_footer_branch
                %276 = sbr.rel target = $region42
              $region47: #{bionic_forward.5} parent=39 // loop_exit
                _
            $region40: #{bionic_forward.5} parent=35 // pred_fallthru
              _
            // Predicated region
            $region48: #{bionic_forward.5} parent=35 // pred_check
              _
            $region49: #{bionic_forward.5} parent=35 // pred_check_branch
              %413 = sbr.rel target = $region51
            $region50: #{bionic_forward.5} parent=35 // pred_region
              _
            $region51: #{bionic_forward.5} parent=35 // pred_fallthru
              _
          $region36: #{bionic_forward.5} parent=31 // pred_fallthru
            _
          %414 = vnop
        $region32: #{bionic_forward.5} parent=27 // pred_fallthru
          _
        // Predicated region
        $region52: #{bionic_forward.5} parent=27 // pred_check
          %p415 = pneg %p82
        $region53: #{bionic_forward.5} parent=27 // pred_check_branch
          %417 = sbr.rel (%p415) target = $region55
        $region54: #{bionic_forward.5} parent=27 // pred_region
          %s418 = smul.u32 32, %s22
          %p419 = scmp.lt.s32.totalorder %s418, 63
          %s420 = scalar_select %p419, %s418, 63
          %s421 = smul.addr %s420, 4
          %s422 = scalar_lea.vmem %s1, %s421
          %s423 = smul.u32 32, %s22
        $region55: #{bionic_forward.5} parent=27 // pred_fallthru
          _
        // Predicated region
        $region56: #{bionic_forward.5} parent=27 // pred_check
          %p424 = pneg %p108
        $region57: #{bionic_forward.5} parent=27 // pred_check_branch
          %426 = sbr.rel (%p424) target = $region59
        $region58: #{bionic_forward.5} parent=27 // pred_region
          %s427 = smul.u32 32, %s22
          %p428 = scmp.lt.s32.totalorder %s427, 63
          %s429 = scalar_select %p428, %s427, 63
          %s430 = smul.addr %s429, 4
          %s431 = scalar_lea.vmem %s2, %s430
          %s432 = smul.u32 32, %s22
        $region59: #{bionic_forward.5} parent=27 // pred_fallthru
          _
        // Predicated region
        $region60: #{bionic_forward.5} parent=27 // pred_check
          %p433 = pneg %p134
        $region61: #{bionic_forward.5} parent=27 // pred_check_branch
          %435 = sbr.rel (%p433) target = $region63
        $region62: #{bionic_forward.5} parent=27 // pred_region
          %s436 = smul.u32 32, %s20
          %p437 = scmp.lt.s32.totalorder %s436, 63
          %s438 = scalar_select %p437, %s436, 63
          %s439 = smul.addr %s438, 8
          %s440 = scalar_lea.vmem %s3, %s439
          %s441 = smul.u32 32, %s20
        $region63: #{bionic_forward.5} parent=27 // pred_fallthru
          _
      $region28: #{bionic_forward.5} parent=5 // pred_fallthru
        _
      %p442 = scmp.le.s32.totalorder 1, %s13
      %p443 = scmp.lt.s32.totalorder %s13, 9
      %p444 = pnand %p442, %p443
      %p445 = pneg %p444
      // Predicated region
      $region64: #{bionic_forward.5} parent=5 // pred_check
        _
      $region65: #{bionic_forward.5} parent=5 // pred_check_branch
        %447 = sbr.rel (%p444) target = $region67
      $region66: #{bionic_forward.5} parent=5 // pred_region
        %s448 = ssub.s32 %s13, 1
        %s449 = sand.u32 %s49, 1
        %s450 = sand.u32 %s49, 1
        %s451 = smul.addr %s450, 512
        %s452 = scalar_lea.vmem [#allocation5], %s451
        // Predicated region
        $region68: #{bionic_forward.5} parent=66 // pred_check
          %p453 = pneg %p62
        $region69: #{bionic_forward.5} parent=66 // pred_check_branch
          %455 = sbr.rel (%p453) target = $region71
        $region70: #{bionic_forward.5} parent=66 // pred_region
          _
        $region71: #{bionic_forward.5} parent=66 // pred_fallthru
          _
        %s456 = sand.u32 %s49, 1
        %s457 = sand.u32 %s49, 1
        %s458 = smul.addr %s457, 512
        %s459 = scalar_lea.vmem [#allocation5], %s458
        %p460 = pneg %p62
        %p461 = pneg %p59
        %s462 = smul.u32 32, %s25
        %p463 = scmp.lt.s32.totalorder %s462, 63
        %s464 = scalar_select %p463, %s462, 63
        %s465 = smul.addr %s464, 4
        %s466 = scalar_lea.vmem %s1, %s465
        %p467 = pneg %p88
        %p468 = pneg %p85
        %s469 = smul.u32 32, %s25
        %p470 = scmp.lt.s32.totalorder %s469, 63
        %s471 = scalar_select %p470, %s469, 63
        %s472 = smul.addr %s471, 4
        %s473 = scalar_lea.vmem %s2, %s472
        %p474 = pneg %p114
        %p475 = pneg %p111
        %s476 = smul.u32 32, %s23
        %p477 = scmp.lt.s32.totalorder %s476, 63
        %s478 = scalar_select %p477, %s476, 63
        %s479 = smul.addr %s478, 8
        %s480 = scalar_lea.vmem %s3, %s479
        %p481 = pneg %p140
        %p482 = pneg %p137
        %p483 = pneg %p161
        %p484 = pneg %p158
        %p485 = pneg %p182
        %p486 = pneg %p179
        %p487 = pneg %p203
        %p488 = pneg %p200
        %p489 = pneg %p229
        %p490 = pneg %p226
        %s491 = smul.u32 32, %s23
        %p492 = scmp.lt.s32.totalorder %s491, 63
        %s493 = scalar_select %p492, %s491, 63
        %s494 = smul.addr %s493, 8
        %s495 = scalar_lea.vmem %s7, %s494
        %s496 = smul.u32 32, %s23
        %s497 = smul.u32 2, %s25
        %s498 = smul.u32 32, %s25
        %p499 = scmp.lt.s32.totalorder %s498, 63
        %s500 = scalar_select %p499, %s498, 63
        %s501 = smul.addr %s500, 4
        %s502 = scalar_lea.vmem %s1, %s501
        %s503 = smul.u32 32, %s25
        %s504 = smul.u32 32, %s25
        %p505 = scmp.lt.s32.totalorder %s504, 63
        %s506 = scalar_select %p505, %s504, 63
        %s507 = smul.addr %s506, 4
        %s508 = scalar_lea.vmem %s2, %s507
        %s509 = smul.u32 32, %s25
        %s510 = smul.u32 32, %s23
        %p511 = scmp.lt.s32.totalorder %s510, 63
        %s512 = scalar_select %p511, %s510, 63
        %s513 = smul.addr %s512, 8
        %s514 = scalar_lea.vmem %s3, %s513
        %s515 = smul.u32 32, %s23
        %s516 = smul.u32 32, %s23
        %p517 = scmp.lt.s32.totalorder %s516, 63
        %s518 = scalar_select %p517, %s516, 63
        %s519 = smul.addr %s518, 8
        %s520 = scalar_lea.vmem %s7, %s519
        %s521 = smul.u32 32, %s23
        %p523 = scmp.eq.s32.totalorder %s24, 0
        %p524 = scmp.eq.s32.totalorder %s25, 0
        %p525 = pnand %p523, %p524
        %p526 = pneg %p525
        // Predicated region
        $region72: #{bionic_forward.5} parent=66 // pred_check
          _
        $region73: #{bionic_forward.5} parent=66 // pred_check_branch
          %528 = sbr.rel (%p525) target = $region75
        $region74: #{bionic_forward.5} parent=66 // pred_region
          %vm529 = vcmask 130048
          %530 = vst.msk [vmem:[#allocation4] sm:$0xff] %vm529, 0.0
          %531 = vst.msk [vmem:[#allocation4 + $0x8] sm:$0xff] %vm529, 0.0
          %532 = vst.msk [vmem:[#allocation4 + $0x10] sm:$0xff] %vm529, 0.0
          %533 = vst.msk [vmem:[#allocation4 + $0x18] sm:$0xff] %vm529, 0.0
          %534 = vst.msk [vmem:[#allocation4 + $0x20] sm:$0xff] %vm529, 0.0
          %535 = vst.msk [vmem:[#allocation4 + $0x28] sm:$0xff] %vm529, 0.0
          %536 = vst.msk [vmem:[#allocation4 + $0x30] sm:$0xff] %vm529, 0.0
          %537 = vst.msk [vmem:[#allocation4 + $0x38] sm:$0xff] %vm529, 0.0
          %538 = vst.msk [vmem:[#allocation4 + $0x40] sm:$0xff] %vm529, 0.0
          %539 = vst.msk [vmem:[#allocation4 + $0x48] sm:$0xff] %vm529, 0.0
          %540 = vst.msk [vmem:[#allocation4 + $0x50] sm:$0xff] %vm529, 0.0
          %541 = vst.msk [vmem:[#allocation4 + $0x58] sm:$0xff] %vm529, 0.0
          %542 = vst.msk [vmem:[#allocation4 + $0x60] sm:$0xff] %vm529, 0.0
          %543 = vst.msk [vmem:[#allocation4 + $0x68] sm:$0xff] %vm529, 0.0
          %544 = vst.msk [vmem:[#allocation4 + $0x70] sm:$0xff] %vm529, 0.0
          %545 = vst.msk [vmem:[#allocation4 + $0x78] sm:$0xff] %vm529, 0.0
          %546 = vst.msk [vmem:[#allocation4 + $0x80] sm:$0xff] %vm529, 0.0
          %547 = vst.msk [vmem:[#allocation4 + $0x88] sm:$0xff] %vm529, 0.0
          %548 = vst.msk [vmem:[#allocation4 + $0x90] sm:$0xff] %vm529, 0.0
          %549 = vst.msk [vmem:[#allocation4 + $0x98] sm:$0xff] %vm529, 0.0
          %550 = vst.msk [vmem:[#allocation4 + $0xa0] sm:$0xff] %vm529, 0.0
          %551 = vst.msk [vmem:[#allocation4 + $0xa8] sm:$0xff] %vm529, 0.0
          %552 = vst.msk [vmem:[#allocation4 + $0xb0] sm:$0xff] %vm529, 0.0
          %553 = vst.msk [vmem:[#allocation4 + $0xb8] sm:$0xff] %vm529, 0.0
          %554 = vst.msk [vmem:[#allocation4 + $0xc0] sm:$0xff] %vm529, 0.0
          %555 = vst.msk [vmem:[#allocation4 + $0xc8] sm:$0xff] %vm529, 0.0
          %556 = vst.msk [vmem:[#allocation4 + $0xd0] sm:$0xff] %vm529, 0.0
          %557 = vst.msk [vmem:[#allocation4 + $0xd8] sm:$0xff] %vm529, 0.0
          %558 = vst.msk [vmem:[#allocation4 + $0xe0] sm:$0xff] %vm529, 0.0
          %559 = vst.msk [vmem:[#allocation4 + $0xe8] sm:$0xff] %vm529, 0.0
          %560 = vst.msk [vmem:[#allocation4 + $0xf0] sm:$0xff] %vm529, 0.0
          %561 = vst.msk [vmem:[#allocation4 + $0xf8] sm:$0xff] %vm529, 0.0
        $region75: #{bionic_forward.5} parent=66 // pred_fallthru
          _
        // Predicated region
        $region76: #{bionic_forward.5} parent=66 // pred_check
          %p562 = pneg %p524
        $region77: #{bionic_forward.5} parent=66 // pred_check_branch
          %564 = sbr.rel (%p562) target = $region79
        $region78: #{bionic_forward.5} parent=66 // pred_region
          %vm565 = vcmask 130048
          %566 = vst.msk [vmem:[#allocation2] sm:$0xff] %vm565, 0.0
          %567 = vst.msk [vmem:[#allocation2 + $0x8] sm:$0xff] %vm565, 0.0
          %568 = vst.msk [vmem:[#allocation2 + $0x10] sm:$0xff] %vm565, 0.0
          %569 = vst.msk [vmem:[#allocation2 + $0x18] sm:$0xff] %vm565, 0.0
          %570 = vst.msk [vmem:[#allocation2 + $0x20] sm:$0xff] %vm565, 0.0
          %571 = vst.msk [vmem:[#allocation2 + $0x28] sm:$0xff] %vm565, 0.0
          %572 = vst.msk [vmem:[#allocation2 + $0x30] sm:$0xff] %vm565, 0.0
          %573 = vst.msk [vmem:[#allocation2 + $0x38] sm:$0xff] %vm565, 0.0
          %574 = vst.msk [vmem:[#allocation2 + $0x40] sm:$0xff] %vm565, 0.0
          %575 = vst.msk [vmem:[#allocation2 + $0x48] sm:$0xff] %vm565, 0.0
          %576 = vst.msk [vmem:[#allocation2 + $0x50] sm:$0xff] %vm565, 0.0
          %577 = vst.msk [vmem:[#allocation2 + $0x58] sm:$0xff] %vm565, 0.0
          %578 = vst.msk [vmem:[#allocation2 + $0x60] sm:$0xff] %vm565, 0.0
          %579 = vst.msk [vmem:[#allocation2 + $0x68] sm:$0xff] %vm565, 0.0
          %580 = vst.msk [vmem:[#allocation2 + $0x70] sm:$0xff] %vm565, 0.0
          %581 = vst.msk [vmem:[#allocation2 + $0x78] sm:$0xff] %vm565, 0.0
          %582 = vst.msk [vmem:[#allocation2 + $0x80] sm:$0xff] %vm565, 0.0
          %583 = vst.msk [vmem:[#allocation2 + $0x88] sm:$0xff] %vm565, 0.0
          %584 = vst.msk [vmem:[#allocation2 + $0x90] sm:$0xff] %vm565, 0.0
          %585 = vst.msk [vmem:[#allocation2 + $0x98] sm:$0xff] %vm565, 0.0
          %586 = vst.msk [vmem:[#allocation2 + $0xa0] sm:$0xff] %vm565, 0.0
          %587 = vst.msk [vmem:[#allocation2 + $0xa8] sm:$0xff] %vm565, 0.0
          %588 = vst.msk [vmem:[#allocation2 + $0xb0] sm:$0xff] %vm565, 0.0
          %589 = vst.msk [vmem:[#allocation2 + $0xb8] sm:$0xff] %vm565, 0.0
          %590 = vst.msk [vmem:[#allocation2 + $0xc0] sm:$0xff] %vm565, 0.0
          %591 = vst.msk [vmem:[#allocation2 + $0xc8] sm:$0xff] %vm565, 0.0
          %592 = vst.msk [vmem:[#allocation2 + $0xd0] sm:$0xff] %vm565, 0.0
          %593 = vst.msk [vmem:[#allocation2 + $0xd8] sm:$0xff] %vm565, 0.0
          %594 = vst.msk [vmem:[#allocation2 + $0xe0] sm:$0xff] %vm565, 0.0
          %595 = vst.msk [vmem:[#allocation2 + $0xe8] sm:$0xff] %vm565, 0.0
          %596 = vst.msk [vmem:[#allocation2 + $0xf0] sm:$0xff] %vm565, 0.0
          %597 = vst.msk [vmem:[#allocation2 + $0xf8] sm:$0xff] %vm565, 0.0
          %598 = vst.msk [vmem:[#allocation3] sm:$0xff] %vm565, 0.0
          %599 = vst.msk [vmem:[#allocation3 + $0x8] sm:$0xff] %vm565, 0.0
          %600 = vst.msk [vmem:[#allocation3 + $0x10] sm:$0xff] %vm565, 0.0
          %601 = vst.msk [vmem:[#allocation3 + $0x18] sm:$0xff] %vm565, 0.0
          %602 = vst.msk [vmem:[#allocation3 + $0x20] sm:$0xff] %vm565, 0.0
          %603 = vst.msk [vmem:[#allocation3 + $0x28] sm:$0xff] %vm565, 0.0
          %604 = vst.msk [vmem:[#allocation3 + $0x30] sm:$0xff] %vm565, 0.0
          %605 = vst.msk [vmem:[#allocation3 + $0x38] sm:$0xff] %vm565, 0.0
          %606 = vst.msk [vmem:[#allocation3 + $0x40] sm:$0xff] %vm565, 0.0
          %607 = vst.msk [vmem:[#allocation3 + $0x48] sm:$0xff] %vm565, 0.0
          %608 = vst.msk [vmem:[#allocation3 + $0x50] sm:$0xff] %vm565, 0.0
          %609 = vst.msk [vmem:[#allocation3 + $0x58] sm:$0xff] %vm565, 0.0
          %610 = vst.msk [vmem:[#allocation3 + $0x60] sm:$0xff] %vm565, 0.0
          %611 = vst.msk [vmem:[#allocation3 + $0x68] sm:$0xff] %vm565, 0.0
          %612 = vst.msk [vmem:[#allocation3 + $0x70] sm:$0xff] %vm565, 0.0
          %613 = vst.msk [vmem:[#allocation3 + $0x78] sm:$0xff] %vm565, 0.0
          %614 = vst.msk [vmem:[#allocation3 + $0x80] sm:$0xff] %vm565, 0.0
          %615 = vst.msk [vmem:[#allocation3 + $0x88] sm:$0xff] %vm565, 0.0
          %616 = vst.msk [vmem:[#allocation3 + $0x90] sm:$0xff] %vm565, 0.0
          %617 = vst.msk [vmem:[#allocation3 + $0x98] sm:$0xff] %vm565, 0.0
          %618 = vst.msk [vmem:[#allocation3 + $0xa0] sm:$0xff] %vm565, 0.0
          %619 = vst.msk [vmem:[#allocation3 + $0xa8] sm:$0xff] %vm565, 0.0
          %620 = vst.msk [vmem:[#allocation3 + $0xb0] sm:$0xff] %vm565, 0.0
          %621 = vst.msk [vmem:[#allocation3 + $0xb8] sm:$0xff] %vm565, 0.0
          %622 = vst.msk [vmem:[#allocation3 + $0xc0] sm:$0xff] %vm565, 0.0
          %623 = vst.msk [vmem:[#allocation3 + $0xc8] sm:$0xff] %vm565, 0.0
          %624 = vst.msk [vmem:[#allocation3 + $0xd0] sm:$0xff] %vm565, 0.0
          %625 = vst.msk [vmem:[#allocation3 + $0xd8] sm:$0xff] %vm565, 0.0
          %626 = vst.msk [vmem:[#allocation3 + $0xe0] sm:$0xff] %vm565, 0.0
          %627 = vst.msk [vmem:[#allocation3 + $0xe8] sm:$0xff] %vm565, 0.0
          %628 = vst.msk [vmem:[#allocation3 + $0xf0] sm:$0xff] %vm565, 0.0
          %629 = vst.msk [vmem:[#allocation3 + $0xf8] sm:$0xff] %vm565, 0.0
        $region79: #{bionic_forward.5} parent=66 // pred_fallthru
          _
        %v630 = vld [vmem:[%s452] sm:$0xff]
        %v631 = vld [vmem:[%s452 + $0x8] sm:$0xff]
        %v632 = vld [vmem:[%s452 + $0x10] sm:$0xff]
        %v633 = vld [vmem:[%s452 + $0x18] sm:$0xff]
        %v634 = vld [vmem:[%s452 + $0x20] sm:$0xff]
        %v635 = vld [vmem:[%s452 + $0x28] sm:$0xff]
        %v636 = vld [vmem:[%s452 + $0x30] sm:$0xff]
        %v637 = vld [vmem:[%s452 + $0x38] sm:$0xff]
        %v638 = vld [vmem:[%s452 + $0x40] sm:$0xff]
        %v639 = vld [vmem:[%s452 + $0x48] sm:$0xff]
        %v640 = vld [vmem:[%s452 + $0x50] sm:$0xff]
        %v641 = vld [vmem:[%s452 + $0x58] sm:$0xff]
        %v642 = vld [vmem:[%s452 + $0x60] sm:$0xff]
        %v643 = vld [vmem:[%s452 + $0x68] sm:$0xff]
        %v644 = vld [vmem:[%s452 + $0x70] sm:$0xff]
        %v645 = vld [vmem:[%s452 + $0x78] sm:$0xff]
        %v646 = vld [vmem:[%s452 + $0x80] sm:$0xff]
        %v647 = vld [vmem:[%s452 + $0x88] sm:$0xff]
        %v648 = vld [vmem:[%s452 + $0x90] sm:$0xff]
        %v649 = vld [vmem:[%s452 + $0x98] sm:$0xff]
        %v650 = vld [vmem:[%s452 + $0xa0] sm:$0xff]
        %v651 = vld [vmem:[%s452 + $0xa8] sm:$0xff]
        %v652 = vld [vmem:[%s452 + $0xb0] sm:$0xff]
        %v653 = vld [vmem:[%s452 + $0xb8] sm:$0xff]
        %v654 = vld [vmem:[%s452 + $0xc0] sm:$0xff]
        %v655 = vld [vmem:[%s452 + $0xc8] sm:$0xff]
        %v656 = vld [vmem:[%s452 + $0xd0] sm:$0xff]
        %v657 = vld [vmem:[%s452 + $0xd8] sm:$0xff]
        %v658 = vld [vmem:[%s452 + $0xe0] sm:$0xff]
        %v659 = vld [vmem:[%s452 + $0xe8] sm:$0xff]
        %v660 = vld [vmem:[%s452 + $0xf0] sm:$0xff]
        %v661 = vld [vmem:[%s452 + $0xf8] sm:$0xff]
        %v662 = vld [vmem:[%s452 + $0x100] sm:$0xff]
        %v663 = vld [vmem:[%s452 + $0x108] sm:$0xff]
        %v664 = vld [vmem:[%s452 + $0x110] sm:$0xff]
        %v665 = vld [vmem:[%s452 + $0x118] sm:$0xff]
        %v666 = vld [vmem:[%s452 + $0x120] sm:$0xff]
        %v667 = vld [vmem:[%s452 + $0x128] sm:$0xff]
        %v668 = vld [vmem:[%s452 + $0x130] sm:$0xff]
        %v669 = vld [vmem:[%s452 + $0x138] sm:$0xff]
        %v670 = vld [vmem:[%s452 + $0x140] sm:$0xff]
        %v671 = vld [vmem:[%s452 + $0x148] sm:$0xff]
        %v672 = vld [vmem:[%s452 + $0x150] sm:$0xff]
        %v673 = vld [vmem:[%s452 + $0x158] sm:$0xff]
        %v674 = vld [vmem:[%s452 + $0x160] sm:$0xff]
        %v675 = vld [vmem:[%s452 + $0x168] sm:$0xff]
        %v676 = vld [vmem:[%s452 + $0x170] sm:$0xff]
        %v677 = vld [vmem:[%s452 + $0x178] sm:$0xff]
        %v678 = vld [vmem:[%s452 + $0x180] sm:$0xff]
        %v679 = vld [vmem:[%s452 + $0x188] sm:$0xff]
        %v680 = vld [vmem:[%s452 + $0x190] sm:$0xff]
        %v681 = vld [vmem:[%s452 + $0x198] sm:$0xff]
        %v682 = vld [vmem:[%s452 + $0x1a0] sm:$0xff]
        %v683 = vld [vmem:[%s452 + $0x1a8] sm:$0xff]
        %v684 = vld [vmem:[%s452 + $0x1b0] sm:$0xff]
        %v685 = vld [vmem:[%s452 + $0x1b8] sm:$0xff]
        %v686 = vld [vmem:[%s452 + $0x1c0] sm:$0xff]
        %v687 = vld [vmem:[%s452 + $0x1c8] sm:$0xff]
        %v688 = vld [vmem:[%s452 + $0x1d0] sm:$0xff]
        %v689 = vld [vmem:[%s452 + $0x1d8] sm:$0xff]
        %v690 = vld [vmem:[%s452 + $0x1e0] sm:$0xff]
        %v691 = vld [vmem:[%s452 + $0x1e8] sm:$0xff]
        %v692 = vld [vmem:[%s452 + $0x1f0] sm:$0xff]
        %v693 = vld [vmem:[%s452 + $0x1f8] sm:$0xff]
        %vm694 = vcmp.ne.f32.partialorder %v630, 0.0
        %vm695 = vcmp.ne.f32.partialorder %v631, 0.0
        %vm696 = vcmp.ne.f32.partialorder %v632, 0.0
        %vm697 = vcmp.ne.f32.partialorder %v633, 0.0
        %vm698 = vcmp.ne.f32.partialorder %v634, 0.0
        %vm699 = vcmp.ne.f32.partialorder %v635, 0.0
        %vm700 = vcmp.ne.f32.partialorder %v636, 0.0
        %vm701 = vcmp.ne.f32.partialorder %v637, 0.0
        %vm702 = vcmp.ne.f32.partialorder %v638, 0.0
        %vm703 = vcmp.ne.f32.partialorder %v639, 0.0
        %vm704 = vcmp.ne.f32.partialorder %v640, 0.0
        %vm705 = vcmp.ne.f32.partialorder %v641, 0.0
        %vm706 = vcmp.ne.f32.partialorder %v642, 0.0
        %vm707 = vcmp.ne.f32.partialorder %v643, 0.0
        %vm708 = vcmp.ne.f32.partialorder %v644, 0.0
        %vm709 = vcmp.ne.f32.partialorder %v645, 0.0
        %vm710 = vcmp.ne.f32.partialorder %v646, 0.0
        %vm711 = vcmp.ne.f32.partialorder %v647, 0.0
        %vm712 = vcmp.ne.f32.partialorder %v648, 0.0
        %vm713 = vcmp.ne.f32.partialorder %v649, 0.0
        %vm714 = vcmp.ne.f32.partialorder %v650, 0.0
        %vm715 = vcmp.ne.f32.partialorder %v651, 0.0
        %vm716 = vcmp.ne.f32.partialorder %v652, 0.0
        %vm717 = vcmp.ne.f32.partialorder %v653, 0.0
        %vm718 = vcmp.ne.f32.partialorder %v654, 0.0
        %vm719 = vcmp.ne.f32.partialorder %v655, 0.0
        %vm720 = vcmp.ne.f32.partialorder %v656, 0.0
        %vm721 = vcmp.ne.f32.partialorder %v657, 0.0
        %vm722 = vcmp.ne.f32.partialorder %v658, 0.0
        %vm723 = vcmp.ne.f32.partialorder %v659, 0.0
        %vm724 = vcmp.ne.f32.partialorder %v660, 0.0
        %vm725 = vcmp.ne.f32.partialorder %v661, 0.0
        %vm726 = vcmp.ne.f32.partialorder %v662, 0.0
        %vm727 = vcmp.ne.f32.partialorder %v663, 0.0
        %vm728 = vcmp.ne.f32.partialorder %v664, 0.0
        %vm729 = vcmp.ne.f32.partialorder %v665, 0.0
        %vm730 = vcmp.ne.f32.partialorder %v666, 0.0
        %vm731 = vcmp.ne.f32.partialorder %v667, 0.0
        %vm732 = vcmp.ne.f32.partialorder %v668, 0.0
        %vm733 = vcmp.ne.f32.partialorder %v669, 0.0
        %vm734 = vcmp.ne.f32.partialorder %v670, 0.0
        %vm735 = vcmp.ne.f32.partialorder %v671, 0.0
        %vm736 = vcmp.ne.f32.partialorder %v672, 0.0
        %vm737 = vcmp.ne.f32.partialorder %v673, 0.0
        %vm738 = vcmp.ne.f32.partialorder %v674, 0.0
        %vm739 = vcmp.ne.f32.partialorder %v675, 0.0
        %vm740 = vcmp.ne.f32.partialorder %v676, 0.0
        %vm741 = vcmp.ne.f32.partialorder %v677, 0.0
        %vm742 = vcmp.ne.f32.partialorder %v678, 0.0
        %vm743 = vcmp.ne.f32.partialorder %v679, 0.0
        %vm744 = vcmp.ne.f32.partialorder %v680, 0.0
        %vm745 = vcmp.ne.f32.partialorder %v681, 0.0
        %vm746 = vcmp.ne.f32.partialorder %v682, 0.0
        %vm747 = vcmp.ne.f32.partialorder %v683, 0.0
        %vm748 = vcmp.ne.f32.partialorder %v684, 0.0
        %vm749 = vcmp.ne.f32.partialorder %v685, 0.0
        %vm750 = vcmp.ne.f32.partialorder %v686, 0.0
        %vm751 = vcmp.ne.f32.partialorder %v687, 0.0
        %vm752 = vcmp.ne.f32.partialorder %v688, 0.0
        %vm753 = vcmp.ne.f32.partialorder %v689, 0.0
        %vm754 = vcmp.ne.f32.partialorder %v690, 0.0
        %vm755 = vcmp.ne.f32.partialorder %v691, 0.0
        %vm756 = vcmp.ne.f32.partialorder %v692, 0.0
        %vm757 = vcmp.ne.f32.partialorder %v693, 0.0
        %v758 = vsel %vm694, 1, 0
        %v759 = vsel %vm695, 1, 0
        %v760 = vsel %vm696, 1, 0
        %v761 = vsel %vm697, 1, 0
        %v762 = vsel %vm698, 1, 0
        %v763 = vsel %vm699, 1, 0
        %v764 = vsel %vm700, 1, 0
        %v765 = vsel %vm701, 1, 0
        %v766 = vsel %vm702, 1, 0
        %v767 = vsel %vm703, 1, 0
        %v768 = vsel %vm704, 1, 0
        %v769 = vsel %vm705, 1, 0
        %v770 = vsel %vm706, 1, 0
        %v771 = vsel %vm707, 1, 0
        %v772 = vsel %vm708, 1, 0
        %v773 = vsel %vm709, 1, 0
        %v774 = vsel %vm710, 1, 0
        %v775 = vsel %vm711, 1, 0
        %v776 = vsel %vm712, 1, 0
        %v777 = vsel %vm713, 1, 0
        %v778 = vsel %vm714, 1, 0
        %v779 = vsel %vm715, 1, 0
        %v780 = vsel %vm716, 1, 0
        %v781 = vsel %vm717, 1, 0
        %v782 = vsel %vm718, 1, 0
        %v783 = vsel %vm719, 1, 0
        %v784 = vsel %vm720, 1, 0
        %v785 = vsel %vm721, 1, 0
        %v786 = vsel %vm722, 1, 0
        %v787 = vsel %vm723, 1, 0
        %v788 = vsel %vm724, 1, 0
        %v789 = vsel %vm725, 1, 0
        %v790 = vsel %vm726, 1, 0
        %v791 = vsel %vm727, 1, 0
        %v792 = vsel %vm728, 1, 0
        %v793 = vsel %vm729, 1, 0
        %v794 = vsel %vm730, 1, 0
        %v795 = vsel %vm731, 1, 0
        %v796 = vsel %vm732, 1, 0
        %v797 = vsel %vm733, 1, 0
        %v798 = vsel %vm734, 1, 0
        %v799 = vsel %vm735, 1, 0
        %v800 = vsel %vm736, 1, 0
        %v801 = vsel %vm737, 1, 0
        %v802 = vsel %vm738, 1, 0
        %v803 = vsel %vm739, 1, 0
        %v804 = vsel %vm740, 1, 0
        %v805 = vsel %vm741, 1, 0
        %v806 = vsel %vm742, 1, 0
        %v807 = vsel %vm743, 1, 0
        %v808 = vsel %vm744, 1, 0
        %v809 = vsel %vm745, 1, 0
        %v810 = vsel %vm746, 1, 0
        %v811 = vsel %vm747, 1, 0
        %v812 = vsel %vm748, 1, 0
        %v813 = vsel %vm749, 1, 0
        %v814 = vsel %vm750, 1, 0
        %v815 = vsel %vm751, 1, 0
        %v816 = vsel %vm752, 1, 0
        %v817 = vsel %vm753, 1, 0
        %v818 = vsel %vm754, 1, 0
        %v819 = vsel %vm755, 1, 0
        %v820 = vsel %vm756, 1, 0
        %v821 = vsel %vm757, 1, 0
        %v822 = vcvt.s32.f32 %v758
        %v823 = vcvt.s32.f32 %v759
        %v824 = vcvt.s32.f32 %v760
        %v825 = vcvt.s32.f32 %v761
        %v826 = vcvt.s32.f32 %v762
        %v827 = vcvt.s32.f32 %v763
        %v828 = vcvt.s32.f32 %v764
        %v829 = vcvt.s32.f32 %v765
        %v830 = vcvt.s32.f32 %v766
        %v831 = vcvt.s32.f32 %v767
        %v832 = vcvt.s32.f32 %v768
        %v833 = vcvt.s32.f32 %v769
        %v834 = vcvt.s32.f32 %v770
        %v835 = vcvt.s32.f32 %v771
        %v836 = vcvt.s32.f32 %v772
        %v837 = vcvt.s32.f32 %v773
        %v838 = vcvt.s32.f32 %v774
        %v839 = vcvt.s32.f32 %v775
        %v840 = vcvt.s32.f32 %v776
        %v841 = vcvt.s32.f32 %v777
        %v842 = vcvt.s32.f32 %v778
        %v843 = vcvt.s32.f32 %v779
        %v844 = vcvt.s32.f32 %v780
        %v845 = vcvt.s32.f32 %v781
        %v846 = vcvt.s32.f32 %v782
        %v847 = vcvt.s32.f32 %v783
        %v848 = vcvt.s32.f32 %v784
        %v849 = vcvt.s32.f32 %v785
        %v850 = vcvt.s32.f32 %v786
        %v851 = vcvt.s32.f32 %v787
        %v852 = vcvt.s32.f32 %v788
        %v853 = vcvt.s32.f32 %v789
        %v854 = vcvt.s32.f32 %v790
        %v855 = vcvt.s32.f32 %v791
        %v856 = vcvt.s32.f32 %v792
        %v857 = vcvt.s32.f32 %v793
        %v858 = vcvt.s32.f32 %v794
        %v859 = vcvt.s32.f32 %v795
        %v860 = vcvt.s32.f32 %v796
        %v861 = vcvt.s32.f32 %v797
        %v862 = vcvt.s32.f32 %v798
        %v863 = vcvt.s32.f32 %v799
        %v864 = vcvt.s32.f32 %v800
        %v865 = vcvt.s32.f32 %v801
        %v866 = vcvt.s32.f32 %v802
        %v867 = vcvt.s32.f32 %v803
        %v868 = vcvt.s32.f32 %v804
        %v869 = vcvt.s32.f32 %v805
        %v870 = vcvt.s32.f32 %v806
        %v871 = vcvt.s32.f32 %v807
        %v872 = vcvt.s32.f32 %v808
        %v873 = vcvt.s32.f32 %v809
        %v874 = vcvt.s32.f32 %v810
        %v875 = vcvt.s32.f32 %v811
        %v876 = vcvt.s32.f32 %v812
        %v877 = vcvt.s32.f32 %v813
        %v878 = vcvt.s32.f32 %v814
        %v879 = vcvt.s32.f32 %v815
        %v880 = vcvt.s32.f32 %v816
        %v881 = vcvt.s32.f32 %v817
        %v882 = vcvt.s32.f32 %v818
        %v883 = vcvt.s32.f32 %v819
        %v884 = vcvt.s32.f32 %v820
        %v885 = vcvt.s32.f32 %v821
        %v886 = vpack.c.bf16 %v824, %v822
        %v887 = vpack.c.bf16 %v825, %v823
        %v888 = vpack.c.bf16 %v828, %v826
        %v889 = vpack.c.bf16 %v829, %v827
        %v890 = vpack.c.bf16 %v832, %v830
        %v891 = vpack.c.bf16 %v833, %v831
        %v892 = vpack.c.bf16 %v836, %v834
        %v893 = vpack.c.bf16 %v837, %v835
        %v894 = vpack.c.bf16 %v840, %v838
        %v895 = vpack.c.bf16 %v841, %v839
        %v896 = vpack.c.bf16 %v844, %v842
        %v897 = vpack.c.bf16 %v845, %v843
        %v898 = vpack.c.bf16 %v848, %v846
        %v899 = vpack.c.bf16 %v849, %v847
        %v900 = vpack.c.bf16 %v852, %v850
        %v901 = vpack.c.bf16 %v853, %v851
        %v902 = vpack.c.bf16 %v856, %v854
        %v903 = vpack.c.bf16 %v857, %v855
        %v904 = vpack.c.bf16 %v860, %v858
        %v905 = vpack.c.bf16 %v861, %v859
        %v906 = vpack.c.bf16 %v864, %v862
        %v907 = vpack.c.bf16 %v865, %v863
        %v908 = vpack.c.bf16 %v868, %v866
        %v909 = vpack.c.bf16 %v869, %v867
        %v910 = vpack.c.bf16 %v872, %v870
        %v911 = vpack.c.bf16 %v873, %v871
        %v912 = vpack.c.bf16 %v876, %v874
        %v913 = vpack.c.bf16 %v877, %v875
        %v914 = vpack.c.bf16 %v880, %v878
        %v915 = vpack.c.bf16 %v881, %v879
        %v916 = vpack.c.bf16 %v884, %v882
        %v917 = vpack.c.bf16 %v885, %v883
        %v918 = vpack.c.bf16 %v632, %v630
        %v919 = vpack.c.bf16 %v633, %v631
        %v920 = vpack.c.bf16 %v636, %v634
        %v921 = vpack.c.bf16 %v637, %v635
        %v922 = vpack.c.bf16 %v640, %v638
        %v923 = vpack.c.bf16 %v641, %v639
        %v924 = vpack.c.bf16 %v644, %v642
        %v925 = vpack.c.bf16 %v645, %v643
        %v926 = vpack.c.bf16 %v648, %v646
        %v927 = vpack.c.bf16 %v649, %v647
        %v928 = vpack.c.bf16 %v652, %v650
        %v929 = vpack.c.bf16 %v653, %v651
        %v930 = vpack.c.bf16 %v656, %v654
        %v931 = vpack.c.bf16 %v657, %v655
        %v932 = vpack.c.bf16 %v660, %v658
        %v933 = vpack.c.bf16 %v661, %v659
        %v934 = vpack.c.bf16 %v664, %v662
        %v935 = vpack.c.bf16 %v665, %v663
        %v936 = vpack.c.bf16 %v668, %v666
        %v937 = vpack.c.bf16 %v669, %v667
        %v938 = vpack.c.bf16 %v672, %v670
        %v939 = vpack.c.bf16 %v673, %v671
        %v940 = vpack.c.bf16 %v676, %v674
        %v941 = vpack.c.bf16 %v677, %v675
        %v942 = vpack.c.bf16 %v680, %v678
        %v943 = vpack.c.bf16 %v681, %v679
        %v944 = vpack.c.bf16 %v684, %v682
        %v945 = vpack.c.bf16 %v685, %v683
        %v946 = vpack.c.bf16 %v688, %v686
        %v947 = vpack.c.bf16 %v689, %v687
        %v948 = vpack.c.bf16 %v692, %v690
        %v949 = vpack.c.bf16 %v693, %v691
        %v950 = vld [vmem:[#allocation2] sm:$0xff]
        %v951 = vld [vmem:[#allocation2 + $0x8] sm:$0xff]
        %v952 = vld [vmem:[#allocation2 + $0x10] sm:$0xff]
        %v953 = vld [vmem:[#allocation2 + $0x18] sm:$0xff]
        %v954 = vld [vmem:[#allocation2 + $0x20] sm:$0xff]
        %v955 = vld [vmem:[#allocation2 + $0x28] sm:$0xff]
        %v956 = vld [vmem:[#allocation2 + $0x30] sm:$0xff]
        %v957 = vld [vmem:[#allocation2 + $0x38] sm:$0xff]
        %v958 = vld [vmem:[#allocation2 + $0x40] sm:$0xff]
        %v959 = vld [vmem:[#allocation2 + $0x48] sm:$0xff]
        %v960 = vld [vmem:[#allocation2 + $0x50] sm:$0xff]
        %v961 = vld [vmem:[#allocation2 + $0x58] sm:$0xff]
        %v962 = vld [vmem:[#allocation2 + $0x60] sm:$0xff]
        %v963 = vld [vmem:[#allocation2 + $0x68] sm:$0xff]
        %v964 = vld [vmem:[#allocation2 + $0x70] sm:$0xff]
        %v965 = vld [vmem:[#allocation2 + $0x78] sm:$0xff]
        %v966 = vld [vmem:[#allocation2 + $0x80] sm:$0xff]
        %v967 = vld [vmem:[#allocation2 + $0x88] sm:$0xff]
        %v968 = vld [vmem:[#allocation2 + $0x90] sm:$0xff]
        %v969 = vld [vmem:[#allocation2 + $0x98] sm:$0xff]
        %v970 = vld [vmem:[#allocation2 + $0xa0] sm:$0xff]
        %v971 = vld [vmem:[#allocation2 + $0xa8] sm:$0xff]
        %v972 = vld [vmem:[#allocation2 + $0xb0] sm:$0xff]
        %v973 = vld [vmem:[#allocation2 + $0xb8] sm:$0xff]
        %v974 = vld [vmem:[#allocation2 + $0xc0] sm:$0xff]
        %v975 = vld [vmem:[#allocation2 + $0xc8] sm:$0xff]
        %v976 = vld [vmem:[#allocation2 + $0xd0] sm:$0xff]
        %v977 = vld [vmem:[#allocation2 + $0xd8] sm:$0xff]
        %v978 = vld [vmem:[#allocation2 + $0xe0] sm:$0xff]
        %v979 = vld [vmem:[#allocation2 + $0xe8] sm:$0xff]
        %v980 = vld [vmem:[#allocation2 + $0xf0] sm:$0xff]
        %v981 = vld [vmem:[#allocation2 + $0xf8] sm:$0xff]
        %v982 = vld [vmem:[%s502] sm:$0xf]
        %v983 = vld [vmem:[%s502 + $0x4] sm:$0xf]
        %v984 = vld [vmem:[%s502 + $0x8] sm:$0xf]
        %v985 = vld [vmem:[%s502 + $0xc] sm:$0xf]
        %v986 = vld [vmem:[%s502 + $0x10] sm:$0xf]
        %v987 = vld [vmem:[%s502 + $0x14] sm:$0xf]
        %v988 = vld [vmem:[%s502 + $0x18] sm:$0xf]
        %v989 = vld [vmem:[%s502 + $0x1c] sm:$0xf]
        %v990 = vld [vmem:[%s502 + $0x20] sm:$0xf]
        %v991 = vld [vmem:[%s502 + $0x24] sm:$0xf]
        %v992 = vld [vmem:[%s502 + $0x28] sm:$0xf]
        %v993 = vld [vmem:[%s502 + $0x2c] sm:$0xf]
        %v994 = vld [vmem:[%s502 + $0x30] sm:$0xf]
        %v995 = vld [vmem:[%s502 + $0x34] sm:$0xf]
        %v996 = vld [vmem:[%s502 + $0x38] sm:$0xf]
        %v997 = vld [vmem:[%s502 + $0x3c] sm:$0xf]
        %v998 = vld [vmem:[%s502 + $0x40] sm:$0xf]
        %v999 = vld [vmem:[%s502 + $0x44] sm:$0xf]
        %v1000 = vld [vmem:[%s502 + $0x48] sm:$0xf]
        %v1001 = vld [vmem:[%s502 + $0x4c] sm:$0xf]
        %v1002 = vld [vmem:[%s502 + $0x50] sm:$0xf]
        %v1003 = vld [vmem:[%s502 + $0x54] sm:$0xf]
        %v1004 = vld [vmem:[%s502 + $0x58] sm:$0xf]
        %v1005 = vld [vmem:[%s502 + $0x5c] sm:$0xf]
        %v1006 = vld [vmem:[%s502 + $0x60] sm:$0xf]
        %v1007 = vld [vmem:[%s502 + $0x64] sm:$0xf]
        %v1008 = vld [vmem:[%s502 + $0x68] sm:$0xf]
        %v1009 = vld [vmem:[%s502 + $0x6c] sm:$0xf]
        %v1010 = vld [vmem:[%s502 + $0x70] sm:$0xf]
        %v1011 = vld [vmem:[%s502 + $0x74] sm:$0xf]
        %v1012 = vld [vmem:[%s502 + $0x78] sm:$0xf]
        %v1013 = vld [vmem:[%s502 + $0x7c] sm:$0xf]
        %v1046 = vunpack.c.l.b16 %v982
        %v1047 = vunpack.c.l.b16 %v983
        %v1048 = vunpack.c.l.b16 %v984
        %v1049 = vunpack.c.l.b16 %v985
        %v1050 = vunpack.c.l.b16 %v986
        %v1051 = vunpack.c.l.b16 %v987
        %v1052 = vunpack.c.l.b16 %v988
        %v1053 = vunpack.c.l.b16 %v989
        %v1054 = vunpack.c.l.b16 %v990
        %v1055 = vunpack.c.l.b16 %v991
        %v1056 = vunpack.c.l.b16 %v992
        %v1057 = vunpack.c.l.b16 %v993
        %v1058 = vunpack.c.l.b16 %v994
        %v1059 = vunpack.c.l.b16 %v995
        %v1060 = vunpack.c.l.b16 %v996
        %v1061 = vunpack.c.l.b16 %v997
        %v1062 = vunpack.c.l.b16 %v998
        %v1063 = vunpack.c.l.b16 %v999
        %v1064 = vunpack.c.l.b16 %v1000
        %v1065 = vunpack.c.l.b16 %v1001
        %v1066 = vunpack.c.l.b16 %v1002
        %v1067 = vunpack.c.l.b16 %v1003
        %v1068 = vunpack.c.l.b16 %v1004
        %v1069 = vunpack.c.l.b16 %v1005
        %v1070 = vunpack.c.l.b16 %v1006
        %v1071 = vunpack.c.l.b16 %v1007
        %v1072 = vunpack.c.l.b16 %v1008
        %v1073 = vunpack.c.l.b16 %v1009
        %v1074 = vunpack.c.l.b16 %v1010
        %v1075 = vunpack.c.l.b16 %v1011
        %v1076 = vunpack.c.l.b16 %v1012
        %v1077 = vunpack.c.l.b16 %v1013
        %v1078 = vpack.c.b16 %v1047, %v1046
        %v1079 = vpack.c.b16 %v1049, %v1048
        %v1080 = vpack.c.b16 %v1051, %v1050
        %v1081 = vpack.c.b16 %v1053, %v1052
        %v1082 = vpack.c.b16 %v1055, %v1054
        %v1083 = vpack.c.b16 %v1057, %v1056
        %v1084 = vpack.c.b16 %v1059, %v1058
        %v1085 = vpack.c.b16 %v1061, %v1060
        %v1086 = vpack.c.b16 %v1063, %v1062
        %v1087 = vpack.c.b16 %v1065, %v1064
        %v1088 = vpack.c.b16 %v1067, %v1066
        %v1089 = vpack.c.b16 %v1069, %v1068
        %v1090 = vpack.c.b16 %v1071, %v1070
        %v1091 = vpack.c.b16 %v1073, %v1072
        %v1092 = vpack.c.b16 %v1075, %v1074
        %v1093 = vpack.c.b16 %v1077, %v1076
        %1110 = vmatprep.subr.bf16.mxu0 0
        %1111 = vmatpush1.bf16.msra.mxu0 %v1085
        %1112 = vmatprep.subr.bf16.mxu0 0
        %1113 = vmatpush1.bf16.msra.mxu0 %v1084
        %1114 = vmatprep.subr.bf16.mxu0 0
        %1115 = vmatpush1.bf16.msra.mxu0 %v1083
        %1116 = vmatprep.subr.bf16.mxu0 0
        %1117 = vmatpush1.bf16.msra.mxu0 %v1082
        %1118 = vmatprep.subr.bf16.mxu0 0
        %1119 = vmatpush1.bf16.msra.mxu0 %v1081
        %1120 = vmatprep.subr.bf16.mxu0 0
        %1121 = vmatpush1.bf16.msra.mxu0 %v1080
        %1122 = vmatprep.subr.bf16.mxu0 0
        %1123 = vmatpush1.bf16.msra.mxu0 %v1079
        %1124 = vmatprep.subr.bf16.mxu0 0
        %1125 = vmatpush1.bf16.msra.mxu0 %v1078
        %1126 = vmatprep.subr.bf16.mxu0 0
        %1127 = vmatpush2.bf16.msra.mxu0 %v1093
        %1128 = vmatprep.subr.bf16.mxu0 0
        %1129 = vmatpush2.bf16.msra.mxu0 %v1092
        %1130 = vmatprep.subr.bf16.mxu0 0
        %1131 = vmatpush2.bf16.msra.mxu0 %v1091
        %1132 = vmatprep.subr.bf16.mxu0 0
        %1133 = vmatpush2.bf16.msra.mxu0 %v1090
        %1134 = vmatprep.subr.bf16.mxu0 0
        %1135 = vmatpush2.bf16.msra.mxu0 %v1089
        %1136 = vmatprep.subr.bf16.mxu0 0
        %1137 = vmatpush2.bf16.msra.mxu0 %v1088
        %1138 = vmatprep.subr.bf16.mxu0 0
        %1139 = vmatpush2.bf16.msra.mxu0 %v1087
        %1140 = vmatprep.subr.bf16.mxu0 0
        %1141 = vmatpush2.bf16.msra.mxu0 %v1086
        %1142 = vmatprep.mubr.bf16.mxu0 %v919
        %1143 = vmatmul.mubr.bf16.gmra.mxu0 %v918
        %v1144 = vpop.f32.mrf.mxu0
        %v1145 = vadd.f32 0.0, %v1144
        %v1146 = vpop.f32.mrf.mxu0
        %v1147 = vpop.f32.mrf.mxu0
        %v1148 = vadd.f32 0.0, %v1147
        %v1149 = vpop.f32.mrf.mxu0
        %1150 = vmatprep.mubr.bf16.mxu0 %v921
        %1151 = vmatmul.mubr.bf16.gmra.mxu0 %v920
        %v1152 = vpop.f32.mrf.mxu0
        %v1153 = vadd.f32 0.0, %v1152
        %v1154 = vpop.f32.mrf.mxu0
        %v1155 = vpop.f32.mrf.mxu0
        %v1156 = vadd.f32 0.0, %v1155
        %v1157 = vpop.f32.mrf.mxu0
        %1158 = vmatprep.mubr.bf16.mxu0 %v923
        %1159 = vmatmul.mubr.bf16.gmra.mxu0 %v922
        %v1160 = vpop.f32.mrf.mxu0
        %v1161 = vadd.f32 0.0, %v1160
        %v1162 = vpop.f32.mrf.mxu0
        %v1163 = vpop.f32.mrf.mxu0
        %v1164 = vadd.f32 0.0, %v1163
        %v1165 = vpop.f32.mrf.mxu0
        %1166 = vmatprep.mubr.bf16.mxu0 %v925
        %1167 = vmatmul.mubr.bf16.gmra.mxu0 %v924
        %v1168 = vpop.f32.mrf.mxu0
        %v1169 = vadd.f32 0.0, %v1168
        %v1170 = vpop.f32.mrf.mxu0
        %v1171 = vpop.f32.mrf.mxu0
        %v1172 = vadd.f32 0.0, %v1171
        %v1173 = vpop.f32.mrf.mxu0
        %1174 = vmatprep.mubr.bf16.mxu0 %v927
        %1175 = vmatmul.mubr.bf16.gmra.mxu0 %v926
        %v1176 = vpop.f32.mrf.mxu0
        %v1177 = vadd.f32 0.0, %v1176
        %v1178 = vpop.f32.mrf.mxu0
        %v1179 = vpop.f32.mrf.mxu0
        %v1180 = vadd.f32 0.0, %v1179
        %v1181 = vpop.f32.mrf.mxu0
        %1182 = vmatprep.mubr.bf16.mxu0 %v929
        %1183 = vmatmul.mubr.bf16.gmra.mxu0 %v928
        %v1184 = vpop.f32.mrf.mxu0
        %v1185 = vadd.f32 0.0, %v1184
        %v1186 = vpop.f32.mrf.mxu0
        %v1187 = vpop.f32.mrf.mxu0
        %v1188 = vadd.f32 0.0, %v1187
        %v1189 = vpop.f32.mrf.mxu0
        %1190 = vmatprep.mubr.bf16.mxu0 %v931
        %1191 = vmatmul.mubr.bf16.gmra.mxu0 %v930
        %v1192 = vpop.f32.mrf.mxu0
        %v1193 = vadd.f32 0.0, %v1192
        %v1194 = vpop.f32.mrf.mxu0
        %v1195 = vpop.f32.mrf.mxu0
        %v1196 = vadd.f32 0.0, %v1195
        %v1197 = vpop.f32.mrf.mxu0
        %1198 = vmatprep.mubr.bf16.mxu0 %v933
        %1199 = vmatmul.mubr.bf16.gmra.mxu0 %v932
        %v1200 = vpop.f32.mrf.mxu0
        %v1201 = vadd.f32 0.0, %v1200
        %v1202 = vpop.f32.mrf.mxu0
        %v1203 = vpop.f32.mrf.mxu0
        %v1204 = vadd.f32 0.0, %v1203
        %v1205 = vpop.f32.mrf.mxu0
        %1206 = vmatprep.mubr.bf16.mxu0 %v935
        %1207 = vmatmul.mubr.bf16.gmra.mxu0 %v934
        %v1208 = vpop.f32.mrf.mxu0
        %v1209 = vadd.f32 0.0, %v1208
        %v1210 = vpop.f32.mrf.mxu0
        %v1211 = vpop.f32.mrf.mxu0
        %v1212 = vadd.f32 0.0, %v1211
        %v1213 = vpop.f32.mrf.mxu0
        %1214 = vmatprep.mubr.bf16.mxu0 %v937
        %1215 = vmatmul.mubr.bf16.gmra.mxu0 %v936
        %v1216 = vpop.f32.mrf.mxu0
        %v1217 = vadd.f32 0.0, %v1216
        %v1218 = vpop.f32.mrf.mxu0
        %v1219 = vpop.f32.mrf.mxu0
        %v1220 = vadd.f32 0.0, %v1219
        %v1221 = vpop.f32.mrf.mxu0
        %1222 = vmatprep.mubr.bf16.mxu0 %v939
        %1223 = vmatmul.mubr.bf16.gmra.mxu0 %v938
        %v1224 = vpop.f32.mrf.mxu0
        %v1225 = vadd.f32 0.0, %v1224
        %v1226 = vpop.f32.mrf.mxu0
        %v1227 = vpop.f32.mrf.mxu0
        %v1228 = vadd.f32 0.0, %v1227
        %v1229 = vpop.f32.mrf.mxu0
        %1230 = vmatprep.mubr.bf16.mxu0 %v941
        %1231 = vmatmul.mubr.bf16.gmra.mxu0 %v940
        %v1232 = vpop.f32.mrf.mxu0
        %v1233 = vadd.f32 0.0, %v1232
        %v1234 = vpop.f32.mrf.mxu0
        %v1235 = vpop.f32.mrf.mxu0
        %v1236 = vadd.f32 0.0, %v1235
        %v1237 = vpop.f32.mrf.mxu0
        %1238 = vmatprep.mubr.bf16.mxu0 %v943
        %1239 = vmatmul.mubr.bf16.gmra.mxu0 %v942
        %v1240 = vpop.f32.mrf.mxu0
        %v1241 = vadd.f32 0.0, %v1240
        %v1242 = vpop.f32.mrf.mxu0
        %v1243 = vpop.f32.mrf.mxu0
        %v1244 = vadd.f32 0.0, %v1243
        %v1245 = vpop.f32.mrf.mxu0
        %1246 = vmatprep.mubr.bf16.mxu0 %v945
        %1247 = vmatmul.mubr.bf16.gmra.mxu0 %v944
        %v1248 = vpop.f32.mrf.mxu0
        %v1249 = vadd.f32 0.0, %v1248
        %v1250 = vpop.f32.mrf.mxu0
        %v1251 = vpop.f32.mrf.mxu0
        %v1252 = vadd.f32 0.0, %v1251
        %v1253 = vpop.f32.mrf.mxu0
        %1254 = vmatprep.mubr.bf16.mxu0 %v947
        %1255 = vmatmul.mubr.bf16.gmra.mxu0 %v946
        %v1256 = vpop.f32.mrf.mxu0
        %v1257 = vadd.f32 0.0, %v1256
        %v1258 = vpop.f32.mrf.mxu0
        %v1259 = vpop.f32.mrf.mxu0
        %v1260 = vadd.f32 0.0, %v1259
        %v1261 = vpop.f32.mrf.mxu0
        %1262 = vmatprep.mubr.bf16.mxu0 %v949
        %1263 = vmatmul.mubr.bf16.gmra.mxu0 %v948
        %v1264 = vpop.f32.mrf.mxu0
        %v1265 = vadd.f32 0.0, %v1264
        %v1266 = vpop.f32.mrf.mxu0
        %v1267 = vpop.f32.mrf.mxu0
        %v1268 = vadd.f32 0.0, %v1267
        %v1269 = vpop.f32.mrf.mxu0
        %1270 = vdwg.mxu0
        %v1271 = vadd.f32 %v950, %v1145
        %v1272 = vadd.f32 %v951, %v1148
        %v1273 = vadd.f32 %v952, %v1153
        %v1274 = vadd.f32 %v953, %v1156
        %v1275 = vadd.f32 %v954, %v1161
        %v1276 = vadd.f32 %v955, %v1164
        %v1277 = vadd.f32 %v956, %v1169
        %v1278 = vadd.f32 %v957, %v1172
        %v1279 = vadd.f32 %v958, %v1177
        %v1280 = vadd.f32 %v959, %v1180
        %v1281 = vadd.f32 %v960, %v1185
        %v1282 = vadd.f32 %v961, %v1188
        %v1283 = vadd.f32 %v962, %v1193
        %v1284 = vadd.f32 %v963, %v1196
        %v1285 = vadd.f32 %v964, %v1201
        %v1286 = vadd.f32 %v965, %v1204
        %v1287 = vadd.f32 %v966, %v1209
        %v1288 = vadd.f32 %v967, %v1212
        %v1289 = vadd.f32 %v968, %v1217
        %v1290 = vadd.f32 %v969, %v1220
        %v1291 = vadd.f32 %v970, %v1225
        %v1292 = vadd.f32 %v971, %v1228
        %v1293 = vadd.f32 %v972, %v1233
        %v1294 = vadd.f32 %v973, %v1236
        %v1295 = vadd.f32 %v974, %v1241
        %v1296 = vadd.f32 %v975, %v1244
        %v1297 = vadd.f32 %v976, %v1249
        %v1298 = vadd.f32 %v977, %v1252
        %v1299 = vadd.f32 %v978, %v1257
        %v1300 = vadd.f32 %v979, %v1260
        %v1301 = vadd.f32 %v980, %v1265
        %v1302 = vadd.f32 %v981, %v1268
        %vm1303 = vcmask 130048
        %1304 = vst.msk [vmem:[#allocation2] sm:$0xff] %vm1303, %v1271
        %1305 = vst.msk [vmem:[#allocation2 + $0x8] sm:$0xff] %vm1303, %v1272
        %1306 = vst.msk [vmem:[#allocation2 + $0x10] sm:$0xff] %vm1303, %v1273
        %1307 = vst.msk [vmem:[#allocation2 + $0x18] sm:$0xff] %vm1303, %v1274
        %1308 = vst.msk [vmem:[#allocation2 + $0x20] sm:$0xff] %vm1303, %v1275
        %1309 = vst.msk [vmem:[#allocation2 + $0x28] sm:$0xff] %vm1303, %v1276
        %1310 = vst.msk [vmem:[#allocation2 + $0x30] sm:$0xff] %vm1303, %v1277
        %1311 = vst.msk [vmem:[#allocation2 + $0x38] sm:$0xff] %vm1303, %v1278
        %1312 = vst.msk [vmem:[#allocation2 + $0x40] sm:$0xff] %vm1303, %v1279
        %1313 = vst.msk [vmem:[#allocation2 + $0x48] sm:$0xff] %vm1303, %v1280
        %1314 = vst.msk [vmem:[#allocation2 + $0x50] sm:$0xff] %vm1303, %v1281
        %1315 = vst.msk [vmem:[#allocation2 + $0x58] sm:$0xff] %vm1303, %v1282
        %1316 = vst.msk [vmem:[#allocation2 + $0x60] sm:$0xff] %vm1303, %v1283
        %1317 = vst.msk [vmem:[#allocation2 + $0x68] sm:$0xff] %vm1303, %v1284
        %1318 = vst.msk [vmem:[#allocation2 + $0x70] sm:$0xff] %vm1303, %v1285
        %1319 = vst.msk [vmem:[#allocation2 + $0x78] sm:$0xff] %vm1303, %v1286
        %1320 = vst.msk [vmem:[#allocation2 + $0x80] sm:$0xff] %vm1303, %v1287
        %1321 = vst.msk [vmem:[#allocation2 + $0x88] sm:$0xff] %vm1303, %v1288
        %1322 = vst.msk [vmem:[#allocation2 + $0x90] sm:$0xff] %vm1303, %v1289
        %1323 = vst.msk [vmem:[#allocation2 + $0x98] sm:$0xff] %vm1303, %v1290
        %1324 = vst.msk [vmem:[#allocation2 + $0xa0] sm:$0xff] %vm1303, %v1291
        %1325 = vst.msk [vmem:[#allocation2 + $0xa8] sm:$0xff] %vm1303, %v1292
        %1326 = vst.msk [vmem:[#allocation2 + $0xb0] sm:$0xff] %vm1303, %v1293
        %1327 = vst.msk [vmem:[#allocation2 + $0xb8] sm:$0xff] %vm1303, %v1294
        %1328 = vst.msk [vmem:[#allocation2 + $0xc0] sm:$0xff] %vm1303, %v1295
        %1329 = vst.msk [vmem:[#allocation2 + $0xc8] sm:$0xff] %vm1303, %v1296
        %1330 = vst.msk [vmem:[#allocation2 + $0xd0] sm:$0xff] %vm1303, %v1297
        %1331 = vst.msk [vmem:[#allocation2 + $0xd8] sm:$0xff] %vm1303, %v1298
        %1332 = vst.msk [vmem:[#allocation2 + $0xe0] sm:$0xff] %vm1303, %v1299
        %1333 = vst.msk [vmem:[#allocation2 + $0xe8] sm:$0xff] %vm1303, %v1300
        %1334 = vst.msk [vmem:[#allocation2 + $0xf0] sm:$0xff] %vm1303, %v1301
        %1335 = vst.msk [vmem:[#allocation2 + $0xf8] sm:$0xff] %vm1303, %v1302
        %v1336 = vld [vmem:[#allocation3] sm:$0xff]
        %v1337 = vld [vmem:[#allocation3 + $0x8] sm:$0xff]
        %v1338 = vld [vmem:[#allocation3 + $0x10] sm:$0xff]
        %v1339 = vld [vmem:[#allocation3 + $0x18] sm:$0xff]
        %v1340 = vld [vmem:[#allocation3 + $0x20] sm:$0xff]
        %v1341 = vld [vmem:[#allocation3 + $0x28] sm:$0xff]
        %v1342 = vld [vmem:[#allocation3 + $0x30] sm:$0xff]
        %v1343 = vld [vmem:[#allocation3 + $0x38] sm:$0xff]
        %v1344 = vld [vmem:[#allocation3 + $0x40] sm:$0xff]
        %v1345 = vld [vmem:[#allocation3 + $0x48] sm:$0xff]
        %v1346 = vld [vmem:[#allocation3 + $0x50] sm:$0xff]
        %v1347 = vld [vmem:[#allocation3 + $0x58] sm:$0xff]
        %v1348 = vld [vmem:[#allocation3 + $0x60] sm:$0xff]
        %v1349 = vld [vmem:[#allocation3 + $0x68] sm:$0xff]
        %v1350 = vld [vmem:[#allocation3 + $0x70] sm:$0xff]
        %v1351 = vld [vmem:[#allocation3 + $0x78] sm:$0xff]
        %v1352 = vld [vmem:[#allocation3 + $0x80] sm:$0xff]
        %v1353 = vld [vmem:[#allocation3 + $0x88] sm:$0xff]
        %v1354 = vld [vmem:[#allocation3 + $0x90] sm:$0xff]
        %v1355 = vld [vmem:[#allocation3 + $0x98] sm:$0xff]
        %v1356 = vld [vmem:[#allocation3 + $0xa0] sm:$0xff]
        %v1357 = vld [vmem:[#allocation3 + $0xa8] sm:$0xff]
        %v1358 = vld [vmem:[#allocation3 + $0xb0] sm:$0xff]
        %v1359 = vld [vmem:[#allocation3 + $0xb8] sm:$0xff]
        %v1360 = vld [vmem:[#allocation3 + $0xc0] sm:$0xff]
        %v1361 = vld [vmem:[#allocation3 + $0xc8] sm:$0xff]
        %v1362 = vld [vmem:[#allocation3 + $0xd0] sm:$0xff]
        %v1363 = vld [vmem:[#allocation3 + $0xd8] sm:$0xff]
        %v1364 = vld [vmem:[#allocation3 + $0xe0] sm:$0xff]
        %v1365 = vld [vmem:[#allocation3 + $0xe8] sm:$0xff]
        %v1366 = vld [vmem:[#allocation3 + $0xf0] sm:$0xff]
        %v1367 = vld [vmem:[#allocation3 + $0xf8] sm:$0xff]
        %v1368 = vld [vmem:[%s508] sm:$0xf]
        %v1369 = vld [vmem:[%s508 + $0x4] sm:$0xf]
        %v1370 = vld [vmem:[%s508 + $0x8] sm:$0xf]
        %v1371 = vld [vmem:[%s508 + $0xc] sm:$0xf]
        %v1372 = vld [vmem:[%s508 + $0x10] sm:$0xf]
        %v1373 = vld [vmem:[%s508 + $0x14] sm:$0xf]
        %v1374 = vld [vmem:[%s508 + $0x18] sm:$0xf]
        %v1375 = vld [vmem:[%s508 + $0x1c] sm:$0xf]
        %v1376 = vld [vmem:[%s508 + $0x20] sm:$0xf]
        %v1377 = vld [vmem:[%s508 + $0x24] sm:$0xf]
        %v1378 = vld [vmem:[%s508 + $0x28] sm:$0xf]
        %v1379 = vld [vmem:[%s508 + $0x2c] sm:$0xf]
        %v1380 = vld [vmem:[%s508 + $0x30] sm:$0xf]
        %v1381 = vld [vmem:[%s508 + $0x34] sm:$0xf]
        %v1382 = vld [vmem:[%s508 + $0x38] sm:$0xf]
        %v1383 = vld [vmem:[%s508 + $0x3c] sm:$0xf]
        %v1384 = vld [vmem:[%s508 + $0x40] sm:$0xf]
        %v1385 = vld [vmem:[%s508 + $0x44] sm:$0xf]
        %v1386 = vld [vmem:[%s508 + $0x48] sm:$0xf]
        %v1387 = vld [vmem:[%s508 + $0x4c] sm:$0xf]
        %v1388 = vld [vmem:[%s508 + $0x50] sm:$0xf]
        %v1389 = vld [vmem:[%s508 + $0x54] sm:$0xf]
        %v1390 = vld [vmem:[%s508 + $0x58] sm:$0xf]
        %v1391 = vld [vmem:[%s508 + $0x5c] sm:$0xf]
        %v1392 = vld [vmem:[%s508 + $0x60] sm:$0xf]
        %v1393 = vld [vmem:[%s508 + $0x64] sm:$0xf]
        %v1394 = vld [vmem:[%s508 + $0x68] sm:$0xf]
        %v1395 = vld [vmem:[%s508 + $0x6c] sm:$0xf]
        %v1396 = vld [vmem:[%s508 + $0x70] sm:$0xf]
        %v1397 = vld [vmem:[%s508 + $0x74] sm:$0xf]
        %v1398 = vld [vmem:[%s508 + $0x78] sm:$0xf]
        %v1399 = vld [vmem:[%s508 + $0x7c] sm:$0xf]
        %v1432 = vunpack.c.l.b16 %v1368
        %v1433 = vunpack.c.l.b16 %v1369
        %v1434 = vunpack.c.l.b16 %v1370
        %v1435 = vunpack.c.l.b16 %v1371
        %v1436 = vunpack.c.l.b16 %v1372
        %v1437 = vunpack.c.l.b16 %v1373
        %v1438 = vunpack.c.l.b16 %v1374
        %v1439 = vunpack.c.l.b16 %v1375
        %v1440 = vunpack.c.l.b16 %v1376
        %v1441 = vunpack.c.l.b16 %v1377
        %v1442 = vunpack.c.l.b16 %v1378
        %v1443 = vunpack.c.l.b16 %v1379
        %v1444 = vunpack.c.l.b16 %v1380
        %v1445 = vunpack.c.l.b16 %v1381
        %v1446 = vunpack.c.l.b16 %v1382
        %v1447 = vunpack.c.l.b16 %v1383
        %v1448 = vunpack.c.l.b16 %v1384
        %v1449 = vunpack.c.l.b16 %v1385
        %v1450 = vunpack.c.l.b16 %v1386
        %v1451 = vunpack.c.l.b16 %v1387
        %v1452 = vunpack.c.l.b16 %v1388
        %v1453 = vunpack.c.l.b16 %v1389
        %v1454 = vunpack.c.l.b16 %v1390
        %v1455 = vunpack.c.l.b16 %v1391
        %v1456 = vunpack.c.l.b16 %v1392
        %v1457 = vunpack.c.l.b16 %v1393
        %v1458 = vunpack.c.l.b16 %v1394
        %v1459 = vunpack.c.l.b16 %v1395
        %v1460 = vunpack.c.l.b16 %v1396
        %v1461 = vunpack.c.l.b16 %v1397
        %v1462 = vunpack.c.l.b16 %v1398
        %v1463 = vunpack.c.l.b16 %v1399
        %v1464 = vpack.c.b16 %v1433, %v1432
        %v1465 = vpack.c.b16 %v1435, %v1434
        %v1466 = vpack.c.b16 %v1437, %v1436
        %v1467 = vpack.c.b16 %v1439, %v1438
        %v1468 = vpack.c.b16 %v1441, %v1440
        %v1469 = vpack.c.b16 %v1443, %v1442
        %v1470 = vpack.c.b16 %v1445, %v1444
        %v1471 = vpack.c.b16 %v1447, %v1446
        %v1472 = vpack.c.b16 %v1449, %v1448
        %v1473 = vpack.c.b16 %v1451, %v1450
        %v1474 = vpack.c.b16 %v1453, %v1452
        %v1475 = vpack.c.b16 %v1455, %v1454
        %v1476 = vpack.c.b16 %v1457, %v1456
        %v1477 = vpack.c.b16 %v1459, %v1458
        %v1478 = vpack.c.b16 %v1461, %v1460
        %v1479 = vpack.c.b16 %v1463, %v1462
        %1496 = vmatprep.subr.bf16.mxu0 0
        %1497 = vmatpush1.bf16.msra.mxu0 %v1471
        %1498 = vmatprep.subr.bf16.mxu0 0
        %1499 = vmatpush1.bf16.msra.mxu0 %v1470
        %1500 = vmatprep.subr.bf16.mxu0 0
        %1501 = vmatpush1.bf16.msra.mxu0 %v1469
        %1502 = vmatprep.subr.bf16.mxu0 0
        %1503 = vmatpush1.bf16.msra.mxu0 %v1468
        %1504 = vmatprep.subr.bf16.mxu0 0
        %1505 = vmatpush1.bf16.msra.mxu0 %v1467
        %1506 = vmatprep.subr.bf16.mxu0 0
        %1507 = vmatpush1.bf16.msra.mxu0 %v1466
        %1508 = vmatprep.subr.bf16.mxu0 0
        %1509 = vmatpush1.bf16.msra.mxu0 %v1465
        %1510 = vmatprep.subr.bf16.mxu0 0
        %1511 = vmatpush1.bf16.msra.mxu0 %v1464
        %1512 = vmatprep.subr.bf16.mxu0 0
        %1513 = vmatpush2.bf16.msra.mxu0 %v1479
        %1514 = vmatprep.subr.bf16.mxu0 0
        %1515 = vmatpush2.bf16.msra.mxu0 %v1478
        %1516 = vmatprep.subr.bf16.mxu0 0
        %1517 = vmatpush2.bf16.msra.mxu0 %v1477
        %1518 = vmatprep.subr.bf16.mxu0 0
        %1519 = vmatpush2.bf16.msra.mxu0 %v1476
        %1520 = vmatprep.subr.bf16.mxu0 0
        %1521 = vmatpush2.bf16.msra.mxu0 %v1475
        %1522 = vmatprep.subr.bf16.mxu0 0
        %1523 = vmatpush2.bf16.msra.mxu0 %v1474
        %1524 = vmatprep.subr.bf16.mxu0 0
        %1525 = vmatpush2.bf16.msra.mxu0 %v1473
        %1526 = vmatprep.subr.bf16.mxu0 0
        %1527 = vmatpush2.bf16.msra.mxu0 %v1472
        %1528 = vmatprep.mubr.bf16.mxu0 %v887
        %1529 = vmatmul.mubr.bf16.gmra.mxu0 %v886
        %v1530 = vpop.f32.mrf.mxu0
        %v1531 = vadd.f32 0.0, %v1530
        %v1532 = vpop.f32.mrf.mxu0
        %v1533 = vpop.f32.mrf.mxu0
        %v1534 = vadd.f32 0.0, %v1533
        %v1535 = vpop.f32.mrf.mxu0
        %1536 = vmatprep.mubr.bf16.mxu0 %v889
        %1537 = vmatmul.mubr.bf16.gmra.mxu0 %v888
        %v1538 = vpop.f32.mrf.mxu0
        %v1539 = vadd.f32 0.0, %v1538
        %v1540 = vpop.f32.mrf.mxu0
        %v1541 = vpop.f32.mrf.mxu0
        %v1542 = vadd.f32 0.0, %v1541
        %v1543 = vpop.f32.mrf.mxu0
        %1544 = vmatprep.mubr.bf16.mxu0 %v891
        %1545 = vmatmul.mubr.bf16.gmra.mxu0 %v890
        %v1546 = vpop.f32.mrf.mxu0
        %v1547 = vadd.f32 0.0, %v1546
        %v1548 = vpop.f32.mrf.mxu0
        %v1549 = vpop.f32.mrf.mxu0
        %v1550 = vadd.f32 0.0, %v1549
        %v1551 = vpop.f32.mrf.mxu0
        %1552 = vmatprep.mubr.bf16.mxu0 %v893
        %1553 = vmatmul.mubr.bf16.gmra.mxu0 %v892
        %v1554 = vpop.f32.mrf.mxu0
        %v1555 = vadd.f32 0.0, %v1554
        %v1556 = vpop.f32.mrf.mxu0
        %v1557 = vpop.f32.mrf.mxu0
        %v1558 = vadd.f32 0.0, %v1557
        %v1559 = vpop.f32.mrf.mxu0
        %1560 = vmatprep.mubr.bf16.mxu0 %v895
        %1561 = vmatmul.mubr.bf16.gmra.mxu0 %v894
        %v1562 = vpop.f32.mrf.mxu0
        %v1563 = vadd.f32 0.0, %v1562
        %v1564 = vpop.f32.mrf.mxu0
        %v1565 = vpop.f32.mrf.mxu0
        %v1566 = vadd.f32 0.0, %v1565
        %v1567 = vpop.f32.mrf.mxu0
        %1568 = vmatprep.mubr.bf16.mxu0 %v897
        %1569 = vmatmul.mubr.bf16.gmra.mxu0 %v896
        %v1570 = vpop.f32.mrf.mxu0
        %v1571 = vadd.f32 0.0, %v1570
        %v1572 = vpop.f32.mrf.mxu0
        %v1573 = vpop.f32.mrf.mxu0
        %v1574 = vadd.f32 0.0, %v1573
        %v1575 = vpop.f32.mrf.mxu0
        %1576 = vmatprep.mubr.bf16.mxu0 %v899
        %1577 = vmatmul.mubr.bf16.gmra.mxu0 %v898
        %v1578 = vpop.f32.mrf.mxu0
        %v1579 = vadd.f32 0.0, %v1578
        %v1580 = vpop.f32.mrf.mxu0
        %v1581 = vpop.f32.mrf.mxu0
        %v1582 = vadd.f32 0.0, %v1581
        %v1583 = vpop.f32.mrf.mxu0
        %1584 = vmatprep.mubr.bf16.mxu0 %v901
        %1585 = vmatmul.mubr.bf16.gmra.mxu0 %v900
        %v1586 = vpop.f32.mrf.mxu0
        %v1587 = vadd.f32 0.0, %v1586
        %v1588 = vpop.f32.mrf.mxu0
        %v1589 = vpop.f32.mrf.mxu0
        %v1590 = vadd.f32 0.0, %v1589
        %v1591 = vpop.f32.mrf.mxu0
        %1592 = vmatprep.mubr.bf16.mxu0 %v903
        %1593 = vmatmul.mubr.bf16.gmra.mxu0 %v902
        %v1594 = vpop.f32.mrf.mxu0
        %v1595 = vadd.f32 0.0, %v1594
        %v1596 = vpop.f32.mrf.mxu0
        %v1597 = vpop.f32.mrf.mxu0
        %v1598 = vadd.f32 0.0, %v1597
        %v1599 = vpop.f32.mrf.mxu0
        %1600 = vmatprep.mubr.bf16.mxu0 %v905
        %1601 = vmatmul.mubr.bf16.gmra.mxu0 %v904
        %v1602 = vpop.f32.mrf.mxu0
        %v1603 = vadd.f32 0.0, %v1602
        %v1604 = vpop.f32.mrf.mxu0
        %v1605 = vpop.f32.mrf.mxu0
        %v1606 = vadd.f32 0.0, %v1605
        %v1607 = vpop.f32.mrf.mxu0
        %1608 = vmatprep.mubr.bf16.mxu0 %v907
        %1609 = vmatmul.mubr.bf16.gmra.mxu0 %v906
        %v1610 = vpop.f32.mrf.mxu0
        %v1611 = vadd.f32 0.0, %v1610
        %v1612 = vpop.f32.mrf.mxu0
        %v1613 = vpop.f32.mrf.mxu0
        %v1614 = vadd.f32 0.0, %v1613
        %v1615 = vpop.f32.mrf.mxu0
        %1616 = vmatprep.mubr.bf16.mxu0 %v909
        %1617 = vmatmul.mubr.bf16.gmra.mxu0 %v908
        %v1618 = vpop.f32.mrf.mxu0
        %v1619 = vadd.f32 0.0, %v1618
        %v1620 = vpop.f32.mrf.mxu0
        %v1621 = vpop.f32.mrf.mxu0
        %v1622 = vadd.f32 0.0, %v1621
        %v1623 = vpop.f32.mrf.mxu0
        %1624 = vmatprep.mubr.bf16.mxu0 %v911
        %1625 = vmatmul.mubr.bf16.gmra.mxu0 %v910
        %v1626 = vpop.f32.mrf.mxu0
        %v1627 = vadd.f32 0.0, %v1626
        %v1628 = vpop.f32.mrf.mxu0
        %v1629 = vpop.f32.mrf.mxu0
        %v1630 = vadd.f32 0.0, %v1629
        %v1631 = vpop.f32.mrf.mxu0
        %1632 = vmatprep.mubr.bf16.mxu0 %v913
        %1633 = vmatmul.mubr.bf16.gmra.mxu0 %v912
        %v1634 = vpop.f32.mrf.mxu0
        %v1635 = vadd.f32 0.0, %v1634
        %v1636 = vpop.f32.mrf.mxu0
        %v1637 = vpop.f32.mrf.mxu0
        %v1638 = vadd.f32 0.0, %v1637
        %v1639 = vpop.f32.mrf.mxu0
        %1640 = vmatprep.mubr.bf16.mxu0 %v915
        %1641 = vmatmul.mubr.bf16.gmra.mxu0 %v914
        %v1642 = vpop.f32.mrf.mxu0
        %v1643 = vadd.f32 0.0, %v1642
        %v1644 = vpop.f32.mrf.mxu0
        %v1645 = vpop.f32.mrf.mxu0
        %v1646 = vadd.f32 0.0, %v1645
        %v1647 = vpop.f32.mrf.mxu0
        %1648 = vmatprep.mubr.bf16.mxu0 %v917
        %1649 = vmatmul.mubr.bf16.gmra.mxu0 %v916
        %v1650 = vpop.f32.mrf.mxu0
        %v1651 = vadd.f32 0.0, %v1650
        %v1652 = vpop.f32.mrf.mxu0
        %v1653 = vpop.f32.mrf.mxu0
        %v1654 = vadd.f32 0.0, %v1653
        %v1655 = vpop.f32.mrf.mxu0
        %1656 = vdwg.mxu0
        %v1657 = vadd.f32 %v1336, %v1531
        %v1658 = vadd.f32 %v1337, %v1534
        %v1659 = vadd.f32 %v1338, %v1539
        %v1660 = vadd.f32 %v1339, %v1542
        %v1661 = vadd.f32 %v1340, %v1547
        %v1662 = vadd.f32 %v1341, %v1550
        %v1663 = vadd.f32 %v1342, %v1555
        %v1664 = vadd.f32 %v1343, %v1558
        %v1665 = vadd.f32 %v1344, %v1563
        %v1666 = vadd.f32 %v1345, %v1566
        %v1667 = vadd.f32 %v1346, %v1571
        %v1668 = vadd.f32 %v1347, %v1574
        %v1669 = vadd.f32 %v1348, %v1579
        %v1670 = vadd.f32 %v1349, %v1582
        %v1671 = vadd.f32 %v1350, %v1587
        %v1672 = vadd.f32 %v1351, %v1590
        %v1673 = vadd.f32 %v1352, %v1595
        %v1674 = vadd.f32 %v1353, %v1598
        %v1675 = vadd.f32 %v1354, %v1603
        %v1676 = vadd.f32 %v1355, %v1606
        %v1677 = vadd.f32 %v1356, %v1611
        %v1678 = vadd.f32 %v1357, %v1614
        %v1679 = vadd.f32 %v1358, %v1619
        %v1680 = vadd.f32 %v1359, %v1622
        %v1681 = vadd.f32 %v1360, %v1627
        %v1682 = vadd.f32 %v1361, %v1630
        %v1683 = vadd.f32 %v1362, %v1635
        %v1684 = vadd.f32 %v1363, %v1638
        %v1685 = vadd.f32 %v1364, %v1643
        %v1686 = vadd.f32 %v1365, %v1646
        %v1687 = vadd.f32 %v1366, %v1651
        %v1688 = vadd.f32 %v1367, %v1654
        %1689 = vst.msk [vmem:[#allocation3] sm:$0xff] %vm1303, %v1657
        %1690 = vst.msk [vmem:[#allocation3 + $0x8] sm:$0xff] %vm1303, %v1658
        %1691 = vst.msk [vmem:[#allocation3 + $0x10] sm:$0xff] %vm1303, %v1659
        %1692 = vst.msk [vmem:[#allocation3 + $0x18] sm:$0xff] %vm1303, %v1660
        %1693 = vst.msk [vmem:[#allocation3 + $0x20] sm:$0xff] %vm1303, %v1661
        %1694 = vst.msk [vmem:[#allocation3 + $0x28] sm:$0xff] %vm1303, %v1662
        %1695 = vst.msk [vmem:[#allocation3 + $0x30] sm:$0xff] %vm1303, %v1663
        %1696 = vst.msk [vmem:[#allocation3 + $0x38] sm:$0xff] %vm1303, %v1664
        %1697 = vst.msk [vmem:[#allocation3 + $0x40] sm:$0xff] %vm1303, %v1665
        %1698 = vst.msk [vmem:[#allocation3 + $0x48] sm:$0xff] %vm1303, %v1666
        %1699 = vst.msk [vmem:[#allocation3 + $0x50] sm:$0xff] %vm1303, %v1667
        %1700 = vst.msk [vmem:[#allocation3 + $0x58] sm:$0xff] %vm1303, %v1668
        %1701 = vst.msk [vmem:[#allocation3 + $0x60] sm:$0xff] %vm1303, %v1669
        %1702 = vst.msk [vmem:[#allocation3 + $0x68] sm:$0xff] %vm1303, %v1670
        %1703 = vst.msk [vmem:[#allocation3 + $0x70] sm:$0xff] %vm1303, %v1671
        %1704 = vst.msk [vmem:[#allocation3 + $0x78] sm:$0xff] %vm1303, %v1672
        %1705 = vst.msk [vmem:[#allocation3 + $0x80] sm:$0xff] %vm1303, %v1673
        %1706 = vst.msk [vmem:[#allocation3 + $0x88] sm:$0xff] %vm1303, %v1674
        %1707 = vst.msk [vmem:[#allocation3 + $0x90] sm:$0xff] %vm1303, %v1675
        %1708 = vst.msk [vmem:[#allocation3 + $0x98] sm:$0xff] %vm1303, %v1676
        %1709 = vst.msk [vmem:[#allocation3 + $0xa0] sm:$0xff] %vm1303, %v1677
        %1710 = vst.msk [vmem:[#allocation3 + $0xa8] sm:$0xff] %vm1303, %v1678
        %1711 = vst.msk [vmem:[#allocation3 + $0xb0] sm:$0xff] %vm1303, %v1679
        %1712 = vst.msk [vmem:[#allocation3 + $0xb8] sm:$0xff] %vm1303, %v1680
        %1713 = vst.msk [vmem:[#allocation3 + $0xc0] sm:$0xff] %vm1303, %v1681
        %1714 = vst.msk [vmem:[#allocation3 + $0xc8] sm:$0xff] %vm1303, %v1682
        %1715 = vst.msk [vmem:[#allocation3 + $0xd0] sm:$0xff] %vm1303, %v1683
        %1716 = vst.msk [vmem:[#allocation3 + $0xd8] sm:$0xff] %vm1303, %v1684
        %1717 = vst.msk [vmem:[#allocation3 + $0xe0] sm:$0xff] %vm1303, %v1685
        %1718 = vst.msk [vmem:[#allocation3 + $0xe8] sm:$0xff] %vm1303, %v1686
        %1719 = vst.msk [vmem:[#allocation3 + $0xf0] sm:$0xff] %vm1303, %v1687
        %1720 = vst.msk [vmem:[#allocation3 + $0xf8] sm:$0xff] %vm1303, %v1688
        %p1721 = scmp.eq.s32.totalorder %s25, 1
        // Predicated region
        $region80: #{bionic_forward.5} parent=66 // pred_check
          %p1722 = pneg %p1721
        $region81: #{bionic_forward.5} parent=66 // pred_check_branch
          %1724 = sbr.rel (%p1722) target = $region83
        $region82: #{bionic_forward.5} parent=66 // pred_region
          %v1725 = vld [vmem:[#allocation2] sm:$0xff]
          %v1726 = vld [vmem:[#allocation2 + $0x8] sm:$0xff]
          %v1727 = vld [vmem:[#allocation2 + $0x10] sm:$0xff]
          %v1728 = vld [vmem:[#allocation2 + $0x18] sm:$0xff]
          %v1729 = vld [vmem:[#allocation2 + $0x20] sm:$0xff]
          %v1730 = vld [vmem:[#allocation2 + $0x28] sm:$0xff]
          %v1731 = vld [vmem:[#allocation2 + $0x30] sm:$0xff]
          %v1732 = vld [vmem:[#allocation2 + $0x38] sm:$0xff]
          %v1733 = vld [vmem:[#allocation2 + $0x40] sm:$0xff]
          %v1734 = vld [vmem:[#allocation2 + $0x48] sm:$0xff]
          %v1735 = vld [vmem:[#allocation2 + $0x50] sm:$0xff]
          %v1736 = vld [vmem:[#allocation2 + $0x58] sm:$0xff]
          %v1737 = vld [vmem:[#allocation2 + $0x60] sm:$0xff]
          %v1738 = vld [vmem:[#allocation2 + $0x68] sm:$0xff]
          %v1739 = vld [vmem:[#allocation2 + $0x70] sm:$0xff]
          %v1740 = vld [vmem:[#allocation2 + $0x78] sm:$0xff]
          %v1741 = vld [vmem:[#allocation2 + $0x80] sm:$0xff]
          %v1742 = vld [vmem:[#allocation2 + $0x88] sm:$0xff]
          %v1743 = vld [vmem:[#allocation2 + $0x90] sm:$0xff]
          %v1744 = vld [vmem:[#allocation2 + $0x98] sm:$0xff]
          %v1745 = vld [vmem:[#allocation2 + $0xa0] sm:$0xff]
          %v1746 = vld [vmem:[#allocation2 + $0xa8] sm:$0xff]
          %v1747 = vld [vmem:[#allocation2 + $0xb0] sm:$0xff]
          %v1748 = vld [vmem:[#allocation2 + $0xb8] sm:$0xff]
          %v1749 = vld [vmem:[#allocation2 + $0xc0] sm:$0xff]
          %v1750 = vld [vmem:[#allocation2 + $0xc8] sm:$0xff]
          %v1751 = vld [vmem:[#allocation2 + $0xd0] sm:$0xff]
          %v1752 = vld [vmem:[#allocation2 + $0xd8] sm:$0xff]
          %v1753 = vld [vmem:[#allocation2 + $0xe0] sm:$0xff]
          %v1754 = vld [vmem:[#allocation2 + $0xe8] sm:$0xff]
          %v1755 = vld [vmem:[#allocation2 + $0xf0] sm:$0xff]
          %v1756 = vld [vmem:[#allocation2 + $0xf8] sm:$0xff]
          %v1757 = vld [vmem:[#allocation3] sm:$0xff]
          %v1758 = vld [vmem:[#allocation3 + $0x8] sm:$0xff]
          %v1759 = vld [vmem:[#allocation3 + $0x10] sm:$0xff]
          %v1760 = vld [vmem:[#allocation3 + $0x18] sm:$0xff]
          %v1761 = vld [vmem:[#allocation3 + $0x20] sm:$0xff]
          %v1762 = vld [vmem:[#allocation3 + $0x28] sm:$0xff]
          %v1763 = vld [vmem:[#allocation3 + $0x30] sm:$0xff]
          %v1764 = vld [vmem:[#allocation3 + $0x38] sm:$0xff]
          %v1765 = vld [vmem:[#allocation3 + $0x40] sm:$0xff]
          %v1766 = vld [vmem:[#allocation3 + $0x48] sm:$0xff]
          %v1767 = vld [vmem:[#allocation3 + $0x50] sm:$0xff]
          %v1768 = vld [vmem:[#allocation3 + $0x58] sm:$0xff]
          %v1769 = vld [vmem:[#allocation3 + $0x60] sm:$0xff]
          %v1770 = vld [vmem:[#allocation3 + $0x68] sm:$0xff]
          %v1771 = vld [vmem:[#allocation3 + $0x70] sm:$0xff]
          %v1772 = vld [vmem:[#allocation3 + $0x78] sm:$0xff]
          %v1773 = vld [vmem:[#allocation3 + $0x80] sm:$0xff]
          %v1774 = vld [vmem:[#allocation3 + $0x88] sm:$0xff]
          %v1775 = vld [vmem:[#allocation3 + $0x90] sm:$0xff]
          %v1776 = vld [vmem:[#allocation3 + $0x98] sm:$0xff]
          %v1777 = vld [vmem:[#allocation3 + $0xa0] sm:$0xff]
          %v1778 = vld [vmem:[#allocation3 + $0xa8] sm:$0xff]
          %v1779 = vld [vmem:[#allocation3 + $0xb0] sm:$0xff]
          %v1780 = vld [vmem:[#allocation3 + $0xb8] sm:$0xff]
          %v1781 = vld [vmem:[#allocation3 + $0xc0] sm:$0xff]
          %v1782 = vld [vmem:[#allocation3 + $0xc8] sm:$0xff]
          %v1783 = vld [vmem:[#allocation3 + $0xd0] sm:$0xff]
          %v1784 = vld [vmem:[#allocation3 + $0xd8] sm:$0xff]
          %v1785 = vld [vmem:[#allocation3 + $0xe0] sm:$0xff]
          %v1786 = vld [vmem:[#allocation3 + $0xe8] sm:$0xff]
          %v1787 = vld [vmem:[#allocation3 + $0xf0] sm:$0xff]
          %v1788 = vld [vmem:[#allocation3 + $0xf8] sm:$0xff]
          %v1789 = vadd.f32 %v1757, 1e-16
          %v1790 = vadd.f32 %v1758, 1e-16
          %v1791 = vadd.f32 %v1759, 1e-16
          %v1792 = vadd.f32 %v1760, 1e-16
          %v1793 = vadd.f32 %v1761, 1e-16
          %v1794 = vadd.f32 %v1762, 1e-16
          %v1795 = vadd.f32 %v1763, 1e-16
          %v1796 = vadd.f32 %v1764, 1e-16
          %v1797 = vadd.f32 %v1765, 1e-16
          %v1798 = vadd.f32 %v1766, 1e-16
          %v1799 = vadd.f32 %v1767, 1e-16
          %v1800 = vadd.f32 %v1768, 1e-16
          %v1801 = vadd.f32 %v1769, 1e-16
          %v1802 = vadd.f32 %v1770, 1e-16
          %v1803 = vadd.f32 %v1771, 1e-16
          %v1804 = vadd.f32 %v1772, 1e-16
          %v1805 = vadd.f32 %v1773, 1e-16
          %v1806 = vadd.f32 %v1774, 1e-16
          %v1807 = vadd.f32 %v1775, 1e-16
          %v1808 = vadd.f32 %v1776, 1e-16
          %v1809 = vadd.f32 %v1777, 1e-16
          %v1810 = vadd.f32 %v1778, 1e-16
          %v1811 = vadd.f32 %v1779, 1e-16
          %v1812 = vadd.f32 %v1780, 1e-16
          %v1813 = vadd.f32 %v1781, 1e-16
          %v1814 = vadd.f32 %v1782, 1e-16
          %v1815 = vadd.f32 %v1783, 1e-16
          %v1816 = vadd.f32 %v1784, 1e-16
          %v1817 = vadd.f32 %v1785, 1e-16
          %v1818 = vadd.f32 %v1786, 1e-16
          %v1819 = vadd.f32 %v1787, 1e-16
          %v1820 = vadd.f32 %v1788, 1e-16
          %v1821 = vrcp.pop %v1789
          %v1822 = vmul.f32 %v1725, %v1821
          %v1823 = vrcp.pop %v1790
          %v1824 = vmul.f32 %v1726, %v1823
          %v1825 = vrcp.pop %v1791
          %v1826 = vmul.f32 %v1727, %v1825
          %v1827 = vrcp.pop %v1792
          %v1828 = vmul.f32 %v1728, %v1827
          %v1829 = vrcp.pop %v1793
          %v1830 = vmul.f32 %v1729, %v1829
          %v1831 = vrcp.pop %v1794
          %v1832 = vmul.f32 %v1730, %v1831
          %v1833 = vrcp.pop %v1795
          %v1834 = vmul.f32 %v1731, %v1833
          %v1835 = vrcp.pop %v1796
          %v1836 = vmul.f32 %v1732, %v1835
          %v1837 = vrcp.pop %v1797
          %v1838 = vmul.f32 %v1733, %v1837
          %v1839 = vrcp.pop %v1798
          %v1840 = vmul.f32 %v1734, %v1839
          %v1841 = vrcp.pop %v1799
          %v1842 = vmul.f32 %v1735, %v1841
          %v1843 = vrcp.pop %v1800
          %v1844 = vmul.f32 %v1736, %v1843
          %v1845 = vrcp.pop %v1801
          %v1846 = vmul.f32 %v1737, %v1845
          %v1847 = vrcp.pop %v1802
          %v1848 = vmul.f32 %v1738, %v1847
          %v1849 = vrcp.pop %v1803
          %v1850 = vmul.f32 %v1739, %v1849
          %v1851 = vrcp.pop %v1804
          %v1852 = vmul.f32 %v1740, %v1851
          %v1853 = vrcp.pop %v1805
          %v1854 = vmul.f32 %v1741, %v1853
          %v1855 = vrcp.pop %v1806
          %v1856 = vmul.f32 %v1742, %v1855
          %v1857 = vrcp.pop %v1807
          %v1858 = vmul.f32 %v1743, %v1857
          %v1859 = vrcp.pop %v1808
          %v1860 = vmul.f32 %v1744, %v1859
          %v1861 = vrcp.pop %v1809
          %v1862 = vmul.f32 %v1745, %v1861
          %v1863 = vrcp.pop %v1810
          %v1864 = vmul.f32 %v1746, %v1863
          %v1865 = vrcp.pop %v1811
          %v1866 = vmul.f32 %v1747, %v1865
          %v1867 = vrcp.pop %v1812
          %v1868 = vmul.f32 %v1748, %v1867
          %v1869 = vrcp.pop %v1813
          %v1870 = vmul.f32 %v1749, %v1869
          %v1871 = vrcp.pop %v1814
          %v1872 = vmul.f32 %v1750, %v1871
          %v1873 = vrcp.pop %v1815
          %v1874 = vmul.f32 %v1751, %v1873
          %v1875 = vrcp.pop %v1816
          %v1876 = vmul.f32 %v1752, %v1875
          %v1877 = vrcp.pop %v1817
          %v1878 = vmul.f32 %v1753, %v1877
          %v1879 = vrcp.pop %v1818
          %v1880 = vmul.f32 %v1754, %v1879
          %v1881 = vrcp.pop %v1819
          %v1882 = vmul.f32 %v1755, %v1881
          %v1883 = vrcp.pop %v1820
          %v1884 = vmul.f32 %v1756, %v1883
          %v1885 = vld [vmem:[%s4] sm:$0x1]
          %v1887 = vlaneseq
          %v1888 = vshrl.u32 %v1887, 7
          %v1889 = vsub.s32 0, %v1888
          %v1890 = vrot.slane %v1885, %v1889
          %v1892 = vadd.f32 %v1822, %v1890
          %v1893 = vadd.f32 %v1824, %v1890
          %v1894 = vadd.f32 %v1826, %v1890
          %v1895 = vadd.f32 %v1828, %v1890
          %v1896 = vadd.f32 %v1830, %v1890
          %v1897 = vadd.f32 %v1832, %v1890
          %v1898 = vadd.f32 %v1834, %v1890
          %v1899 = vadd.f32 %v1836, %v1890
          %v1900 = vadd.f32 %v1838, %v1890
          %v1901 = vadd.f32 %v1840, %v1890
          %v1902 = vadd.f32 %v1842, %v1890
          %v1903 = vadd.f32 %v1844, %v1890
          %v1904 = vadd.f32 %v1846, %v1890
          %v1905 = vadd.f32 %v1848, %v1890
          %v1906 = vadd.f32 %v1850, %v1890
          %v1907 = vadd.f32 %v1852, %v1890
          %v1908 = vadd.f32 %v1854, %v1890
          %v1909 = vadd.f32 %v1856, %v1890
          %v1910 = vadd.f32 %v1858, %v1890
          %v1911 = vadd.f32 %v1860, %v1890
          %v1912 = vadd.f32 %v1862, %v1890
          %v1913 = vadd.f32 %v1864, %v1890
          %v1914 = vadd.f32 %v1866, %v1890
          %v1915 = vadd.f32 %v1868, %v1890
          %v1916 = vadd.f32 %v1870, %v1890
          %v1917 = vadd.f32 %v1872, %v1890
          %v1918 = vadd.f32 %v1874, %v1890
          %v1919 = vadd.f32 %v1876, %v1890
          %v1920 = vadd.f32 %v1878, %v1890
          %v1921 = vadd.f32 %v1880, %v1890
          %v1922 = vadd.f32 %v1882, %v1890
          %v1923 = vadd.f32 %v1884, %v1890
          %v1924 = vlaneseq
          %v1925 = vand.u32 %v1924, 127
          %v1926 = vstv %s24
          %vm1927 = vcmp.eq.s32.totalorder %v1925, %v1926
          %v1928 = vld [vmem:[%s514] sm:$0xff]
          %v1929 = vld [vmem:[%s514 + $0x8] sm:$0xff]
          %v1930 = vld [vmem:[%s514 + $0x10] sm:$0xff]
          %v1931 = vld [vmem:[%s514 + $0x18] sm:$0xff]
          %v1932 = vld [vmem:[%s514 + $0x20] sm:$0xff]
          %v1933 = vld [vmem:[%s514 + $0x28] sm:$0xff]
          %v1934 = vld [vmem:[%s514 + $0x30] sm:$0xff]
          %v1935 = vld [vmem:[%s514 + $0x38] sm:$0xff]
          %v1936 = vld [vmem:[%s514 + $0x40] sm:$0xff]
          %v1937 = vld [vmem:[%s514 + $0x48] sm:$0xff]
          %v1938 = vld [vmem:[%s514 + $0x50] sm:$0xff]
          %v1939 = vld [vmem:[%s514 + $0x58] sm:$0xff]
          %v1940 = vld [vmem:[%s514 + $0x60] sm:$0xff]
          %v1941 = vld [vmem:[%s514 + $0x68] sm:$0xff]
          %v1942 = vld [vmem:[%s514 + $0x70] sm:$0xff]
          %v1943 = vld [vmem:[%s514 + $0x78] sm:$0xff]
          %v1944 = vld [vmem:[%s514 + $0x80] sm:$0xff]
          %v1945 = vld [vmem:[%s514 + $0x88] sm:$0xff]
          %v1946 = vld [vmem:[%s514 + $0x90] sm:$0xff]
          %v1947 = vld [vmem:[%s514 + $0x98] sm:$0xff]
          %v1948 = vld [vmem:[%s514 + $0xa0] sm:$0xff]
          %v1949 = vld [vmem:[%s514 + $0xa8] sm:$0xff]
          %v1950 = vld [vmem:[%s514 + $0xb0] sm:$0xff]
          %v1951 = vld [vmem:[%s514 + $0xb8] sm:$0xff]
          %v1952 = vld [vmem:[%s514 + $0xc0] sm:$0xff]
          %v1953 = vld [vmem:[%s514 + $0xc8] sm:$0xff]
          %v1954 = vld [vmem:[%s514 + $0xd0] sm:$0xff]
          %v1955 = vld [vmem:[%s514 + $0xd8] sm:$0xff]
          %v1956 = vld [vmem:[%s514 + $0xe0] sm:$0xff]
          %v1957 = vld [vmem:[%s514 + $0xe8] sm:$0xff]
          %v1958 = vld [vmem:[%s514 + $0xf0] sm:$0xff]
          %v1959 = vld [vmem:[%s514 + $0xf8] sm:$0xff]
          %v1960 = vsel %vm1927, %v1928, 0.0
          %v1961 = vsel %vm1927, %v1929, 0.0
          %v1962 = vsel %vm1927, %v1930, 0.0
          %v1963 = vsel %vm1927, %v1931, 0.0
          %v1964 = vsel %vm1927, %v1932, 0.0
          %v1965 = vsel %vm1927, %v1933, 0.0
          %v1966 = vsel %vm1927, %v1934, 0.0
          %v1967 = vsel %vm1927, %v1935, 0.0
          %v1968 = vsel %vm1927, %v1936, 0.0
          %v1969 = vsel %vm1927, %v1937, 0.0
          %v1970 = vsel %vm1927, %v1938, 0.0
          %v1971 = vsel %vm1927, %v1939, 0.0
          %v1972 = vsel %vm1927, %v1940, 0.0
          %v1973 = vsel %vm1927, %v1941, 0.0
          %v1974 = vsel %vm1927, %v1942, 0.0
          %v1975 = vsel %vm1927, %v1943, 0.0
          %v1976 = vsel %vm1927, %v1944, 0.0
          %v1977 = vsel %vm1927, %v1945, 0.0
          %v1978 = vsel %vm1927, %v1946, 0.0
          %v1979 = vsel %vm1927, %v1947, 0.0
          %v1980 = vsel %vm1927, %v1948, 0.0
          %v1981 = vsel %vm1927, %v1949, 0.0
          %v1982 = vsel %vm1927, %v1950, 0.0
          %v1983 = vsel %vm1927, %v1951, 0.0
          %v1984 = vsel %vm1927, %v1952, 0.0
          %v1985 = vsel %vm1927, %v1953, 0.0
          %v1986 = vsel %vm1927, %v1954, 0.0
          %v1987 = vsel %vm1927, %v1955, 0.0
          %v1988 = vsel %vm1927, %v1956, 0.0
          %v1989 = vsel %vm1927, %v1957, 0.0
          %v1990 = vsel %vm1927, %v1958, 0.0
          %v1991 = vsel %vm1927, %v1959, 0.0
          %vm1992 = vcmask 15360
          %v1993 = vsel %vm1992, %v1960, 0.0
          %1994 = vadd.xlane.f32.xlu0 %v1993
          %v1995 = vpop.xlane.xlu0 %1994
          %v1996 = vsel %vm1992, %v1961, 0.0
          %1997 = vadd.xlane.f32.xlu0 %v1996
          %v1998 = vpop.xlane.xlu0 %1997
          %v1999 = vsel %vm1992, %v1962, 0.0
          %2000 = vadd.xlane.f32.xlu0 %v1999
          %v2001 = vpop.xlane.xlu0 %2000
          %v2002 = vsel %vm1992, %v1963, 0.0
          %2003 = vadd.xlane.f32.xlu0 %v2002
          %v2004 = vpop.xlane.xlu0 %2003
          %v2005 = vsel %vm1992, %v1964, 0.0
          %2006 = vadd.xlane.f32.xlu0 %v2005
          %v2007 = vpop.xlane.xlu0 %2006
          %v2008 = vsel %vm1992, %v1965, 0.0
          %2009 = vadd.xlane.f32.xlu0 %v2008
          %v2010 = vpop.xlane.xlu0 %2009
          %v2011 = vsel %vm1992, %v1966, 0.0
          %2012 = vadd.xlane.f32.xlu0 %v2011
          %v2013 = vpop.xlane.xlu0 %2012
          %v2014 = vsel %vm1992, %v1967, 0.0
          %2015 = vadd.xlane.f32.xlu0 %v2014
          %v2016 = vpop.xlane.xlu0 %2015
          %v2017 = vsel %vm1992, %v1968, 0.0
          %2018 = vadd.xlane.f32.xlu0 %v2017
          %v2019 = vpop.xlane.xlu0 %2018
          %v2020 = vsel %vm1992, %v1969, 0.0
          %2021 = vadd.xlane.f32.xlu0 %v2020
          %v2022 = vpop.xlane.xlu0 %2021
          %v2023 = vsel %vm1992, %v1970, 0.0
          %2024 = vadd.xlane.f32.xlu0 %v2023
          %v2025 = vpop.xlane.xlu0 %2024
          %v2026 = vsel %vm1992, %v1971, 0.0
          %2027 = vadd.xlane.f32.xlu0 %v2026
          %v2028 = vpop.xlane.xlu0 %2027
          %v2029 = vsel %vm1992, %v1972, 0.0
          %2030 = vadd.xlane.f32.xlu0 %v2029
          %v2031 = vpop.xlane.xlu0 %2030
          %v2032 = vsel %vm1992, %v1973, 0.0
          %2033 = vadd.xlane.f32.xlu0 %v2032
          %v2034 = vpop.xlane.xlu0 %2033
          %v2035 = vsel %vm1992, %v1974, 0.0
          %2036 = vadd.xlane.f32.xlu0 %v2035
          %v2037 = vpop.xlane.xlu0 %2036
          %v2038 = vsel %vm1992, %v1975, 0.0
          %2039 = vadd.xlane.f32.xlu0 %v2038
          %v2040 = vpop.xlane.xlu0 %2039
          %v2041 = vsel %vm1992, %v1976, 0.0
          %2042 = vadd.xlane.f32.xlu0 %v2041
          %v2043 = vpop.xlane.xlu0 %2042
          %v2044 = vsel %vm1992, %v1977, 0.0
          %2045 = vadd.xlane.f32.xlu0 %v2044
          %v2046 = vpop.xlane.xlu0 %2045
          %v2047 = vsel %vm1992, %v1978, 0.0
          %2048 = vadd.xlane.f32.xlu0 %v2047
          %v2049 = vpop.xlane.xlu0 %2048
          %v2050 = vsel %vm1992, %v1979, 0.0
          %2051 = vadd.xlane.f32.xlu0 %v2050
          %v2052 = vpop.xlane.xlu0 %2051
          %v2053 = vsel %vm1992, %v1980, 0.0
          %2054 = vadd.xlane.f32.xlu0 %v2053
          %v2055 = vpop.xlane.xlu0 %2054
          %v2056 = vsel %vm1992, %v1981, 0.0
          %2057 = vadd.xlane.f32.xlu0 %v2056
          %v2058 = vpop.xlane.xlu0 %2057
          %v2059 = vsel %vm1992, %v1982, 0.0
          %2060 = vadd.xlane.f32.xlu0 %v2059
          %v2061 = vpop.xlane.xlu0 %2060
          %v2062 = vsel %vm1992, %v1983, 0.0
          %2063 = vadd.xlane.f32.xlu0 %v2062
          %v2064 = vpop.xlane.xlu0 %2063
          %v2065 = vsel %vm1992, %v1984, 0.0
          %2066 = vadd.xlane.f32.xlu0 %v2065
          %v2067 = vpop.xlane.xlu0 %2066
          %v2068 = vsel %vm1992, %v1985, 0.0
          %2069 = vadd.xlane.f32.xlu0 %v2068
          %v2070 = vpop.xlane.xlu0 %2069
          %v2071 = vsel %vm1992, %v1986, 0.0
          %2072 = vadd.xlane.f32.xlu0 %v2071
          %v2073 = vpop.xlane.xlu0 %2072
          %v2074 = vsel %vm1992, %v1987, 0.0
          %2075 = vadd.xlane.f32.xlu0 %v2074
          %v2076 = vpop.xlane.xlu0 %2075
          %v2077 = vsel %vm1992, %v1988, 0.0
          %2078 = vadd.xlane.f32.xlu0 %v2077
          %v2079 = vpop.xlane.xlu0 %2078
          %v2080 = vsel %vm1992, %v1989, 0.0
          %2081 = vadd.xlane.f32.xlu0 %v2080
          %v2082 = vpop.xlane.xlu0 %2081
          %v2083 = vsel %vm1992, %v1990, 0.0
          %2084 = vadd.xlane.f32.xlu0 %v2083
          %v2085 = vpop.xlane.xlu0 %2084
          %v2086 = vsel %vm1992, %v1991, 0.0
          %2087 = vadd.xlane.f32.xlu0 %v2086
          %v2088 = vpop.xlane.xlu0 %2087
          %v2089 = vld [vmem:[#allocation4] sm:$0xff]
          %v2090 = vld [vmem:[#allocation4 + $0x8] sm:$0xff]
          %v2091 = vld [vmem:[#allocation4 + $0x10] sm:$0xff]
          %v2092 = vld [vmem:[#allocation4 + $0x18] sm:$0xff]
          %v2093 = vld [vmem:[#allocation4 + $0x20] sm:$0xff]
          %v2094 = vld [vmem:[#allocation4 + $0x28] sm:$0xff]
          %v2095 = vld [vmem:[#allocation4 + $0x30] sm:$0xff]
          %v2096 = vld [vmem:[#allocation4 + $0x38] sm:$0xff]
          %v2097 = vld [vmem:[#allocation4 + $0x40] sm:$0xff]
          %v2098 = vld [vmem:[#allocation4 + $0x48] sm:$0xff]
          %v2099 = vld [vmem:[#allocation4 + $0x50] sm:$0xff]
          %v2100 = vld [vmem:[#allocation4 + $0x58] sm:$0xff]
          %v2101 = vld [vmem:[#allocation4 + $0x60] sm:$0xff]
          %v2102 = vld [vmem:[#allocation4 + $0x68] sm:$0xff]
          %v2103 = vld [vmem:[#allocation4 + $0x70] sm:$0xff]
          %v2104 = vld [vmem:[#allocation4 + $0x78] sm:$0xff]
          %v2105 = vld [vmem:[#allocation4 + $0x80] sm:$0xff]
          %v2106 = vld [vmem:[#allocation4 + $0x88] sm:$0xff]
          %v2107 = vld [vmem:[#allocation4 + $0x90] sm:$0xff]
          %v2108 = vld [vmem:[#allocation4 + $0x98] sm:$0xff]
          %v2109 = vld [vmem:[#allocation4 + $0xa0] sm:$0xff]
          %v2110 = vld [vmem:[#allocation4 + $0xa8] sm:$0xff]
          %v2111 = vld [vmem:[#allocation4 + $0xb0] sm:$0xff]
          %v2112 = vld [vmem:[#allocation4 + $0xb8] sm:$0xff]
          %v2113 = vld [vmem:[#allocation4 + $0xc0] sm:$0xff]
          %v2114 = vld [vmem:[#allocation4 + $0xc8] sm:$0xff]
          %v2115 = vld [vmem:[#allocation4 + $0xd0] sm:$0xff]
          %v2116 = vld [vmem:[#allocation4 + $0xd8] sm:$0xff]
          %v2117 = vld [vmem:[#allocation4 + $0xe0] sm:$0xff]
          %v2118 = vld [vmem:[#allocation4 + $0xe8] sm:$0xff]
          %v2119 = vld [vmem:[#allocation4 + $0xf0] sm:$0xff]
          %v2120 = vld [vmem:[#allocation4 + $0xf8] sm:$0xff]
          %v2121 = vmul.f32 %v1995, %v1892
          %v2122 = vmul.f32 %v1998, %v1893
          %v2123 = vmul.f32 %v2001, %v1894
          %v2124 = vmul.f32 %v2004, %v1895
          %v2125 = vmul.f32 %v2007, %v1896
          %v2126 = vmul.f32 %v2010, %v1897
          %v2127 = vmul.f32 %v2013, %v1898
          %v2128 = vmul.f32 %v2016, %v1899
          %v2129 = vmul.f32 %v2019, %v1900
          %v2130 = vmul.f32 %v2022, %v1901
          %v2131 = vmul.f32 %v2025, %v1902
          %v2132 = vmul.f32 %v2028, %v1903
          %v2133 = vmul.f32 %v2031, %v1904
          %v2134 = vmul.f32 %v2034, %v1905
          %v2135 = vmul.f32 %v2037, %v1906
          %v2136 = vmul.f32 %v2040, %v1907
          %v2137 = vmul.f32 %v2043, %v1908
          %v2138 = vmul.f32 %v2046, %v1909
          %v2139 = vmul.f32 %v2049, %v1910
          %v2140 = vmul.f32 %v2052, %v1911
          %v2141 = vmul.f32 %v2055, %v1912
          %v2142 = vmul.f32 %v2058, %v1913
          %v2143 = vmul.f32 %v2061, %v1914
          %v2144 = vmul.f32 %v2064, %v1915
          %v2145 = vmul.f32 %v2067, %v1916
          %v2146 = vmul.f32 %v2070, %v1917
          %v2147 = vmul.f32 %v2073, %v1918
          %v2148 = vmul.f32 %v2076, %v1919
          %v2149 = vmul.f32 %v2079, %v1920
          %v2150 = vmul.f32 %v2082, %v1921
          %v2151 = vmul.f32 %v2085, %v1922
          %v2152 = vmul.f32 %v2088, %v1923
          %v2153 = vadd.f32 %v2089, %v2121
          %v2154 = vadd.f32 %v2090, %v2122
          %v2155 = vadd.f32 %v2091, %v2123
          %v2156 = vadd.f32 %v2092, %v2124
          %v2157 = vadd.f32 %v2093, %v2125
          %v2158 = vadd.f32 %v2094, %v2126
          %v2159 = vadd.f32 %v2095, %v2127
          %v2160 = vadd.f32 %v2096, %v2128
          %v2161 = vadd.f32 %v2097, %v2129
          %v2162 = vadd.f32 %v2098, %v2130
          %v2163 = vadd.f32 %v2099, %v2131
          %v2164 = vadd.f32 %v2100, %v2132
          %v2165 = vadd.f32 %v2101, %v2133
          %v2166 = vadd.f32 %v2102, %v2134
          %v2167 = vadd.f32 %v2103, %v2135
          %v2168 = vadd.f32 %v2104, %v2136
          %v2169 = vadd.f32 %v2105, %v2137
          %v2170 = vadd.f32 %v2106, %v2138
          %v2171 = vadd.f32 %v2107, %v2139
          %v2172 = vadd.f32 %v2108, %v2140
          %v2173 = vadd.f32 %v2109, %v2141
          %v2174 = vadd.f32 %v2110, %v2142
          %v2175 = vadd.f32 %v2111, %v2143
          %v2176 = vadd.f32 %v2112, %v2144
          %v2177 = vadd.f32 %v2113, %v2145
          %v2178 = vadd.f32 %v2114, %v2146
          %v2179 = vadd.f32 %v2115, %v2147
          %v2180 = vadd.f32 %v2116, %v2148
          %v2181 = vadd.f32 %v2117, %v2149
          %v2182 = vadd.f32 %v2118, %v2150
          %v2183 = vadd.f32 %v2119, %v2151
          %v2184 = vadd.f32 %v2120, %v2152
          %2185 = vst.msk [vmem:[#allocation4] sm:$0xff] %vm1303, %v2153
          %2186 = vst.msk [vmem:[#allocation4 + $0x8] sm:$0xff] %vm1303, %v2154
          %2187 = vst.msk [vmem:[#allocation4 + $0x10] sm:$0xff] %vm1303, %v2155
          %2188 = vst.msk [vmem:[#allocation4 + $0x18] sm:$0xff] %vm1303, %v2156
          %2189 = vst.msk [vmem:[#allocation4 + $0x20] sm:$0xff] %vm1303, %v2157
          %2190 = vst.msk [vmem:[#allocation4 + $0x28] sm:$0xff] %vm1303, %v2158
          %2191 = vst.msk [vmem:[#allocation4 + $0x30] sm:$0xff] %vm1303, %v2159
          %2192 = vst.msk [vmem:[#allocation4 + $0x38] sm:$0xff] %vm1303, %v2160
          %2193 = vst.msk [vmem:[#allocation4 + $0x40] sm:$0xff] %vm1303, %v2161
          %2194 = vst.msk [vmem:[#allocation4 + $0x48] sm:$0xff] %vm1303, %v2162
          %2195 = vst.msk [vmem:[#allocation4 + $0x50] sm:$0xff] %vm1303, %v2163
          %2196 = vst.msk [vmem:[#allocation4 + $0x58] sm:$0xff] %vm1303, %v2164
          %2197 = vst.msk [vmem:[#allocation4 + $0x60] sm:$0xff] %vm1303, %v2165
          %2198 = vst.msk [vmem:[#allocation4 + $0x68] sm:$0xff] %vm1303, %v2166
          %2199 = vst.msk [vmem:[#allocation4 + $0x70] sm:$0xff] %vm1303, %v2167
          %2200 = vst.msk [vmem:[#allocation4 + $0x78] sm:$0xff] %vm1303, %v2168
          %2201 = vst.msk [vmem:[#allocation4 + $0x80] sm:$0xff] %vm1303, %v2169
          %2202 = vst.msk [vmem:[#allocation4 + $0x88] sm:$0xff] %vm1303, %v2170
          %2203 = vst.msk [vmem:[#allocation4 + $0x90] sm:$0xff] %vm1303, %v2171
          %2204 = vst.msk [vmem:[#allocation4 + $0x98] sm:$0xff] %vm1303, %v2172
          %2205 = vst.msk [vmem:[#allocation4 + $0xa0] sm:$0xff] %vm1303, %v2173
          %2206 = vst.msk [vmem:[#allocation4 + $0xa8] sm:$0xff] %vm1303, %v2174
          %2207 = vst.msk [vmem:[#allocation4 + $0xb0] sm:$0xff] %vm1303, %v2175
          %2208 = vst.msk [vmem:[#allocation4 + $0xb8] sm:$0xff] %vm1303, %v2176
          %2209 = vst.msk [vmem:[#allocation4 + $0xc0] sm:$0xff] %vm1303, %v2177
          %2210 = vst.msk [vmem:[#allocation4 + $0xc8] sm:$0xff] %vm1303, %v2178
          %2211 = vst.msk [vmem:[#allocation4 + $0xd0] sm:$0xff] %vm1303, %v2179
          %2212 = vst.msk [vmem:[#allocation4 + $0xd8] sm:$0xff] %vm1303, %v2180
          %2213 = vst.msk [vmem:[#allocation4 + $0xe0] sm:$0xff] %vm1303, %v2181
          %2214 = vst.msk [vmem:[#allocation4 + $0xe8] sm:$0xff] %vm1303, %v2182
          %2215 = vst.msk [vmem:[#allocation4 + $0xf0] sm:$0xff] %vm1303, %v2183
          %2216 = vst.msk [vmem:[#allocation4 + $0xf8] sm:$0xff] %vm1303, %v2184
        $region83: #{bionic_forward.5} parent=66 // pred_fallthru
          _
        %p2217 = scmp.eq.s32.totalorder %s24, 1
        %p2218 = pnand %p1721, %p2217
        %p2219 = pneg %p2218
        // Predicated region
        $region84: #{bionic_forward.5} parent=66 // pred_check
          _
        $region85: #{bionic_forward.5} parent=66 // pred_check_branch
          %2221 = sbr.rel (%p2218) target = $region87
        $region86: #{bionic_forward.5} parent=66 // pred_region
          %v2222 = vld [vmem:[#allocation4] sm:$0xff]
          %v2223 = vld [vmem:[#allocation4 + $0x8] sm:$0xff]
          %v2224 = vld [vmem:[#allocation4 + $0x10] sm:$0xff]
          %v2225 = vld [vmem:[#allocation4 + $0x18] sm:$0xff]
          %v2226 = vld [vmem:[#allocation4 + $0x20] sm:$0xff]
          %v2227 = vld [vmem:[#allocation4 + $0x28] sm:$0xff]
          %v2228 = vld [vmem:[#allocation4 + $0x30] sm:$0xff]
          %v2229 = vld [vmem:[#allocation4 + $0x38] sm:$0xff]
          %v2230 = vld [vmem:[#allocation4 + $0x40] sm:$0xff]
          %v2231 = vld [vmem:[#allocation4 + $0x48] sm:$0xff]
          %v2232 = vld [vmem:[#allocation4 + $0x50] sm:$0xff]
          %v2233 = vld [vmem:[#allocation4 + $0x58] sm:$0xff]
          %v2234 = vld [vmem:[#allocation4 + $0x60] sm:$0xff]
          %v2235 = vld [vmem:[#allocation4 + $0x68] sm:$0xff]
          %v2236 = vld [vmem:[#allocation4 + $0x70] sm:$0xff]
          %v2237 = vld [vmem:[#allocation4 + $0x78] sm:$0xff]
          %v2238 = vld [vmem:[#allocation4 + $0x80] sm:$0xff]
          %v2239 = vld [vmem:[#allocation4 + $0x88] sm:$0xff]
          %v2240 = vld [vmem:[#allocation4 + $0x90] sm:$0xff]
          %v2241 = vld [vmem:[#allocation4 + $0x98] sm:$0xff]
          %v2242 = vld [vmem:[#allocation4 + $0xa0] sm:$0xff]
          %v2243 = vld [vmem:[#allocation4 + $0xa8] sm:$0xff]
          %v2244 = vld [vmem:[#allocation4 + $0xb0] sm:$0xff]
          %v2245 = vld [vmem:[#allocation4 + $0xb8] sm:$0xff]
          %v2246 = vld [vmem:[#allocation4 + $0xc0] sm:$0xff]
          %v2247 = vld [vmem:[#allocation4 + $0xc8] sm:$0xff]
          %v2248 = vld [vmem:[#allocation4 + $0xd0] sm:$0xff]
          %v2249 = vld [vmem:[#allocation4 + $0xd8] sm:$0xff]
          %v2250 = vld [vmem:[#allocation4 + $0xe0] sm:$0xff]
          %v2251 = vld [vmem:[#allocation4 + $0xe8] sm:$0xff]
          %v2252 = vld [vmem:[#allocation4 + $0xf0] sm:$0xff]
          %v2253 = vld [vmem:[#allocation4 + $0xf8] sm:$0xff]
          %v2254 = vld [vmem:[%s5] sm:$0xff]
          %v2255 = vld [vmem:[%s5 + $0x8] sm:$0xff]
          %v2256 = vld [vmem:[%s6] sm:$0x1]
          %v2258 = vlaneseq
          %v2259 = vshrl.u32 %v2258, 7
          %v2260 = vsub.s32 0, %v2259
          %v2261 = vrot.slane %v2256, %v2260
          %v2264 = vsel %vm1303, %v2222, 0
          %v2267 = vsel %vm1303, %v2223, 0
          %v2270 = vsel %vm1303, %v2224, 0
          %v2273 = vsel %vm1303, %v2225, 0
          %v2276 = vsel %vm1303, %v2226, 0
          %v2279 = vsel %vm1303, %v2227, 0
          %v2282 = vsel %vm1303, %v2228, 0
          %v2285 = vsel %vm1303, %v2229, 0
          %v2288 = vsel %vm1303, %v2230, 0
          %v2291 = vsel %vm1303, %v2231, 0
          %v2294 = vsel %vm1303, %v2232, 0
          %v2297 = vsel %vm1303, %v2233, 0
          %v2300 = vsel %vm1303, %v2234, 0
          %v2303 = vsel %vm1303, %v2235, 0
          %v2306 = vsel %vm1303, %v2236, 0
          %v2309 = vsel %vm1303, %v2237, 0
          %v2312 = vsel %vm1303, %v2238, 0
          %v2315 = vsel %vm1303, %v2239, 0
          %v2318 = vsel %vm1303, %v2240, 0
          %v2321 = vsel %vm1303, %v2241, 0
          %v2324 = vsel %vm1303, %v2242, 0
          %v2327 = vsel %vm1303, %v2243, 0
          %v2330 = vsel %vm1303, %v2244, 0
          %v2333 = vsel %vm1303, %v2245, 0
          %v2336 = vsel %vm1303, %v2246, 0
          %v2339 = vsel %vm1303, %v2247, 0
          %v2342 = vsel %vm1303, %v2248, 0
          %v2345 = vsel %vm1303, %v2249, 0
          %v2348 = vsel %vm1303, %v2250, 0
          %v2351 = vsel %vm1303, %v2251, 0
          %v2354 = vsel %vm1303, %v2252, 0
          %v2357 = vsel %vm1303, %v2253, 0
          %2359 = vmatprep.subr.mxu0 0.0
          %2360 = vmatpush1.msra.mxu0 0.0
          %2361 = vmatprep.subr.mxu0 0.0
          %2362 = vmatpush1.msra.mxu0 0.0
          %2363 = vmatprep.subr.mxu0 0.0
          %2364 = vmatpush1.msra.mxu0 0.0
          %2365 = vmatprep.subr.mxu0 0.0
          %2366 = vmatpush1.msra.mxu0 0.0
          %2367 = vmatprep.subr.mxu0 0.0
          %2368 = vmatpush1.msra.mxu0 0.0
          %2369 = vmatprep.subr.mxu0 0.0
          %2370 = vmatpush1.msra.mxu0 0.0
          %2371 = vmatprep.subr.mxu0 0.0
          %2372 = vmatpush1.msra.mxu0 0.0
          %2373 = vmatprep.subr.mxu0 0.0
          %2374 = vmatpush1.msra.mxu0 0.0
          %2375 = vmatprep.subr.mxu0 0.0
          %2376 = vmatpush1.msra.mxu0 0.0
          %2377 = vmatprep.subr.mxu0 0.0
          %2378 = vmatpush1.msra.mxu0 0.0
          %2379 = vmatprep.subr.mxu0 0.0
          %2380 = vmatpush1.msra.mxu0 0.0
          %2381 = vmatprep.subr.mxu0 0.0
          %2382 = vmatpush1.msra.mxu0 0.0
          %2383 = vmatprep.subr.mxu0 0.0
          %2384 = vmatpush1.msra.mxu0 0.0
          %2385 = vmatprep.subr.mxu0 0.0
          %2386 = vmatpush1.msra.mxu0 0.0
          %2387 = vmatprep.subr.mxu0 0.0
          %2388 = vmatpush1.msra.mxu0 %v2255
          %2389 = vmatprep.subr.mxu0 0.0
          %2390 = vmatpush1.msra.mxu0 %v2254
          %2391 = vmatprep.subr.mxu0 0.0
          %2392 = vmatpush2.msra.mxu0 0.0
          %2393 = vmatprep.subr.mxu0 0.0
          %2394 = vmatpush2.msra.mxu0 0.0
          %2395 = vmatprep.subr.mxu0 0.0
          %2396 = vmatpush2.msra.mxu0 0.0
          %2397 = vmatprep.subr.mxu0 0.0
          %2398 = vmatpush2.msra.mxu0 0.0
          %2399 = vmatprep.subr.mxu0 0.0
          %2400 = vmatpush2.msra.mxu0 0.0
          %2401 = vmatprep.subr.mxu0 0.0
          %2402 = vmatpush2.msra.mxu0 0.0
          %2403 = vmatprep.subr.mxu0 0.0
          %2404 = vmatpush2.msra.mxu0 0.0
          %2405 = vmatprep.subr.mxu0 0.0
          %2406 = vmatpush2.msra.mxu0 0.0
          %2407 = vmatprep.subr.mxu0 0.0
          %2408 = vmatpush2.msra.mxu0 0.0
          %2409 = vmatprep.subr.mxu0 0.0
          %2410 = vmatpush2.msra.mxu0 0.0
          %2411 = vmatprep.subr.mxu0 0.0
          %2412 = vmatpush2.msra.mxu0 0.0
          %2413 = vmatprep.subr.mxu0 0.0
          %2414 = vmatpush2.msra.mxu0 0.0
          %2415 = vmatprep.subr.mxu0 0.0
          %2416 = vmatpush2.msra.mxu0 0.0
          %2417 = vmatprep.subr.mxu0 0.0
          %2418 = vmatpush2.msra.mxu0 0.0
          %2419 = vmatprep.subr.mxu0 0.0
          %2420 = vmatpush2.msra.mxu0 0.0
          %2421 = vmatprep.subr.mxu0 0.0
          %2422 = vmatpush2.msra.mxu0 0.0
          %2423 = vmatprep.mubr.f32.mxu0 0.0
          %2424 = vmatmul.mubr.f32.gmra.mxu0 %v2264
          %v2425 = vpop.f32.mrf.mxu0
          %v2426 = vadd.f32 %v2261, %v2425
          %v2427 = vpop.f32.mrf.mxu0
          %2428 = vmatprep.mubr.f32.mxu0 0.0
          %2429 = vmatmul.mubr.f32.gmra.mxu0 %v2267
          %v2430 = vpop.f32.mrf.mxu0
          %v2431 = vadd.f32 %v2261, %v2430
          %v2432 = vpop.f32.mrf.mxu0
          %2433 = vmatprep.mubr.f32.mxu0 0.0
          %2434 = vmatmul.mubr.f32.gmra.mxu0 %v2270
          %v2435 = vpop.f32.mrf.mxu0
          %v2436 = vadd.f32 %v2261, %v2435
          %v2437 = vpop.f32.mrf.mxu0
          %2438 = vmatprep.mubr.f32.mxu0 0.0
          %2439 = vmatmul.mubr.f32.gmra.mxu0 %v2273
          %v2440 = vpop.f32.mrf.mxu0
          %v2441 = vadd.f32 %v2261, %v2440
          %v2442 = vpop.f32.mrf.mxu0
          %2443 = vmatprep.mubr.f32.mxu0 0.0
          %2444 = vmatmul.mubr.f32.gmra.mxu0 %v2276
          %v2445 = vpop.f32.mrf.mxu0
          %v2446 = vadd.f32 %v2261, %v2445
          %v2447 = vpop.f32.mrf.mxu0
          %2448 = vmatprep.mubr.f32.mxu0 0.0
          %2449 = vmatmul.mubr.f32.gmra.mxu0 %v2279
          %v2450 = vpop.f32.mrf.mxu0
          %v2451 = vadd.f32 %v2261, %v2450
          %v2452 = vpop.f32.mrf.mxu0
          %2453 = vmatprep.mubr.f32.mxu0 0.0
          %2454 = vmatmul.mubr.f32.gmra.mxu0 %v2282
          %v2455 = vpop.f32.mrf.mxu0
          %v2456 = vadd.f32 %v2261, %v2455
          %v2457 = vpop.f32.mrf.mxu0
          %2458 = vmatprep.mubr.f32.mxu0 0.0
          %2459 = vmatmul.mubr.f32.gmra.mxu0 %v2285
          %v2460 = vpop.f32.mrf.mxu0
          %v2461 = vadd.f32 %v2261, %v2460
          %v2462 = vpop.f32.mrf.mxu0
          %2463 = vmatprep.mubr.f32.mxu0 0.0
          %2464 = vmatmul.mubr.f32.gmra.mxu0 %v2288
          %v2465 = vpop.f32.mrf.mxu0
          %v2466 = vadd.f32 %v2261, %v2465
          %v2467 = vpop.f32.mrf.mxu0
          %2468 = vmatprep.mubr.f32.mxu0 0.0
          %2469 = vmatmul.mubr.f32.gmra.mxu0 %v2291
          %v2470 = vpop.f32.mrf.mxu0
          %v2471 = vadd.f32 %v2261, %v2470
          %v2472 = vpop.f32.mrf.mxu0
          %2473 = vmatprep.mubr.f32.mxu0 0.0
          %2474 = vmatmul.mubr.f32.gmra.mxu0 %v2294
          %v2475 = vpop.f32.mrf.mxu0
          %v2476 = vadd.f32 %v2261, %v2475
          %v2477 = vpop.f32.mrf.mxu0
          %2478 = vmatprep.mubr.f32.mxu0 0.0
          %2479 = vmatmul.mubr.f32.gmra.mxu0 %v2297
          %v2480 = vpop.f32.mrf.mxu0
          %v2481 = vadd.f32 %v2261, %v2480
          %v2482 = vpop.f32.mrf.mxu0
          %2483 = vmatprep.mubr.f32.mxu0 0.0
          %2484 = vmatmul.mubr.f32.gmra.mxu0 %v2300
          %v2485 = vpop.f32.mrf.mxu0
          %v2486 = vadd.f32 %v2261, %v2485
          %v2487 = vpop.f32.mrf.mxu0
          %2488 = vmatprep.mubr.f32.mxu0 0.0
          %2489 = vmatmul.mubr.f32.gmra.mxu0 %v2303
          %v2490 = vpop.f32.mrf.mxu0
          %v2491 = vadd.f32 %v2261, %v2490
          %v2492 = vpop.f32.mrf.mxu0
          %2493 = vmatprep.mubr.f32.mxu0 0.0
          %2494 = vmatmul.mubr.f32.gmra.mxu0 %v2306
          %v2495 = vpop.f32.mrf.mxu0
          %v2496 = vadd.f32 %v2261, %v2495
          %v2497 = vpop.f32.mrf.mxu0
          %2498 = vmatprep.mubr.f32.mxu0 0.0
          %2499 = vmatmul.mubr.f32.gmra.mxu0 %v2309
          %v2500 = vpop.f32.mrf.mxu0
          %v2501 = vadd.f32 %v2261, %v2500
          %v2502 = vpop.f32.mrf.mxu0
          %2503 = vmatprep.mubr.f32.mxu0 0.0
          %2504 = vmatmul.mubr.f32.gmra.mxu0 %v2312
          %v2505 = vpop.f32.mrf.mxu0
          %v2506 = vadd.f32 %v2261, %v2505
          %v2507 = vpop.f32.mrf.mxu0
          %2508 = vmatprep.mubr.f32.mxu0 0.0
          %2509 = vmatmul.mubr.f32.gmra.mxu0 %v2315
          %v2510 = vpop.f32.mrf.mxu0
          %v2511 = vadd.f32 %v2261, %v2510
          %v2512 = vpop.f32.mrf.mxu0
          %2513 = vmatprep.mubr.f32.mxu0 0.0
          %2514 = vmatmul.mubr.f32.gmra.mxu0 %v2318
          %v2515 = vpop.f32.mrf.mxu0
          %v2516 = vadd.f32 %v2261, %v2515
          %v2517 = vpop.f32.mrf.mxu0
          %2518 = vmatprep.mubr.f32.mxu0 0.0
          %2519 = vmatmul.mubr.f32.gmra.mxu0 %v2321
          %v2520 = vpop.f32.mrf.mxu0
          %v2521 = vadd.f32 %v2261, %v2520
          %v2522 = vpop.f32.mrf.mxu0
          %2523 = vmatprep.mubr.f32.mxu0 0.0
          %2524 = vmatmul.mubr.f32.gmra.mxu0 %v2324
          %v2525 = vpop.f32.mrf.mxu0
          %v2526 = vadd.f32 %v2261, %v2525
          %v2527 = vpop.f32.mrf.mxu0
          %2528 = vmatprep.mubr.f32.mxu0 0.0
          %2529 = vmatmul.mubr.f32.gmra.mxu0 %v2327
          %v2530 = vpop.f32.mrf.mxu0
          %v2531 = vadd.f32 %v2261, %v2530
          %v2532 = vpop.f32.mrf.mxu0
          %2533 = vmatprep.mubr.f32.mxu0 0.0
          %2534 = vmatmul.mubr.f32.gmra.mxu0 %v2330
          %v2535 = vpop.f32.mrf.mxu0
          %v2536 = vadd.f32 %v2261, %v2535
          %v2537 = vpop.f32.mrf.mxu0
          %2538 = vmatprep.mubr.f32.mxu0 0.0
          %2539 = vmatmul.mubr.f32.gmra.mxu0 %v2333
          %v2540 = vpop.f32.mrf.mxu0
          %v2541 = vadd.f32 %v2261, %v2540
          %v2542 = vpop.f32.mrf.mxu0
          %2543 = vmatprep.mubr.f32.mxu0 0.0
          %2544 = vmatmul.mubr.f32.gmra.mxu0 %v2336
          %v2545 = vpop.f32.mrf.mxu0
          %v2546 = vadd.f32 %v2261, %v2545
          %v2547 = vpop.f32.mrf.mxu0
          %2548 = vmatprep.mubr.f32.mxu0 0.0
          %2549 = vmatmul.mubr.f32.gmra.mxu0 %v2339
          %v2550 = vpop.f32.mrf.mxu0
          %v2551 = vadd.f32 %v2261, %v2550
          %v2552 = vpop.f32.mrf.mxu0
          %2553 = vmatprep.mubr.f32.mxu0 0.0
          %2554 = vmatmul.mubr.f32.gmra.mxu0 %v2342
          %v2555 = vpop.f32.mrf.mxu0
          %v2556 = vadd.f32 %v2261, %v2555
          %v2557 = vpop.f32.mrf.mxu0
          %2558 = vmatprep.mubr.f32.mxu0 0.0
          %2559 = vmatmul.mubr.f32.gmra.mxu0 %v2345
          %v2560 = vpop.f32.mrf.mxu0
          %v2561 = vadd.f32 %v2261, %v2560
          %v2562 = vpop.f32.mrf.mxu0
          %2563 = vmatprep.mubr.f32.mxu0 0.0
          %2564 = vmatmul.mubr.f32.gmra.mxu0 %v2348
          %v2565 = vpop.f32.mrf.mxu0
          %v2566 = vadd.f32 %v2261, %v2565
          %v2567 = vpop.f32.mrf.mxu0
          %2568 = vmatprep.mubr.f32.mxu0 0.0
          %2569 = vmatmul.mubr.f32.gmra.mxu0 %v2351
          %v2570 = vpop.f32.mrf.mxu0
          %v2571 = vadd.f32 %v2261, %v2570
          %v2572 = vpop.f32.mrf.mxu0
          %2573 = vmatprep.mubr.f32.mxu0 0.0
          %2574 = vmatmul.mubr.f32.gmra.mxu0 %v2354
          %v2575 = vpop.f32.mrf.mxu0
          %v2576 = vadd.f32 %v2261, %v2575
          %v2577 = vpop.f32.mrf.mxu0
          %2578 = vmatprep.mubr.f32.mxu0 0.0
          %2579 = vmatmul.mubr.f32.gmra.mxu0 %v2357
          %v2580 = vpop.f32.mrf.mxu0
          %v2581 = vadd.f32 %v2261, %v2580
          %v2582 = vpop.f32.mrf.mxu0
          %2583 = vdwg.mxu0
          %vm2584 = vcmask 261120
          %2585 = vst.msk [vmem:[%s520] sm:$0xff] %vm2584, %v2426
          %2586 = vst.msk [vmem:[%s520 + $0x8] sm:$0xff] %vm2584, %v2431
          %2587 = vst.msk [vmem:[%s520 + $0x10] sm:$0xff] %vm2584, %v2436
          %2588 = vst.msk [vmem:[%s520 + $0x18] sm:$0xff] %vm2584, %v2441
          %2589 = vst.msk [vmem:[%s520 + $0x20] sm:$0xff] %vm2584, %v2446
          %2590 = vst.msk [vmem:[%s520 + $0x28] sm:$0xff] %vm2584, %v2451
          %2591 = vst.msk [vmem:[%s520 + $0x30] sm:$0xff] %vm2584, %v2456
          %2592 = vst.msk [vmem:[%s520 + $0x38] sm:$0xff] %vm2584, %v2461
          %2593 = vst.msk [vmem:[%s520 + $0x40] sm:$0xff] %vm2584, %v2466
          %2594 = vst.msk [vmem:[%s520 + $0x48] sm:$0xff] %vm2584, %v2471
          %2595 = vst.msk [vmem:[%s520 + $0x50] sm:$0xff] %vm2584, %v2476
          %2596 = vst.msk [vmem:[%s520 + $0x58] sm:$0xff] %vm2584, %v2481
          %2597 = vst.msk [vmem:[%s520 + $0x60] sm:$0xff] %vm2584, %v2486
          %2598 = vst.msk [vmem:[%s520 + $0x68] sm:$0xff] %vm2584, %v2491
          %2599 = vst.msk [vmem:[%s520 + $0x70] sm:$0xff] %vm2584, %v2496
          %2600 = vst.msk [vmem:[%s520 + $0x78] sm:$0xff] %vm2584, %v2501
          %2601 = vst.msk [vmem:[%s520 + $0x80] sm:$0xff] %vm2584, %v2506
          %2602 = vst.msk [vmem:[%s520 + $0x88] sm:$0xff] %vm2584, %v2511
          %2603 = vst.msk [vmem:[%s520 + $0x90] sm:$0xff] %vm2584, %v2516
          %2604 = vst.msk [vmem:[%s520 + $0x98] sm:$0xff] %vm2584, %v2521
          %2605 = vst.msk [vmem:[%s520 + $0xa0] sm:$0xff] %vm2584, %v2526
          %2606 = vst.msk [vmem:[%s520 + $0xa8] sm:$0xff] %vm2584, %v2531
          %2607 = vst.msk [vmem:[%s520 + $0xb0] sm:$0xff] %vm2584, %v2536
          %2608 = vst.msk [vmem:[%s520 + $0xb8] sm:$0xff] %vm2584, %v2541
          %2609 = vst.msk [vmem:[%s520 + $0xc0] sm:$0xff] %vm2584, %v2546
          %2610 = vst.msk [vmem:[%s520 + $0xc8] sm:$0xff] %vm2584, %v2551
          %2611 = vst.msk [vmem:[%s520 + $0xd0] sm:$0xff] %vm2584, %v2556
          %2612 = vst.msk [vmem:[%s520 + $0xd8] sm:$0xff] %vm2584, %v2561
          %2613 = vst.msk [vmem:[%s520 + $0xe0] sm:$0xff] %vm2584, %v2566
          %2614 = vst.msk [vmem:[%s520 + $0xe8] sm:$0xff] %vm2584, %v2571
          %2615 = vst.msk [vmem:[%s520 + $0xf0] sm:$0xff] %vm2584, %v2576
          %2616 = vst.msk [vmem:[%s520 + $0xf8] sm:$0xff] %vm2584, %v2581
        $region87: #{bionic_forward.5} parent=66 // pred_fallthru
          _
        %s2617 = smul.u32 32, %s23
        %p2618 = scmp.lt.s32.totalorder %s2617, 63
        %s2619 = scalar_select %p2618, %s2617, 63
        %s2620 = smul.addr %s2619, 8
        %s2621 = scalar_lea.vmem %s7, %s2620
        // Predicated region
        $region88: #{bionic_forward.5} parent=66 // pred_check
          %p2622 = pneg %p226
        $region89: #{bionic_forward.5} parent=66 // pred_check_branch
          %2624 = sbr.rel (%p2622) target = $region91
        $region90: #{bionic_forward.5} parent=66 // pred_region
          %s2625 = smul.u32 32, %s23
        $region91: #{bionic_forward.5} parent=66 // pred_fallthru
          _
      $region67: #{bionic_forward.5} parent=5 // pred_fallthru
        _
      %p2626 = scmp.le.s32.totalorder 2, %s13
      // Predicated region
      $region92: #{bionic_forward.5} parent=5 // pred_check
        %p2627 = pneg %p2626
      $region93: #{bionic_forward.5} parent=5 // pred_check_branch
        %2629 = sbr.rel (%p2627) target = $region95
      $region94: #{bionic_forward.5} parent=5 // pred_region
        %s2630 = ssub.s32 %s13, 2
        // Predicated region
        $region96: #{bionic_forward.5} parent=94 // pred_check
          %p2631 = pneg %p232
        $region97: #{bionic_forward.5} parent=94 // pred_check_branch
          %2633 = sbr.rel (%p2631) target = $region99
        $region98: #{bionic_forward.5} parent=94 // pred_region
          %s2634 = smul.u32 32, %s26
          %p2635 = scmp.lt.s32.totalorder %s2634, 63
          %s2636 = scalar_select %p2635, %s2634, 63
          %s2637 = smul.addr %s2636, 8
          %s2638 = scalar_lea.vmem %s7, %s2637
        $region99: #{bionic_forward.5} parent=94 // pred_fallthru
          _
      $region95: #{bionic_forward.5} parent=5 // pred_fallthru
        _
    $region6: #{bionic_forward.5} parent=1 // loop_footer
      %s17 = sadd.s32 1, %s13
    $region7: #{bionic_forward.5} parent=1 // loop_footer_branch
      %12 = sbr.rel target = $region3
    $region8: #{bionic_forward.5} parent=1 // loop_exit
      _

</llo_original>
